<compile_context>
chip_gen: v7x
topology: tpu7x:2x2x1
jax: 0.10.0
libtpu: 0.0.40
codegen_flags: <defaults>
</compile_context>

<pallas_src>
import numpy as np
import jax
import jax.numpy as jnp
from jax import lax
from jax.experimental import pallas as pl
from jax.experimental.pallas import tpu as pltpu


# ----------------------------------------------------------------------------
# The single fused Pallas kernel
# ----------------------------------------------------------------------------

def _fused_cnn_kernel(p1_ref, w1_ref, s1_ref, b1_ref,
                      g2_ref, w2_ref, s2_ref, b2_ref,
                      g3_ref, w3_ref, s3_ref, b3_ref,
                      avg_ref, fw1_ref, fs1_ref, fb1_ref, fw2_ref, fb2_ref,
                      o_ref):
    f32, bf16 = jnp.float32, jnp.bfloat16

    def conv_bn_relu_pool(a, g_ref, wcat_ref, s_ref, b_ref):
        # a:        (M_in, Cin) f32 activations, rows = (n, y, x) row-major.
        # wcat_ref: (Cin, 9*Cout) bf16   lane-dense per-tap weights.
        # g_ref:    (9, 4*M_out, M_in) bf16 constant 0/1 gather matrices (tap shift +
        #           SAME zero-pad + 4 pool offsets branch-stacked along rows).
        cout = s_ref.shape[-1]
        z = jnp.dot(a.astype(bf16), wcat_ref[...], preferred_element_type=f32)
        z = z.astype(bf16)                                            # (M_in, 9*Cout)
        acc = jnp.dot(g_ref[0], z[:, 0:cout], preferred_element_type=f32)
        for t in range(1, 9):                                         # accumulate 9 taps
            acc = acc + jnp.dot(g_ref[t], z[:, t * cout:(t + 1) * cout],
                                preferred_element_type=f32)           # (4*M_out, Cout)
        y = jnp.maximum(acc * s_ref[...] + b_ref[...], 0.0)           # BN(folded) + ReLU
        m = y.shape[0] // 4                                           # MaxPool(2,2)
        return jnp.maximum(jnp.maximum(y[0:m], y[m:2 * m]),
                           jnp.maximum(y[2 * m:3 * m], y[3 * m:4 * m]))

    # ---- Block 1: Conv(1->32) on the VPU (9 broadcast MACs), BN + ReLU, MaxPool ----
    y1 = p1_ref[0] * w1_ref[0]                                        # (4*M1,1)*(1,32)
    for k in range(1, 9):
        y1 = y1 + p1_ref[k] * w1_ref[k]
    y1 = jnp.maximum(y1 * s1_ref[...] + b1_ref[...], 0.0)
    m1 = y1.shape[0] // 4
    a1 = jnp.maximum(jnp.maximum(y1[0:m1], y1[m1:2 * m1]),
                     jnp.maximum(y1[2 * m1:3 * m1], y1[3 * m1:4 * m1]))  # (N*64, 32)

    # ---- Blocks 2 & 3 ----
    a2 = conv_bn_relu_pool(a1, g2_ref, w2_ref, s2_ref, b2_ref)        # (N*16, 64)
    a3 = conv_bn_relu_pool(a2, g3_ref, w3_ref, s3_ref, b3_ref)        # (N*4, 128)

    # ---- Head: GlobalAvgPool (constant matmul) + FC + BN1d + ReLU + FC + Sigmoid ----
    pooled = jnp.dot(avg_ref[...], a3, preferred_element_type=f32)    # (N, 128)
    h = jnp.dot(pooled, fw1_ref[...], preferred_element_type=f32)
    h = jnp.maximum(h * fs1_ref[...] + fb1_ref[...], 0.0)
    logits = jnp.dot(h, fw2_ref[...], preferred_element_type=f32) + fb2_ref[...]
    o_ref[...] = 1.0 / (1.0 + jnp.exp(-logits))                       # Sigmoid


_VMEM = pl.BlockSpec(memory_space=pltpu.MemorySpace.VMEM)


# ----------------------------------------------------------------------------
# Trace-time constant builders (numpy) + light wrapper glue
# ----------------------------------------------------------------------------

def _gather_mats(n, h, w):
    """0/1 matrices G[t] of shape (4*M_out, M_in) per 3x3 tap t: (G[t] @ z)[b*M_out + r_out]
    selects z at spatial (2*ho+dy+ky-1, 2*wo+dx+kx-1), zero when out of bounds (SAME pad)."""
    ho_n, wo_n = h // 2, w // 2
    m_out, m_in = n * ho_n * wo_n, n * h * w
    g = np.zeros((9, 4 * m_out, m_in), np.float32)
    for ky in range(3):
        for kx in range(3):
            t = ky * 3 + kx
            for dy in range(2):
                for dx in range(2):
                    b = dy * 2 + dx
                    for ni in range(n):
                        for ho in range(ho_n):
                            for wo in range(wo_n):
                                ys = 2 * ho + dy + ky - 1
                                xs = 2 * wo + dx + kx - 1
                                if 0 <= ys < h and 0 <= xs < w:
                                    r = b * m_out + (ni * ho_n + ho) * wo_n + wo
                                    g[t, r, (ni * h + ys) * w + xs] = 1.0
    return g


def _layer1_patches(x):
    """Branch-stacked 3x3 patch columns for the Cin=1 first conv.
    Returns (9, 4*N*(H//2)*(W//2), 1): tap-major, rows = [pool-branch, n, ho, wo]."""
    n, h, w = x.shape
    ho_n, wo_n = h // 2, w // 2
    xp = jnp.pad(x, ((0, 0), (1, 1), (1, 1)))
    taps = []
    for ky in range(3):
        for kx in range(3):
            branches = []
            for dy in range(2):
                for dx in range(2):
                    sl = xp[:, dy + ky: dy + ky + 2 * ho_n - 1: 2,
                            dx + kx: dx + kx + 2 * wo_n - 1: 2]       # (N, H//2, W//2)
                    branches.append(sl.reshape(n * ho_n * wo_n))
            taps.append(jnp.concatenate(branches, axis=0))
    return jnp.stack(taps, axis=0)[..., None].astype(jnp.float32)


def _prep_conv(w_hwio):
    """HWIO (3,3,Cin,Cout) -> lane-dense (Cin, 9*Cout) bf16 weight [w_tap0 | ... | w_tap8]."""
    kh, kw, cin, cout = w_hwio.shape
    return jnp.transpose(w_hwio.reshape(kh * kw, cin, cout), (1, 0, 2)).reshape(
        cin, kh * kw * cout).astype(jnp.bfloat16)


def improved_cnn_forward(x_nchw, params):
    """Forward pass matching ImprovedCNNClassifier.forward (eval mode), one fused kernel."""
    x = x_nchw.astype(jnp.float32)[:, 0, :, :]                        # (N, H, W), Cin = 1
    n, h, w = x.shape
    num_classes = params["fw2"].shape[-1]

    p1 = _layer1_patches(x)                                           # (9, N*H*W, 1)
    w1 = params["w1"].reshape(9, 1, -1).astype(jnp.float32)           # (9, 1, 32)
    g2 = jnp.asarray(_gather_mats(n, h // 2, w // 2), jnp.bfloat16)   # (9, 128, 128)
    g3 = jnp.asarray(_gather_mats(n, h // 4, w // 4), jnp.bfloat16)   # (9, 32, 32)
    w2c = _prep_conv(params["w2"])                                    # (32, 576)
    w3c = _prep_conv(params["w3"])                                    # (64, 1152)

    spatial3 = (h // 8) * (w // 8)                                    # = 4
    avg = jnp.asarray(np.kron(np.eye(n, dtype=np.float32),
                              np.full((1, spatial3), 1.0 / spatial3, np.float32)))

    def col(v):
        return v.reshape(1, -1).astype(jnp.float32)

    flops = 2 * (9 * p1.shape[1] * 32
                 + g2.shape[2] * 32 * 576 + 9 * g2.shape[1] * g2.shape[2] * 64
                 + g3.shape[2] * 64 * 1152 + 9 * g3.shape[1] * g3.shape[2] * 128
                 + n * (4 * n * 128 + 128 * 64 + 64 * num_classes))

    kernel = pl.pallas_call(
        _fused_cnn_kernel,
        out_shape=jax.ShapeDtypeStruct((n, num_classes), jnp.float32),
        in_specs=[_VMEM] * 18,
        out_specs=_VMEM,
        compiler_params=pltpu.CompilerParams(vmem_limit_bytes=32 * 1024 * 1024),
        cost_estimate=pl.CostEstimate(flops=int(flops), transcendentals=int(n),
                                      bytes_accessed=2_000_000),
    )
    return kernel(p1, w1, col(params["s1"]), col(params["b1"]),
                  g2, w2c, col(params["s2"]), col(params["b2"]),
                  g3, w3c, col(params["s3"]), col(params["b3"]),
                  avg, params["fw1"].astype(jnp.float32), col(params["fs1"]),
                  col(params["fb1"]), params["fw2"].astype(jnp.float32), col(params["fb2"]))


# ----------------------------------------------------------------------------
# Pure-JAX reference (same folded-BN eval-mode semantics) for validation
# ----------------------------------------------------------------------------

def reference_forward(x_nchw, params):
    x = jnp.transpose(x_nchw, (0, 2, 3, 1)).astype(jnp.float32)       # NCHW -> NHWC

    def block(x, w, s, b):
        y = lax.conv_general_dilated(x, w, (1, 1), "SAME",
                                     dimension_numbers=("NHWC", "HWIO", "NHWC"))
        y = jnp.maximum(y * s + b, 0.0)
        n, hh, ww, c = y.shape
        return y.reshape(n, hh // 2, 2, ww // 2, 2, c).max(axis=(2, 4))

    x = block(x, params["w1"], params["s1"], params["b1"])
    x = block(x, params["w2"], params["s2"], params["b2"])
    x = block(x, params["w3"], params["s3"], params["b3"])
    pooled = x.mean(axis=(1, 2))
    hid = jnp.maximum((pooled @ params["fw1"]) * params["fs1"] + params["fb1"], 0.0)
    logits = hid @ params["fw2"] + params["fb2"]
    return 1.0 / (1.0 + jnp.exp(-logits))


# ----------------------------------------------------------------------------
# Deterministic parameter initialization (synthetic weights, BN folded)
# ----------------------------------------------------------------------------

def init_params(key):
    eps = 1e-5
    keys = jax.random.split(key, 16)

    def conv_w(k, cin, cout):
        return jax.random.normal(k, (3, 3, cin, cout), jnp.float32) / jnp.sqrt(9.0 * cin)

    def bn_fold(k, cout, layer_bias):
        kg, kb, km, kv = jax.random.split(k, 4)
        gamma = 1.0 + 0.1 * jax.random.normal(kg, (cout,), jnp.float32)
        beta = 0.1 * jax.random.normal(kb, (cout,), jnp.float32)
        mean = 0.1 * jax.random.normal(km, (cout,), jnp.float32)
        var = 1.0 + jax.random.uniform(kv, (cout,), jnp.float32)
        scale = gamma / jnp.sqrt(var + eps)
        bias = scale * (layer_bias - mean) + beta
        return scale, bias

    p = {}
    p["w1"] = conv_w(keys[0], 1, 32)
    cb1 = 0.05 * jax.random.normal(keys[1], (32,), jnp.float32)
    p["s1"], p["b1"] = bn_fold(keys[2], 32, cb1)

    p["w2"] = conv_w(keys[3], 32, 64)
    cb2 = 0.05 * jax.random.normal(keys[4], (64,), jnp.float32)
    p["s2"], p["b2"] = bn_fold(keys[5], 64, cb2)

    p["w3"] = conv_w(keys[6], 64, 128)
    cb3 = 0.05 * jax.random.normal(keys[7], (128,), jnp.float32)
    p["s3"], p["b3"] = bn_fold(keys[8], 128, cb3)

    p["fw1"] = jax.random.normal(keys[9], (128, 64), jnp.float32) / jnp.sqrt(128.0)
    fb1 = 0.05 * jax.random.normal(keys[10], (64,), jnp.float32)
    p["fs1"], p["fb1"] = bn_fold(keys[11], 64, fb1)

    p["fw2"] = jax.random.normal(keys[12], (64, 1), jnp.float32) / jnp.sqrt(64.0)
    p["fb2"] = 0.05 * jax.random.normal(keys[13], (1,), jnp.float32)
    return p


# ----------------------------------------------------------------------------

if __name__ == "__main__":
    # Input matching nn.Conv2d(1, 32, ...): NCHW, 1 channel, 16x16 spatial, batch 2.
    x = jax.random.normal(jax.random.PRNGKey(0), (2, 1, 16, 16), dtype=jnp.float32)
    params = init_params(jax.random.PRNGKey(42))

    fwd = jax.jit(improved_cnn_forward)
    out = jax.block_until_ready(fwd(x, params))
    ref = jax.block_until_ready(jax.jit(reference_forward)(x, params))

    assert out.shape == (2, 1), out.shape
    assert bool(jnp.all(jnp.isfinite(out)))
    assert bool(jnp.all((out >= 0.0) & (out <= 1.0)))                 # sigmoid range
    assert float(jnp.max(jnp.abs(out - ref))) < 5e-2, (out, ref)      # bf16-tolerance check
    print("KERNEL_OK")
</pallas_src>

<mosaic_0001>
module attributes {stable_mosaic.version = 11 : i64} {
  func.func @_fused_cnn_kernel(%arg0: memref<9x512x1xf32, #tpu.memory_space<vmem>>, %arg1: memref<9x1x32xf32, #tpu.memory_space<vmem>>, %arg2: memref<1x32xf32, #tpu.memory_space<vmem>>, %arg3: memref<1x32xf32, #tpu.memory_space<vmem>>, %arg4: memref<9x128x128xbf16, #tpu.memory_space<vmem>>, %arg5: memref<32x576xbf16, #tpu.memory_space<vmem>>, %arg6: memref<1x64xf32, #tpu.memory_space<vmem>>, %arg7: memref<1x64xf32, #tpu.memory_space<vmem>>, %arg8: memref<9x32x32xbf16, #tpu.memory_space<vmem>>, %arg9: memref<64x1152xbf16, #tpu.memory_space<vmem>>, %arg10: memref<1x128xf32, #tpu.memory_space<vmem>>, %arg11: memref<1x128xf32, #tpu.memory_space<vmem>>, %arg12: memref<2x8xf32, #tpu.memory_space<vmem>>, %arg13: memref<128x64xf32, #tpu.memory_space<vmem>>, %arg14: memref<1x64xf32, #tpu.memory_space<vmem>>, %arg15: memref<1x64xf32, #tpu.memory_space<vmem>>, %arg16: memref<64x1xf32, #tpu.memory_space<vmem>>, %arg17: memref<1x1xf32, #tpu.memory_space<vmem>>, %arg18: memref<2x1xf32, #tpu.memory_space<vmem>>) attributes {dimension_semantics = [], scalar_prefetch = 0 : i64, scratch_operands = 0 : i64, tpu.core_type = #tpu.core_type<tc>} {
    %c0 = arith.constant 0 : index
    %c0_0 = arith.constant 0 : index
    %c0_1 = arith.constant 0 : index
    %0 = vector.load %arg0[%c0, %c0_0, %c0_1] : memref<9x512x1xf32, #tpu.memory_space<vmem>>, vector<1x512x1xf32>
    %1 = vector.shape_cast %0 : vector<1x512x1xf32> to vector<512x1xf32>
    %c0_2 = arith.constant 0 : index
    %c0_3 = arith.constant 0 : index
    %c0_4 = arith.constant 0 : index
    %2 = vector.load %arg1[%c0_2, %c0_3, %c0_4] : memref<9x1x32xf32, #tpu.memory_space<vmem>>, vector<1x1x32xf32>
    %3 = vector.shape_cast %2 : vector<1x1x32xf32> to vector<1x32xf32>
    %4 = vector.broadcast %1 : vector<512x1xf32> to vector<512x32xf32>
    %5 = vector.broadcast %3 : vector<1x32xf32> to vector<512x32xf32>
    %6 = arith.mulf %4, %5 : vector<512x32xf32>
    %c1 = arith.constant 1 : index
    %c0_5 = arith.constant 0 : index
    %c0_6 = arith.constant 0 : index
    %7 = vector.load %arg0[%c1, %c0_5, %c0_6] : memref<9x512x1xf32, #tpu.memory_space<vmem>>, vector<1x512x1xf32>
    %8 = vector.shape_cast %7 : vector<1x512x1xf32> to vector<512x1xf32>
    %c1_7 = arith.constant 1 : index
    %c0_8 = arith.constant 0 : index
    %c0_9 = arith.constant 0 : index
    %9 = vector.load %arg1[%c1_7, %c0_8, %c0_9] : memref<9x1x32xf32, #tpu.memory_space<vmem>>, vector<1x1x32xf32>
    %10 = vector.shape_cast %9 : vector<1x1x32xf32> to vector<1x32xf32>
    %11 = vector.broadcast %8 : vector<512x1xf32> to vector<512x32xf32>
    %12 = vector.broadcast %10 : vector<1x32xf32> to vector<512x32xf32>
    %13 = arith.mulf %11, %12 : vector<512x32xf32>
    %14 = arith.addf %6, %13 : vector<512x32xf32>
    %c2 = arith.constant 2 : index
    %c0_10 = arith.constant 0 : index
    %c0_11 = arith.constant 0 : index
    %15 = vector.load %arg0[%c2, %c0_10, %c0_11] : memref<9x512x1xf32, #tpu.memory_space<vmem>>, vector<1x512x1xf32>
    %16 = vector.shape_cast %15 : vector<1x512x1xf32> to vector<512x1xf32>
    %c2_12 = arith.constant 2 : index
    %c0_13 = arith.constant 0 : index
    %c0_14 = arith.constant 0 : index
    %17 = vector.load %arg1[%c2_12, %c0_13, %c0_14] : memref<9x1x32xf32, #tpu.memory_space<vmem>>, vector<1x1x32xf32>
    %18 = vector.shape_cast %17 : vector<1x1x32xf32> to vector<1x32xf32>
    %19 = vector.broadcast %16 : vector<512x1xf32> to vector<512x32xf32>
    %20 = vector.broadcast %18 : vector<1x32xf32> to vector<512x32xf32>
    %21 = arith.mulf %19, %20 : vector<512x32xf32>
    %22 = arith.addf %14, %21 : vector<512x32xf32>
    %c3 = arith.constant 3 : index
    %c0_15 = arith.constant 0 : index
    %c0_16 = arith.constant 0 : index
    %23 = vector.load %arg0[%c3, %c0_15, %c0_16] : memref<9x512x1xf32, #tpu.memory_space<vmem>>, vector<1x512x1xf32>
    %24 = vector.shape_cast %23 : vector<1x512x1xf32> to vector<512x1xf32>
    %c3_17 = arith.constant 3 : index
    %c0_18 = arith.constant 0 : index
    %c0_19 = arith.constant 0 : index
    %25 = vector.load %arg1[%c3_17, %c0_18, %c0_19] : memref<9x1x32xf32, #tpu.memory_space<vmem>>, vector<1x1x32xf32>
    %26 = vector.shape_cast %25 : vector<1x1x32xf32> to vector<1x32xf32>
    %27 = vector.broadcast %24 : vector<512x1xf32> to vector<512x32xf32>
    %28 = vector.broadcast %26 : vector<1x32xf32> to vector<512x32xf32>
    %29 = arith.mulf %27, %28 : vector<512x32xf32>
    %30 = arith.addf %22, %29 : vector<512x32xf32>
    %c4 = arith.constant 4 : index
    %c0_20 = arith.constant 0 : index
    %c0_21 = arith.constant 0 : index
    %31 = vector.load %arg0[%c4, %c0_20, %c0_21] : memref<9x512x1xf32, #tpu.memory_space<vmem>>, vector<1x512x1xf32>
    %32 = vector.shape_cast %31 : vector<1x512x1xf32> to vector<512x1xf32>
    %c4_22 = arith.constant 4 : index
    %c0_23 = arith.constant 0 : index
    %c0_24 = arith.constant 0 : index
    %33 = vector.load %arg1[%c4_22, %c0_23, %c0_24] : memref<9x1x32xf32, #tpu.memory_space<vmem>>, vector<1x1x32xf32>
    %34 = vector.shape_cast %33 : vector<1x1x32xf32> to vector<1x32xf32>
    %35 = vector.broadcast %32 : vector<512x1xf32> to vector<512x32xf32>
    %36 = vector.broadcast %34 : vector<1x32xf32> to vector<512x32xf32>
    %37 = arith.mulf %35, %36 : vector<512x32xf32>
    %38 = arith.addf %30, %37 : vector<512x32xf32>
    %c5 = arith.constant 5 : index
    %c0_25 = arith.constant 0 : index
    %c0_26 = arith.constant 0 : index
    %39 = vector.load %arg0[%c5, %c0_25, %c0_26] : memref<9x512x1xf32, #tpu.memory_space<vmem>>, vector<1x512x1xf32>
    %40 = vector.shape_cast %39 : vector<1x512x1xf32> to vector<512x1xf32>
    %c5_27 = arith.constant 5 : index
    %c0_28 = arith.constant 0 : index
    %c0_29 = arith.constant 0 : index
    %41 = vector.load %arg1[%c5_27, %c0_28, %c0_29] : memref<9x1x32xf32, #tpu.memory_space<vmem>>, vector<1x1x32xf32>
    %42 = vector.shape_cast %41 : vector<1x1x32xf32> to vector<1x32xf32>
    %43 = vector.broadcast %40 : vector<512x1xf32> to vector<512x32xf32>
    %44 = vector.broadcast %42 : vector<1x32xf32> to vector<512x32xf32>
    %45 = arith.mulf %43, %44 : vector<512x32xf32>
    %46 = arith.addf %38, %45 : vector<512x32xf32>
    %c6 = arith.constant 6 : index
    %c0_30 = arith.constant 0 : index
    %c0_31 = arith.constant 0 : index
    %47 = vector.load %arg0[%c6, %c0_30, %c0_31] : memref<9x512x1xf32, #tpu.memory_space<vmem>>, vector<1x512x1xf32>
    %48 = vector.shape_cast %47 : vector<1x512x1xf32> to vector<512x1xf32>
    %c6_32 = arith.constant 6 : index
    %c0_33 = arith.constant 0 : index
    %c0_34 = arith.constant 0 : index
    %49 = vector.load %arg1[%c6_32, %c0_33, %c0_34] : memref<9x1x32xf32, #tpu.memory_space<vmem>>, vector<1x1x32xf32>
    %50 = vector.shape_cast %49 : vector<1x1x32xf32> to vector<1x32xf32>
    %51 = vector.broadcast %48 : vector<512x1xf32> to vector<512x32xf32>
    %52 = vector.broadcast %50 : vector<1x32xf32> to vector<512x32xf32>
    %53 = arith.mulf %51, %52 : vector<512x32xf32>
    %54 = arith.addf %46, %53 : vector<512x32xf32>
    %c7 = arith.constant 7 : index
    %c0_35 = arith.constant 0 : index
    %c0_36 = arith.constant 0 : index
    %55 = vector.load %arg0[%c7, %c0_35, %c0_36] : memref<9x512x1xf32, #tpu.memory_space<vmem>>, vector<1x512x1xf32>
    %56 = vector.shape_cast %55 : vector<1x512x1xf32> to vector<512x1xf32>
    %c7_37 = arith.constant 7 : index
    %c0_38 = arith.constant 0 : index
    %c0_39 = arith.constant 0 : index
    %57 = vector.load %arg1[%c7_37, %c0_38, %c0_39] : memref<9x1x32xf32, #tpu.memory_space<vmem>>, vector<1x1x32xf32>
    %58 = vector.shape_cast %57 : vector<1x1x32xf32> to vector<1x32xf32>
    %59 = vector.broadcast %56 : vector<512x1xf32> to vector<512x32xf32>
    %60 = vector.broadcast %58 : vector<1x32xf32> to vector<512x32xf32>
    %61 = arith.mulf %59, %60 : vector<512x32xf32>
    %62 = arith.addf %54, %61 : vector<512x32xf32>
    %c8 = arith.constant 8 : index
    %c0_40 = arith.constant 0 : index
    %c0_41 = arith.constant 0 : index
    %63 = vector.load %arg0[%c8, %c0_40, %c0_41] : memref<9x512x1xf32, #tpu.memory_space<vmem>>, vector<1x512x1xf32>
    %64 = vector.shape_cast %63 : vector<1x512x1xf32> to vector<512x1xf32>
    %c8_42 = arith.constant 8 : index
    %c0_43 = arith.constant 0 : index
    %c0_44 = arith.constant 0 : index
    %65 = vector.load %arg1[%c8_42, %c0_43, %c0_44] : memref<9x1x32xf32, #tpu.memory_space<vmem>>, vector<1x1x32xf32>
    %66 = vector.shape_cast %65 : vector<1x1x32xf32> to vector<1x32xf32>
    %67 = vector.broadcast %64 : vector<512x1xf32> to vector<512x32xf32>
    %68 = vector.broadcast %66 : vector<1x32xf32> to vector<512x32xf32>
    %69 = arith.mulf %67, %68 : vector<512x32xf32>
    %70 = arith.addf %62, %69 : vector<512x32xf32>
    %c0_45 = arith.constant 0 : index
    %c0_46 = arith.constant 0 : index
    %71 = vector.load %arg2[%c0_45, %c0_46] : memref<1x32xf32, #tpu.memory_space<vmem>>, vector<1x32xf32>
    %72 = vector.broadcast %71 : vector<1x32xf32> to vector<512x32xf32>
    %73 = arith.mulf %70, %72 : vector<512x32xf32>
    %c0_47 = arith.constant 0 : index
    %c0_48 = arith.constant 0 : index
    %74 = vector.load %arg3[%c0_47, %c0_48] : memref<1x32xf32, #tpu.memory_space<vmem>>, vector<1x32xf32>
    %75 = vector.broadcast %74 : vector<1x32xf32> to vector<512x32xf32>
    %76 = arith.addf %73, %75 : vector<512x32xf32>
    %cst = arith.constant 0.000000e+00 : f32
    %77 = vector.broadcast %cst : f32 to vector<512x32xf32>
    %78 = arith.maximumf %76, %77 : vector<512x32xf32>
    %79 = vector.extract_strided_slice %78 {offsets = [0, 0], sizes = [128, 32], strides = [1, 1]} : vector<512x32xf32> to vector<128x32xf32>
    %80 = vector.extract_strided_slice %78 {offsets = [128, 0], sizes = [128, 32], strides = [1, 1]} : vector<512x32xf32> to vector<128x32xf32>
    %81 = arith.maximumf %79, %80 : vector<128x32xf32>
    %82 = vector.extract_strided_slice %78 {offsets = [256, 0], sizes = [128, 32], strides = [1, 1]} : vector<512x32xf32> to vector<128x32xf32>
    %83 = vector.extract_strided_slice %78 {offsets = [384, 0], sizes = [128, 32], strides = [1, 1]} : vector<512x32xf32> to vector<128x32xf32>
    %84 = arith.maximumf %82, %83 : vector<128x32xf32>
    %85 = arith.maximumf %81, %84 : vector<128x32xf32>
    %86 = arith.truncf %85 : vector<128x32xf32> to vector<128x32xbf16>
    %c0_49 = arith.constant 0 : index
    %c0_50 = arith.constant 0 : index
    %87 = vector.load %arg5[%c0_49, %c0_50] : memref<32x576xbf16, #tpu.memory_space<vmem>>, vector<32x576xbf16>
    %cst_51 = arith.constant dense<0.000000e+00> : vector<128x576xf32>
    %88 = tpu.matmul %86, %87, %cst_51 {dimension_numbers = #tpu.dot_dimension_numbers<[1], [0], [0], [1], [0, 0, 1, 1], [], []>} : vector<128x32xbf16>, vector<32x576xbf16>, vector<128x576xf32> -> vector<128x576xf32>
    %89 = arith.truncf %88 : vector<128x576xf32> to vector<128x576xbf16>
    %c0_52 = arith.constant 0 : index
    %c0_53 = arith.constant 0 : index
    %c0_54 = arith.constant 0 : index
    %90 = vector.load %arg4[%c0_52, %c0_53, %c0_54] : memref<9x128x128xbf16, #tpu.memory_space<vmem>>, vector<1x128x128xbf16>
    %91 = vector.shape_cast %90 : vector<1x128x128xbf16> to vector<128x128xbf16>
    %92 = vector.extract_strided_slice %89 {offsets = [0, 0], sizes = [128, 64], strides = [1, 1]} : vector<128x576xbf16> to vector<128x64xbf16>
    %cst_55 = arith.constant dense<0.000000e+00> : vector<128x64xf32>
    %93 = tpu.matmul %91, %92, %cst_55 {dimension_numbers = #tpu.dot_dimension_numbers<[1], [0], [0], [1], [0, 0, 1, 1], [], []>} : vector<128x128xbf16>, vector<128x64xbf16>, vector<128x64xf32> -> vector<128x64xf32>
    %c1_56 = arith.constant 1 : index
    %c0_57 = arith.constant 0 : index
    %c0_58 = arith.constant 0 : index
    %94 = vector.load %arg4[%c1_56, %c0_57, %c0_58] : memref<9x128x128xbf16, #tpu.memory_space<vmem>>, vector<1x128x128xbf16>
    %95 = vector.shape_cast %94 : vector<1x128x128xbf16> to vector<128x128xbf16>
    %96 = vector.extract_strided_slice %89 {offsets = [0, 64], sizes = [128, 64], strides = [1, 1]} : vector<128x576xbf16> to vector<128x64xbf16>
    %cst_59 = arith.constant dense<0.000000e+00> : vector<128x64xf32>
    %97 = tpu.matmul %95, %96, %cst_59 {dimension_numbers = #tpu.dot_dimension_numbers<[1], [0], [0], [1], [0, 0, 1, 1], [], []>} : vector<128x128xbf16>, vector<128x64xbf16>, vector<128x64xf32> -> vector<128x64xf32>
    %98 = arith.addf %93, %97 : vector<128x64xf32>
    %c2_60 = arith.constant 2 : index
    %c0_61 = arith.constant 0 : index
    %c0_62 = arith.constant 0 : index
    %99 = vector.load %arg4[%c2_60, %c0_61, %c0_62] : memref<9x128x128xbf16, #tpu.memory_space<vmem>>, vector<1x128x128xbf16>
    %100 = vector.shape_cast %99 : vector<1x128x128xbf16> to vector<128x128xbf16>
    %101 = vector.extract_strided_slice %89 {offsets = [0, 128], sizes = [128, 64], strides = [1, 1]} : vector<128x576xbf16> to vector<128x64xbf16>
    %cst_63 = arith.constant dense<0.000000e+00> : vector<128x64xf32>
    %102 = tpu.matmul %100, %101, %cst_63 {dimension_numbers = #tpu.dot_dimension_numbers<[1], [0], [0], [1], [0, 0, 1, 1], [], []>} : vector<128x128xbf16>, vector<128x64xbf16>, vector<128x64xf32> -> vector<128x64xf32>
    %103 = arith.addf %98, %102 : vector<128x64xf32>
    %c3_64 = arith.constant 3 : index
    %c0_65 = arith.constant 0 : index
    %c0_66 = arith.constant 0 : index
    %104 = vector.load %arg4[%c3_64, %c0_65, %c0_66] : memref<9x128x128xbf16, #tpu.memory_space<vmem>>, vector<1x128x128xbf16>
    %105 = vector.shape_cast %104 : vector<1x128x128xbf16> to vector<128x128xbf16>
    %106 = vector.extract_strided_slice %89 {offsets = [0, 192], sizes = [128, 64], strides = [1, 1]} : vector<128x576xbf16> to vector<128x64xbf16>
    %cst_67 = arith.constant dense<0.000000e+00> : vector<128x64xf32>
    %107 = tpu.matmul %105, %106, %cst_67 {dimension_numbers = #tpu.dot_dimension_numbers<[1], [0], [0], [1], [0, 0, 1, 1], [], []>} : vector<128x128xbf16>, vector<128x64xbf16>, vector<128x64xf32> -> vector<128x64xf32>
    %108 = arith.addf %103, %107 : vector<128x64xf32>
    %c4_68 = arith.constant 4 : index
    %c0_69 = arith.constant 0 : index
    %c0_70 = arith.constant 0 : index
    %109 = vector.load %arg4[%c4_68, %c0_69, %c0_70] : memref<9x128x128xbf16, #tpu.memory_space<vmem>>, vector<1x128x128xbf16>
    %110 = vector.shape_cast %109 : vector<1x128x128xbf16> to vector<128x128xbf16>
    %111 = vector.extract_strided_slice %89 {offsets = [0, 256], sizes = [128, 64], strides = [1, 1]} : vector<128x576xbf16> to vector<128x64xbf16>
    %cst_71 = arith.constant dense<0.000000e+00> : vector<128x64xf32>
    %112 = tpu.matmul %110, %111, %cst_71 {dimension_numbers = #tpu.dot_dimension_numbers<[1], [0], [0], [1], [0, 0, 1, 1], [], []>} : vector<128x128xbf16>, vector<128x64xbf16>, vector<128x64xf32> -> vector<128x64xf32>
    %113 = arith.addf %108, %112 : vector<128x64xf32>
    %c5_72 = arith.constant 5 : index
    %c0_73 = arith.constant 0 : index
    %c0_74 = arith.constant 0 : index
    %114 = vector.load %arg4[%c5_72, %c0_73, %c0_74] : memref<9x128x128xbf16, #tpu.memory_space<vmem>>, vector<1x128x128xbf16>
    %115 = vector.shape_cast %114 : vector<1x128x128xbf16> to vector<128x128xbf16>
    %116 = vector.extract_strided_slice %89 {offsets = [0, 320], sizes = [128, 64], strides = [1, 1]} : vector<128x576xbf16> to vector<128x64xbf16>
    %cst_75 = arith.constant dense<0.000000e+00> : vector<128x64xf32>
    %117 = tpu.matmul %115, %116, %cst_75 {dimension_numbers = #tpu.dot_dimension_numbers<[1], [0], [0], [1], [0, 0, 1, 1], [], []>} : vector<128x128xbf16>, vector<128x64xbf16>, vector<128x64xf32> -> vector<128x64xf32>
    %118 = arith.addf %113, %117 : vector<128x64xf32>
    %c6_76 = arith.constant 6 : index
    %c0_77 = arith.constant 0 : index
    %c0_78 = arith.constant 0 : index
    %119 = vector.load %arg4[%c6_76, %c0_77, %c0_78] : memref<9x128x128xbf16, #tpu.memory_space<vmem>>, vector<1x128x128xbf16>
    %120 = vector.shape_cast %119 : vector<1x128x128xbf16> to vector<128x128xbf16>
    %121 = vector.extract_strided_slice %89 {offsets = [0, 384], sizes = [128, 64], strides = [1, 1]} : vector<128x576xbf16> to vector<128x64xbf16>
    %cst_79 = arith.constant dense<0.000000e+00> : vector<128x64xf32>
    %122 = tpu.matmul %120, %121, %cst_79 {dimension_numbers = #tpu.dot_dimension_numbers<[1], [0], [0], [1], [0, 0, 1, 1], [], []>} : vector<128x128xbf16>, vector<128x64xbf16>, vector<128x64xf32> -> vector<128x64xf32>
    %123 = arith.addf %118, %122 : vector<128x64xf32>
    %c7_80 = arith.constant 7 : index
    %c0_81 = arith.constant 0 : index
    %c0_82 = arith.constant 0 : index
    %124 = vector.load %arg4[%c7_80, %c0_81, %c0_82] : memref<9x128x128xbf16, #tpu.memory_space<vmem>>, vector<1x128x128xbf16>
    %125 = vector.shape_cast %124 : vector<1x128x128xbf16> to vector<128x128xbf16>
    %126 = vector.extract_strided_slice %89 {offsets = [0, 448], sizes = [128, 64], strides = [1, 1]} : vector<128x576xbf16> to vector<128x64xbf16>
    %cst_83 = arith.constant dense<0.000000e+00> : vector<128x64xf32>
    %127 = tpu.matmul %125, %126, %cst_83 {dimension_numbers = #tpu.dot_dimension_numbers<[1], [0], [0], [1], [0, 0, 1, 1], [], []>} : vector<128x128xbf16>, vector<128x64xbf16>, vector<128x64xf32> -> vector<128x64xf32>
    %128 = arith.addf %123, %127 : vector<128x64xf32>
    %c8_84 = arith.constant 8 : index
    %c0_85 = arith.constant 0 : index
    %c0_86 = arith.constant 0 : index
    %129 = vector.load %arg4[%c8_84, %c0_85, %c0_86] : memref<9x128x128xbf16, #tpu.memory_space<vmem>>, vector<1x128x128xbf16>
    %130 = vector.shape_cast %129 : vector<1x128x128xbf16> to vector<128x128xbf16>
    %131 = vector.extract_strided_slice %89 {offsets = [0, 512], sizes = [128, 64], strides = [1, 1]} : vector<128x576xbf16> to vector<128x64xbf16>
    %cst_87 = arith.constant dense<0.000000e+00> : vector<128x64xf32>
    %132 = tpu.matmul %130, %131, %cst_87 {dimension_numbers = #tpu.dot_dimension_numbers<[1], [0], [0], [1], [0, 0, 1, 1], [], []>} : vector<128x128xbf16>, vector<128x64xbf16>, vector<128x64xf32> -> vector<128x64xf32>
    %133 = arith.addf %128, %132 : vector<128x64xf32>
    %c0_88 = arith.constant 0 : index
    %c0_89 = arith.constant 0 : index
    %134 = vector.load %arg6[%c0_88, %c0_89] : memref<1x64xf32, #tpu.memory_space<vmem>>, vector<1x64xf32>
    %135 = vector.broadcast %134 : vector<1x64xf32> to vector<128x64xf32>
    %136 = arith.mulf %133, %135 : vector<128x64xf32>
    %c0_90 = arith.constant 0 : index
    %c0_91 = arith.constant 0 : index
    %137 = vector.load %arg7[%c0_90, %c0_91] : memref<1x64xf32, #tpu.memory_space<vmem>>, vector<1x64xf32>
    %138 = vector.broadcast %137 : vector<1x64xf32> to vector<128x64xf32>
    %139 = arith.addf %136, %138 : vector<128x64xf32>
    %cst_92 = arith.constant 0.000000e+00 : f32
    %140 = vector.broadcast %cst_92 : f32 to vector<128x64xf32>
    %141 = arith.maximumf %139, %140 : vector<128x64xf32>
    %142 = vector.extract_strided_slice %141 {offsets = [0, 0], sizes = [32, 64], strides = [1, 1]} : vector<128x64xf32> to vector<32x64xf32>
    %143 = vector.extract_strided_slice %141 {offsets = [32, 0], sizes = [32, 64], strides = [1, 1]} : vector<128x64xf32> to vector<32x64xf32>
    %144 = arith.maximumf %142, %143 : vector<32x64xf32>
    %145 = vector.extract_strided_slice %141 {offsets = [64, 0], sizes = [32, 64], strides = [1, 1]} : vector<128x64xf32> to vector<32x64xf32>
    %146 = vector.extract_strided_slice %141 {offsets = [96, 0], sizes = [32, 64], strides = [1, 1]} : vector<128x64xf32> to vector<32x64xf32>
    %147 = arith.maximumf %145, %146 : vector<32x64xf32>
    %148 = arith.maximumf %144, %147 : vector<32x64xf32>
    %149 = arith.truncf %148 : vector<32x64xf32> to vector<32x64xbf16>
    %c0_93 = arith.constant 0 : index
    %c0_94 = arith.constant 0 : index
    %150 = vector.load %arg9[%c0_93, %c0_94] : memref<64x1152xbf16, #tpu.memory_space<vmem>>, vector<64x1152xbf16>
    %cst_95 = arith.constant dense<0.000000e+00> : vector<32x1152xf32>
    %151 = tpu.matmul %149, %150, %cst_95 {dimension_numbers = #tpu.dot_dimension_numbers<[1], [0], [0], [1], [0, 0, 1, 1], [], []>} : vector<32x64xbf16>, vector<64x1152xbf16>, vector<32x1152xf32> -> vector<32x1152xf32>
    %152 = arith.truncf %151 : vector<32x1152xf32> to vector<32x1152xbf16>
    %c0_96 = arith.constant 0 : index
    %c0_97 = arith.constant 0 : index
    %c0_98 = arith.constant 0 : index
    %153 = vector.load %arg8[%c0_96, %c0_97, %c0_98] : memref<9x32x32xbf16, #tpu.memory_space<vmem>>, vector<1x32x32xbf16>
    %154 = vector.shape_cast %153 : vector<1x32x32xbf16> to vector<32x32xbf16>
    %155 = vector.extract_strided_slice %152 {offsets = [0, 0], sizes = [32, 128], strides = [1, 1]} : vector<32x1152xbf16> to vector<32x128xbf16>
    %cst_99 = arith.constant dense<0.000000e+00> : vector<32x128xf32>
    %156 = tpu.matmul %154, %155, %cst_99 {dimension_numbers = #tpu.dot_dimension_numbers<[1], [0], [0], [1], [0, 0, 1, 1], [], []>} : vector<32x32xbf16>, vector<32x128xbf16>, vector<32x128xf32> -> vector<32x128xf32>
    %c1_100 = arith.constant 1 : index
    %c0_101 = arith.constant 0 : index
    %c0_102 = arith.constant 0 : index
    %157 = vector.load %arg8[%c1_100, %c0_101, %c0_102] : memref<9x32x32xbf16, #tpu.memory_space<vmem>>, vector<1x32x32xbf16>
    %158 = vector.shape_cast %157 : vector<1x32x32xbf16> to vector<32x32xbf16>
    %159 = vector.extract_strided_slice %152 {offsets = [0, 128], sizes = [32, 128], strides = [1, 1]} : vector<32x1152xbf16> to vector<32x128xbf16>
    %cst_103 = arith.constant dense<0.000000e+00> : vector<32x128xf32>
    %160 = tpu.matmul %158, %159, %cst_103 {dimension_numbers = #tpu.dot_dimension_numbers<[1], [0], [0], [1], [0, 0, 1, 1], [], []>} : vector<32x32xbf16>, vector<32x128xbf16>, vector<32x128xf32> -> vector<32x128xf32>
    %161 = arith.addf %156, %160 : vector<32x128xf32>
    %c2_104 = arith.constant 2 : index
    %c0_105 = arith.constant 0 : index
    %c0_106 = arith.constant 0 : index
    %162 = vector.load %arg8[%c2_104, %c0_105, %c0_106] : memref<9x32x32xbf16, #tpu.memory_space<vmem>>, vector<1x32x32xbf16>
    %163 = vector.shape_cast %162 : vector<1x32x32xbf16> to vector<32x32xbf16>
    %164 = vector.extract_strided_slice %152 {offsets = [0, 256], sizes = [32, 128], strides = [1, 1]} : vector<32x1152xbf16> to vector<32x128xbf16>
    %cst_107 = arith.constant dense<0.000000e+00> : vector<32x128xf32>
    %165 = tpu.matmul %163, %164, %cst_107 {dimension_numbers = #tpu.dot_dimension_numbers<[1], [0], [0], [1], [0, 0, 1, 1], [], []>} : vector<32x32xbf16>, vector<32x128xbf16>, vector<32x128xf32> -> vector<32x128xf32>
    %166 = arith.addf %161, %165 : vector<32x128xf32>
    %c3_108 = arith.constant 3 : index
    %c0_109 = arith.constant 0 : index
    %c0_110 = arith.constant 0 : index
    %167 = vector.load %arg8[%c3_108, %c0_109, %c0_110] : memref<9x32x32xbf16, #tpu.memory_space<vmem>>, vector<1x32x32xbf16>
    %168 = vector.shape_cast %167 : vector<1x32x32xbf16> to vector<32x32xbf16>
    %169 = vector.extract_strided_slice %152 {offsets = [0, 384], sizes = [32, 128], strides = [1, 1]} : vector<32x1152xbf16> to vector<32x128xbf16>
    %cst_111 = arith.constant dense<0.000000e+00> : vector<32x128xf32>
    %170 = tpu.matmul %168, %169, %cst_111 {dimension_numbers = #tpu.dot_dimension_numbers<[1], [0], [0], [1], [0, 0, 1, 1], [], []>} : vector<32x32xbf16>, vector<32x128xbf16>, vector<32x128xf32> -> vector<32x128xf32>
    %171 = arith.addf %166, %170 : vector<32x128xf32>
    %c4_112 = arith.constant 4 : index
    %c0_113 = arith.constant 0 : index
    %c0_114 = arith.constant 0 : index
    %172 = vector.load %arg8[%c4_112, %c0_113, %c0_114] : memref<9x32x32xbf16, #tpu.memory_space<vmem>>, vector<1x32x32xbf16>
    %173 = vector.shape_cast %172 : vector<1x32x32xbf16> to vector<32x32xbf16>
    %174 = vector.extract_strided_slice %152 {offsets = [0, 512], sizes = [32, 128], strides = [1, 1]} : vector<32x1152xbf16> to vector<32x128xbf16>
    %cst_115 = arith.constant dense<0.000000e+00> : vector<32x128xf32>
    %175 = tpu.matmul %173, %174, %cst_115 {dimension_numbers = #tpu.dot_dimension_numbers<[1], [0], [0], [1], [0, 0, 1, 1], [], []>} : vector<32x32xbf16>, vector<32x128xbf16>, vector<32x128xf32> -> vector<32x128xf32>
    %176 = arith.addf %171, %175 : vector<32x128xf32>
    %c5_116 = arith.constant 5 : index
    %c0_117 = arith.constant 0 : index
    %c0_118 = arith.constant 0 : index
    %177 = vector.load %arg8[%c5_116, %c0_117, %c0_118] : memref<9x32x32xbf16, #tpu.memory_space<vmem>>, vector<1x32x32xbf16>
    %178 = vector.shape_cast %177 : vector<1x32x32xbf16> to vector<32x32xbf16>
    %179 = vector.extract_strided_slice %152 {offsets = [0, 640], sizes = [32, 128], strides = [1, 1]} : vector<32x1152xbf16> to vector<32x128xbf16>
    %cst_119 = arith.constant dense<0.000000e+00> : vector<32x128xf32>
    %180 = tpu.matmul %178, %179, %cst_119 {dimension_numbers = #tpu.dot_dimension_numbers<[1], [0], [0], [1], [0, 0, 1, 1], [], []>} : vector<32x32xbf16>, vector<32x128xbf16>, vector<32x128xf32> -> vector<32x128xf32>
    %181 = arith.addf %176, %180 : vector<32x128xf32>
    %c6_120 = arith.constant 6 : index
    %c0_121 = arith.constant 0 : index
    %c0_122 = arith.constant 0 : index
    %182 = vector.load %arg8[%c6_120, %c0_121, %c0_122] : memref<9x32x32xbf16, #tpu.memory_space<vmem>>, vector<1x32x32xbf16>
    %183 = vector.shape_cast %182 : vector<1x32x32xbf16> to vector<32x32xbf16>
    %184 = vector.extract_strided_slice %152 {offsets = [0, 768], sizes = [32, 128], strides = [1, 1]} : vector<32x1152xbf16> to vector<32x128xbf16>
    %cst_123 = arith.constant dense<0.000000e+00> : vector<32x128xf32>
    %185 = tpu.matmul %183, %184, %cst_123 {dimension_numbers = #tpu.dot_dimension_numbers<[1], [0], [0], [1], [0, 0, 1, 1], [], []>} : vector<32x32xbf16>, vector<32x128xbf16>, vector<32x128xf32> -> vector<32x128xf32>
    %186 = arith.addf %181, %185 : vector<32x128xf32>
    %c7_124 = arith.constant 7 : index
    %c0_125 = arith.constant 0 : index
    %c0_126 = arith.constant 0 : index
    %187 = vector.load %arg8[%c7_124, %c0_125, %c0_126] : memref<9x32x32xbf16, #tpu.memory_space<vmem>>, vector<1x32x32xbf16>
    %188 = vector.shape_cast %187 : vector<1x32x32xbf16> to vector<32x32xbf16>
    %189 = vector.extract_strided_slice %152 {offsets = [0, 896], sizes = [32, 128], strides = [1, 1]} : vector<32x1152xbf16> to vector<32x128xbf16>
    %cst_127 = arith.constant dense<0.000000e+00> : vector<32x128xf32>
    %190 = tpu.matmul %188, %189, %cst_127 {dimension_numbers = #tpu.dot_dimension_numbers<[1], [0], [0], [1], [0, 0, 1, 1], [], []>} : vector<32x32xbf16>, vector<32x128xbf16>, vector<32x128xf32> -> vector<32x128xf32>
    %191 = arith.addf %186, %190 : vector<32x128xf32>
    %c8_128 = arith.constant 8 : index
    %c0_129 = arith.constant 0 : index
    %c0_130 = arith.constant 0 : index
    %192 = vector.load %arg8[%c8_128, %c0_129, %c0_130] : memref<9x32x32xbf16, #tpu.memory_space<vmem>>, vector<1x32x32xbf16>
    %193 = vector.shape_cast %192 : vector<1x32x32xbf16> to vector<32x32xbf16>
    %194 = vector.extract_strided_slice %152 {offsets = [0, 1024], sizes = [32, 128], strides = [1, 1]} : vector<32x1152xbf16> to vector<32x128xbf16>
    %cst_131 = arith.constant dense<0.000000e+00> : vector<32x128xf32>
    %195 = tpu.matmul %193, %194, %cst_131 {dimension_numbers = #tpu.dot_dimension_numbers<[1], [0], [0], [1], [0, 0, 1, 1], [], []>} : vector<32x32xbf16>, vector<32x128xbf16>, vector<32x128xf32> -> vector<32x128xf32>
    %196 = arith.addf %191, %195 : vector<32x128xf32>
    %c0_132 = arith.constant 0 : index
    %c0_133 = arith.constant 0 : index
    %197 = vector.load %arg10[%c0_132, %c0_133] : memref<1x128xf32, #tpu.memory_space<vmem>>, vector<1x128xf32>
    %198 = vector.broadcast %197 : vector<1x128xf32> to vector<32x128xf32>
    %199 = arith.mulf %196, %198 : vector<32x128xf32>
    %c0_134 = arith.constant 0 : index
    %c0_135 = arith.constant 0 : index
    %200 = vector.load %arg11[%c0_134, %c0_135] : memref<1x128xf32, #tpu.memory_space<vmem>>, vector<1x128xf32>
    %201 = vector.broadcast %200 : vector<1x128xf32> to vector<32x128xf32>
    %202 = arith.addf %199, %201 : vector<32x128xf32>
    %cst_136 = arith.constant 0.000000e+00 : f32
    %203 = vector.broadcast %cst_136 : f32 to vector<32x128xf32>
    %204 = arith.maximumf %202, %203 : vector<32x128xf32>
    %205 = vector.extract_strided_slice %204 {offsets = [0, 0], sizes = [8, 128], strides = [1, 1]} : vector<32x128xf32> to vector<8x128xf32>
    %206 = vector.extract_strided_slice %204 {offsets = [8, 0], sizes = [8, 128], strides = [1, 1]} : vector<32x128xf32> to vector<8x128xf32>
    %207 = arith.maximumf %205, %206 : vector<8x128xf32>
    %208 = vector.extract_strided_slice %204 {offsets = [16, 0], sizes = [8, 128], strides = [1, 1]} : vector<32x128xf32> to vector<8x128xf32>
    %209 = vector.extract_strided_slice %204 {offsets = [24, 0], sizes = [8, 128], strides = [1, 1]} : vector<32x128xf32> to vector<8x128xf32>
    %210 = arith.maximumf %208, %209 : vector<8x128xf32>
    %211 = arith.maximumf %207, %210 : vector<8x128xf32>
    %c0_137 = arith.constant 0 : index
    %c0_138 = arith.constant 0 : index
    %212 = vector.load %arg12[%c0_137, %c0_138] : memref<2x8xf32, #tpu.memory_space<vmem>>, vector<2x8xf32>
    %cst_139 = arith.constant dense<0.000000e+00> : vector<2x128xf32>
    %213 = tpu.matmul %212, %211, %cst_139 {dimension_numbers = #tpu.dot_dimension_numbers<[1], [0], [0], [1], [0, 0, 1, 1], [], []>} : vector<2x8xf32>, vector<8x128xf32>, vector<2x128xf32> -> vector<2x128xf32>
    %c0_140 = arith.constant 0 : index
    %c0_141 = arith.constant 0 : index
    %214 = vector.load %arg13[%c0_140, %c0_141] : memref<128x64xf32, #tpu.memory_space<vmem>>, vector<128x64xf32>
    %cst_142 = arith.constant dense<0.000000e+00> : vector<2x64xf32>
    %215 = tpu.matmul %213, %214, %cst_142 {dimension_numbers = #tpu.dot_dimension_numbers<[1], [0], [0], [1], [0, 0, 1, 1], [], []>} : vector<2x128xf32>, vector<128x64xf32>, vector<2x64xf32> -> vector<2x64xf32>
    %c0_143 = arith.constant 0 : index
    %c0_144 = arith.constant 0 : index
    %216 = vector.load %arg14[%c0_143, %c0_144] : memref<1x64xf32, #tpu.memory_space<vmem>>, vector<1x64xf32>
    %217 = vector.broadcast %216 : vector<1x64xf32> to vector<2x64xf32>
    %218 = arith.mulf %215, %217 : vector<2x64xf32>
    %c0_145 = arith.constant 0 : index
    %c0_146 = arith.constant 0 : index
    %219 = vector.load %arg15[%c0_145, %c0_146] : memref<1x64xf32, #tpu.memory_space<vmem>>, vector<1x64xf32>
    %220 = vector.broadcast %219 : vector<1x64xf32> to vector<2x64xf32>
    %221 = arith.addf %218, %220 : vector<2x64xf32>
    %cst_147 = arith.constant 0.000000e+00 : f32
    %222 = vector.broadcast %cst_147 : f32 to vector<2x64xf32>
    %223 = arith.maximumf %221, %222 : vector<2x64xf32>
    %c0_148 = arith.constant 0 : index
    %c0_149 = arith.constant 0 : index
    %224 = vector.load %arg16[%c0_148, %c0_149] : memref<64x1xf32, #tpu.memory_space<vmem>>, vector<64x1xf32>
    %cst_150 = arith.constant dense<0.000000e+00> : vector<2x1xf32>
    %225 = tpu.matmul %223, %224, %cst_150 {dimension_numbers = #tpu.dot_dimension_numbers<[1], [0], [0], [1], [0, 0, 1, 1], [], []>} : vector<2x64xf32>, vector<64x1xf32>, vector<2x1xf32> -> vector<2x1xf32>
    %c0_151 = arith.constant 0 : index
    %c0_152 = arith.constant 0 : index
    %226 = vector.load %arg17[%c0_151, %c0_152] : memref<1x1xf32, #tpu.memory_space<vmem>>, vector<1x1xf32>
    %227 = vector.broadcast %226 : vector<1x1xf32> to vector<2x1xf32>
    %228 = arith.addf %225, %227 : vector<2x1xf32>
    %cst_153 = arith.constant 0.000000e+00 : f32
    %229 = vector.broadcast %cst_153 : f32 to vector<2x1xf32>
    %230 = arith.subf %229, %228 : vector<2x1xf32>
    %231 = math.exp %230 : vector<2x1xf32>
    %cst_154 = arith.constant 1.000000e+00 : f32
    %232 = vector.broadcast %cst_154 : f32 to vector<2x1xf32>
    %233 = arith.addf %232, %231 : vector<2x1xf32>
    %cst_155 = arith.constant 1.000000e+00 : f32
    %234 = vector.broadcast %cst_155 : f32 to vector<2x1xf32>
    %235 = arith.divf %234, %233 : vector<2x1xf32>
    %c0_156 = arith.constant 0 : index
    %c0_157 = arith.constant 0 : index
    %236 = vector.load %arg18[%c0_156, %c0_157] : memref<2x1xf32, #tpu.memory_space<vmem>>, vector<2x1xf32>
    tpu.vector_store %arg18[%c0_156, %c0_157], %235 {strides = array<i32>} : memref<2x1xf32, #tpu.memory_space<vmem>>, vector<2x1xf32>,
    return
  }
}

</mosaic_0001>

<llo_original>
// kernel: improved_cnn_forward.1
$region0: #{improved_cnn_forward.1}
  #allocation0 [shape = 'u32[]', space=smem, size = 0x4, offset = 0x4, fixed_abs, tag = 'smem constant byte address 0x4 - core index']
  #allocation1 [shape = 'u32[144,128]{1,0:T(1,128)}', space=vmem, size = 0x12000, scoped, tag = 'internal scratch']
  #allocation2 [shape = 'f32[1,1]{1,0:T(1,128)S(1)}', space=vmem, size = 0x200, scoped, tag = 'scoped memory for improved_cnn_forward.1']
  %s0 = inlined_call_operand.vmem [shape: f32[9,512,1], index: 0, kind: input, shape index: {}]
  %s1 = inlined_call_operand.vmem [shape: f32[9,1,32], index: 1, kind: input, shape index: {}]
  %s2 = inlined_call_operand.vmem [shape: f32[1,32], index: 2, kind: input, shape index: {}]
  %s3 = inlined_call_operand.vmem [shape: f32[1,32], index: 3, kind: input, shape index: {}]
  %s4 = inlined_call_operand.vmem [shape: bf16[9,128,128], index: 4, kind: input, shape index: {}]
  %s5 = inlined_call_operand.vmem [shape: bf16[32,576], index: 5, kind: input, shape index: {}]
  %s6 = inlined_call_operand.vmem [shape: f32[1,64], index: 6, kind: input, shape index: {}]
  %s7 = inlined_call_operand.vmem [shape: f32[1,64], index: 7, kind: input, shape index: {}]
  %s8 = inlined_call_operand.vmem [shape: bf16[9,32,32], index: 8, kind: input, shape index: {}]
  %s9 = inlined_call_operand.vmem [shape: bf16[64,1152], index: 9, kind: input, shape index: {}]
  %s10 = inlined_call_operand.vmem [shape: f32[1,128], index: 10, kind: input, shape index: {}]
  %s11 = inlined_call_operand.vmem [shape: f32[1,128], index: 11, kind: input, shape index: {}]
  %s12 = inlined_call_operand.vmem [shape: f32[2,8], index: 12, kind: input, shape index: {}]
  %s13 = inlined_call_operand.vmem [shape: f32[128,64], index: 13, kind: input, shape index: {}]
  %s14 = inlined_call_operand.vmem [shape: f32[1,64], index: 14, kind: input, shape index: {}]
  %s15 = inlined_call_operand.vmem [shape: f32[1,64], index: 15, kind: input, shape index: {}]
  %s16 = inlined_call_operand.vmem [shape: f32[64,1], index: 16, kind: input, shape index: {}]
  %s17 = inlined_call_operand.<no memory space> [shape: f32[1,1], index: 17, kind: input, shape index: {}]
  %s18 = inlined_call_operand.vmem [shape: f32[2,1], index: 18, kind: output, shape index: {}]
  %s19 = sld [smem:[#allocation0]]
  $region82: #{improved_cnn_forward.1} parent=0
    _
  %s21 = ssub.s32 1, %s19
  %s22 = scalar_select 0, %s21, %s19
  %v23 = vstv %s17
  %24 = vst [vmem:[#allocation2] sm:$0x1] %v23
  // Predicated region
  $region2: #{improved_cnn_forward.1} parent=0 // pred_check
    _
  $region3: #{improved_cnn_forward.1} parent=0 // pred_check_branch
    %26 = sbr.rel (0) target = $region5
  $region4: #{improved_cnn_forward.1} parent=0 // pred_region
    _
  $region5: #{improved_cnn_forward.1} parent=0 // pred_fallthru
    _
  // Predicated region
  $region6: #{improved_cnn_forward.1} parent=0 // pred_check
    _
  $region7: #{improved_cnn_forward.1} parent=0 // pred_check_branch
    %28 = sbr.rel (0) target = $region9
  $region8: #{improved_cnn_forward.1} parent=0 // pred_region
    _
  $region9: #{improved_cnn_forward.1} parent=0 // pred_fallthru
    _
  // Predicated region
  $region10: #{improved_cnn_forward.1} parent=0 // pred_check
    _
  $region11: #{improved_cnn_forward.1} parent=0 // pred_check_branch
    %30 = sbr.rel (0) target = $region13
  $region12: #{improved_cnn_forward.1} parent=0 // pred_region
    _
  $region13: #{improved_cnn_forward.1} parent=0 // pred_fallthru
    _
  // Predicated region
  $region14: #{improved_cnn_forward.1} parent=0 // pred_check
    _
  $region15: #{improved_cnn_forward.1} parent=0 // pred_check_branch
    %32 = sbr.rel (0) target = $region17
  $region16: #{improved_cnn_forward.1} parent=0 // pred_region
    _
  $region17: #{improved_cnn_forward.1} parent=0 // pred_fallthru
    _
  // Predicated region
  $region18: #{improved_cnn_forward.1} parent=0 // pred_check
    _
  $region19: #{improved_cnn_forward.1} parent=0 // pred_check_branch
    %34 = sbr.rel (0) target = $region21
  $region20: #{improved_cnn_forward.1} parent=0 // pred_region
    _
  $region21: #{improved_cnn_forward.1} parent=0 // pred_fallthru
    _
  // Predicated region
  $region22: #{improved_cnn_forward.1} parent=0 // pred_check
    _
  $region23: #{improved_cnn_forward.1} parent=0 // pred_check_branch
    %36 = sbr.rel (0) target = $region25
  $region24: #{improved_cnn_forward.1} parent=0 // pred_region
    _
  $region25: #{improved_cnn_forward.1} parent=0 // pred_fallthru
    _
  // Predicated region
  $region26: #{improved_cnn_forward.1} parent=0 // pred_check
    _
  $region27: #{improved_cnn_forward.1} parent=0 // pred_check_branch
    %38 = sbr.rel (0) target = $region29
  $region28: #{improved_cnn_forward.1} parent=0 // pred_region
    _
  $region29: #{improved_cnn_forward.1} parent=0 // pred_fallthru
    _
  // Predicated region
  $region30: #{improved_cnn_forward.1} parent=0 // pred_check
    _
  $region31: #{improved_cnn_forward.1} parent=0 // pred_check_branch
    %40 = sbr.rel (0) target = $region33
  $region32: #{improved_cnn_forward.1} parent=0 // pred_region
    _
  $region33: #{improved_cnn_forward.1} parent=0 // pred_fallthru
    _
  // Predicated region
  $region34: #{improved_cnn_forward.1} parent=0 // pred_check
    _
  $region35: #{improved_cnn_forward.1} parent=0 // pred_check_branch
    %42 = sbr.rel (0) target = $region37
  $region36: #{improved_cnn_forward.1} parent=0 // pred_region
    _
  $region37: #{improved_cnn_forward.1} parent=0 // pred_fallthru
    _
  // Predicated region
  $region38: #{improved_cnn_forward.1} parent=0 // pred_check
    _
  $region39: #{improved_cnn_forward.1} parent=0 // pred_check_branch
    %44 = sbr.rel (0) target = $region41
  $region40: #{improved_cnn_forward.1} parent=0 // pred_region
    _
  $region41: #{improved_cnn_forward.1} parent=0 // pred_fallthru
    _
  // Predicated region
  $region42: #{improved_cnn_forward.1} parent=0 // pred_check
    _
  $region43: #{improved_cnn_forward.1} parent=0 // pred_check_branch
    %46 = sbr.rel (0) target = $region45
  $region44: #{improved_cnn_forward.1} parent=0 // pred_region
    _
  $region45: #{improved_cnn_forward.1} parent=0 // pred_fallthru
    _
  // Predicated region
  $region46: #{improved_cnn_forward.1} parent=0 // pred_check
    _
  $region47: #{improved_cnn_forward.1} parent=0 // pred_check_branch
    %48 = sbr.rel (0) target = $region49
  $region48: #{improved_cnn_forward.1} parent=0 // pred_region
    _
  $region49: #{improved_cnn_forward.1} parent=0 // pred_fallthru
    _
  // Predicated region
  $region50: #{improved_cnn_forward.1} parent=0 // pred_check
    _
  $region51: #{improved_cnn_forward.1} parent=0 // pred_check_branch
    %50 = sbr.rel (0) target = $region53
  $region52: #{improved_cnn_forward.1} parent=0 // pred_region
    _
  $region53: #{improved_cnn_forward.1} parent=0 // pred_fallthru
    _
  // Predicated region
  $region54: #{improved_cnn_forward.1} parent=0 // pred_check
    _
  $region55: #{improved_cnn_forward.1} parent=0 // pred_check_branch
    %52 = sbr.rel (0) target = $region57
  $region56: #{improved_cnn_forward.1} parent=0 // pred_region
    _
  $region57: #{improved_cnn_forward.1} parent=0 // pred_fallthru
    _
  // Predicated region
  $region58: #{improved_cnn_forward.1} parent=0 // pred_check
    _
  $region59: #{improved_cnn_forward.1} parent=0 // pred_check_branch
    %54 = sbr.rel (0) target = $region61
  $region60: #{improved_cnn_forward.1} parent=0 // pred_region
    _
  $region61: #{improved_cnn_forward.1} parent=0 // pred_fallthru
    _
  // Predicated region
  $region62: #{improved_cnn_forward.1} parent=0 // pred_check
    _
  $region63: #{improved_cnn_forward.1} parent=0 // pred_check_branch
    %56 = sbr.rel (0) target = $region65
  $region64: #{improved_cnn_forward.1} parent=0 // pred_region
    _
  $region65: #{improved_cnn_forward.1} parent=0 // pred_fallthru
    _
  // Predicated region
  $region66: #{improved_cnn_forward.1} parent=0 // pred_check
    _
  $region67: #{improved_cnn_forward.1} parent=0 // pred_check_branch
    %58 = sbr.rel (0) target = $region69
  $region68: #{improved_cnn_forward.1} parent=0 // pred_region
    _
  $region69: #{improved_cnn_forward.1} parent=0 // pred_fallthru
    _
  // Predicated region
  $region70: #{improved_cnn_forward.1} parent=0 // pred_check
    _
  $region71: #{improved_cnn_forward.1} parent=0 // pred_check_branch
    %60 = sbr.rel (0) target = $region73
  $region72: #{improved_cnn_forward.1} parent=0 // pred_region
    _
  $region73: #{improved_cnn_forward.1} parent=0 // pred_fallthru
    _
  %v62 = vld [vmem:[%s0] sm:$0xff]
  %v63 = vld [vmem:[%s0 + $0x8] sm:$0xff]
  %v64 = vld [vmem:[%s0 + $0x10] sm:$0xff]
  %v65 = vld [vmem:[%s0 + $0x18] sm:$0xff]
  %v66 = vld [vmem:[%s0 + $0x20] sm:$0xff]
  %v67 = vld [vmem:[%s0 + $0x28] sm:$0xff]
  %v68 = vld [vmem:[%s0 + $0x30] sm:$0xff]
  %v69 = vld [vmem:[%s0 + $0x38] sm:$0xff]
  %v70 = vld [vmem:[%s0 + $0x40] sm:$0xff]
  %v71 = vld [vmem:[%s0 + $0x48] sm:$0xff]
  %v72 = vld [vmem:[%s0 + $0x50] sm:$0xff]
  %v73 = vld [vmem:[%s0 + $0x58] sm:$0xff]
  %v74 = vld [vmem:[%s0 + $0x60] sm:$0xff]
  %v75 = vld [vmem:[%s0 + $0x68] sm:$0xff]
  %v76 = vld [vmem:[%s0 + $0x70] sm:$0xff]
  %v77 = vld [vmem:[%s0 + $0x78] sm:$0xff]
  %v78 = vld [vmem:[%s0 + $0x80] sm:$0xff]
  %v79 = vld [vmem:[%s0 + $0x88] sm:$0xff]
  %v80 = vld [vmem:[%s0 + $0x90] sm:$0xff]
  %v81 = vld [vmem:[%s0 + $0x98] sm:$0xff]
  %v82 = vld [vmem:[%s0 + $0xa0] sm:$0xff]
  %v83 = vld [vmem:[%s0 + $0xa8] sm:$0xff]
  %v84 = vld [vmem:[%s0 + $0xb0] sm:$0xff]
  %v85 = vld [vmem:[%s0 + $0xb8] sm:$0xff]
  %v86 = vld [vmem:[%s0 + $0xc0] sm:$0xff]
  %v87 = vld [vmem:[%s0 + $0xc8] sm:$0xff]
  %v88 = vld [vmem:[%s0 + $0xd0] sm:$0xff]
  %v89 = vld [vmem:[%s0 + $0xd8] sm:$0xff]
  %v90 = vld [vmem:[%s0 + $0xe0] sm:$0xff]
  %v91 = vld [vmem:[%s0 + $0xe8] sm:$0xff]
  %v92 = vld [vmem:[%s0 + $0xf0] sm:$0xff]
  %v93 = vld [vmem:[%s0 + $0xf8] sm:$0xff]
  %v94 = vld [vmem:[%s0 + $0x100] sm:$0xff]
  %v95 = vld [vmem:[%s0 + $0x108] sm:$0xff]
  %v96 = vld [vmem:[%s0 + $0x110] sm:$0xff]
  %v97 = vld [vmem:[%s0 + $0x118] sm:$0xff]
  %v98 = vld [vmem:[%s0 + $0x120] sm:$0xff]
  %v99 = vld [vmem:[%s0 + $0x128] sm:$0xff]
  %v100 = vld [vmem:[%s0 + $0x130] sm:$0xff]
  %v101 = vld [vmem:[%s0 + $0x138] sm:$0xff]
  %v102 = vld [vmem:[%s0 + $0x140] sm:$0xff]
  %v103 = vld [vmem:[%s0 + $0x148] sm:$0xff]
  %v104 = vld [vmem:[%s0 + $0x150] sm:$0xff]
  %v105 = vld [vmem:[%s0 + $0x158] sm:$0xff]
  %v106 = vld [vmem:[%s0 + $0x160] sm:$0xff]
  %v107 = vld [vmem:[%s0 + $0x168] sm:$0xff]
  %v108 = vld [vmem:[%s0 + $0x170] sm:$0xff]
  %v109 = vld [vmem:[%s0 + $0x178] sm:$0xff]
  %v110 = vld [vmem:[%s0 + $0x180] sm:$0xff]
  %v111 = vld [vmem:[%s0 + $0x188] sm:$0xff]
  %v112 = vld [vmem:[%s0 + $0x190] sm:$0xff]
  %v113 = vld [vmem:[%s0 + $0x198] sm:$0xff]
  %v114 = vld [vmem:[%s0 + $0x1a0] sm:$0xff]
  %v115 = vld [vmem:[%s0 + $0x1a8] sm:$0xff]
  %v116 = vld [vmem:[%s0 + $0x1b0] sm:$0xff]
  %v117 = vld [vmem:[%s0 + $0x1b8] sm:$0xff]
  %v118 = vld [vmem:[%s0 + $0x1c0] sm:$0xff]
  %v119 = vld [vmem:[%s0 + $0x1c8] sm:$0xff]
  %v120 = vld [vmem:[%s0 + $0x1d0] sm:$0xff]
  %v121 = vld [vmem:[%s0 + $0x1d8] sm:$0xff]
  %v122 = vld [vmem:[%s0 + $0x1e0] sm:$0xff]
  %v123 = vld [vmem:[%s0 + $0x1e8] sm:$0xff]
  %v124 = vld [vmem:[%s0 + $0x1f0] sm:$0xff]
  %v125 = vld [vmem:[%s0 + $0x1f8] sm:$0xff]
  %v126 = vld [vmem:[%s1] sm:$0x1]
  %128 = vset.pattern.permute.xlu0 0
  %129 = vperm.xlu0 %128, %v62
  %v130 = vpop.permute.xlu0 %129
  %133 = vset.pattern.permute.xlu0 0
  %134 = vperm.xlu0 %133, %v63
  %v135 = vpop.permute.xlu0 %134
  %138 = vset.pattern.permute.xlu0 0
  %139 = vperm.xlu0 %138, %v64
  %v140 = vpop.permute.xlu0 %139
  %143 = vset.pattern.permute.xlu0 0
  %144 = vperm.xlu0 %143, %v65
  %v145 = vpop.permute.xlu0 %144
  %148 = vset.pattern.permute.xlu0 0
  %149 = vperm.xlu0 %148, %v66
  %v150 = vpop.permute.xlu0 %149
  %153 = vset.pattern.permute.xlu0 0
  %154 = vperm.xlu0 %153, %v67
  %v155 = vpop.permute.xlu0 %154
  %158 = vset.pattern.permute.xlu0 0
  %159 = vperm.xlu0 %158, %v68
  %v160 = vpop.permute.xlu0 %159
  %163 = vset.pattern.permute.xlu0 0
  %164 = vperm.xlu0 %163, %v69
  %v165 = vpop.permute.xlu0 %164
  %168 = vset.pattern.permute.xlu0 0
  %169 = vperm.xlu0 %168, %v70
  %v170 = vpop.permute.xlu0 %169
  %173 = vset.pattern.permute.xlu0 0
  %174 = vperm.xlu0 %173, %v71
  %v175 = vpop.permute.xlu0 %174
  %178 = vset.pattern.permute.xlu0 0
  %179 = vperm.xlu0 %178, %v72
  %v180 = vpop.permute.xlu0 %179
  %183 = vset.pattern.permute.xlu0 0
  %184 = vperm.xlu0 %183, %v73
  %v185 = vpop.permute.xlu0 %184
  %188 = vset.pattern.permute.xlu0 0
  %189 = vperm.xlu0 %188, %v74
  %v190 = vpop.permute.xlu0 %189
  %193 = vset.pattern.permute.xlu0 0
  %194 = vperm.xlu0 %193, %v75
  %v195 = vpop.permute.xlu0 %194
  %198 = vset.pattern.permute.xlu0 0
  %199 = vperm.xlu0 %198, %v76
  %v200 = vpop.permute.xlu0 %199
  %203 = vset.pattern.permute.xlu0 0
  %204 = vperm.xlu0 %203, %v77
  %v205 = vpop.permute.xlu0 %204
  %208 = vset.pattern.permute.xlu0 0
  %209 = vperm.xlu0 %208, %v78
  %v210 = vpop.permute.xlu0 %209
  %213 = vset.pattern.permute.xlu0 0
  %214 = vperm.xlu0 %213, %v79
  %v215 = vpop.permute.xlu0 %214
  %218 = vset.pattern.permute.xlu0 0
  %219 = vperm.xlu0 %218, %v80
  %v220 = vpop.permute.xlu0 %219
  %223 = vset.pattern.permute.xlu0 0
  %224 = vperm.xlu0 %223, %v81
  %v225 = vpop.permute.xlu0 %224
  %228 = vset.pattern.permute.xlu0 0
  %229 = vperm.xlu0 %228, %v82
  %v230 = vpop.permute.xlu0 %229
  %233 = vset.pattern.permute.xlu0 0
  %234 = vperm.xlu0 %233, %v83
  %v235 = vpop.permute.xlu0 %234
  %238 = vset.pattern.permute.xlu0 0
  %239 = vperm.xlu0 %238, %v84
  %v240 = vpop.permute.xlu0 %239
  %243 = vset.pattern.permute.xlu0 0
  %244 = vperm.xlu0 %243, %v85
  %v245 = vpop.permute.xlu0 %244
  %248 = vset.pattern.permute.xlu0 0
  %249 = vperm.xlu0 %248, %v86
  %v250 = vpop.permute.xlu0 %249
  %253 = vset.pattern.permute.xlu0 0
  %254 = vperm.xlu0 %253, %v87
  %v255 = vpop.permute.xlu0 %254
  %258 = vset.pattern.permute.xlu0 0
  %259 = vperm.xlu0 %258, %v88
  %v260 = vpop.permute.xlu0 %259
  %263 = vset.pattern.permute.xlu0 0
  %264 = vperm.xlu0 %263, %v89
  %v265 = vpop.permute.xlu0 %264
  %268 = vset.pattern.permute.xlu0 0
  %269 = vperm.xlu0 %268, %v90
  %v270 = vpop.permute.xlu0 %269
  %273 = vset.pattern.permute.xlu0 0
  %274 = vperm.xlu0 %273, %v91
  %v275 = vpop.permute.xlu0 %274
  %278 = vset.pattern.permute.xlu0 0
  %279 = vperm.xlu0 %278, %v92
  %v280 = vpop.permute.xlu0 %279
  %283 = vset.pattern.permute.xlu0 0
  %284 = vperm.xlu0 %283, %v93
  %v285 = vpop.permute.xlu0 %284
  %288 = vset.pattern.permute.xlu0 0
  %289 = vperm.xlu0 %288, %v94
  %v290 = vpop.permute.xlu0 %289
  %293 = vset.pattern.permute.xlu0 0
  %294 = vperm.xlu0 %293, %v95
  %v295 = vpop.permute.xlu0 %294
  %298 = vset.pattern.permute.xlu0 0
  %299 = vperm.xlu0 %298, %v96
  %v300 = vpop.permute.xlu0 %299
  %303 = vset.pattern.permute.xlu0 0
  %304 = vperm.xlu0 %303, %v97
  %v305 = vpop.permute.xlu0 %304
  %308 = vset.pattern.permute.xlu0 0
  %309 = vperm.xlu0 %308, %v98
  %v310 = vpop.permute.xlu0 %309
  %313 = vset.pattern.permute.xlu0 0
  %314 = vperm.xlu0 %313, %v99
  %v315 = vpop.permute.xlu0 %314
  %318 = vset.pattern.permute.xlu0 0
  %319 = vperm.xlu0 %318, %v100
  %v320 = vpop.permute.xlu0 %319
  %323 = vset.pattern.permute.xlu0 0
  %324 = vperm.xlu0 %323, %v101
  %v325 = vpop.permute.xlu0 %324
  %328 = vset.pattern.permute.xlu0 0
  %329 = vperm.xlu0 %328, %v102
  %v330 = vpop.permute.xlu0 %329
  %333 = vset.pattern.permute.xlu0 0
  %334 = vperm.xlu0 %333, %v103
  %v335 = vpop.permute.xlu0 %334
  %338 = vset.pattern.permute.xlu0 0
  %339 = vperm.xlu0 %338, %v104
  %v340 = vpop.permute.xlu0 %339
  %343 = vset.pattern.permute.xlu0 0
  %344 = vperm.xlu0 %343, %v105
  %v345 = vpop.permute.xlu0 %344
  %348 = vset.pattern.permute.xlu0 0
  %349 = vperm.xlu0 %348, %v106
  %v350 = vpop.permute.xlu0 %349
  %353 = vset.pattern.permute.xlu0 0
  %354 = vperm.xlu0 %353, %v107
  %v355 = vpop.permute.xlu0 %354
  %358 = vset.pattern.permute.xlu0 0
  %359 = vperm.xlu0 %358, %v108
  %v360 = vpop.permute.xlu0 %359
  %363 = vset.pattern.permute.xlu0 0
  %364 = vperm.xlu0 %363, %v109
  %v365 = vpop.permute.xlu0 %364
  %368 = vset.pattern.permute.xlu0 0
  %369 = vperm.xlu0 %368, %v110
  %v370 = vpop.permute.xlu0 %369
  %373 = vset.pattern.permute.xlu0 0
  %374 = vperm.xlu0 %373, %v111
  %v375 = vpop.permute.xlu0 %374
  %378 = vset.pattern.permute.xlu0 0
  %379 = vperm.xlu0 %378, %v112
  %v380 = vpop.permute.xlu0 %379
  %383 = vset.pattern.permute.xlu0 0
  %384 = vperm.xlu0 %383, %v113
  %v385 = vpop.permute.xlu0 %384
  %388 = vset.pattern.permute.xlu0 0
  %389 = vperm.xlu0 %388, %v114
  %v390 = vpop.permute.xlu0 %389
  %393 = vset.pattern.permute.xlu0 0
  %394 = vperm.xlu0 %393, %v115
  %v395 = vpop.permute.xlu0 %394
  %398 = vset.pattern.permute.xlu0 0
  %399 = vperm.xlu0 %398, %v116
  %v400 = vpop.permute.xlu0 %399
  %403 = vset.pattern.permute.xlu0 0
  %404 = vperm.xlu0 %403, %v117
  %v405 = vpop.permute.xlu0 %404
  %408 = vset.pattern.permute.xlu0 0
  %409 = vperm.xlu0 %408, %v118
  %v410 = vpop.permute.xlu0 %409
  %413 = vset.pattern.permute.xlu0 0
  %414 = vperm.xlu0 %413, %v119
  %v415 = vpop.permute.xlu0 %414
  %418 = vset.pattern.permute.xlu0 0
  %419 = vperm.xlu0 %418, %v120
  %v420 = vpop.permute.xlu0 %419
  %423 = vset.pattern.permute.xlu0 0
  %424 = vperm.xlu0 %423, %v121
  %v425 = vpop.permute.xlu0 %424
  %428 = vset.pattern.permute.xlu0 0
  %429 = vperm.xlu0 %428, %v122
  %v430 = vpop.permute.xlu0 %429
  %433 = vset.pattern.permute.xlu0 0
  %434 = vperm.xlu0 %433, %v123
  %v435 = vpop.permute.xlu0 %434
  %438 = vset.pattern.permute.xlu0 0
  %439 = vperm.xlu0 %438, %v124
  %v440 = vpop.permute.xlu0 %439
  %443 = vset.pattern.permute.xlu0 0
  %444 = vperm.xlu0 %443, %v125
  %v445 = vpop.permute.xlu0 %444
  %v448 = vlaneseq
  %v449 = vshrl.u32 %v448, 7
  %v450 = vsub.s32 0, %v449
  %v451 = vrot.slane %v126, %v450
  %v453 = vmul.f32 %v130, %v451
  %v454 = vmul.f32 %v135, %v451
  %v455 = vmul.f32 %v140, %v451
  %v456 = vmul.f32 %v145, %v451
  %v457 = vmul.f32 %v150, %v451
  %v458 = vmul.f32 %v155, %v451
  %v459 = vmul.f32 %v160, %v451
  %v460 = vmul.f32 %v165, %v451
  %v461 = vmul.f32 %v170, %v451
  %v462 = vmul.f32 %v175, %v451
  %v463 = vmul.f32 %v180, %v451
  %v464 = vmul.f32 %v185, %v451
  %v465 = vmul.f32 %v190, %v451
  %v466 = vmul.f32 %v195, %v451
  %v467 = vmul.f32 %v200, %v451
  %v468 = vmul.f32 %v205, %v451
  %v469 = vmul.f32 %v210, %v451
  %v470 = vmul.f32 %v215, %v451
  %v471 = vmul.f32 %v220, %v451
  %v472 = vmul.f32 %v225, %v451
  %v473 = vmul.f32 %v230, %v451
  %v474 = vmul.f32 %v235, %v451
  %v475 = vmul.f32 %v240, %v451
  %v476 = vmul.f32 %v245, %v451
  %v477 = vmul.f32 %v250, %v451
  %v478 = vmul.f32 %v255, %v451
  %v479 = vmul.f32 %v260, %v451
  %v480 = vmul.f32 %v265, %v451
  %v481 = vmul.f32 %v270, %v451
  %v482 = vmul.f32 %v275, %v451
  %v483 = vmul.f32 %v280, %v451
  %v484 = vmul.f32 %v285, %v451
  %v485 = vmul.f32 %v290, %v451
  %v486 = vmul.f32 %v295, %v451
  %v487 = vmul.f32 %v300, %v451
  %v488 = vmul.f32 %v305, %v451
  %v489 = vmul.f32 %v310, %v451
  %v490 = vmul.f32 %v315, %v451
  %v491 = vmul.f32 %v320, %v451
  %v492 = vmul.f32 %v325, %v451
  %v493 = vmul.f32 %v330, %v451
  %v494 = vmul.f32 %v335, %v451
  %v495 = vmul.f32 %v340, %v451
  %v496 = vmul.f32 %v345, %v451
  %v497 = vmul.f32 %v350, %v451
  %v498 = vmul.f32 %v355, %v451
  %v499 = vmul.f32 %v360, %v451
  %v500 = vmul.f32 %v365, %v451
  %v501 = vmul.f32 %v370, %v451
  %v502 = vmul.f32 %v375, %v451
  %v503 = vmul.f32 %v380, %v451
  %v504 = vmul.f32 %v385, %v451
  %v505 = vmul.f32 %v390, %v451
  %v506 = vmul.f32 %v395, %v451
  %v507 = vmul.f32 %v400, %v451
  %v508 = vmul.f32 %v405, %v451
  %v509 = vmul.f32 %v410, %v451
  %v510 = vmul.f32 %v415, %v451
  %v511 = vmul.f32 %v420, %v451
  %v512 = vmul.f32 %v425, %v451
  %v513 = vmul.f32 %v430, %v451
  %v514 = vmul.f32 %v435, %v451
  %v515 = vmul.f32 %v440, %v451
  %v516 = vmul.f32 %v445, %v451
  %s517 = scalar_lea.vmem %s0, 512
  %v518 = vld [vmem:[%s517] sm:$0xff]
  %v519 = vld [vmem:[%s517 + $0x8] sm:$0xff]
  %v520 = vld [vmem:[%s517 + $0x10] sm:$0xff]
  %v521 = vld [vmem:[%s517 + $0x18] sm:$0xff]
  %v522 = vld [vmem:[%s517 + $0x20] sm:$0xff]
  %v523 = vld [vmem:[%s517 + $0x28] sm:$0xff]
  %v524 = vld [vmem:[%s517 + $0x30] sm:$0xff]
  %v525 = vld [vmem:[%s517 + $0x38] sm:$0xff]
  %v526 = vld [vmem:[%s517 + $0x40] sm:$0xff]
  %v527 = vld [vmem:[%s517 + $0x48] sm:$0xff]
  %v528 = vld [vmem:[%s517 + $0x50] sm:$0xff]
  %v529 = vld [vmem:[%s517 + $0x58] sm:$0xff]
  %v530 = vld [vmem:[%s517 + $0x60] sm:$0xff]
  %v531 = vld [vmem:[%s517 + $0x68] sm:$0xff]
  %v532 = vld [vmem:[%s517 + $0x70] sm:$0xff]
  %v533 = vld [vmem:[%s517 + $0x78] sm:$0xff]
  %v534 = vld [vmem:[%s517 + $0x80] sm:$0xff]
  %v535 = vld [vmem:[%s517 + $0x88] sm:$0xff]
  %v536 = vld [vmem:[%s517 + $0x90] sm:$0xff]
  %v537 = vld [vmem:[%s517 + $0x98] sm:$0xff]
  %v538 = vld [vmem:[%s517 + $0xa0] sm:$0xff]
  %v539 = vld [vmem:[%s517 + $0xa8] sm:$0xff]
  %v540 = vld [vmem:[%s517 + $0xb0] sm:$0xff]
  %v541 = vld [vmem:[%s517 + $0xb8] sm:$0xff]
  %v542 = vld [vmem:[%s517 + $0xc0] sm:$0xff]
  %v543 = vld [vmem:[%s517 + $0xc8] sm:$0xff]
  %v544 = vld [vmem:[%s517 + $0xd0] sm:$0xff]
  %v545 = vld [vmem:[%s517 + $0xd8] sm:$0xff]
  %v546 = vld [vmem:[%s517 + $0xe0] sm:$0xff]
  %v547 = vld [vmem:[%s517 + $0xe8] sm:$0xff]
  %v548 = vld [vmem:[%s517 + $0xf0] sm:$0xff]
  %v549 = vld [vmem:[%s517 + $0xf8] sm:$0xff]
  %v550 = vld [vmem:[%s517 + $0x100] sm:$0xff]
  %v551 = vld [vmem:[%s517 + $0x108] sm:$0xff]
  %v552 = vld [vmem:[%s517 + $0x110] sm:$0xff]
  %v553 = vld [vmem:[%s517 + $0x118] sm:$0xff]
  %v554 = vld [vmem:[%s517 + $0x120] sm:$0xff]
  %v555 = vld [vmem:[%s517 + $0x128] sm:$0xff]
  %v556 = vld [vmem:[%s517 + $0x130] sm:$0xff]
  %v557 = vld [vmem:[%s517 + $0x138] sm:$0xff]
  %v558 = vld [vmem:[%s517 + $0x140] sm:$0xff]
  %v559 = vld [vmem:[%s517 + $0x148] sm:$0xff]
  %v560 = vld [vmem:[%s517 + $0x150] sm:$0xff]
  %v561 = vld [vmem:[%s517 + $0x158] sm:$0xff]
  %v562 = vld [vmem:[%s517 + $0x160] sm:$0xff]
  %v563 = vld [vmem:[%s517 + $0x168] sm:$0xff]
  %v564 = vld [vmem:[%s517 + $0x170] sm:$0xff]
  %v565 = vld [vmem:[%s517 + $0x178] sm:$0xff]
  %v566 = vld [vmem:[%s517 + $0x180] sm:$0xff]
  %v567 = vld [vmem:[%s517 + $0x188] sm:$0xff]
  %v568 = vld [vmem:[%s517 + $0x190] sm:$0xff]
  %v569 = vld [vmem:[%s517 + $0x198] sm:$0xff]
  %v570 = vld [vmem:[%s517 + $0x1a0] sm:$0xff]
  %v571 = vld [vmem:[%s517 + $0x1a8] sm:$0xff]
  %v572 = vld [vmem:[%s517 + $0x1b0] sm:$0xff]
  %v573 = vld [vmem:[%s517 + $0x1b8] sm:$0xff]
  %v574 = vld [vmem:[%s517 + $0x1c0] sm:$0xff]
  %v575 = vld [vmem:[%s517 + $0x1c8] sm:$0xff]
  %v576 = vld [vmem:[%s517 + $0x1d0] sm:$0xff]
  %v577 = vld [vmem:[%s517 + $0x1d8] sm:$0xff]
  %v578 = vld [vmem:[%s517 + $0x1e0] sm:$0xff]
  %v579 = vld [vmem:[%s517 + $0x1e8] sm:$0xff]
  %v580 = vld [vmem:[%s517 + $0x1f0] sm:$0xff]
  %v581 = vld [vmem:[%s517 + $0x1f8] sm:$0xff]
  %s582 = scalar_lea.vmem %s1, 1
  %v583 = vld [vmem:[%s582] sm:$0x1]
  %585 = vset.pattern.permute.xlu0 0
  %586 = vperm.xlu0 %585, %v518
  %v587 = vpop.permute.xlu0 %586
  %590 = vset.pattern.permute.xlu0 0
  %591 = vperm.xlu0 %590, %v519
  %v592 = vpop.permute.xlu0 %591
  %595 = vset.pattern.permute.xlu0 0
  %596 = vperm.xlu0 %595, %v520
  %v597 = vpop.permute.xlu0 %596
  %600 = vset.pattern.permute.xlu0 0
  %601 = vperm.xlu0 %600, %v521
  %v602 = vpop.permute.xlu0 %601
  %605 = vset.pattern.permute.xlu0 0
  %606 = vperm.xlu0 %605, %v522
  %v607 = vpop.permute.xlu0 %606
  %610 = vset.pattern.permute.xlu0 0
  %611 = vperm.xlu0 %610, %v523
  %v612 = vpop.permute.xlu0 %611
  %615 = vset.pattern.permute.xlu0 0
  %616 = vperm.xlu0 %615, %v524
  %v617 = vpop.permute.xlu0 %616
  %620 = vset.pattern.permute.xlu0 0
  %621 = vperm.xlu0 %620, %v525
  %v622 = vpop.permute.xlu0 %621
  %625 = vset.pattern.permute.xlu0 0
  %626 = vperm.xlu0 %625, %v526
  %v627 = vpop.permute.xlu0 %626
  %630 = vset.pattern.permute.xlu0 0
  %631 = vperm.xlu0 %630, %v527
  %v632 = vpop.permute.xlu0 %631
  %635 = vset.pattern.permute.xlu0 0
  %636 = vperm.xlu0 %635, %v528
  %v637 = vpop.permute.xlu0 %636
  %640 = vset.pattern.permute.xlu0 0
  %641 = vperm.xlu0 %640, %v529
  %v642 = vpop.permute.xlu0 %641
  %645 = vset.pattern.permute.xlu0 0
  %646 = vperm.xlu0 %645, %v530
  %v647 = vpop.permute.xlu0 %646
  %650 = vset.pattern.permute.xlu0 0
  %651 = vperm.xlu0 %650, %v531
  %v652 = vpop.permute.xlu0 %651
  %655 = vset.pattern.permute.xlu0 0
  %656 = vperm.xlu0 %655, %v532
  %v657 = vpop.permute.xlu0 %656
  %660 = vset.pattern.permute.xlu0 0
  %661 = vperm.xlu0 %660, %v533
  %v662 = vpop.permute.xlu0 %661
  %665 = vset.pattern.permute.xlu0 0
  %666 = vperm.xlu0 %665, %v534
  %v667 = vpop.permute.xlu0 %666
  %670 = vset.pattern.permute.xlu0 0
  %671 = vperm.xlu0 %670, %v535
  %v672 = vpop.permute.xlu0 %671
  %675 = vset.pattern.permute.xlu0 0
  %676 = vperm.xlu0 %675, %v536
  %v677 = vpop.permute.xlu0 %676
  %680 = vset.pattern.permute.xlu0 0
  %681 = vperm.xlu0 %680, %v537
  %v682 = vpop.permute.xlu0 %681
  %685 = vset.pattern.permute.xlu0 0
  %686 = vperm.xlu0 %685, %v538
  %v687 = vpop.permute.xlu0 %686
  %690 = vset.pattern.permute.xlu0 0
  %691 = vperm.xlu0 %690, %v539
  %v692 = vpop.permute.xlu0 %691
  %695 = vset.pattern.permute.xlu0 0
  %696 = vperm.xlu0 %695, %v540
  %v697 = vpop.permute.xlu0 %696
  %700 = vset.pattern.permute.xlu0 0
  %701 = vperm.xlu0 %700, %v541
  %v702 = vpop.permute.xlu0 %701
  %705 = vset.pattern.permute.xlu0 0
  %706 = vperm.xlu0 %705, %v542
  %v707 = vpop.permute.xlu0 %706
  %710 = vset.pattern.permute.xlu0 0
  %711 = vperm.xlu0 %710, %v543
  %v712 = vpop.permute.xlu0 %711
  %715 = vset.pattern.permute.xlu0 0
  %716 = vperm.xlu0 %715, %v544
  %v717 = vpop.permute.xlu0 %716
  %720 = vset.pattern.permute.xlu0 0
  %721 = vperm.xlu0 %720, %v545
  %v722 = vpop.permute.xlu0 %721
  %725 = vset.pattern.permute.xlu0 0
  %726 = vperm.xlu0 %725, %v546
  %v727 = vpop.permute.xlu0 %726
  %730 = vset.pattern.permute.xlu0 0
  %731 = vperm.xlu0 %730, %v547
  %v732 = vpop.permute.xlu0 %731
  %735 = vset.pattern.permute.xlu0 0
  %736 = vperm.xlu0 %735, %v548
  %v737 = vpop.permute.xlu0 %736
  %740 = vset.pattern.permute.xlu0 0
  %741 = vperm.xlu0 %740, %v549
  %v742 = vpop.permute.xlu0 %741
  %745 = vset.pattern.permute.xlu0 0
  %746 = vperm.xlu0 %745, %v550
  %v747 = vpop.permute.xlu0 %746
  %750 = vset.pattern.permute.xlu0 0
  %751 = vperm.xlu0 %750, %v551
  %v752 = vpop.permute.xlu0 %751
  %755 = vset.pattern.permute.xlu0 0
  %756 = vperm.xlu0 %755, %v552
  %v757 = vpop.permute.xlu0 %756
  %760 = vset.pattern.permute.xlu0 0
  %761 = vperm.xlu0 %760, %v553
  %v762 = vpop.permute.xlu0 %761
  %765 = vset.pattern.permute.xlu0 0
  %766 = vperm.xlu0 %765, %v554
  %v767 = vpop.permute.xlu0 %766
  %770 = vset.pattern.permute.xlu0 0
  %771 = vperm.xlu0 %770, %v555
  %v772 = vpop.permute.xlu0 %771
  %775 = vset.pattern.permute.xlu0 0
  %776 = vperm.xlu0 %775, %v556
  %v777 = vpop.permute.xlu0 %776
  %780 = vset.pattern.permute.xlu0 0
  %781 = vperm.xlu0 %780, %v557
  %v782 = vpop.permute.xlu0 %781
  %785 = vset.pattern.permute.xlu0 0
  %786 = vperm.xlu0 %785, %v558
  %v787 = vpop.permute.xlu0 %786
  %790 = vset.pattern.permute.xlu0 0
  %791 = vperm.xlu0 %790, %v559
  %v792 = vpop.permute.xlu0 %791
  %795 = vset.pattern.permute.xlu0 0
  %796 = vperm.xlu0 %795, %v560
  %v797 = vpop.permute.xlu0 %796
  %800 = vset.pattern.permute.xlu0 0
  %801 = vperm.xlu0 %800, %v561
  %v802 = vpop.permute.xlu0 %801
  %805 = vset.pattern.permute.xlu0 0
  %806 = vperm.xlu0 %805, %v562
  %v807 = vpop.permute.xlu0 %806
  %810 = vset.pattern.permute.xlu0 0
  %811 = vperm.xlu0 %810, %v563
  %v812 = vpop.permute.xlu0 %811
  %815 = vset.pattern.permute.xlu0 0
  %816 = vperm.xlu0 %815, %v564
  %v817 = vpop.permute.xlu0 %816
  %820 = vset.pattern.permute.xlu0 0
  %821 = vperm.xlu0 %820, %v565
  %v822 = vpop.permute.xlu0 %821
  %825 = vset.pattern.permute.xlu0 0
  %826 = vperm.xlu0 %825, %v566
  %v827 = vpop.permute.xlu0 %826
  %830 = vset.pattern.permute.xlu0 0
  %831 = vperm.xlu0 %830, %v567
  %v832 = vpop.permute.xlu0 %831
  %835 = vset.pattern.permute.xlu0 0
  %836 = vperm.xlu0 %835, %v568
  %v837 = vpop.permute.xlu0 %836
  %840 = vset.pattern.permute.xlu0 0
  %841 = vperm.xlu0 %840, %v569
  %v842 = vpop.permute.xlu0 %841
  %845 = vset.pattern.permute.xlu0 0
  %846 = vperm.xlu0 %845, %v570
  %v847 = vpop.permute.xlu0 %846
  %850 = vset.pattern.permute.xlu0 0
  %851 = vperm.xlu0 %850, %v571
  %v852 = vpop.permute.xlu0 %851
  %855 = vset.pattern.permute.xlu0 0
  %856 = vperm.xlu0 %855, %v572
  %v857 = vpop.permute.xlu0 %856
  %860 = vset.pattern.permute.xlu0 0
  %861 = vperm.xlu0 %860, %v573
  %v862 = vpop.permute.xlu0 %861
  %865 = vset.pattern.permute.xlu0 0
  %866 = vperm.xlu0 %865, %v574
  %v867 = vpop.permute.xlu0 %866
  %870 = vset.pattern.permute.xlu0 0
  %871 = vperm.xlu0 %870, %v575
  %v872 = vpop.permute.xlu0 %871
  %875 = vset.pattern.permute.xlu0 0
  %876 = vperm.xlu0 %875, %v576
  %v877 = vpop.permute.xlu0 %876
  %880 = vset.pattern.permute.xlu0 0
  %881 = vperm.xlu0 %880, %v577
  %v882 = vpop.permute.xlu0 %881
  %885 = vset.pattern.permute.xlu0 0
  %886 = vperm.xlu0 %885, %v578
  %v887 = vpop.permute.xlu0 %886
  %890 = vset.pattern.permute.xlu0 0
  %891 = vperm.xlu0 %890, %v579
  %v892 = vpop.permute.xlu0 %891
  %895 = vset.pattern.permute.xlu0 0
  %896 = vperm.xlu0 %895, %v580
  %v897 = vpop.permute.xlu0 %896
  %900 = vset.pattern.permute.xlu0 0
  %901 = vperm.xlu0 %900, %v581
  %v902 = vpop.permute.xlu0 %901
  %v905 = vlaneseq
  %v906 = vshrl.u32 %v905, 7
  %v907 = vsub.s32 0, %v906
  %v908 = vrot.slane %v583, %v907
  %v910 = vmul.f32 %v587, %v908
  %v911 = vmul.f32 %v592, %v908
  %v912 = vmul.f32 %v597, %v908
  %v913 = vmul.f32 %v602, %v908
  %v914 = vmul.f32 %v607, %v908
  %v915 = vmul.f32 %v612, %v908
  %v916 = vmul.f32 %v617, %v908
  %v917 = vmul.f32 %v622, %v908
  %v918 = vmul.f32 %v627, %v908
  %v919 = vmul.f32 %v632, %v908
  %v920 = vmul.f32 %v637, %v908
  %v921 = vmul.f32 %v642, %v908
  %v922 = vmul.f32 %v647, %v908
  %v923 = vmul.f32 %v652, %v908
  %v924 = vmul.f32 %v657, %v908
  %v925 = vmul.f32 %v662, %v908
  %v926 = vmul.f32 %v667, %v908
  %v927 = vmul.f32 %v672, %v908
  %v928 = vmul.f32 %v677, %v908
  %v929 = vmul.f32 %v682, %v908
  %v930 = vmul.f32 %v687, %v908
  %v931 = vmul.f32 %v692, %v908
  %v932 = vmul.f32 %v697, %v908
  %v933 = vmul.f32 %v702, %v908
  %v934 = vmul.f32 %v707, %v908
  %v935 = vmul.f32 %v712, %v908
  %v936 = vmul.f32 %v717, %v908
  %v937 = vmul.f32 %v722, %v908
  %v938 = vmul.f32 %v727, %v908
  %v939 = vmul.f32 %v732, %v908
  %v940 = vmul.f32 %v737, %v908
  %v941 = vmul.f32 %v742, %v908
  %v942 = vmul.f32 %v747, %v908
  %v943 = vmul.f32 %v752, %v908
  %v944 = vmul.f32 %v757, %v908
  %v945 = vmul.f32 %v762, %v908
  %v946 = vmul.f32 %v767, %v908
  %v947 = vmul.f32 %v772, %v908
  %v948 = vmul.f32 %v777, %v908
  %v949 = vmul.f32 %v782, %v908
  %v950 = vmul.f32 %v787, %v908
  %v951 = vmul.f32 %v792, %v908
  %v952 = vmul.f32 %v797, %v908
  %v953 = vmul.f32 %v802, %v908
  %v954 = vmul.f32 %v807, %v908
  %v955 = vmul.f32 %v812, %v908
  %v956 = vmul.f32 %v817, %v908
  %v957 = vmul.f32 %v822, %v908
  %v958 = vmul.f32 %v827, %v908
  %v959 = vmul.f32 %v832, %v908
  %v960 = vmul.f32 %v837, %v908
  %v961 = vmul.f32 %v842, %v908
  %v962 = vmul.f32 %v847, %v908
  %v963 = vmul.f32 %v852, %v908
  %v964 = vmul.f32 %v857, %v908
  %v965 = vmul.f32 %v862, %v908
  %v966 = vmul.f32 %v867, %v908
  %v967 = vmul.f32 %v872, %v908
  %v968 = vmul.f32 %v877, %v908
  %v969 = vmul.f32 %v882, %v908
  %v970 = vmul.f32 %v887, %v908
  %v971 = vmul.f32 %v892, %v908
  %v972 = vmul.f32 %v897, %v908
  %v973 = vmul.f32 %v902, %v908
  %v974 = vadd.f32 %v453, %v910
  %v975 = vadd.f32 %v454, %v911
  %v976 = vadd.f32 %v455, %v912
  %v977 = vadd.f32 %v456, %v913
  %v978 = vadd.f32 %v457, %v914
  %v979 = vadd.f32 %v458, %v915
  %v980 = vadd.f32 %v459, %v916
  %v981 = vadd.f32 %v460, %v917
  %v982 = vadd.f32 %v461, %v918
  %v983 = vadd.f32 %v462, %v919
  %v984 = vadd.f32 %v463, %v920
  %v985 = vadd.f32 %v464, %v921
  %v986 = vadd.f32 %v465, %v922
  %v987 = vadd.f32 %v466, %v923
  %v988 = vadd.f32 %v467, %v924
  %v989 = vadd.f32 %v468, %v925
  %v990 = vadd.f32 %v469, %v926
  %v991 = vadd.f32 %v470, %v927
  %v992 = vadd.f32 %v471, %v928
  %v993 = vadd.f32 %v472, %v929
  %v994 = vadd.f32 %v473, %v930
  %v995 = vadd.f32 %v474, %v931
  %v996 = vadd.f32 %v475, %v932
  %v997 = vadd.f32 %v476, %v933
  %v998 = vadd.f32 %v477, %v934
  %v999 = vadd.f32 %v478, %v935
  %v1000 = vadd.f32 %v479, %v936
  %v1001 = vadd.f32 %v480, %v937
  %v1002 = vadd.f32 %v481, %v938
  %v1003 = vadd.f32 %v482, %v939
  %v1004 = vadd.f32 %v483, %v940
  %v1005 = vadd.f32 %v484, %v941
  %v1006 = vadd.f32 %v485, %v942
  %v1007 = vadd.f32 %v486, %v943
  %v1008 = vadd.f32 %v487, %v944
  %v1009 = vadd.f32 %v488, %v945
  %v1010 = vadd.f32 %v489, %v946
  %v1011 = vadd.f32 %v490, %v947
  %v1012 = vadd.f32 %v491, %v948
  %v1013 = vadd.f32 %v492, %v949
  %v1014 = vadd.f32 %v493, %v950
  %v1015 = vadd.f32 %v494, %v951
  %v1016 = vadd.f32 %v495, %v952
  %v1017 = vadd.f32 %v496, %v953
  %v1018 = vadd.f32 %v497, %v954
  %v1019 = vadd.f32 %v498, %v955
  %v1020 = vadd.f32 %v499, %v956
  %v1021 = vadd.f32 %v500, %v957
  %v1022 = vadd.f32 %v501, %v958
  %v1023 = vadd.f32 %v502, %v959
  %v1024 = vadd.f32 %v503, %v960
  %v1025 = vadd.f32 %v504, %v961
  %v1026 = vadd.f32 %v505, %v962
  %v1027 = vadd.f32 %v506, %v963
  %v1028 = vadd.f32 %v507, %v964
  %v1029 = vadd.f32 %v508, %v965
  %v1030 = vadd.f32 %v509, %v966
  %v1031 = vadd.f32 %v510, %v967
  %v1032 = vadd.f32 %v511, %v968
  %v1033 = vadd.f32 %v512, %v969
  %v1034 = vadd.f32 %v513, %v970
  %v1035 = vadd.f32 %v514, %v971
  %v1036 = vadd.f32 %v515, %v972
  %v1037 = vadd.f32 %v516, %v973
  %s1038 = scalar_lea.vmem %s0, 1024
  %v1039 = vld [vmem:[%s1038] sm:$0xff]
  %v1040 = vld [vmem:[%s1038 + $0x8] sm:$0xff]
  %v1041 = vld [vmem:[%s1038 + $0x10] sm:$0xff]
  %v1042 = vld [vmem:[%s1038 + $0x18] sm:$0xff]
  %v1043 = vld [vmem:[%s1038 + $0x20] sm:$0xff]
  %v1044 = vld [vmem:[%s1038 + $0x28] sm:$0xff]
  %v1045 = vld [vmem:[%s1038 + $0x30] sm:$0xff]
  %v1046 = vld [vmem:[%s1038 + $0x38] sm:$0xff]
  %v1047 = vld [vmem:[%s1038 + $0x40] sm:$0xff]
  %v1048 = vld [vmem:[%s1038 + $0x48] sm:$0xff]
  %v1049 = vld [vmem:[%s1038 + $0x50] sm:$0xff]
  %v1050 = vld [vmem:[%s1038 + $0x58] sm:$0xff]
  %v1051 = vld [vmem:[%s1038 + $0x60] sm:$0xff]
  %v1052 = vld [vmem:[%s1038 + $0x68] sm:$0xff]
  %v1053 = vld [vmem:[%s1038 + $0x70] sm:$0xff]
  %v1054 = vld [vmem:[%s1038 + $0x78] sm:$0xff]
  %v1055 = vld [vmem:[%s1038 + $0x80] sm:$0xff]
  %v1056 = vld [vmem:[%s1038 + $0x88] sm:$0xff]
  %v1057 = vld [vmem:[%s1038 + $0x90] sm:$0xff]
  %v1058 = vld [vmem:[%s1038 + $0x98] sm:$0xff]
  %v1059 = vld [vmem:[%s1038 + $0xa0] sm:$0xff]
  %v1060 = vld [vmem:[%s1038 + $0xa8] sm:$0xff]
  %v1061 = vld [vmem:[%s1038 + $0xb0] sm:$0xff]
  %v1062 = vld [vmem:[%s1038 + $0xb8] sm:$0xff]
  %v1063 = vld [vmem:[%s1038 + $0xc0] sm:$0xff]
  %v1064 = vld [vmem:[%s1038 + $0xc8] sm:$0xff]
  %v1065 = vld [vmem:[%s1038 + $0xd0] sm:$0xff]
  %v1066 = vld [vmem:[%s1038 + $0xd8] sm:$0xff]
  %v1067 = vld [vmem:[%s1038 + $0xe0] sm:$0xff]
  %v1068 = vld [vmem:[%s1038 + $0xe8] sm:$0xff]
  %v1069 = vld [vmem:[%s1038 + $0xf0] sm:$0xff]
  %v1070 = vld [vmem:[%s1038 + $0xf8] sm:$0xff]
  %v1071 = vld [vmem:[%s1038 + $0x100] sm:$0xff]
  %v1072 = vld [vmem:[%s1038 + $0x108] sm:$0xff]
  %v1073 = vld [vmem:[%s1038 + $0x110] sm:$0xff]
  %v1074 = vld [vmem:[%s1038 + $0x118] sm:$0xff]
  %v1075 = vld [vmem:[%s1038 + $0x120] sm:$0xff]
  %v1076 = vld [vmem:[%s1038 + $0x128] sm:$0xff]
  %v1077 = vld [vmem:[%s1038 + $0x130] sm:$0xff]
  %v1078 = vld [vmem:[%s1038 + $0x138] sm:$0xff]
  %v1079 = vld [vmem:[%s1038 + $0x140] sm:$0xff]
  %v1080 = vld [vmem:[%s1038 + $0x148] sm:$0xff]
  %v1081 = vld [vmem:[%s1038 + $0x150] sm:$0xff]
  %v1082 = vld [vmem:[%s1038 + $0x158] sm:$0xff]
  %v1083 = vld [vmem:[%s1038 + $0x160] sm:$0xff]
  %v1084 = vld [vmem:[%s1038 + $0x168] sm:$0xff]
  %v1085 = vld [vmem:[%s1038 + $0x170] sm:$0xff]
  %v1086 = vld [vmem:[%s1038 + $0x178] sm:$0xff]
  %v1087 = vld [vmem:[%s1038 + $0x180] sm:$0xff]
  %v1088 = vld [vmem:[%s1038 + $0x188] sm:$0xff]
  %v1089 = vld [vmem:[%s1038 + $0x190] sm:$0xff]
  %v1090 = vld [vmem:[%s1038 + $0x198] sm:$0xff]
  %v1091 = vld [vmem:[%s1038 + $0x1a0] sm:$0xff]
  %v1092 = vld [vmem:[%s1038 + $0x1a8] sm:$0xff]
  %v1093 = vld [vmem:[%s1038 + $0x1b0] sm:$0xff]
  %v1094 = vld [vmem:[%s1038 + $0x1b8] sm:$0xff]
  %v1095 = vld [vmem:[%s1038 + $0x1c0] sm:$0xff]
  %v1096 = vld [vmem:[%s1038 + $0x1c8] sm:$0xff]
  %v1097 = vld [vmem:[%s1038 + $0x1d0] sm:$0xff]
  %v1098 = vld [vmem:[%s1038 + $0x1d8] sm:$0xff]
  %v1099 = vld [vmem:[%s1038 + $0x1e0] sm:$0xff]
  %v1100 = vld [vmem:[%s1038 + $0x1e8] sm:$0xff]
  %v1101 = vld [vmem:[%s1038 + $0x1f0] sm:$0xff]
  %v1102 = vld [vmem:[%s1038 + $0x1f8] sm:$0xff]
  %s1103 = scalar_lea.vmem %s1, 2
  %v1104 = vld [vmem:[%s1103] sm:$0x1]
  %1106 = vset.pattern.permute.xlu0 0
  %1107 = vperm.xlu0 %1106, %v1039
  %v1108 = vpop.permute.xlu0 %1107
  %1111 = vset.pattern.permute.xlu0 0
  %1112 = vperm.xlu0 %1111, %v1040
  %v1113 = vpop.permute.xlu0 %1112
  %1116 = vset.pattern.permute.xlu0 0
  %1117 = vperm.xlu0 %1116, %v1041
  %v1118 = vpop.permute.xlu0 %1117
  %1121 = vset.pattern.permute.xlu0 0
  %1122 = vperm.xlu0 %1121, %v1042
  %v1123 = vpop.permute.xlu0 %1122
  %1126 = vset.pattern.permute.xlu0 0
  %1127 = vperm.xlu0 %1126, %v1043
  %v1128 = vpop.permute.xlu0 %1127
  %1131 = vset.pattern.permute.xlu0 0
  %1132 = vperm.xlu0 %1131, %v1044
  %v1133 = vpop.permute.xlu0 %1132
  %1136 = vset.pattern.permute.xlu0 0
  %1137 = vperm.xlu0 %1136, %v1045
  %v1138 = vpop.permute.xlu0 %1137
  %1141 = vset.pattern.permute.xlu0 0
  %1142 = vperm.xlu0 %1141, %v1046
  %v1143 = vpop.permute.xlu0 %1142
  %1146 = vset.pattern.permute.xlu0 0
  %1147 = vperm.xlu0 %1146, %v1047
  %v1148 = vpop.permute.xlu0 %1147
  %1151 = vset.pattern.permute.xlu0 0
  %1152 = vperm.xlu0 %1151, %v1048
  %v1153 = vpop.permute.xlu0 %1152
  %1156 = vset.pattern.permute.xlu0 0
  %1157 = vperm.xlu0 %1156, %v1049
  %v1158 = vpop.permute.xlu0 %1157
  %1161 = vset.pattern.permute.xlu0 0
  %1162 = vperm.xlu0 %1161, %v1050
  %v1163 = vpop.permute.xlu0 %1162
  %1166 = vset.pattern.permute.xlu0 0
  %1167 = vperm.xlu0 %1166, %v1051
  %v1168 = vpop.permute.xlu0 %1167
  %1171 = vset.pattern.permute.xlu0 0
  %1172 = vperm.xlu0 %1171, %v1052
  %v1173 = vpop.permute.xlu0 %1172
  %1176 = vset.pattern.permute.xlu0 0
  %1177 = vperm.xlu0 %1176, %v1053
  %v1178 = vpop.permute.xlu0 %1177
  %1181 = vset.pattern.permute.xlu0 0
  %1182 = vperm.xlu0 %1181, %v1054
  %v1183 = vpop.permute.xlu0 %1182
  %1186 = vset.pattern.permute.xlu0 0
  %1187 = vperm.xlu0 %1186, %v1055
  %v1188 = vpop.permute.xlu0 %1187
  %1191 = vset.pattern.permute.xlu0 0
  %1192 = vperm.xlu0 %1191, %v1056
  %v1193 = vpop.permute.xlu0 %1192
  %1196 = vset.pattern.permute.xlu0 0
  %1197 = vperm.xlu0 %1196, %v1057
  %v1198 = vpop.permute.xlu0 %1197
  %1201 = vset.pattern.permute.xlu0 0
  %1202 = vperm.xlu0 %1201, %v1058
  %v1203 = vpop.permute.xlu0 %1202
  %1206 = vset.pattern.permute.xlu0 0
  %1207 = vperm.xlu0 %1206, %v1059
  %v1208 = vpop.permute.xlu0 %1207
  %1211 = vset.pattern.permute.xlu0 0
  %1212 = vperm.xlu0 %1211, %v1060
  %v1213 = vpop.permute.xlu0 %1212
  %1216 = vset.pattern.permute.xlu0 0
  %1217 = vperm.xlu0 %1216, %v1061
  %v1218 = vpop.permute.xlu0 %1217
  %1221 = vset.pattern.permute.xlu0 0
  %1222 = vperm.xlu0 %1221, %v1062
  %v1223 = vpop.permute.xlu0 %1222
  %1226 = vset.pattern.permute.xlu0 0
  %1227 = vperm.xlu0 %1226, %v1063
  %v1228 = vpop.permute.xlu0 %1227
  %1231 = vset.pattern.permute.xlu0 0
  %1232 = vperm.xlu0 %1231, %v1064
  %v1233 = vpop.permute.xlu0 %1232
  %1236 = vset.pattern.permute.xlu0 0
  %1237 = vperm.xlu0 %1236, %v1065
  %v1238 = vpop.permute.xlu0 %1237
  %1241 = vset.pattern.permute.xlu0 0
  %1242 = vperm.xlu0 %1241, %v1066
  %v1243 = vpop.permute.xlu0 %1242
  %1246 = vset.pattern.permute.xlu0 0
  %1247 = vperm.xlu0 %1246, %v1067
  %v1248 = vpop.permute.xlu0 %1247
  %1251 = vset.pattern.permute.xlu0 0
  %1252 = vperm.xlu0 %1251, %v1068
  %v1253 = vpop.permute.xlu0 %1252
  %1256 = vset.pattern.permute.xlu0 0
  %1257 = vperm.xlu0 %1256, %v1069
  %v1258 = vpop.permute.xlu0 %1257
  %1261 = vset.pattern.permute.xlu0 0
  %1262 = vperm.xlu0 %1261, %v1070
  %v1263 = vpop.permute.xlu0 %1262
  %1266 = vset.pattern.permute.xlu0 0
  %1267 = vperm.xlu0 %1266, %v1071
  %v1268 = vpop.permute.xlu0 %1267
  %1271 = vset.pattern.permute.xlu0 0
  %1272 = vperm.xlu0 %1271, %v1072
  %v1273 = vpop.permute.xlu0 %1272
  %1276 = vset.pattern.permute.xlu0 0
  %1277 = vperm.xlu0 %1276, %v1073
  %v1278 = vpop.permute.xlu0 %1277
  %1281 = vset.pattern.permute.xlu0 0
  %1282 = vperm.xlu0 %1281, %v1074
  %v1283 = vpop.permute.xlu0 %1282
  %1286 = vset.pattern.permute.xlu0 0
  %1287 = vperm.xlu0 %1286, %v1075
  %v1288 = vpop.permute.xlu0 %1287
  %1291 = vset.pattern.permute.xlu0 0
  %1292 = vperm.xlu0 %1291, %v1076
  %v1293 = vpop.permute.xlu0 %1292
  %1296 = vset.pattern.permute.xlu0 0
  %1297 = vperm.xlu0 %1296, %v1077
  %v1298 = vpop.permute.xlu0 %1297
  %1301 = vset.pattern.permute.xlu0 0
  %1302 = vperm.xlu0 %1301, %v1078
  %v1303 = vpop.permute.xlu0 %1302
  %1306 = vset.pattern.permute.xlu0 0
  %1307 = vperm.xlu0 %1306, %v1079
  %v1308 = vpop.permute.xlu0 %1307
  %1311 = vset.pattern.permute.xlu0 0
  %1312 = vperm.xlu0 %1311, %v1080
  %v1313 = vpop.permute.xlu0 %1312
  %1316 = vset.pattern.permute.xlu0 0
  %1317 = vperm.xlu0 %1316, %v1081
  %v1318 = vpop.permute.xlu0 %1317
  %1321 = vset.pattern.permute.xlu0 0
  %1322 = vperm.xlu0 %1321, %v1082
  %v1323 = vpop.permute.xlu0 %1322
  %1326 = vset.pattern.permute.xlu0 0
  %1327 = vperm.xlu0 %1326, %v1083
  %v1328 = vpop.permute.xlu0 %1327
  %1331 = vset.pattern.permute.xlu0 0
  %1332 = vperm.xlu0 %1331, %v1084
  %v1333 = vpop.permute.xlu0 %1332
  %1336 = vset.pattern.permute.xlu0 0
  %1337 = vperm.xlu0 %1336, %v1085
  %v1338 = vpop.permute.xlu0 %1337
  %1341 = vset.pattern.permute.xlu0 0
  %1342 = vperm.xlu0 %1341, %v1086
  %v1343 = vpop.permute.xlu0 %1342
  %1346 = vset.pattern.permute.xlu0 0
  %1347 = vperm.xlu0 %1346, %v1087
  %v1348 = vpop.permute.xlu0 %1347
  %1351 = vset.pattern.permute.xlu0 0
  %1352 = vperm.xlu0 %1351, %v1088
  %v1353 = vpop.permute.xlu0 %1352
  %1356 = vset.pattern.permute.xlu0 0
  %1357 = vperm.xlu0 %1356, %v1089
  %v1358 = vpop.permute.xlu0 %1357
  %1361 = vset.pattern.permute.xlu0 0
  %1362 = vperm.xlu0 %1361, %v1090
  %v1363 = vpop.permute.xlu0 %1362
  %1366 = vset.pattern.permute.xlu0 0
  %1367 = vperm.xlu0 %1366, %v1091
  %v1368 = vpop.permute.xlu0 %1367
  %1371 = vset.pattern.permute.xlu0 0
  %1372 = vperm.xlu0 %1371, %v1092
  %v1373 = vpop.permute.xlu0 %1372
  %1376 = vset.pattern.permute.xlu0 0
  %1377 = vperm.xlu0 %1376, %v1093
  %v1378 = vpop.permute.xlu0 %1377
  %1381 = vset.pattern.permute.xlu0 0
  %1382 = vperm.xlu0 %1381, %v1094
  %v1383 = vpop.permute.xlu0 %1382
  %1386 = vset.pattern.permute.xlu0 0
  %1387 = vperm.xlu0 %1386, %v1095
  %v1388 = vpop.permute.xlu0 %1387
  %1391 = vset.pattern.permute.xlu0 0
  %1392 = vperm.xlu0 %1391, %v1096
  %v1393 = vpop.permute.xlu0 %1392
  %1396 = vset.pattern.permute.xlu0 0
  %1397 = vperm.xlu0 %1396, %v1097
  %v1398 = vpop.permute.xlu0 %1397
  %1401 = vset.pattern.permute.xlu0 0
  %1402 = vperm.xlu0 %1401, %v1098
  %v1403 = vpop.permute.xlu0 %1402
  %1406 = vset.pattern.permute.xlu0 0
  %1407 = vperm.xlu0 %1406, %v1099
  %v1408 = vpop.permute.xlu0 %1407
  %1411 = vset.pattern.permute.xlu0 0
  %1412 = vperm.xlu0 %1411, %v1100
  %v1413 = vpop.permute.xlu0 %1412
  %1416 = vset.pattern.permute.xlu0 0
  %1417 = vperm.xlu0 %1416, %v1101
  %v1418 = vpop.permute.xlu0 %1417
  %1421 = vset.pattern.permute.xlu0 0
  %1422 = vperm.xlu0 %1421, %v1102
  %v1423 = vpop.permute.xlu0 %1422
  %v1426 = vlaneseq
  %v1427 = vshrl.u32 %v1426, 7
  %v1428 = vsub.s32 0, %v1427
  %v1429 = vrot.slane %v1104, %v1428
  %v1431 = vmul.f32 %v1108, %v1429
  %v1432 = vmul.f32 %v1113, %v1429
  %v1433 = vmul.f32 %v1118, %v1429
  %v1434 = vmul.f32 %v1123, %v1429
  %v1435 = vmul.f32 %v1128, %v1429
  %v1436 = vmul.f32 %v1133, %v1429
  %v1437 = vmul.f32 %v1138, %v1429
  %v1438 = vmul.f32 %v1143, %v1429
  %v1439 = vmul.f32 %v1148, %v1429
  %v1440 = vmul.f32 %v1153, %v1429
  %v1441 = vmul.f32 %v1158, %v1429
  %v1442 = vmul.f32 %v1163, %v1429
  %v1443 = vmul.f32 %v1168, %v1429
  %v1444 = vmul.f32 %v1173, %v1429
  %v1445 = vmul.f32 %v1178, %v1429
  %v1446 = vmul.f32 %v1183, %v1429
  %v1447 = vmul.f32 %v1188, %v1429
  %v1448 = vmul.f32 %v1193, %v1429
  %v1449 = vmul.f32 %v1198, %v1429
  %v1450 = vmul.f32 %v1203, %v1429
  %v1451 = vmul.f32 %v1208, %v1429
  %v1452 = vmul.f32 %v1213, %v1429
  %v1453 = vmul.f32 %v1218, %v1429
  %v1454 = vmul.f32 %v1223, %v1429
  %v1455 = vmul.f32 %v1228, %v1429
  %v1456 = vmul.f32 %v1233, %v1429
  %v1457 = vmul.f32 %v1238, %v1429
  %v1458 = vmul.f32 %v1243, %v1429
  %v1459 = vmul.f32 %v1248, %v1429
  %v1460 = vmul.f32 %v1253, %v1429
  %v1461 = vmul.f32 %v1258, %v1429
  %v1462 = vmul.f32 %v1263, %v1429
  %v1463 = vmul.f32 %v1268, %v1429
  %v1464 = vmul.f32 %v1273, %v1429
  %v1465 = vmul.f32 %v1278, %v1429
  %v1466 = vmul.f32 %v1283, %v1429
  %v1467 = vmul.f32 %v1288, %v1429
  %v1468 = vmul.f32 %v1293, %v1429
  %v1469 = vmul.f32 %v1298, %v1429
  %v1470 = vmul.f32 %v1303, %v1429
  %v1471 = vmul.f32 %v1308, %v1429
  %v1472 = vmul.f32 %v1313, %v1429
  %v1473 = vmul.f32 %v1318, %v1429
  %v1474 = vmul.f32 %v1323, %v1429
  %v1475 = vmul.f32 %v1328, %v1429
  %v1476 = vmul.f32 %v1333, %v1429
  %v1477 = vmul.f32 %v1338, %v1429
  %v1478 = vmul.f32 %v1343, %v1429
  %v1479 = vmul.f32 %v1348, %v1429
  %v1480 = vmul.f32 %v1353, %v1429
  %v1481 = vmul.f32 %v1358, %v1429
  %v1482 = vmul.f32 %v1363, %v1429
  %v1483 = vmul.f32 %v1368, %v1429
  %v1484 = vmul.f32 %v1373, %v1429
  %v1485 = vmul.f32 %v1378, %v1429
  %v1486 = vmul.f32 %v1383, %v1429
  %v1487 = vmul.f32 %v1388, %v1429
  %v1488 = vmul.f32 %v1393, %v1429
  %v1489 = vmul.f32 %v1398, %v1429
  %v1490 = vmul.f32 %v1403, %v1429
  %v1491 = vmul.f32 %v1408, %v1429
  %v1492 = vmul.f32 %v1413, %v1429
  %v1493 = vmul.f32 %v1418, %v1429
  %v1494 = vmul.f32 %v1423, %v1429
  %v1495 = vadd.f32 %v974, %v1431
  %v1496 = vadd.f32 %v975, %v1432
  %v1497 = vadd.f32 %v976, %v1433
  %v1498 = vadd.f32 %v977, %v1434
  %v1499 = vadd.f32 %v978, %v1435
  %v1500 = vadd.f32 %v979, %v1436
  %v1501 = vadd.f32 %v980, %v1437
  %v1502 = vadd.f32 %v981, %v1438
  %v1503 = vadd.f32 %v982, %v1439
  %v1504 = vadd.f32 %v983, %v1440
  %v1505 = vadd.f32 %v984, %v1441
  %v1506 = vadd.f32 %v985, %v1442
  %v1507 = vadd.f32 %v986, %v1443
  %v1508 = vadd.f32 %v987, %v1444
  %v1509 = vadd.f32 %v988, %v1445
  %v1510 = vadd.f32 %v989, %v1446
  %v1511 = vadd.f32 %v990, %v1447
  %v1512 = vadd.f32 %v991, %v1448
  %v1513 = vadd.f32 %v992, %v1449
  %v1514 = vadd.f32 %v993, %v1450
  %v1515 = vadd.f32 %v994, %v1451
  %v1516 = vadd.f32 %v995, %v1452
  %v1517 = vadd.f32 %v996, %v1453
  %v1518 = vadd.f32 %v997, %v1454
  %v1519 = vadd.f32 %v998, %v1455
  %v1520 = vadd.f32 %v999, %v1456
  %v1521 = vadd.f32 %v1000, %v1457
  %v1522 = vadd.f32 %v1001, %v1458
  %v1523 = vadd.f32 %v1002, %v1459
  %v1524 = vadd.f32 %v1003, %v1460
  %v1525 = vadd.f32 %v1004, %v1461
  %v1526 = vadd.f32 %v1005, %v1462
  %v1527 = vadd.f32 %v1006, %v1463
  %v1528 = vadd.f32 %v1007, %v1464
  %v1529 = vadd.f32 %v1008, %v1465
  %v1530 = vadd.f32 %v1009, %v1466
  %v1531 = vadd.f32 %v1010, %v1467
  %v1532 = vadd.f32 %v1011, %v1468
  %v1533 = vadd.f32 %v1012, %v1469
  %v1534 = vadd.f32 %v1013, %v1470
  %v1535 = vadd.f32 %v1014, %v1471
  %v1536 = vadd.f32 %v1015, %v1472
  %v1537 = vadd.f32 %v1016, %v1473
  %v1538 = vadd.f32 %v1017, %v1474
  %v1539 = vadd.f32 %v1018, %v1475
  %v1540 = vadd.f32 %v1019, %v1476
  %v1541 = vadd.f32 %v1020, %v1477
  %v1542 = vadd.f32 %v1021, %v1478
  %v1543 = vadd.f32 %v1022, %v1479
  %v1544 = vadd.f32 %v1023, %v1480
  %v1545 = vadd.f32 %v1024, %v1481
  %v1546 = vadd.f32 %v1025, %v1482
  %v1547 = vadd.f32 %v1026, %v1483
  %v1548 = vadd.f32 %v1027, %v1484
  %v1549 = vadd.f32 %v1028, %v1485
  %v1550 = vadd.f32 %v1029, %v1486
  %v1551 = vadd.f32 %v1030, %v1487
  %v1552 = vadd.f32 %v1031, %v1488
  %v1553 = vadd.f32 %v1032, %v1489
  %v1554 = vadd.f32 %v1033, %v1490
  %v1555 = vadd.f32 %v1034, %v1491
  %v1556 = vadd.f32 %v1035, %v1492
  %v1557 = vadd.f32 %v1036, %v1493
  %v1558 = vadd.f32 %v1037, %v1494
  %s1559 = scalar_lea.vmem %s0, 1536
  %v1560 = vld [vmem:[%s1559] sm:$0xff]
  %v1561 = vld [vmem:[%s1559 + $0x8] sm:$0xff]
  %v1562 = vld [vmem:[%s1559 + $0x10] sm:$0xff]
  %v1563 = vld [vmem:[%s1559 + $0x18] sm:$0xff]
  %v1564 = vld [vmem:[%s1559 + $0x20] sm:$0xff]
  %v1565 = vld [vmem:[%s1559 + $0x28] sm:$0xff]
  %v1566 = vld [vmem:[%s1559 + $0x30] sm:$0xff]
  %v1567 = vld [vmem:[%s1559 + $0x38] sm:$0xff]
  %v1568 = vld [vmem:[%s1559 + $0x40] sm:$0xff]
  %v1569 = vld [vmem:[%s1559 + $0x48] sm:$0xff]
  %v1570 = vld [vmem:[%s1559 + $0x50] sm:$0xff]
  %v1571 = vld [vmem:[%s1559 + $0x58] sm:$0xff]
  %v1572 = vld [vmem:[%s1559 + $0x60] sm:$0xff]
  %v1573 = vld [vmem:[%s1559 + $0x68] sm:$0xff]
  %v1574 = vld [vmem:[%s1559 + $0x70] sm:$0xff]
  %v1575 = vld [vmem:[%s1559 + $0x78] sm:$0xff]
  %v1576 = vld [vmem:[%s1559 + $0x80] sm:$0xff]
  %v1577 = vld [vmem:[%s1559 + $0x88] sm:$0xff]
  %v1578 = vld [vmem:[%s1559 + $0x90] sm:$0xff]
  %v1579 = vld [vmem:[%s1559 + $0x98] sm:$0xff]
  %v1580 = vld [vmem:[%s1559 + $0xa0] sm:$0xff]
  %v1581 = vld [vmem:[%s1559 + $0xa8] sm:$0xff]
  %v1582 = vld [vmem:[%s1559 + $0xb0] sm:$0xff]
  %v1583 = vld [vmem:[%s1559 + $0xb8] sm:$0xff]
  %v1584 = vld [vmem:[%s1559 + $0xc0] sm:$0xff]
  %v1585 = vld [vmem:[%s1559 + $0xc8] sm:$0xff]
  %v1586 = vld [vmem:[%s1559 + $0xd0] sm:$0xff]
  %v1587 = vld [vmem:[%s1559 + $0xd8] sm:$0xff]
  %v1588 = vld [vmem:[%s1559 + $0xe0] sm:$0xff]
  %v1589 = vld [vmem:[%s1559 + $0xe8] sm:$0xff]
  %v1590 = vld [vmem:[%s1559 + $0xf0] sm:$0xff]
  %v1591 = vld [vmem:[%s1559 + $0xf8] sm:$0xff]
  %v1592 = vld [vmem:[%s1559 + $0x100] sm:$0xff]
  %v1593 = vld [vmem:[%s1559 + $0x108] sm:$0xff]
  %v1594 = vld [vmem:[%s1559 + $0x110] sm:$0xff]
  %v1595 = vld [vmem:[%s1559 + $0x118] sm:$0xff]
  %v1596 = vld [vmem:[%s1559 + $0x120] sm:$0xff]
  %v1597 = vld [vmem:[%s1559 + $0x128] sm:$0xff]
  %v1598 = vld [vmem:[%s1559 + $0x130] sm:$0xff]
  %v1599 = vld [vmem:[%s1559 + $0x138] sm:$0xff]
  %v1600 = vld [vmem:[%s1559 + $0x140] sm:$0xff]
  %v1601 = vld [vmem:[%s1559 + $0x148] sm:$0xff]
  %v1602 = vld [vmem:[%s1559 + $0x150] sm:$0xff]
  %v1603 = vld [vmem:[%s1559 + $0x158] sm:$0xff]
  %v1604 = vld [vmem:[%s1559 + $0x160] sm:$0xff]
  %v1605 = vld [vmem:[%s1559 + $0x168] sm:$0xff]
  %v1606 = vld [vmem:[%s1559 + $0x170] sm:$0xff]
  %v1607 = vld [vmem:[%s1559 + $0x178] sm:$0xff]
  %v1608 = vld [vmem:[%s1559 + $0x180] sm:$0xff]
  %v1609 = vld [vmem:[%s1559 + $0x188] sm:$0xff]
  %v1610 = vld [vmem:[%s1559 + $0x190] sm:$0xff]
  %v1611 = vld [vmem:[%s1559 + $0x198] sm:$0xff]
  %v1612 = vld [vmem:[%s1559 + $0x1a0] sm:$0xff]
  %v1613 = vld [vmem:[%s1559 + $0x1a8] sm:$0xff]
  %v1614 = vld [vmem:[%s1559 + $0x1b0] sm:$0xff]
  %v1615 = vld [vmem:[%s1559 + $0x1b8] sm:$0xff]
  %v1616 = vld [vmem:[%s1559 + $0x1c0] sm:$0xff]
  %v1617 = vld [vmem:[%s1559 + $0x1c8] sm:$0xff]
  %v1618 = vld [vmem:[%s1559 + $0x1d0] sm:$0xff]
  %v1619 = vld [vmem:[%s1559 + $0x1d8] sm:$0xff]
  %v1620 = vld [vmem:[%s1559 + $0x1e0] sm:$0xff]
  %v1621 = vld [vmem:[%s1559 + $0x1e8] sm:$0xff]
  %v1622 = vld [vmem:[%s1559 + $0x1f0] sm:$0xff]
  %v1623 = vld [vmem:[%s1559 + $0x1f8] sm:$0xff]
  %s1624 = scalar_lea.vmem %s1, 3
  %v1625 = vld [vmem:[%s1624] sm:$0x1]
  %1627 = vset.pattern.permute.xlu0 0
  %1628 = vperm.xlu0 %1627, %v1560
  %v1629 = vpop.permute.xlu0 %1628
  %1632 = vset.pattern.permute.xlu0 0
  %1633 = vperm.xlu0 %1632, %v1561
  %v1634 = vpop.permute.xlu0 %1633
  %1637 = vset.pattern.permute.xlu0 0
  %1638 = vperm.xlu0 %1637, %v1562
  %v1639 = vpop.permute.xlu0 %1638
  %1642 = vset.pattern.permute.xlu0 0
  %1643 = vperm.xlu0 %1642, %v1563
  %v1644 = vpop.permute.xlu0 %1643
  %1647 = vset.pattern.permute.xlu0 0
  %1648 = vperm.xlu0 %1647, %v1564
  %v1649 = vpop.permute.xlu0 %1648
  %1652 = vset.pattern.permute.xlu0 0
  %1653 = vperm.xlu0 %1652, %v1565
  %v1654 = vpop.permute.xlu0 %1653
  %1657 = vset.pattern.permute.xlu0 0
  %1658 = vperm.xlu0 %1657, %v1566
  %v1659 = vpop.permute.xlu0 %1658
  %1662 = vset.pattern.permute.xlu0 0
  %1663 = vperm.xlu0 %1662, %v1567
  %v1664 = vpop.permute.xlu0 %1663
  %1667 = vset.pattern.permute.xlu0 0
  %1668 = vperm.xlu0 %1667, %v1568
  %v1669 = vpop.permute.xlu0 %1668
  %1672 = vset.pattern.permute.xlu0 0
  %1673 = vperm.xlu0 %1672, %v1569
  %v1674 = vpop.permute.xlu0 %1673
  %1677 = vset.pattern.permute.xlu0 0
  %1678 = vperm.xlu0 %1677, %v1570
  %v1679 = vpop.permute.xlu0 %1678
  %1682 = vset.pattern.permute.xlu0 0
  %1683 = vperm.xlu0 %1682, %v1571
  %v1684 = vpop.permute.xlu0 %1683
  %1687 = vset.pattern.permute.xlu0 0
  %1688 = vperm.xlu0 %1687, %v1572
  %v1689 = vpop.permute.xlu0 %1688
  %1692 = vset.pattern.permute.xlu0 0
  %1693 = vperm.xlu0 %1692, %v1573
  %v1694 = vpop.permute.xlu0 %1693
  %1697 = vset.pattern.permute.xlu0 0
  %1698 = vperm.xlu0 %1697, %v1574
  %v1699 = vpop.permute.xlu0 %1698
  %1702 = vset.pattern.permute.xlu0 0
  %1703 = vperm.xlu0 %1702, %v1575
  %v1704 = vpop.permute.xlu0 %1703
  %1707 = vset.pattern.permute.xlu0 0
  %1708 = vperm.xlu0 %1707, %v1576
  %v1709 = vpop.permute.xlu0 %1708
  %1712 = vset.pattern.permute.xlu0 0
  %1713 = vperm.xlu0 %1712, %v1577
  %v1714 = vpop.permute.xlu0 %1713
  %1717 = vset.pattern.permute.xlu0 0
  %1718 = vperm.xlu0 %1717, %v1578
  %v1719 = vpop.permute.xlu0 %1718
  %1722 = vset.pattern.permute.xlu0 0
  %1723 = vperm.xlu0 %1722, %v1579
  %v1724 = vpop.permute.xlu0 %1723
  %1727 = vset.pattern.permute.xlu0 0
  %1728 = vperm.xlu0 %1727, %v1580
  %v1729 = vpop.permute.xlu0 %1728
  %1732 = vset.pattern.permute.xlu0 0
  %1733 = vperm.xlu0 %1732, %v1581
  %v1734 = vpop.permute.xlu0 %1733
  %1737 = vset.pattern.permute.xlu0 0
  %1738 = vperm.xlu0 %1737, %v1582
  %v1739 = vpop.permute.xlu0 %1738
  %1742 = vset.pattern.permute.xlu0 0
  %1743 = vperm.xlu0 %1742, %v1583
  %v1744 = vpop.permute.xlu0 %1743
  %1747 = vset.pattern.permute.xlu0 0
  %1748 = vperm.xlu0 %1747, %v1584
  %v1749 = vpop.permute.xlu0 %1748
  %1752 = vset.pattern.permute.xlu0 0
  %1753 = vperm.xlu0 %1752, %v1585
  %v1754 = vpop.permute.xlu0 %1753
  %1757 = vset.pattern.permute.xlu0 0
  %1758 = vperm.xlu0 %1757, %v1586
  %v1759 = vpop.permute.xlu0 %1758
  %1762 = vset.pattern.permute.xlu0 0
  %1763 = vperm.xlu0 %1762, %v1587
  %v1764 = vpop.permute.xlu0 %1763
  %1767 = vset.pattern.permute.xlu0 0
  %1768 = vperm.xlu0 %1767, %v1588
  %v1769 = vpop.permute.xlu0 %1768
  %1772 = vset.pattern.permute.xlu0 0
  %1773 = vperm.xlu0 %1772, %v1589
  %v1774 = vpop.permute.xlu0 %1773
  %1777 = vset.pattern.permute.xlu0 0
  %1778 = vperm.xlu0 %1777, %v1590
  %v1779 = vpop.permute.xlu0 %1778
  %1782 = vset.pattern.permute.xlu0 0
  %1783 = vperm.xlu0 %1782, %v1591
  %v1784 = vpop.permute.xlu0 %1783
  %1787 = vset.pattern.permute.xlu0 0
  %1788 = vperm.xlu0 %1787, %v1592
  %v1789 = vpop.permute.xlu0 %1788
  %1792 = vset.pattern.permute.xlu0 0
  %1793 = vperm.xlu0 %1792, %v1593
  %v1794 = vpop.permute.xlu0 %1793
  %1797 = vset.pattern.permute.xlu0 0
  %1798 = vperm.xlu0 %1797, %v1594
  %v1799 = vpop.permute.xlu0 %1798
  %1802 = vset.pattern.permute.xlu0 0
  %1803 = vperm.xlu0 %1802, %v1595
  %v1804 = vpop.permute.xlu0 %1803
  %1807 = vset.pattern.permute.xlu0 0
  %1808 = vperm.xlu0 %1807, %v1596
  %v1809 = vpop.permute.xlu0 %1808
  %1812 = vset.pattern.permute.xlu0 0
  %1813 = vperm.xlu0 %1812, %v1597
  %v1814 = vpop.permute.xlu0 %1813
  %1817 = vset.pattern.permute.xlu0 0
  %1818 = vperm.xlu0 %1817, %v1598
  %v1819 = vpop.permute.xlu0 %1818
  %1822 = vset.pattern.permute.xlu0 0
  %1823 = vperm.xlu0 %1822, %v1599
  %v1824 = vpop.permute.xlu0 %1823
  %1827 = vset.pattern.permute.xlu0 0
  %1828 = vperm.xlu0 %1827, %v1600
  %v1829 = vpop.permute.xlu0 %1828
  %1832 = vset.pattern.permute.xlu0 0
  %1833 = vperm.xlu0 %1832, %v1601
  %v1834 = vpop.permute.xlu0 %1833
  %1837 = vset.pattern.permute.xlu0 0
  %1838 = vperm.xlu0 %1837, %v1602
  %v1839 = vpop.permute.xlu0 %1838
  %1842 = vset.pattern.permute.xlu0 0
  %1843 = vperm.xlu0 %1842, %v1603
  %v1844 = vpop.permute.xlu0 %1843
  %1847 = vset.pattern.permute.xlu0 0
  %1848 = vperm.xlu0 %1847, %v1604
  %v1849 = vpop.permute.xlu0 %1848
  %1852 = vset.pattern.permute.xlu0 0
  %1853 = vperm.xlu0 %1852, %v1605
  %v1854 = vpop.permute.xlu0 %1853
  %1857 = vset.pattern.permute.xlu0 0
  %1858 = vperm.xlu0 %1857, %v1606
  %v1859 = vpop.permute.xlu0 %1858
  %1862 = vset.pattern.permute.xlu0 0
  %1863 = vperm.xlu0 %1862, %v1607
  %v1864 = vpop.permute.xlu0 %1863
  %1867 = vset.pattern.permute.xlu0 0
  %1868 = vperm.xlu0 %1867, %v1608
  %v1869 = vpop.permute.xlu0 %1868
  %1872 = vset.pattern.permute.xlu0 0
  %1873 = vperm.xlu0 %1872, %v1609
  %v1874 = vpop.permute.xlu0 %1873
  %1877 = vset.pattern.permute.xlu0 0
  %1878 = vperm.xlu0 %1877, %v1610
  %v1879 = vpop.permute.xlu0 %1878
  %1882 = vset.pattern.permute.xlu0 0
  %1883 = vperm.xlu0 %1882, %v1611
  %v1884 = vpop.permute.xlu0 %1883
  %1887 = vset.pattern.permute.xlu0 0
  %1888 = vperm.xlu0 %1887, %v1612
  %v1889 = vpop.permute.xlu0 %1888
  %1892 = vset.pattern.permute.xlu0 0
  %1893 = vperm.xlu0 %1892, %v1613
  %v1894 = vpop.permute.xlu0 %1893
  %1897 = vset.pattern.permute.xlu0 0
  %1898 = vperm.xlu0 %1897, %v1614
  %v1899 = vpop.permute.xlu0 %1898
  %1902 = vset.pattern.permute.xlu0 0
  %1903 = vperm.xlu0 %1902, %v1615
  %v1904 = vpop.permute.xlu0 %1903
  %1907 = vset.pattern.permute.xlu0 0
  %1908 = vperm.xlu0 %1907, %v1616
  %v1909 = vpop.permute.xlu0 %1908
  %1912 = vset.pattern.permute.xlu0 0
  %1913 = vperm.xlu0 %1912, %v1617
  %v1914 = vpop.permute.xlu0 %1913
  %1917 = vset.pattern.permute.xlu0 0
  %1918 = vperm.xlu0 %1917, %v1618
  %v1919 = vpop.permute.xlu0 %1918
  %1922 = vset.pattern.permute.xlu0 0
  %1923 = vperm.xlu0 %1922, %v1619
  %v1924 = vpop.permute.xlu0 %1923
  %1927 = vset.pattern.permute.xlu0 0
  %1928 = vperm.xlu0 %1927, %v1620
  %v1929 = vpop.permute.xlu0 %1928
  %1932 = vset.pattern.permute.xlu0 0
  %1933 = vperm.xlu0 %1932, %v1621
  %v1934 = vpop.permute.xlu0 %1933
  %1937 = vset.pattern.permute.xlu0 0
  %1938 = vperm.xlu0 %1937, %v1622
  %v1939 = vpop.permute.xlu0 %1938
  %1942 = vset.pattern.permute.xlu0 0
  %1943 = vperm.xlu0 %1942, %v1623
  %v1944 = vpop.permute.xlu0 %1943
  %v1947 = vlaneseq
  %v1948 = vshrl.u32 %v1947, 7
  %v1949 = vsub.s32 0, %v1948
  %v1950 = vrot.slane %v1625, %v1949
  %v1952 = vmul.f32 %v1629, %v1950
  %v1953 = vmul.f32 %v1634, %v1950
  %v1954 = vmul.f32 %v1639, %v1950
  %v1955 = vmul.f32 %v1644, %v1950
  %v1956 = vmul.f32 %v1649, %v1950
  %v1957 = vmul.f32 %v1654, %v1950
  %v1958 = vmul.f32 %v1659, %v1950
  %v1959 = vmul.f32 %v1664, %v1950
  %v1960 = vmul.f32 %v1669, %v1950
  %v1961 = vmul.f32 %v1674, %v1950
  %v1962 = vmul.f32 %v1679, %v1950
  %v1963 = vmul.f32 %v1684, %v1950
  %v1964 = vmul.f32 %v1689, %v1950
  %v1965 = vmul.f32 %v1694, %v1950
  %v1966 = vmul.f32 %v1699, %v1950
  %v1967 = vmul.f32 %v1704, %v1950
  %v1968 = vmul.f32 %v1709, %v1950
  %v1969 = vmul.f32 %v1714, %v1950
  %v1970 = vmul.f32 %v1719, %v1950
  %v1971 = vmul.f32 %v1724, %v1950
  %v1972 = vmul.f32 %v1729, %v1950
  %v1973 = vmul.f32 %v1734, %v1950
  %v1974 = vmul.f32 %v1739, %v1950
  %v1975 = vmul.f32 %v1744, %v1950
  %v1976 = vmul.f32 %v1749, %v1950
  %v1977 = vmul.f32 %v1754, %v1950
  %v1978 = vmul.f32 %v1759, %v1950
  %v1979 = vmul.f32 %v1764, %v1950
  %v1980 = vmul.f32 %v1769, %v1950
  %v1981 = vmul.f32 %v1774, %v1950
  %v1982 = vmul.f32 %v1779, %v1950
  %v1983 = vmul.f32 %v1784, %v1950
  %v1984 = vmul.f32 %v1789, %v1950
  %v1985 = vmul.f32 %v1794, %v1950
  %v1986 = vmul.f32 %v1799, %v1950
  %v1987 = vmul.f32 %v1804, %v1950
  %v1988 = vmul.f32 %v1809, %v1950
  %v1989 = vmul.f32 %v1814, %v1950
  %v1990 = vmul.f32 %v1819, %v1950
  %v1991 = vmul.f32 %v1824, %v1950
  %v1992 = vmul.f32 %v1829, %v1950
  %v1993 = vmul.f32 %v1834, %v1950
  %v1994 = vmul.f32 %v1839, %v1950
  %v1995 = vmul.f32 %v1844, %v1950
  %v1996 = vmul.f32 %v1849, %v1950
  %v1997 = vmul.f32 %v1854, %v1950
  %v1998 = vmul.f32 %v1859, %v1950
  %v1999 = vmul.f32 %v1864, %v1950
  %v2000 = vmul.f32 %v1869, %v1950
  %v2001 = vmul.f32 %v1874, %v1950
  %v2002 = vmul.f32 %v1879, %v1950
  %v2003 = vmul.f32 %v1884, %v1950
  %v2004 = vmul.f32 %v1889, %v1950
  %v2005 = vmul.f32 %v1894, %v1950
  %v2006 = vmul.f32 %v1899, %v1950
  %v2007 = vmul.f32 %v1904, %v1950
  %v2008 = vmul.f32 %v1909, %v1950
  %v2009 = vmul.f32 %v1914, %v1950
  %v2010 = vmul.f32 %v1919, %v1950
  %v2011 = vmul.f32 %v1924, %v1950
  %v2012 = vmul.f32 %v1929, %v1950
  %v2013 = vmul.f32 %v1934, %v1950
  %v2014 = vmul.f32 %v1939, %v1950
  %v2015 = vmul.f32 %v1944, %v1950
  %v2016 = vadd.f32 %v1495, %v1952
  %v2017 = vadd.f32 %v1496, %v1953
  %v2018 = vadd.f32 %v1497, %v1954
  %v2019 = vadd.f32 %v1498, %v1955
  %v2020 = vadd.f32 %v1499, %v1956
  %v2021 = vadd.f32 %v1500, %v1957
  %v2022 = vadd.f32 %v1501, %v1958
  %v2023 = vadd.f32 %v1502, %v1959
  %v2024 = vadd.f32 %v1503, %v1960
  %v2025 = vadd.f32 %v1504, %v1961
  %v2026 = vadd.f32 %v1505, %v1962
  %v2027 = vadd.f32 %v1506, %v1963
  %v2028 = vadd.f32 %v1507, %v1964
  %v2029 = vadd.f32 %v1508, %v1965
  %v2030 = vadd.f32 %v1509, %v1966
  %v2031 = vadd.f32 %v1510, %v1967
  %v2032 = vadd.f32 %v1511, %v1968
  %v2033 = vadd.f32 %v1512, %v1969
  %v2034 = vadd.f32 %v1513, %v1970
  %v2035 = vadd.f32 %v1514, %v1971
  %v2036 = vadd.f32 %v1515, %v1972
  %v2037 = vadd.f32 %v1516, %v1973
  %v2038 = vadd.f32 %v1517, %v1974
  %v2039 = vadd.f32 %v1518, %v1975
  %v2040 = vadd.f32 %v1519, %v1976
  %v2041 = vadd.f32 %v1520, %v1977
  %v2042 = vadd.f32 %v1521, %v1978
  %v2043 = vadd.f32 %v1522, %v1979
  %v2044 = vadd.f32 %v1523, %v1980
  %v2045 = vadd.f32 %v1524, %v1981
  %v2046 = vadd.f32 %v1525, %v1982
  %v2047 = vadd.f32 %v1526, %v1983
  %v2048 = vadd.f32 %v1527, %v1984
  %v2049 = vadd.f32 %v1528, %v1985
  %v2050 = vadd.f32 %v1529, %v1986
  %v2051 = vadd.f32 %v1530, %v1987
  %v2052 = vadd.f32 %v1531, %v1988
  %v2053 = vadd.f32 %v1532, %v1989
  %v2054 = vadd.f32 %v1533, %v1990
  %v2055 = vadd.f32 %v1534, %v1991
  %v2056 = vadd.f32 %v1535, %v1992
  %v2057 = vadd.f32 %v1536, %v1993
  %v2058 = vadd.f32 %v1537, %v1994
  %v2059 = vadd.f32 %v1538, %v1995
  %v2060 = vadd.f32 %v1539, %v1996
  %v2061 = vadd.f32 %v1540, %v1997
  %v2062 = vadd.f32 %v1541, %v1998
  %v2063 = vadd.f32 %v1542, %v1999
  %v2064 = vadd.f32 %v1543, %v2000
  %v2065 = vadd.f32 %v1544, %v2001
  %v2066 = vadd.f32 %v1545, %v2002
  %v2067 = vadd.f32 %v1546, %v2003
  %v2068 = vadd.f32 %v1547, %v2004
  %v2069 = vadd.f32 %v1548, %v2005
  %v2070 = vadd.f32 %v1549, %v2006
  %v2071 = vadd.f32 %v1550, %v2007
  %v2072 = vadd.f32 %v1551, %v2008
  %v2073 = vadd.f32 %v1552, %v2009
  %v2074 = vadd.f32 %v1553, %v2010
  %v2075 = vadd.f32 %v1554, %v2011
  %v2076 = vadd.f32 %v1555, %v2012
  %v2077 = vadd.f32 %v1556, %v2013
  %v2078 = vadd.f32 %v1557, %v2014
  %v2079 = vadd.f32 %v1558, %v2015
  %s2080 = scalar_lea.vmem %s0, 2048
  %v2081 = vld [vmem:[%s2080] sm:$0xff]
  %v2082 = vld [vmem:[%s2080 + $0x8] sm:$0xff]
  %v2083 = vld [vmem:[%s2080 + $0x10] sm:$0xff]
  %v2084 = vld [vmem:[%s2080 + $0x18] sm:$0xff]
  %v2085 = vld [vmem:[%s2080 + $0x20] sm:$0xff]
  %v2086 = vld [vmem:[%s2080 + $0x28] sm:$0xff]
  %v2087 = vld [vmem:[%s2080 + $0x30] sm:$0xff]
  %v2088 = vld [vmem:[%s2080 + $0x38] sm:$0xff]
  %v2089 = vld [vmem:[%s2080 + $0x40] sm:$0xff]
  %v2090 = vld [vmem:[%s2080 + $0x48] sm:$0xff]
  %v2091 = vld [vmem:[%s2080 + $0x50] sm:$0xff]
  %v2092 = vld [vmem:[%s2080 + $0x58] sm:$0xff]
  %v2093 = vld [vmem:[%s2080 + $0x60] sm:$0xff]
  %v2094 = vld [vmem:[%s2080 + $0x68] sm:$0xff]
  %v2095 = vld [vmem:[%s2080 + $0x70] sm:$0xff]
  %v2096 = vld [vmem:[%s2080 + $0x78] sm:$0xff]
  %v2097 = vld [vmem:[%s2080 + $0x80] sm:$0xff]
  %v2098 = vld [vmem:[%s2080 + $0x88] sm:$0xff]
  %v2099 = vld [vmem:[%s2080 + $0x90] sm:$0xff]
  %v2100 = vld [vmem:[%s2080 + $0x98] sm:$0xff]
  %v2101 = vld [vmem:[%s2080 + $0xa0] sm:$0xff]
  %v2102 = vld [vmem:[%s2080 + $0xa8] sm:$0xff]
  %v2103 = vld [vmem:[%s2080 + $0xb0] sm:$0xff]
  %v2104 = vld [vmem:[%s2080 + $0xb8] sm:$0xff]
  %v2105 = vld [vmem:[%s2080 + $0xc0] sm:$0xff]
  %v2106 = vld [vmem:[%s2080 + $0xc8] sm:$0xff]
  %v2107 = vld [vmem:[%s2080 + $0xd0] sm:$0xff]
  %v2108 = vld [vmem:[%s2080 + $0xd8] sm:$0xff]
  %v2109 = vld [vmem:[%s2080 + $0xe0] sm:$0xff]
  %v2110 = vld [vmem:[%s2080 + $0xe8] sm:$0xff]
  %v2111 = vld [vmem:[%s2080 + $0xf0] sm:$0xff]
  %v2112 = vld [vmem:[%s2080 + $0xf8] sm:$0xff]
  %v2113 = vld [vmem:[%s2080 + $0x100] sm:$0xff]
  %v2114 = vld [vmem:[%s2080 + $0x108] sm:$0xff]
  %v2115 = vld [vmem:[%s2080 + $0x110] sm:$0xff]
  %v2116 = vld [vmem:[%s2080 + $0x118] sm:$0xff]
  %v2117 = vld [vmem:[%s2080 + $0x120] sm:$0xff]
  %v2118 = vld [vmem:[%s2080 + $0x128] sm:$0xff]
  %v2119 = vld [vmem:[%s2080 + $0x130] sm:$0xff]
  %v2120 = vld [vmem:[%s2080 + $0x138] sm:$0xff]
  %v2121 = vld [vmem:[%s2080 + $0x140] sm:$0xff]
  %v2122 = vld [vmem:[%s2080 + $0x148] sm:$0xff]
  %v2123 = vld [vmem:[%s2080 + $0x150] sm:$0xff]
  %v2124 = vld [vmem:[%s2080 + $0x158] sm:$0xff]
  %v2125 = vld [vmem:[%s2080 + $0x160] sm:$0xff]
  %v2126 = vld [vmem:[%s2080 + $0x168] sm:$0xff]
  %v2127 = vld [vmem:[%s2080 + $0x170] sm:$0xff]
  %v2128 = vld [vmem:[%s2080 + $0x178] sm:$0xff]
  %v2129 = vld [vmem:[%s2080 + $0x180] sm:$0xff]
  %v2130 = vld [vmem:[%s2080 + $0x188] sm:$0xff]
  %v2131 = vld [vmem:[%s2080 + $0x190] sm:$0xff]
  %v2132 = vld [vmem:[%s2080 + $0x198] sm:$0xff]
  %v2133 = vld [vmem:[%s2080 + $0x1a0] sm:$0xff]
  %v2134 = vld [vmem:[%s2080 + $0x1a8] sm:$0xff]
  %v2135 = vld [vmem:[%s2080 + $0x1b0] sm:$0xff]
  %v2136 = vld [vmem:[%s2080 + $0x1b8] sm:$0xff]
  %v2137 = vld [vmem:[%s2080 + $0x1c0] sm:$0xff]
  %v2138 = vld [vmem:[%s2080 + $0x1c8] sm:$0xff]
  %v2139 = vld [vmem:[%s2080 + $0x1d0] sm:$0xff]
  %v2140 = vld [vmem:[%s2080 + $0x1d8] sm:$0xff]
  %v2141 = vld [vmem:[%s2080 + $0x1e0] sm:$0xff]
  %v2142 = vld [vmem:[%s2080 + $0x1e8] sm:$0xff]
  %v2143 = vld [vmem:[%s2080 + $0x1f0] sm:$0xff]
  %v2144 = vld [vmem:[%s2080 + $0x1f8] sm:$0xff]
  %s2145 = scalar_lea.vmem %s1, 4
  %v2146 = vld [vmem:[%s2145] sm:$0x1]
  %2148 = vset.pattern.permute.xlu0 0
  %2149 = vperm.xlu0 %2148, %v2081
  %v2150 = vpop.permute.xlu0 %2149
  %2153 = vset.pattern.permute.xlu0 0
  %2154 = vperm.xlu0 %2153, %v2082
  %v2155 = vpop.permute.xlu0 %2154
  %2158 = vset.pattern.permute.xlu0 0
  %2159 = vperm.xlu0 %2158, %v2083
  %v2160 = vpop.permute.xlu0 %2159
  %2163 = vset.pattern.permute.xlu0 0
  %2164 = vperm.xlu0 %2163, %v2084
  %v2165 = vpop.permute.xlu0 %2164
  %2168 = vset.pattern.permute.xlu0 0
  %2169 = vperm.xlu0 %2168, %v2085
  %v2170 = vpop.permute.xlu0 %2169
  %2173 = vset.pattern.permute.xlu0 0
  %2174 = vperm.xlu0 %2173, %v2086
  %v2175 = vpop.permute.xlu0 %2174
  %2178 = vset.pattern.permute.xlu0 0
  %2179 = vperm.xlu0 %2178, %v2087
  %v2180 = vpop.permute.xlu0 %2179
  %2183 = vset.pattern.permute.xlu0 0
  %2184 = vperm.xlu0 %2183, %v2088
  %v2185 = vpop.permute.xlu0 %2184
  %2188 = vset.pattern.permute.xlu0 0
  %2189 = vperm.xlu0 %2188, %v2089
  %v2190 = vpop.permute.xlu0 %2189
  %2193 = vset.pattern.permute.xlu0 0
  %2194 = vperm.xlu0 %2193, %v2090
  %v2195 = vpop.permute.xlu0 %2194
  %2198 = vset.pattern.permute.xlu0 0
  %2199 = vperm.xlu0 %2198, %v2091
  %v2200 = vpop.permute.xlu0 %2199
  %2203 = vset.pattern.permute.xlu0 0
  %2204 = vperm.xlu0 %2203, %v2092
  %v2205 = vpop.permute.xlu0 %2204
  %2208 = vset.pattern.permute.xlu0 0
  %2209 = vperm.xlu0 %2208, %v2093
  %v2210 = vpop.permute.xlu0 %2209
  %2213 = vset.pattern.permute.xlu0 0
  %2214 = vperm.xlu0 %2213, %v2094
  %v2215 = vpop.permute.xlu0 %2214
  %2218 = vset.pattern.permute.xlu0 0
  %2219 = vperm.xlu0 %2218, %v2095
  %v2220 = vpop.permute.xlu0 %2219
  %2223 = vset.pattern.permute.xlu0 0
  %2224 = vperm.xlu0 %2223, %v2096
  %v2225 = vpop.permute.xlu0 %2224
  %2228 = vset.pattern.permute.xlu0 0
  %2229 = vperm.xlu0 %2228, %v2097
  %v2230 = vpop.permute.xlu0 %2229
  %2233 = vset.pattern.permute.xlu0 0
  %2234 = vperm.xlu0 %2233, %v2098
  %v2235 = vpop.permute.xlu0 %2234
  %2238 = vset.pattern.permute.xlu0 0
  %2239 = vperm.xlu0 %2238, %v2099
  %v2240 = vpop.permute.xlu0 %2239
  %2243 = vset.pattern.permute.xlu0 0
  %2244 = vperm.xlu0 %2243, %v2100
  %v2245 = vpop.permute.xlu0 %2244
  %2248 = vset.pattern.permute.xlu0 0
  %2249 = vperm.xlu0 %2248, %v2101
  %v2250 = vpop.permute.xlu0 %2249
  %2253 = vset.pattern.permute.xlu0 0
  %2254 = vperm.xlu0 %2253, %v2102
  %v2255 = vpop.permute.xlu0 %2254
  %2258 = vset.pattern.permute.xlu0 0
  %2259 = vperm.xlu0 %2258, %v2103
  %v2260 = vpop.permute.xlu0 %2259
  %2263 = vset.pattern.permute.xlu0 0
  %2264 = vperm.xlu0 %2263, %v2104
  %v2265 = vpop.permute.xlu0 %2264
  %2268 = vset.pattern.permute.xlu0 0
  %2269 = vperm.xlu0 %2268, %v2105
  %v2270 = vpop.permute.xlu0 %2269
  %2273 = vset.pattern.permute.xlu0 0
  %2274 = vperm.xlu0 %2273, %v2106
  %v2275 = vpop.permute.xlu0 %2274
  %2278 = vset.pattern.permute.xlu0 0
  %2279 = vperm.xlu0 %2278, %v2107
  %v2280 = vpop.permute.xlu0 %2279
  %2283 = vset.pattern.permute.xlu0 0
  %2284 = vperm.xlu0 %2283, %v2108
  %v2285 = vpop.permute.xlu0 %2284
  %2288 = vset.pattern.permute.xlu0 0
  %2289 = vperm.xlu0 %2288, %v2109
  %v2290 = vpop.permute.xlu0 %2289
  %2293 = vset.pattern.permute.xlu0 0
  %2294 = vperm.xlu0 %2293, %v2110
  %v2295 = vpop.permute.xlu0 %2294
  %2298 = vset.pattern.permute.xlu0 0
  %2299 = vperm.xlu0 %2298, %v2111
  %v2300 = vpop.permute.xlu0 %2299
  %2303 = vset.pattern.permute.xlu0 0
  %2304 = vperm.xlu0 %2303, %v2112
  %v2305 = vpop.permute.xlu0 %2304
  %2308 = vset.pattern.permute.xlu0 0
  %2309 = vperm.xlu0 %2308, %v2113
  %v2310 = vpop.permute.xlu0 %2309
  %2313 = vset.pattern.permute.xlu0 0
  %2314 = vperm.xlu0 %2313, %v2114
  %v2315 = vpop.permute.xlu0 %2314
  %2318 = vset.pattern.permute.xlu0 0
  %2319 = vperm.xlu0 %2318, %v2115
  %v2320 = vpop.permute.xlu0 %2319
  %2323 = vset.pattern.permute.xlu0 0
  %2324 = vperm.xlu0 %2323, %v2116
  %v2325 = vpop.permute.xlu0 %2324
  %2328 = vset.pattern.permute.xlu0 0
  %2329 = vperm.xlu0 %2328, %v2117
  %v2330 = vpop.permute.xlu0 %2329
  %2333 = vset.pattern.permute.xlu0 0
  %2334 = vperm.xlu0 %2333, %v2118
  %v2335 = vpop.permute.xlu0 %2334
  %2338 = vset.pattern.permute.xlu0 0
  %2339 = vperm.xlu0 %2338, %v2119
  %v2340 = vpop.permute.xlu0 %2339
  %2343 = vset.pattern.permute.xlu0 0
  %2344 = vperm.xlu0 %2343, %v2120
  %v2345 = vpop.permute.xlu0 %2344
  %2348 = vset.pattern.permute.xlu0 0
  %2349 = vperm.xlu0 %2348, %v2121
  %v2350 = vpop.permute.xlu0 %2349
  %2353 = vset.pattern.permute.xlu0 0
  %2354 = vperm.xlu0 %2353, %v2122
  %v2355 = vpop.permute.xlu0 %2354
  %2358 = vset.pattern.permute.xlu0 0
  %2359 = vperm.xlu0 %2358, %v2123
  %v2360 = vpop.permute.xlu0 %2359
  %2363 = vset.pattern.permute.xlu0 0
  %2364 = vperm.xlu0 %2363, %v2124
  %v2365 = vpop.permute.xlu0 %2364
  %2368 = vset.pattern.permute.xlu0 0
  %2369 = vperm.xlu0 %2368, %v2125
  %v2370 = vpop.permute.xlu0 %2369
  %2373 = vset.pattern.permute.xlu0 0
  %2374 = vperm.xlu0 %2373, %v2126
  %v2375 = vpop.permute.xlu0 %2374
  %2378 = vset.pattern.permute.xlu0 0
  %2379 = vperm.xlu0 %2378, %v2127
  %v2380 = vpop.permute.xlu0 %2379
  %2383 = vset.pattern.permute.xlu0 0
  %2384 = vperm.xlu0 %2383, %v2128
  %v2385 = vpop.permute.xlu0 %2384
  %2388 = vset.pattern.permute.xlu0 0
  %2389 = vperm.xlu0 %2388, %v2129
  %v2390 = vpop.permute.xlu0 %2389
  %2393 = vset.pattern.permute.xlu0 0
  %2394 = vperm.xlu0 %2393, %v2130
  %v2395 = vpop.permute.xlu0 %2394
  %2398 = vset.pattern.permute.xlu0 0
  %2399 = vperm.xlu0 %2398, %v2131
  %v2400 = vpop.permute.xlu0 %2399
  %2403 = vset.pattern.permute.xlu0 0
  %2404 = vperm.xlu0 %2403, %v2132
  %v2405 = vpop.permute.xlu0 %2404
  %2408 = vset.pattern.permute.xlu0 0
  %2409 = vperm.xlu0 %2408, %v2133
  %v2410 = vpop.permute.xlu0 %2409
  %2413 = vset.pattern.permute.xlu0 0
  %2414 = vperm.xlu0 %2413, %v2134
  %v2415 = vpop.permute.xlu0 %2414
  %2418 = vset.pattern.permute.xlu0 0
  %2419 = vperm.xlu0 %2418, %v2135
  %v2420 = vpop.permute.xlu0 %2419
  %2423 = vset.pattern.permute.xlu0 0
  %2424 = vperm.xlu0 %2423, %v2136
  %v2425 = vpop.permute.xlu0 %2424
  %2428 = vset.pattern.permute.xlu0 0
  %2429 = vperm.xlu0 %2428, %v2137
  %v2430 = vpop.permute.xlu0 %2429
  %2433 = vset.pattern.permute.xlu0 0
  %2434 = vperm.xlu0 %2433, %v2138
  %v2435 = vpop.permute.xlu0 %2434
  %2438 = vset.pattern.permute.xlu0 0
  %2439 = vperm.xlu0 %2438, %v2139
  %v2440 = vpop.permute.xlu0 %2439
  %2443 = vset.pattern.permute.xlu0 0
  %2444 = vperm.xlu0 %2443, %v2140
  %v2445 = vpop.permute.xlu0 %2444
  %2448 = vset.pattern.permute.xlu0 0
  %2449 = vperm.xlu0 %2448, %v2141
  %v2450 = vpop.permute.xlu0 %2449
  %2453 = vset.pattern.permute.xlu0 0
  %2454 = vperm.xlu0 %2453, %v2142
  %v2455 = vpop.permute.xlu0 %2454
  %2458 = vset.pattern.permute.xlu0 0
  %2459 = vperm.xlu0 %2458, %v2143
  %v2460 = vpop.permute.xlu0 %2459
  %2463 = vset.pattern.permute.xlu0 0
  %2464 = vperm.xlu0 %2463, %v2144
  %v2465 = vpop.permute.xlu0 %2464
  %v2468 = vlaneseq
  %v2469 = vshrl.u32 %v2468, 7
  %v2470 = vsub.s32 0, %v2469
  %v2471 = vrot.slane %v2146, %v2470
  %v2473 = vmul.f32 %v2150, %v2471
  %v2474 = vmul.f32 %v2155, %v2471
  %v2475 = vmul.f32 %v2160, %v2471
  %v2476 = vmul.f32 %v2165, %v2471
  %v2477 = vmul.f32 %v2170, %v2471
  %v2478 = vmul.f32 %v2175, %v2471
  %v2479 = vmul.f32 %v2180, %v2471
  %v2480 = vmul.f32 %v2185, %v2471
  %v2481 = vmul.f32 %v2190, %v2471
  %v2482 = vmul.f32 %v2195, %v2471
  %v2483 = vmul.f32 %v2200, %v2471
  %v2484 = vmul.f32 %v2205, %v2471
  %v2485 = vmul.f32 %v2210, %v2471
  %v2486 = vmul.f32 %v2215, %v2471
  %v2487 = vmul.f32 %v2220, %v2471
  %v2488 = vmul.f32 %v2225, %v2471
  %v2489 = vmul.f32 %v2230, %v2471
  %v2490 = vmul.f32 %v2235, %v2471
  %v2491 = vmul.f32 %v2240, %v2471
  %v2492 = vmul.f32 %v2245, %v2471
  %v2493 = vmul.f32 %v2250, %v2471
  %v2494 = vmul.f32 %v2255, %v2471
  %v2495 = vmul.f32 %v2260, %v2471
  %v2496 = vmul.f32 %v2265, %v2471
  %v2497 = vmul.f32 %v2270, %v2471
  %v2498 = vmul.f32 %v2275, %v2471
  %v2499 = vmul.f32 %v2280, %v2471
  %v2500 = vmul.f32 %v2285, %v2471
  %v2501 = vmul.f32 %v2290, %v2471
  %v2502 = vmul.f32 %v2295, %v2471
  %v2503 = vmul.f32 %v2300, %v2471
  %v2504 = vmul.f32 %v2305, %v2471
  %v2505 = vmul.f32 %v2310, %v2471
  %v2506 = vmul.f32 %v2315, %v2471
  %v2507 = vmul.f32 %v2320, %v2471
  %v2508 = vmul.f32 %v2325, %v2471
  %v2509 = vmul.f32 %v2330, %v2471
  %v2510 = vmul.f32 %v2335, %v2471
  %v2511 = vmul.f32 %v2340, %v2471
  %v2512 = vmul.f32 %v2345, %v2471
  %v2513 = vmul.f32 %v2350, %v2471
  %v2514 = vmul.f32 %v2355, %v2471
  %v2515 = vmul.f32 %v2360, %v2471
  %v2516 = vmul.f32 %v2365, %v2471
  %v2517 = vmul.f32 %v2370, %v2471
  %v2518 = vmul.f32 %v2375, %v2471
  %v2519 = vmul.f32 %v2380, %v2471
  %v2520 = vmul.f32 %v2385, %v2471
  %v2521 = vmul.f32 %v2390, %v2471
  %v2522 = vmul.f32 %v2395, %v2471
  %v2523 = vmul.f32 %v2400, %v2471
  %v2524 = vmul.f32 %v2405, %v2471
  %v2525 = vmul.f32 %v2410, %v2471
  %v2526 = vmul.f32 %v2415, %v2471
  %v2527 = vmul.f32 %v2420, %v2471
  %v2528 = vmul.f32 %v2425, %v2471
  %v2529 = vmul.f32 %v2430, %v2471
  %v2530 = vmul.f32 %v2435, %v2471
  %v2531 = vmul.f32 %v2440, %v2471
  %v2532 = vmul.f32 %v2445, %v2471
  %v2533 = vmul.f32 %v2450, %v2471
  %v2534 = vmul.f32 %v2455, %v2471
  %v2535 = vmul.f32 %v2460, %v2471
  %v2536 = vmul.f32 %v2465, %v2471
  %v2537 = vadd.f32 %v2016, %v2473
  %v2538 = vadd.f32 %v2017, %v2474
  %v2539 = vadd.f32 %v2018, %v2475
  %v2540 = vadd.f32 %v2019, %v2476
  %v2541 = vadd.f32 %v2020, %v2477
  %v2542 = vadd.f32 %v2021, %v2478
  %v2543 = vadd.f32 %v2022, %v2479
  %v2544 = vadd.f32 %v2023, %v2480
  %v2545 = vadd.f32 %v2024, %v2481
  %v2546 = vadd.f32 %v2025, %v2482
  %v2547 = vadd.f32 %v2026, %v2483
  %v2548 = vadd.f32 %v2027, %v2484
  %v2549 = vadd.f32 %v2028, %v2485
  %v2550 = vadd.f32 %v2029, %v2486
  %v2551 = vadd.f32 %v2030, %v2487
  %v2552 = vadd.f32 %v2031, %v2488
  %v2553 = vadd.f32 %v2032, %v2489
  %v2554 = vadd.f32 %v2033, %v2490
  %v2555 = vadd.f32 %v2034, %v2491
  %v2556 = vadd.f32 %v2035, %v2492
  %v2557 = vadd.f32 %v2036, %v2493
  %v2558 = vadd.f32 %v2037, %v2494
  %v2559 = vadd.f32 %v2038, %v2495
  %v2560 = vadd.f32 %v2039, %v2496
  %v2561 = vadd.f32 %v2040, %v2497
  %v2562 = vadd.f32 %v2041, %v2498
  %v2563 = vadd.f32 %v2042, %v2499
  %v2564 = vadd.f32 %v2043, %v2500
  %v2565 = vadd.f32 %v2044, %v2501
  %v2566 = vadd.f32 %v2045, %v2502
  %v2567 = vadd.f32 %v2046, %v2503
  %v2568 = vadd.f32 %v2047, %v2504
  %v2569 = vadd.f32 %v2048, %v2505
  %v2570 = vadd.f32 %v2049, %v2506
  %v2571 = vadd.f32 %v2050, %v2507
  %v2572 = vadd.f32 %v2051, %v2508
  %v2573 = vadd.f32 %v2052, %v2509
  %v2574 = vadd.f32 %v2053, %v2510
  %v2575 = vadd.f32 %v2054, %v2511
  %v2576 = vadd.f32 %v2055, %v2512
  %v2577 = vadd.f32 %v2056, %v2513
  %v2578 = vadd.f32 %v2057, %v2514
  %v2579 = vadd.f32 %v2058, %v2515
  %v2580 = vadd.f32 %v2059, %v2516
  %v2581 = vadd.f32 %v2060, %v2517
  %v2582 = vadd.f32 %v2061, %v2518
  %v2583 = vadd.f32 %v2062, %v2519
  %v2584 = vadd.f32 %v2063, %v2520
  %v2585 = vadd.f32 %v2064, %v2521
  %v2586 = vadd.f32 %v2065, %v2522
  %v2587 = vadd.f32 %v2066, %v2523
  %v2588 = vadd.f32 %v2067, %v2524
  %v2589 = vadd.f32 %v2068, %v2525
  %v2590 = vadd.f32 %v2069, %v2526
  %v2591 = vadd.f32 %v2070, %v2527
  %v2592 = vadd.f32 %v2071, %v2528
  %v2593 = vadd.f32 %v2072, %v2529
  %v2594 = vadd.f32 %v2073, %v2530
  %v2595 = vadd.f32 %v2074, %v2531
  %v2596 = vadd.f32 %v2075, %v2532
  %v2597 = vadd.f32 %v2076, %v2533
  %v2598 = vadd.f32 %v2077, %v2534
  %v2599 = vadd.f32 %v2078, %v2535
  %v2600 = vadd.f32 %v2079, %v2536
  %s2601 = scalar_lea.vmem %s0, 2560
  %v2602 = vld [vmem:[%s2601] sm:$0xff]
  %v2603 = vld [vmem:[%s2601 + $0x8] sm:$0xff]
  %v2604 = vld [vmem:[%s2601 + $0x10] sm:$0xff]
  %v2605 = vld [vmem:[%s2601 + $0x18] sm:$0xff]
  %v2606 = vld [vmem:[%s2601 + $0x20] sm:$0xff]
  %v2607 = vld [vmem:[%s2601 + $0x28] sm:$0xff]
  %v2608 = vld [vmem:[%s2601 + $0x30] sm:$0xff]
  %v2609 = vld [vmem:[%s2601 + $0x38] sm:$0xff]
  %v2610 = vld [vmem:[%s2601 + $0x40] sm:$0xff]
  %v2611 = vld [vmem:[%s2601 + $0x48] sm:$0xff]
  %v2612 = vld [vmem:[%s2601 + $0x50] sm:$0xff]
  %v2613 = vld [vmem:[%s2601 + $0x58] sm:$0xff]
  %v2614 = vld [vmem:[%s2601 + $0x60] sm:$0xff]
  %v2615 = vld [vmem:[%s2601 + $0x68] sm:$0xff]
  %v2616 = vld [vmem:[%s2601 + $0x70] sm:$0xff]
  %v2617 = vld [vmem:[%s2601 + $0x78] sm:$0xff]
  %v2618 = vld [vmem:[%s2601 + $0x80] sm:$0xff]
  %v2619 = vld [vmem:[%s2601 + $0x88] sm:$0xff]
  %v2620 = vld [vmem:[%s2601 + $0x90] sm:$0xff]
  %v2621 = vld [vmem:[%s2601 + $0x98] sm:$0xff]
  %v2622 = vld [vmem:[%s2601 + $0xa0] sm:$0xff]
  %v2623 = vld [vmem:[%s2601 + $0xa8] sm:$0xff]
  %v2624 = vld [vmem:[%s2601 + $0xb0] sm:$0xff]
  %v2625 = vld [vmem:[%s2601 + $0xb8] sm:$0xff]
  %v2626 = vld [vmem:[%s2601 + $0xc0] sm:$0xff]
  %v2627 = vld [vmem:[%s2601 + $0xc8] sm:$0xff]
  %v2628 = vld [vmem:[%s2601 + $0xd0] sm:$0xff]
  %v2629 = vld [vmem:[%s2601 + $0xd8] sm:$0xff]
  %v2630 = vld [vmem:[%s2601 + $0xe0] sm:$0xff]
  %v2631 = vld [vmem:[%s2601 + $0xe8] sm:$0xff]
  %v2632 = vld [vmem:[%s2601 + $0xf0] sm:$0xff]
  %v2633 = vld [vmem:[%s2601 + $0xf8] sm:$0xff]
  %v2634 = vld [vmem:[%s2601 + $0x100] sm:$0xff]
  %v2635 = vld [vmem:[%s2601 + $0x108] sm:$0xff]
  %v2636 = vld [vmem:[%s2601 + $0x110] sm:$0xff]
  %v2637 = vld [vmem:[%s2601 + $0x118] sm:$0xff]
  %v2638 = vld [vmem:[%s2601 + $0x120] sm:$0xff]
  %v2639 = vld [vmem:[%s2601 + $0x128] sm:$0xff]
  %v2640 = vld [vmem:[%s2601 + $0x130] sm:$0xff]
  %v2641 = vld [vmem:[%s2601 + $0x138] sm:$0xff]
  %v2642 = vld [vmem:[%s2601 + $0x140] sm:$0xff]
  %v2643 = vld [vmem:[%s2601 + $0x148] sm:$0xff]
  %v2644 = vld [vmem:[%s2601 + $0x150] sm:$0xff]
  %v2645 = vld [vmem:[%s2601 + $0x158] sm:$0xff]
  %v2646 = vld [vmem:[%s2601 + $0x160] sm:$0xff]
  %v2647 = vld [vmem:[%s2601 + $0x168] sm:$0xff]
  %v2648 = vld [vmem:[%s2601 + $0x170] sm:$0xff]
  %v2649 = vld [vmem:[%s2601 + $0x178] sm:$0xff]
  %v2650 = vld [vmem:[%s2601 + $0x180] sm:$0xff]
  %v2651 = vld [vmem:[%s2601 + $0x188] sm:$0xff]
  %v2652 = vld [vmem:[%s2601 + $0x190] sm:$0xff]
  %v2653 = vld [vmem:[%s2601 + $0x198] sm:$0xff]
  %v2654 = vld [vmem:[%s2601 + $0x1a0] sm:$0xff]
  %v2655 = vld [vmem:[%s2601 + $0x1a8] sm:$0xff]
  %v2656 = vld [vmem:[%s2601 + $0x1b0] sm:$0xff]
  %v2657 = vld [vmem:[%s2601 + $0x1b8] sm:$0xff]
  %v2658 = vld [vmem:[%s2601 + $0x1c0] sm:$0xff]
  %v2659 = vld [vmem:[%s2601 + $0x1c8] sm:$0xff]
  %v2660 = vld [vmem:[%s2601 + $0x1d0] sm:$0xff]
  %v2661 = vld [vmem:[%s2601 + $0x1d8] sm:$0xff]
  %v2662 = vld [vmem:[%s2601 + $0x1e0] sm:$0xff]
  %v2663 = vld [vmem:[%s2601 + $0x1e8] sm:$0xff]
  %v2664 = vld [vmem:[%s2601 + $0x1f0] sm:$0xff]
  %v2665 = vld [vmem:[%s2601 + $0x1f8] sm:$0xff]
  %s2666 = scalar_lea.vmem %s1, 5
  %v2667 = vld [vmem:[%s2666] sm:$0x1]
  %2669 = vset.pattern.permute.xlu0 0
  %2670 = vperm.xlu0 %2669, %v2602
  %v2671 = vpop.permute.xlu0 %2670
  %2674 = vset.pattern.permute.xlu0 0
  %2675 = vperm.xlu0 %2674, %v2603
  %v2676 = vpop.permute.xlu0 %2675
  %2679 = vset.pattern.permute.xlu0 0
  %2680 = vperm.xlu0 %2679, %v2604
  %v2681 = vpop.permute.xlu0 %2680
  %2684 = vset.pattern.permute.xlu0 0
  %2685 = vperm.xlu0 %2684, %v2605
  %v2686 = vpop.permute.xlu0 %2685
  %2689 = vset.pattern.permute.xlu0 0
  %2690 = vperm.xlu0 %2689, %v2606
  %v2691 = vpop.permute.xlu0 %2690
  %2694 = vset.pattern.permute.xlu0 0
  %2695 = vperm.xlu0 %2694, %v2607
  %v2696 = vpop.permute.xlu0 %2695
  %2699 = vset.pattern.permute.xlu0 0
  %2700 = vperm.xlu0 %2699, %v2608
  %v2701 = vpop.permute.xlu0 %2700
  %2704 = vset.pattern.permute.xlu0 0
  %2705 = vperm.xlu0 %2704, %v2609
  %v2706 = vpop.permute.xlu0 %2705
  %2709 = vset.pattern.permute.xlu0 0
  %2710 = vperm.xlu0 %2709, %v2610
  %v2711 = vpop.permute.xlu0 %2710
  %2714 = vset.pattern.permute.xlu0 0
  %2715 = vperm.xlu0 %2714, %v2611
  %v2716 = vpop.permute.xlu0 %2715
  %2719 = vset.pattern.permute.xlu0 0
  %2720 = vperm.xlu0 %2719, %v2612
  %v2721 = vpop.permute.xlu0 %2720
  %2724 = vset.pattern.permute.xlu0 0
  %2725 = vperm.xlu0 %2724, %v2613
  %v2726 = vpop.permute.xlu0 %2725
  %2729 = vset.pattern.permute.xlu0 0
  %2730 = vperm.xlu0 %2729, %v2614
  %v2731 = vpop.permute.xlu0 %2730
  %2734 = vset.pattern.permute.xlu0 0
  %2735 = vperm.xlu0 %2734, %v2615
  %v2736 = vpop.permute.xlu0 %2735
  %2739 = vset.pattern.permute.xlu0 0
  %2740 = vperm.xlu0 %2739, %v2616
  %v2741 = vpop.permute.xlu0 %2740
  %2744 = vset.pattern.permute.xlu0 0
  %2745 = vperm.xlu0 %2744, %v2617
  %v2746 = vpop.permute.xlu0 %2745
  %2749 = vset.pattern.permute.xlu0 0
  %2750 = vperm.xlu0 %2749, %v2618
  %v2751 = vpop.permute.xlu0 %2750
  %2754 = vset.pattern.permute.xlu0 0
  %2755 = vperm.xlu0 %2754, %v2619
  %v2756 = vpop.permute.xlu0 %2755
  %2759 = vset.pattern.permute.xlu0 0
  %2760 = vperm.xlu0 %2759, %v2620
  %v2761 = vpop.permute.xlu0 %2760
  %2764 = vset.pattern.permute.xlu0 0
  %2765 = vperm.xlu0 %2764, %v2621
  %v2766 = vpop.permute.xlu0 %2765
  %2769 = vset.pattern.permute.xlu0 0
  %2770 = vperm.xlu0 %2769, %v2622
  %v2771 = vpop.permute.xlu0 %2770
  %2774 = vset.pattern.permute.xlu0 0
  %2775 = vperm.xlu0 %2774, %v2623
  %v2776 = vpop.permute.xlu0 %2775
  %2779 = vset.pattern.permute.xlu0 0
  %2780 = vperm.xlu0 %2779, %v2624
  %v2781 = vpop.permute.xlu0 %2780
  %2784 = vset.pattern.permute.xlu0 0
  %2785 = vperm.xlu0 %2784, %v2625
  %v2786 = vpop.permute.xlu0 %2785
  %2789 = vset.pattern.permute.xlu0 0
  %2790 = vperm.xlu0 %2789, %v2626
  %v2791 = vpop.permute.xlu0 %2790
  %2794 = vset.pattern.permute.xlu0 0
  %2795 = vperm.xlu0 %2794, %v2627
  %v2796 = vpop.permute.xlu0 %2795
  %2799 = vset.pattern.permute.xlu0 0
  %2800 = vperm.xlu0 %2799, %v2628
  %v2801 = vpop.permute.xlu0 %2800
  %2804 = vset.pattern.permute.xlu0 0
  %2805 = vperm.xlu0 %2804, %v2629
  %v2806 = vpop.permute.xlu0 %2805
  %2809 = vset.pattern.permute.xlu0 0
  %2810 = vperm.xlu0 %2809, %v2630
  %v2811 = vpop.permute.xlu0 %2810
  %2814 = vset.pattern.permute.xlu0 0
  %2815 = vperm.xlu0 %2814, %v2631
  %v2816 = vpop.permute.xlu0 %2815
  %2819 = vset.pattern.permute.xlu0 0
  %2820 = vperm.xlu0 %2819, %v2632
  %v2821 = vpop.permute.xlu0 %2820
  %2824 = vset.pattern.permute.xlu0 0
  %2825 = vperm.xlu0 %2824, %v2633
  %v2826 = vpop.permute.xlu0 %2825
  %2829 = vset.pattern.permute.xlu0 0
  %2830 = vperm.xlu0 %2829, %v2634
  %v2831 = vpop.permute.xlu0 %2830
  %2834 = vset.pattern.permute.xlu0 0
  %2835 = vperm.xlu0 %2834, %v2635
  %v2836 = vpop.permute.xlu0 %2835
  %2839 = vset.pattern.permute.xlu0 0
  %2840 = vperm.xlu0 %2839, %v2636
  %v2841 = vpop.permute.xlu0 %2840
  %2844 = vset.pattern.permute.xlu0 0
  %2845 = vperm.xlu0 %2844, %v2637
  %v2846 = vpop.permute.xlu0 %2845
  %2849 = vset.pattern.permute.xlu0 0
  %2850 = vperm.xlu0 %2849, %v2638
  %v2851 = vpop.permute.xlu0 %2850
  %2854 = vset.pattern.permute.xlu0 0
  %2855 = vperm.xlu0 %2854, %v2639
  %v2856 = vpop.permute.xlu0 %2855
  %2859 = vset.pattern.permute.xlu0 0
  %2860 = vperm.xlu0 %2859, %v2640
  %v2861 = vpop.permute.xlu0 %2860
  %2864 = vset.pattern.permute.xlu0 0
  %2865 = vperm.xlu0 %2864, %v2641
  %v2866 = vpop.permute.xlu0 %2865
  %2869 = vset.pattern.permute.xlu0 0
  %2870 = vperm.xlu0 %2869, %v2642
  %v2871 = vpop.permute.xlu0 %2870
  %2874 = vset.pattern.permute.xlu0 0
  %2875 = vperm.xlu0 %2874, %v2643
  %v2876 = vpop.permute.xlu0 %2875
  %2879 = vset.pattern.permute.xlu0 0
  %2880 = vperm.xlu0 %2879, %v2644
  %v2881 = vpop.permute.xlu0 %2880
  %2884 = vset.pattern.permute.xlu0 0
  %2885 = vperm.xlu0 %2884, %v2645
  %v2886 = vpop.permute.xlu0 %2885
  %2889 = vset.pattern.permute.xlu0 0
  %2890 = vperm.xlu0 %2889, %v2646
  %v2891 = vpop.permute.xlu0 %2890
  %2894 = vset.pattern.permute.xlu0 0
  %2895 = vperm.xlu0 %2894, %v2647
  %v2896 = vpop.permute.xlu0 %2895
  %2899 = vset.pattern.permute.xlu0 0
  %2900 = vperm.xlu0 %2899, %v2648
  %v2901 = vpop.permute.xlu0 %2900
  %2904 = vset.pattern.permute.xlu0 0
  %2905 = vperm.xlu0 %2904, %v2649
  %v2906 = vpop.permute.xlu0 %2905
  %2909 = vset.pattern.permute.xlu0 0
  %2910 = vperm.xlu0 %2909, %v2650
  %v2911 = vpop.permute.xlu0 %2910
  %2914 = vset.pattern.permute.xlu0 0
  %2915 = vperm.xlu0 %2914, %v2651
  %v2916 = vpop.permute.xlu0 %2915
  %2919 = vset.pattern.permute.xlu0 0
  %2920 = vperm.xlu0 %2919, %v2652
  %v2921 = vpop.permute.xlu0 %2920
  %2924 = vset.pattern.permute.xlu0 0
  %2925 = vperm.xlu0 %2924, %v2653
  %v2926 = vpop.permute.xlu0 %2925
  %2929 = vset.pattern.permute.xlu0 0
  %2930 = vperm.xlu0 %2929, %v2654
  %v2931 = vpop.permute.xlu0 %2930
  %2934 = vset.pattern.permute.xlu0 0
  %2935 = vperm.xlu0 %2934, %v2655
  %v2936 = vpop.permute.xlu0 %2935
  %2939 = vset.pattern.permute.xlu0 0
  %2940 = vperm.xlu0 %2939, %v2656
  %v2941 = vpop.permute.xlu0 %2940
  %2944 = vset.pattern.permute.xlu0 0
  %2945 = vperm.xlu0 %2944, %v2657
  %v2946 = vpop.permute.xlu0 %2945
  %2949 = vset.pattern.permute.xlu0 0
  %2950 = vperm.xlu0 %2949, %v2658
  %v2951 = vpop.permute.xlu0 %2950
  %2954 = vset.pattern.permute.xlu0 0
  %2955 = vperm.xlu0 %2954, %v2659
  %v2956 = vpop.permute.xlu0 %2955
  %2959 = vset.pattern.permute.xlu0 0
  %2960 = vperm.xlu0 %2959, %v2660
  %v2961 = vpop.permute.xlu0 %2960
  %2964 = vset.pattern.permute.xlu0 0
  %2965 = vperm.xlu0 %2964, %v2661
  %v2966 = vpop.permute.xlu0 %2965
  %2969 = vset.pattern.permute.xlu0 0
  %2970 = vperm.xlu0 %2969, %v2662
  %v2971 = vpop.permute.xlu0 %2970
  %2974 = vset.pattern.permute.xlu0 0
  %2975 = vperm.xlu0 %2974, %v2663
  %v2976 = vpop.permute.xlu0 %2975
  %2979 = vset.pattern.permute.xlu0 0
  %2980 = vperm.xlu0 %2979, %v2664
  %v2981 = vpop.permute.xlu0 %2980
  %2984 = vset.pattern.permute.xlu0 0
  %2985 = vperm.xlu0 %2984, %v2665
  %v2986 = vpop.permute.xlu0 %2985
  %v2989 = vlaneseq
  %v2990 = vshrl.u32 %v2989, 7
  %v2991 = vsub.s32 0, %v2990
  %v2992 = vrot.slane %v2667, %v2991
  %v2994 = vmul.f32 %v2671, %v2992
  %v2995 = vmul.f32 %v2676, %v2992
  %v2996 = vmul.f32 %v2681, %v2992
  %v2997 = vmul.f32 %v2686, %v2992
  %v2998 = vmul.f32 %v2691, %v2992
  %v2999 = vmul.f32 %v2696, %v2992
  %v3000 = vmul.f32 %v2701, %v2992
  %v3001 = vmul.f32 %v2706, %v2992
  %v3002 = vmul.f32 %v2711, %v2992
  %v3003 = vmul.f32 %v2716, %v2992
  %v3004 = vmul.f32 %v2721, %v2992
  %v3005 = vmul.f32 %v2726, %v2992
  %v3006 = vmul.f32 %v2731, %v2992
  %v3007 = vmul.f32 %v2736, %v2992
  %v3008 = vmul.f32 %v2741, %v2992
  %v3009 = vmul.f32 %v2746, %v2992
  %v3010 = vmul.f32 %v2751, %v2992
  %v3011 = vmul.f32 %v2756, %v2992
  %v3012 = vmul.f32 %v2761, %v2992
  %v3013 = vmul.f32 %v2766, %v2992
  %v3014 = vmul.f32 %v2771, %v2992
  %v3015 = vmul.f32 %v2776, %v2992
  %v3016 = vmul.f32 %v2781, %v2992
  %v3017 = vmul.f32 %v2786, %v2992
  %v3018 = vmul.f32 %v2791, %v2992
  %v3019 = vmul.f32 %v2796, %v2992
  %v3020 = vmul.f32 %v2801, %v2992
  %v3021 = vmul.f32 %v2806, %v2992
  %v3022 = vmul.f32 %v2811, %v2992
  %v3023 = vmul.f32 %v2816, %v2992
  %v3024 = vmul.f32 %v2821, %v2992
  %v3025 = vmul.f32 %v2826, %v2992
  %v3026 = vmul.f32 %v2831, %v2992
  %v3027 = vmul.f32 %v2836, %v2992
  %v3028 = vmul.f32 %v2841, %v2992
  %v3029 = vmul.f32 %v2846, %v2992
  %v3030 = vmul.f32 %v2851, %v2992
  %v3031 = vmul.f32 %v2856, %v2992
  %v3032 = vmul.f32 %v2861, %v2992
  %v3033 = vmul.f32 %v2866, %v2992
  %v3034 = vmul.f32 %v2871, %v2992
  %v3035 = vmul.f32 %v2876, %v2992
  %v3036 = vmul.f32 %v2881, %v2992
  %v3037 = vmul.f32 %v2886, %v2992
  %v3038 = vmul.f32 %v2891, %v2992
  %v3039 = vmul.f32 %v2896, %v2992
  %v3040 = vmul.f32 %v2901, %v2992
  %v3041 = vmul.f32 %v2906, %v2992
  %v3042 = vmul.f32 %v2911, %v2992
  %v3043 = vmul.f32 %v2916, %v2992
  %v3044 = vmul.f32 %v2921, %v2992
  %v3045 = vmul.f32 %v2926, %v2992
  %v3046 = vmul.f32 %v2931, %v2992
  %v3047 = vmul.f32 %v2936, %v2992
  %v3048 = vmul.f32 %v2941, %v2992
  %v3049 = vmul.f32 %v2946, %v2992
  %v3050 = vmul.f32 %v2951, %v2992
  %v3051 = vmul.f32 %v2956, %v2992
  %v3052 = vmul.f32 %v2961, %v2992
  %v3053 = vmul.f32 %v2966, %v2992
  %v3054 = vmul.f32 %v2971, %v2992
  %v3055 = vmul.f32 %v2976, %v2992
  %v3056 = vmul.f32 %v2981, %v2992
  %v3057 = vmul.f32 %v2986, %v2992
  %v3058 = vadd.f32 %v2537, %v2994
  %v3059 = vadd.f32 %v2538, %v2995
  %v3060 = vadd.f32 %v2539, %v2996
  %v3061 = vadd.f32 %v2540, %v2997
  %v3062 = vadd.f32 %v2541, %v2998
  %v3063 = vadd.f32 %v2542, %v2999
  %v3064 = vadd.f32 %v2543, %v3000
  %v3065 = vadd.f32 %v2544, %v3001
  %v3066 = vadd.f32 %v2545, %v3002
  %v3067 = vadd.f32 %v2546, %v3003
  %v3068 = vadd.f32 %v2547, %v3004
  %v3069 = vadd.f32 %v2548, %v3005
  %v3070 = vadd.f32 %v2549, %v3006
  %v3071 = vadd.f32 %v2550, %v3007
  %v3072 = vadd.f32 %v2551, %v3008
  %v3073 = vadd.f32 %v2552, %v3009
  %v3074 = vadd.f32 %v2553, %v3010
  %v3075 = vadd.f32 %v2554, %v3011
  %v3076 = vadd.f32 %v2555, %v3012
  %v3077 = vadd.f32 %v2556, %v3013
  %v3078 = vadd.f32 %v2557, %v3014
  %v3079 = vadd.f32 %v2558, %v3015
  %v3080 = vadd.f32 %v2559, %v3016
  %v3081 = vadd.f32 %v2560, %v3017
  %v3082 = vadd.f32 %v2561, %v3018
  %v3083 = vadd.f32 %v2562, %v3019
  %v3084 = vadd.f32 %v2563, %v3020
  %v3085 = vadd.f32 %v2564, %v3021
  %v3086 = vadd.f32 %v2565, %v3022
  %v3087 = vadd.f32 %v2566, %v3023
  %v3088 = vadd.f32 %v2567, %v3024
  %v3089 = vadd.f32 %v2568, %v3025
  %v3090 = vadd.f32 %v2569, %v3026
  %v3091 = vadd.f32 %v2570, %v3027
  %v3092 = vadd.f32 %v2571, %v3028
  %v3093 = vadd.f32 %v2572, %v3029
  %v3094 = vadd.f32 %v2573, %v3030
  %v3095 = vadd.f32 %v2574, %v3031
  %v3096 = vadd.f32 %v2575, %v3032
  %v3097 = vadd.f32 %v2576, %v3033
  %v3098 = vadd.f32 %v2577, %v3034
  %v3099 = vadd.f32 %v2578, %v3035
  %v3100 = vadd.f32 %v2579, %v3036
  %v3101 = vadd.f32 %v2580, %v3037
  %v3102 = vadd.f32 %v2581, %v3038
  %v3103 = vadd.f32 %v2582, %v3039
  %v3104 = vadd.f32 %v2583, %v3040
  %v3105 = vadd.f32 %v2584, %v3041
  %v3106 = vadd.f32 %v2585, %v3042
  %v3107 = vadd.f32 %v2586, %v3043
  %v3108 = vadd.f32 %v2587, %v3044
  %v3109 = vadd.f32 %v2588, %v3045
  %v3110 = vadd.f32 %v2589, %v3046
  %v3111 = vadd.f32 %v2590, %v3047
  %v3112 = vadd.f32 %v2591, %v3048
  %v3113 = vadd.f32 %v2592, %v3049
  %v3114 = vadd.f32 %v2593, %v3050
  %v3115 = vadd.f32 %v2594, %v3051
  %v3116 = vadd.f32 %v2595, %v3052
  %v3117 = vadd.f32 %v2596, %v3053
  %v3118 = vadd.f32 %v2597, %v3054
  %v3119 = vadd.f32 %v2598, %v3055
  %v3120 = vadd.f32 %v2599, %v3056
  %v3121 = vadd.f32 %v2600, %v3057
  %s3122 = scalar_lea.vmem %s0, 3072
  %v3123 = vld [vmem:[%s3122] sm:$0xff]
  %v3124 = vld [vmem:[%s3122 + $0x8] sm:$0xff]
  %v3125 = vld [vmem:[%s3122 + $0x10] sm:$0xff]
  %v3126 = vld [vmem:[%s3122 + $0x18] sm:$0xff]
  %v3127 = vld [vmem:[%s3122 + $0x20] sm:$0xff]
  %v3128 = vld [vmem:[%s3122 + $0x28] sm:$0xff]
  %v3129 = vld [vmem:[%s3122 + $0x30] sm:$0xff]
  %v3130 = vld [vmem:[%s3122 + $0x38] sm:$0xff]
  %v3131 = vld [vmem:[%s3122 + $0x40] sm:$0xff]
  %v3132 = vld [vmem:[%s3122 + $0x48] sm:$0xff]
  %v3133 = vld [vmem:[%s3122 + $0x50] sm:$0xff]
  %v3134 = vld [vmem:[%s3122 + $0x58] sm:$0xff]
  %v3135 = vld [vmem:[%s3122 + $0x60] sm:$0xff]
  %v3136 = vld [vmem:[%s3122 + $0x68] sm:$0xff]
  %v3137 = vld [vmem:[%s3122 + $0x70] sm:$0xff]
  %v3138 = vld [vmem:[%s3122 + $0x78] sm:$0xff]
  %v3139 = vld [vmem:[%s3122 + $0x80] sm:$0xff]
  %v3140 = vld [vmem:[%s3122 + $0x88] sm:$0xff]
  %v3141 = vld [vmem:[%s3122 + $0x90] sm:$0xff]
  %v3142 = vld [vmem:[%s3122 + $0x98] sm:$0xff]
  %v3143 = vld [vmem:[%s3122 + $0xa0] sm:$0xff]
  %v3144 = vld [vmem:[%s3122 + $0xa8] sm:$0xff]
  %v3145 = vld [vmem:[%s3122 + $0xb0] sm:$0xff]
  %v3146 = vld [vmem:[%s3122 + $0xb8] sm:$0xff]
  %v3147 = vld [vmem:[%s3122 + $0xc0] sm:$0xff]
  %v3148 = vld [vmem:[%s3122 + $0xc8] sm:$0xff]
  %v3149 = vld [vmem:[%s3122 + $0xd0] sm:$0xff]
  %v3150 = vld [vmem:[%s3122 + $0xd8] sm:$0xff]
  %v3151 = vld [vmem:[%s3122 + $0xe0] sm:$0xff]
  %v3152 = vld [vmem:[%s3122 + $0xe8] sm:$0xff]
  %v3153 = vld [vmem:[%s3122 + $0xf0] sm:$0xff]
  %v3154 = vld [vmem:[%s3122 + $0xf8] sm:$0xff]
  %v3155 = vld [vmem:[%s3122 + $0x100] sm:$0xff]
  %v3156 = vld [vmem:[%s3122 + $0x108] sm:$0xff]
  %v3157 = vld [vmem:[%s3122 + $0x110] sm:$0xff]
  %v3158 = vld [vmem:[%s3122 + $0x118] sm:$0xff]
  %v3159 = vld [vmem:[%s3122 + $0x120] sm:$0xff]
  %v3160 = vld [vmem:[%s3122 + $0x128] sm:$0xff]
  %v3161 = vld [vmem:[%s3122 + $0x130] sm:$0xff]
  %v3162 = vld [vmem:[%s3122 + $0x138] sm:$0xff]
  %v3163 = vld [vmem:[%s3122 + $0x140] sm:$0xff]
  %v3164 = vld [vmem:[%s3122 + $0x148] sm:$0xff]
  %v3165 = vld [vmem:[%s3122 + $0x150] sm:$0xff]
  %v3166 = vld [vmem:[%s3122 + $0x158] sm:$0xff]
  %v3167 = vld [vmem:[%s3122 + $0x160] sm:$0xff]
  %v3168 = vld [vmem:[%s3122 + $0x168] sm:$0xff]
  %v3169 = vld [vmem:[%s3122 + $0x170] sm:$0xff]
  %v3170 = vld [vmem:[%s3122 + $0x178] sm:$0xff]
  %v3171 = vld [vmem:[%s3122 + $0x180] sm:$0xff]
  %v3172 = vld [vmem:[%s3122 + $0x188] sm:$0xff]
  %v3173 = vld [vmem:[%s3122 + $0x190] sm:$0xff]
  %v3174 = vld [vmem:[%s3122 + $0x198] sm:$0xff]
  %v3175 = vld [vmem:[%s3122 + $0x1a0] sm:$0xff]
  %v3176 = vld [vmem:[%s3122 + $0x1a8] sm:$0xff]
  %v3177 = vld [vmem:[%s3122 + $0x1b0] sm:$0xff]
  %v3178 = vld [vmem:[%s3122 + $0x1b8] sm:$0xff]
  %v3179 = vld [vmem:[%s3122 + $0x1c0] sm:$0xff]
  %v3180 = vld [vmem:[%s3122 + $0x1c8] sm:$0xff]
  %v3181 = vld [vmem:[%s3122 + $0x1d0] sm:$0xff]
  %v3182 = vld [vmem:[%s3122 + $0x1d8] sm:$0xff]
  %v3183 = vld [vmem:[%s3122 + $0x1e0] sm:$0xff]
  %v3184 = vld [vmem:[%s3122 + $0x1e8] sm:$0xff]
  %v3185 = vld [vmem:[%s3122 + $0x1f0] sm:$0xff]
  %v3186 = vld [vmem:[%s3122 + $0x1f8] sm:$0xff]
  %s3187 = scalar_lea.vmem %s1, 6
  %v3188 = vld [vmem:[%s3187] sm:$0x1]
  %3190 = vset.pattern.permute.xlu0 0
  %3191 = vperm.xlu0 %3190, %v3123
  %v3192 = vpop.permute.xlu0 %3191
  %3195 = vset.pattern.permute.xlu0 0
  %3196 = vperm.xlu0 %3195, %v3124
  %v3197 = vpop.permute.xlu0 %3196
  %3200 = vset.pattern.permute.xlu0 0
  %3201 = vperm.xlu0 %3200, %v3125
  %v3202 = vpop.permute.xlu0 %3201
  %3205 = vset.pattern.permute.xlu0 0
  %3206 = vperm.xlu0 %3205, %v3126
  %v3207 = vpop.permute.xlu0 %3206
  %3210 = vset.pattern.permute.xlu0 0
  %3211 = vperm.xlu0 %3210, %v3127
  %v3212 = vpop.permute.xlu0 %3211
  %3215 = vset.pattern.permute.xlu0 0
  %3216 = vperm.xlu0 %3215, %v3128
  %v3217 = vpop.permute.xlu0 %3216
  %3220 = vset.pattern.permute.xlu0 0
  %3221 = vperm.xlu0 %3220, %v3129
  %v3222 = vpop.permute.xlu0 %3221
  %3225 = vset.pattern.permute.xlu0 0
  %3226 = vperm.xlu0 %3225, %v3130
  %v3227 = vpop.permute.xlu0 %3226
  %3230 = vset.pattern.permute.xlu0 0
  %3231 = vperm.xlu0 %3230, %v3131
  %v3232 = vpop.permute.xlu0 %3231
  %3235 = vset.pattern.permute.xlu0 0
  %3236 = vperm.xlu0 %3235, %v3132
  %v3237 = vpop.permute.xlu0 %3236
  %3240 = vset.pattern.permute.xlu0 0
  %3241 = vperm.xlu0 %3240, %v3133
  %v3242 = vpop.permute.xlu0 %3241
  %3245 = vset.pattern.permute.xlu0 0
  %3246 = vperm.xlu0 %3245, %v3134
  %v3247 = vpop.permute.xlu0 %3246
  %3250 = vset.pattern.permute.xlu0 0
  %3251 = vperm.xlu0 %3250, %v3135
  %v3252 = vpop.permute.xlu0 %3251
  %3255 = vset.pattern.permute.xlu0 0
  %3256 = vperm.xlu0 %3255, %v3136
  %v3257 = vpop.permute.xlu0 %3256
  %3260 = vset.pattern.permute.xlu0 0
  %3261 = vperm.xlu0 %3260, %v3137
  %v3262 = vpop.permute.xlu0 %3261
  %3265 = vset.pattern.permute.xlu0 0
  %3266 = vperm.xlu0 %3265, %v3138
  %v3267 = vpop.permute.xlu0 %3266
  %3270 = vset.pattern.permute.xlu0 0
  %3271 = vperm.xlu0 %3270, %v3139
  %v3272 = vpop.permute.xlu0 %3271
  %3275 = vset.pattern.permute.xlu0 0
  %3276 = vperm.xlu0 %3275, %v3140
  %v3277 = vpop.permute.xlu0 %3276
  %3280 = vset.pattern.permute.xlu0 0
  %3281 = vperm.xlu0 %3280, %v3141
  %v3282 = vpop.permute.xlu0 %3281
  %3285 = vset.pattern.permute.xlu0 0
  %3286 = vperm.xlu0 %3285, %v3142
  %v3287 = vpop.permute.xlu0 %3286
  %3290 = vset.pattern.permute.xlu0 0
  %3291 = vperm.xlu0 %3290, %v3143
  %v3292 = vpop.permute.xlu0 %3291
  %3295 = vset.pattern.permute.xlu0 0
  %3296 = vperm.xlu0 %3295, %v3144
  %v3297 = vpop.permute.xlu0 %3296
  %3300 = vset.pattern.permute.xlu0 0
  %3301 = vperm.xlu0 %3300, %v3145
  %v3302 = vpop.permute.xlu0 %3301
  %3305 = vset.pattern.permute.xlu0 0
  %3306 = vperm.xlu0 %3305, %v3146
  %v3307 = vpop.permute.xlu0 %3306
  %3310 = vset.pattern.permute.xlu0 0
  %3311 = vperm.xlu0 %3310, %v3147
  %v3312 = vpop.permute.xlu0 %3311
  %3315 = vset.pattern.permute.xlu0 0
  %3316 = vperm.xlu0 %3315, %v3148
  %v3317 = vpop.permute.xlu0 %3316
  %3320 = vset.pattern.permute.xlu0 0
  %3321 = vperm.xlu0 %3320, %v3149
  %v3322 = vpop.permute.xlu0 %3321
  %3325 = vset.pattern.permute.xlu0 0
  %3326 = vperm.xlu0 %3325, %v3150
  %v3327 = vpop.permute.xlu0 %3326
  %3330 = vset.pattern.permute.xlu0 0
  %3331 = vperm.xlu0 %3330, %v3151
  %v3332 = vpop.permute.xlu0 %3331
  %3335 = vset.pattern.permute.xlu0 0
  %3336 = vperm.xlu0 %3335, %v3152
  %v3337 = vpop.permute.xlu0 %3336
  %3340 = vset.pattern.permute.xlu0 0
  %3341 = vperm.xlu0 %3340, %v3153
  %v3342 = vpop.permute.xlu0 %3341
  %3345 = vset.pattern.permute.xlu0 0
  %3346 = vperm.xlu0 %3345, %v3154
  %v3347 = vpop.permute.xlu0 %3346
  %3350 = vset.pattern.permute.xlu0 0
  %3351 = vperm.xlu0 %3350, %v3155
  %v3352 = vpop.permute.xlu0 %3351
  %3355 = vset.pattern.permute.xlu0 0
  %3356 = vperm.xlu0 %3355, %v3156
  %v3357 = vpop.permute.xlu0 %3356
  %3360 = vset.pattern.permute.xlu0 0
  %3361 = vperm.xlu0 %3360, %v3157
  %v3362 = vpop.permute.xlu0 %3361
  %3365 = vset.pattern.permute.xlu0 0
  %3366 = vperm.xlu0 %3365, %v3158
  %v3367 = vpop.permute.xlu0 %3366
  %3370 = vset.pattern.permute.xlu0 0
  %3371 = vperm.xlu0 %3370, %v3159
  %v3372 = vpop.permute.xlu0 %3371
  %3375 = vset.pattern.permute.xlu0 0
  %3376 = vperm.xlu0 %3375, %v3160
  %v3377 = vpop.permute.xlu0 %3376
  %3380 = vset.pattern.permute.xlu0 0
  %3381 = vperm.xlu0 %3380, %v3161
  %v3382 = vpop.permute.xlu0 %3381
  %3385 = vset.pattern.permute.xlu0 0
  %3386 = vperm.xlu0 %3385, %v3162
  %v3387 = vpop.permute.xlu0 %3386
  %3390 = vset.pattern.permute.xlu0 0
  %3391 = vperm.xlu0 %3390, %v3163
  %v3392 = vpop.permute.xlu0 %3391
  %3395 = vset.pattern.permute.xlu0 0
  %3396 = vperm.xlu0 %3395, %v3164
  %v3397 = vpop.permute.xlu0 %3396
  %3400 = vset.pattern.permute.xlu0 0
  %3401 = vperm.xlu0 %3400, %v3165
  %v3402 = vpop.permute.xlu0 %3401
  %3405 = vset.pattern.permute.xlu0 0
  %3406 = vperm.xlu0 %3405, %v3166
  %v3407 = vpop.permute.xlu0 %3406
  %3410 = vset.pattern.permute.xlu0 0
  %3411 = vperm.xlu0 %3410, %v3167
  %v3412 = vpop.permute.xlu0 %3411
  %3415 = vset.pattern.permute.xlu0 0
  %3416 = vperm.xlu0 %3415, %v3168
  %v3417 = vpop.permute.xlu0 %3416
  %3420 = vset.pattern.permute.xlu0 0
  %3421 = vperm.xlu0 %3420, %v3169
  %v3422 = vpop.permute.xlu0 %3421
  %3425 = vset.pattern.permute.xlu0 0
  %3426 = vperm.xlu0 %3425, %v3170
  %v3427 = vpop.permute.xlu0 %3426
  %3430 = vset.pattern.permute.xlu0 0
  %3431 = vperm.xlu0 %3430, %v3171
  %v3432 = vpop.permute.xlu0 %3431
  %3435 = vset.pattern.permute.xlu0 0
  %3436 = vperm.xlu0 %3435, %v3172
  %v3437 = vpop.permute.xlu0 %3436
  %3440 = vset.pattern.permute.xlu0 0
  %3441 = vperm.xlu0 %3440, %v3173
  %v3442 = vpop.permute.xlu0 %3441
  %3445 = vset.pattern.permute.xlu0 0
  %3446 = vperm.xlu0 %3445, %v3174
  %v3447 = vpop.permute.xlu0 %3446
  %3450 = vset.pattern.permute.xlu0 0
  %3451 = vperm.xlu0 %3450, %v3175
  %v3452 = vpop.permute.xlu0 %3451
  %3455 = vset.pattern.permute.xlu0 0
  %3456 = vperm.xlu0 %3455, %v3176
  %v3457 = vpop.permute.xlu0 %3456
  %3460 = vset.pattern.permute.xlu0 0
  %3461 = vperm.xlu0 %3460, %v3177
  %v3462 = vpop.permute.xlu0 %3461
  %3465 = vset.pattern.permute.xlu0 0
  %3466 = vperm.xlu0 %3465, %v3178
  %v3467 = vpop.permute.xlu0 %3466
  %3470 = vset.pattern.permute.xlu0 0
  %3471 = vperm.xlu0 %3470, %v3179
  %v3472 = vpop.permute.xlu0 %3471
  %3475 = vset.pattern.permute.xlu0 0
  %3476 = vperm.xlu0 %3475, %v3180
  %v3477 = vpop.permute.xlu0 %3476
  %3480 = vset.pattern.permute.xlu0 0
  %3481 = vperm.xlu0 %3480, %v3181
  %v3482 = vpop.permute.xlu0 %3481
  %3485 = vset.pattern.permute.xlu0 0
  %3486 = vperm.xlu0 %3485, %v3182
  %v3487 = vpop.permute.xlu0 %3486
  %3490 = vset.pattern.permute.xlu0 0
  %3491 = vperm.xlu0 %3490, %v3183
  %v3492 = vpop.permute.xlu0 %3491
  %3495 = vset.pattern.permute.xlu0 0
  %3496 = vperm.xlu0 %3495, %v3184
  %v3497 = vpop.permute.xlu0 %3496
  %3500 = vset.pattern.permute.xlu0 0
  %3501 = vperm.xlu0 %3500, %v3185
  %v3502 = vpop.permute.xlu0 %3501
  %3505 = vset.pattern.permute.xlu0 0
  %3506 = vperm.xlu0 %3505, %v3186
  %v3507 = vpop.permute.xlu0 %3506
  %v3510 = vlaneseq
  %v3511 = vshrl.u32 %v3510, 7
  %v3512 = vsub.s32 0, %v3511
  %v3513 = vrot.slane %v3188, %v3512
  %v3515 = vmul.f32 %v3192, %v3513
  %v3516 = vmul.f32 %v3197, %v3513
  %v3517 = vmul.f32 %v3202, %v3513
  %v3518 = vmul.f32 %v3207, %v3513
  %v3519 = vmul.f32 %v3212, %v3513
  %v3520 = vmul.f32 %v3217, %v3513
  %v3521 = vmul.f32 %v3222, %v3513
  %v3522 = vmul.f32 %v3227, %v3513
  %v3523 = vmul.f32 %v3232, %v3513
  %v3524 = vmul.f32 %v3237, %v3513
  %v3525 = vmul.f32 %v3242, %v3513
  %v3526 = vmul.f32 %v3247, %v3513
  %v3527 = vmul.f32 %v3252, %v3513
  %v3528 = vmul.f32 %v3257, %v3513
  %v3529 = vmul.f32 %v3262, %v3513
  %v3530 = vmul.f32 %v3267, %v3513
  %v3531 = vmul.f32 %v3272, %v3513
  %v3532 = vmul.f32 %v3277, %v3513
  %v3533 = vmul.f32 %v3282, %v3513
  %v3534 = vmul.f32 %v3287, %v3513
  %v3535 = vmul.f32 %v3292, %v3513
  %v3536 = vmul.f32 %v3297, %v3513
  %v3537 = vmul.f32 %v3302, %v3513
  %v3538 = vmul.f32 %v3307, %v3513
  %v3539 = vmul.f32 %v3312, %v3513
  %v3540 = vmul.f32 %v3317, %v3513
  %v3541 = vmul.f32 %v3322, %v3513
  %v3542 = vmul.f32 %v3327, %v3513
  %v3543 = vmul.f32 %v3332, %v3513
  %v3544 = vmul.f32 %v3337, %v3513
  %v3545 = vmul.f32 %v3342, %v3513
  %v3546 = vmul.f32 %v3347, %v3513
  %v3547 = vmul.f32 %v3352, %v3513
  %v3548 = vmul.f32 %v3357, %v3513
  %v3549 = vmul.f32 %v3362, %v3513
  %v3550 = vmul.f32 %v3367, %v3513
  %v3551 = vmul.f32 %v3372, %v3513
  %v3552 = vmul.f32 %v3377, %v3513
  %v3553 = vmul.f32 %v3382, %v3513
  %v3554 = vmul.f32 %v3387, %v3513
  %v3555 = vmul.f32 %v3392, %v3513
  %v3556 = vmul.f32 %v3397, %v3513
  %v3557 = vmul.f32 %v3402, %v3513
  %v3558 = vmul.f32 %v3407, %v3513
  %v3559 = vmul.f32 %v3412, %v3513
  %v3560 = vmul.f32 %v3417, %v3513
  %v3561 = vmul.f32 %v3422, %v3513
  %v3562 = vmul.f32 %v3427, %v3513
  %v3563 = vmul.f32 %v3432, %v3513
  %v3564 = vmul.f32 %v3437, %v3513
  %v3565 = vmul.f32 %v3442, %v3513
  %v3566 = vmul.f32 %v3447, %v3513
  %v3567 = vmul.f32 %v3452, %v3513
  %v3568 = vmul.f32 %v3457, %v3513
  %v3569 = vmul.f32 %v3462, %v3513
  %v3570 = vmul.f32 %v3467, %v3513
  %v3571 = vmul.f32 %v3472, %v3513
  %v3572 = vmul.f32 %v3477, %v3513
  %v3573 = vmul.f32 %v3482, %v3513
  %v3574 = vmul.f32 %v3487, %v3513
  %v3575 = vmul.f32 %v3492, %v3513
  %v3576 = vmul.f32 %v3497, %v3513
  %v3577 = vmul.f32 %v3502, %v3513
  %v3578 = vmul.f32 %v3507, %v3513
  %v3579 = vadd.f32 %v3058, %v3515
  %v3580 = vadd.f32 %v3059, %v3516
  %v3581 = vadd.f32 %v3060, %v3517
  %v3582 = vadd.f32 %v3061, %v3518
  %v3583 = vadd.f32 %v3062, %v3519
  %v3584 = vadd.f32 %v3063, %v3520
  %v3585 = vadd.f32 %v3064, %v3521
  %v3586 = vadd.f32 %v3065, %v3522
  %v3587 = vadd.f32 %v3066, %v3523
  %v3588 = vadd.f32 %v3067, %v3524
  %v3589 = vadd.f32 %v3068, %v3525
  %v3590 = vadd.f32 %v3069, %v3526
  %v3591 = vadd.f32 %v3070, %v3527
  %v3592 = vadd.f32 %v3071, %v3528
  %v3593 = vadd.f32 %v3072, %v3529
  %v3594 = vadd.f32 %v3073, %v3530
  %v3595 = vadd.f32 %v3074, %v3531
  %v3596 = vadd.f32 %v3075, %v3532
  %v3597 = vadd.f32 %v3076, %v3533
  %v3598 = vadd.f32 %v3077, %v3534
  %v3599 = vadd.f32 %v3078, %v3535
  %v3600 = vadd.f32 %v3079, %v3536
  %v3601 = vadd.f32 %v3080, %v3537
  %v3602 = vadd.f32 %v3081, %v3538
  %v3603 = vadd.f32 %v3082, %v3539
  %v3604 = vadd.f32 %v3083, %v3540
  %v3605 = vadd.f32 %v3084, %v3541
  %v3606 = vadd.f32 %v3085, %v3542
  %v3607 = vadd.f32 %v3086, %v3543
  %v3608 = vadd.f32 %v3087, %v3544
  %v3609 = vadd.f32 %v3088, %v3545
  %v3610 = vadd.f32 %v3089, %v3546
  %v3611 = vadd.f32 %v3090, %v3547
  %v3612 = vadd.f32 %v3091, %v3548
  %v3613 = vadd.f32 %v3092, %v3549
  %v3614 = vadd.f32 %v3093, %v3550
  %v3615 = vadd.f32 %v3094, %v3551
  %v3616 = vadd.f32 %v3095, %v3552
  %v3617 = vadd.f32 %v3096, %v3553
  %v3618 = vadd.f32 %v3097, %v3554
  %v3619 = vadd.f32 %v3098, %v3555
  %v3620 = vadd.f32 %v3099, %v3556
  %v3621 = vadd.f32 %v3100, %v3557
  %v3622 = vadd.f32 %v3101, %v3558
  %v3623 = vadd.f32 %v3102, %v3559
  %v3624 = vadd.f32 %v3103, %v3560
  %v3625 = vadd.f32 %v3104, %v3561
  %v3626 = vadd.f32 %v3105, %v3562
  %v3627 = vadd.f32 %v3106, %v3563
  %v3628 = vadd.f32 %v3107, %v3564
  %v3629 = vadd.f32 %v3108, %v3565
  %v3630 = vadd.f32 %v3109, %v3566
  %v3631 = vadd.f32 %v3110, %v3567
  %v3632 = vadd.f32 %v3111, %v3568
  %v3633 = vadd.f32 %v3112, %v3569
  %v3634 = vadd.f32 %v3113, %v3570
  %v3635 = vadd.f32 %v3114, %v3571
  %v3636 = vadd.f32 %v3115, %v3572
  %v3637 = vadd.f32 %v3116, %v3573
  %v3638 = vadd.f32 %v3117, %v3574
  %v3639 = vadd.f32 %v3118, %v3575
  %v3640 = vadd.f32 %v3119, %v3576
  %v3641 = vadd.f32 %v3120, %v3577
  %v3642 = vadd.f32 %v3121, %v3578
  %s3643 = scalar_lea.vmem %s0, 3584
  %v3644 = vld [vmem:[%s3643] sm:$0xff]
  %v3645 = vld [vmem:[%s3643 + $0x8] sm:$0xff]
  %v3646 = vld [vmem:[%s3643 + $0x10] sm:$0xff]
  %v3647 = vld [vmem:[%s3643 + $0x18] sm:$0xff]
  %v3648 = vld [vmem:[%s3643 + $0x20] sm:$0xff]
  %v3649 = vld [vmem:[%s3643 + $0x28] sm:$0xff]
  %v3650 = vld [vmem:[%s3643 + $0x30] sm:$0xff]
  %v3651 = vld [vmem:[%s3643 + $0x38] sm:$0xff]
  %v3652 = vld [vmem:[%s3643 + $0x40] sm:$0xff]
  %v3653 = vld [vmem:[%s3643 + $0x48] sm:$0xff]
  %v3654 = vld [vmem:[%s3643 + $0x50] sm:$0xff]
  %v3655 = vld [vmem:[%s3643 + $0x58] sm:$0xff]
  %v3656 = vld [vmem:[%s3643 + $0x60] sm:$0xff]
  %v3657 = vld [vmem:[%s3643 + $0x68] sm:$0xff]
  %v3658 = vld [vmem:[%s3643 + $0x70] sm:$0xff]
  %v3659 = vld [vmem:[%s3643 + $0x78] sm:$0xff]
  %v3660 = vld [vmem:[%s3643 + $0x80] sm:$0xff]
  %v3661 = vld [vmem:[%s3643 + $0x88] sm:$0xff]
  %v3662 = vld [vmem:[%s3643 + $0x90] sm:$0xff]
  %v3663 = vld [vmem:[%s3643 + $0x98] sm:$0xff]
  %v3664 = vld [vmem:[%s3643 + $0xa0] sm:$0xff]
  %v3665 = vld [vmem:[%s3643 + $0xa8] sm:$0xff]
  %v3666 = vld [vmem:[%s3643 + $0xb0] sm:$0xff]
  %v3667 = vld [vmem:[%s3643 + $0xb8] sm:$0xff]
  %v3668 = vld [vmem:[%s3643 + $0xc0] sm:$0xff]
  %v3669 = vld [vmem:[%s3643 + $0xc8] sm:$0xff]
  %v3670 = vld [vmem:[%s3643 + $0xd0] sm:$0xff]
  %v3671 = vld [vmem:[%s3643 + $0xd8] sm:$0xff]
  %v3672 = vld [vmem:[%s3643 + $0xe0] sm:$0xff]
  %v3673 = vld [vmem:[%s3643 + $0xe8] sm:$0xff]
  %v3674 = vld [vmem:[%s3643 + $0xf0] sm:$0xff]
  %v3675 = vld [vmem:[%s3643 + $0xf8] sm:$0xff]
  %v3676 = vld [vmem:[%s3643 + $0x100] sm:$0xff]
  %v3677 = vld [vmem:[%s3643 + $0x108] sm:$0xff]
  %v3678 = vld [vmem:[%s3643 + $0x110] sm:$0xff]
  %v3679 = vld [vmem:[%s3643 + $0x118] sm:$0xff]
  %v3680 = vld [vmem:[%s3643 + $0x120] sm:$0xff]
  %v3681 = vld [vmem:[%s3643 + $0x128] sm:$0xff]
  %v3682 = vld [vmem:[%s3643 + $0x130] sm:$0xff]
  %v3683 = vld [vmem:[%s3643 + $0x138] sm:$0xff]
  %v3684 = vld [vmem:[%s3643 + $0x140] sm:$0xff]
  %v3685 = vld [vmem:[%s3643 + $0x148] sm:$0xff]
  %v3686 = vld [vmem:[%s3643 + $0x150] sm:$0xff]
  %v3687 = vld [vmem:[%s3643 + $0x158] sm:$0xff]
  %v3688 = vld [vmem:[%s3643 + $0x160] sm:$0xff]
  %v3689 = vld [vmem:[%s3643 + $0x168] sm:$0xff]
  %v3690 = vld [vmem:[%s3643 + $0x170] sm:$0xff]
  %v3691 = vld [vmem:[%s3643 + $0x178] sm:$0xff]
  %v3692 = vld [vmem:[%s3643 + $0x180] sm:$0xff]
  %v3693 = vld [vmem:[%s3643 + $0x188] sm:$0xff]
  %v3694 = vld [vmem:[%s3643 + $0x190] sm:$0xff]
  %v3695 = vld [vmem:[%s3643 + $0x198] sm:$0xff]
  %v3696 = vld [vmem:[%s3643 + $0x1a0] sm:$0xff]
  %v3697 = vld [vmem:[%s3643 + $0x1a8] sm:$0xff]
  %v3698 = vld [vmem:[%s3643 + $0x1b0] sm:$0xff]
  %v3699 = vld [vmem:[%s3643 + $0x1b8] sm:$0xff]
  %v3700 = vld [vmem:[%s3643 + $0x1c0] sm:$0xff]
  %v3701 = vld [vmem:[%s3643 + $0x1c8] sm:$0xff]
  %v3702 = vld [vmem:[%s3643 + $0x1d0] sm:$0xff]
  %v3703 = vld [vmem:[%s3643 + $0x1d8] sm:$0xff]
  %v3704 = vld [vmem:[%s3643 + $0x1e0] sm:$0xff]
  %v3705 = vld [vmem:[%s3643 + $0x1e8] sm:$0xff]
  %v3706 = vld [vmem:[%s3643 + $0x1f0] sm:$0xff]
  %v3707 = vld [vmem:[%s3643 + $0x1f8] sm:$0xff]
  %s3708 = scalar_lea.vmem %s1, 7
  %v3709 = vld [vmem:[%s3708] sm:$0x1]
  %3711 = vset.pattern.permute.xlu0 0
  %3712 = vperm.xlu0 %3711, %v3644
  %v3713 = vpop.permute.xlu0 %3712
  %3716 = vset.pattern.permute.xlu0 0
  %3717 = vperm.xlu0 %3716, %v3645
  %v3718 = vpop.permute.xlu0 %3717
  %3721 = vset.pattern.permute.xlu0 0
  %3722 = vperm.xlu0 %3721, %v3646
  %v3723 = vpop.permute.xlu0 %3722
  %3726 = vset.pattern.permute.xlu0 0
  %3727 = vperm.xlu0 %3726, %v3647
  %v3728 = vpop.permute.xlu0 %3727
  %3731 = vset.pattern.permute.xlu0 0
  %3732 = vperm.xlu0 %3731, %v3648
  %v3733 = vpop.permute.xlu0 %3732
  %3736 = vset.pattern.permute.xlu0 0
  %3737 = vperm.xlu0 %3736, %v3649
  %v3738 = vpop.permute.xlu0 %3737
  %3741 = vset.pattern.permute.xlu0 0
  %3742 = vperm.xlu0 %3741, %v3650
  %v3743 = vpop.permute.xlu0 %3742
  %3746 = vset.pattern.permute.xlu0 0
  %3747 = vperm.xlu0 %3746, %v3651
  %v3748 = vpop.permute.xlu0 %3747
  %3751 = vset.pattern.permute.xlu0 0
  %3752 = vperm.xlu0 %3751, %v3652
  %v3753 = vpop.permute.xlu0 %3752
  %3756 = vset.pattern.permute.xlu0 0
  %3757 = vperm.xlu0 %3756, %v3653
  %v3758 = vpop.permute.xlu0 %3757
  %3761 = vset.pattern.permute.xlu0 0
  %3762 = vperm.xlu0 %3761, %v3654
  %v3763 = vpop.permute.xlu0 %3762
  %3766 = vset.pattern.permute.xlu0 0
  %3767 = vperm.xlu0 %3766, %v3655
  %v3768 = vpop.permute.xlu0 %3767
  %3771 = vset.pattern.permute.xlu0 0
  %3772 = vperm.xlu0 %3771, %v3656
  %v3773 = vpop.permute.xlu0 %3772
  %3776 = vset.pattern.permute.xlu0 0
  %3777 = vperm.xlu0 %3776, %v3657
  %v3778 = vpop.permute.xlu0 %3777
  %3781 = vset.pattern.permute.xlu0 0
  %3782 = vperm.xlu0 %3781, %v3658
  %v3783 = vpop.permute.xlu0 %3782
  %3786 = vset.pattern.permute.xlu0 0
  %3787 = vperm.xlu0 %3786, %v3659
  %v3788 = vpop.permute.xlu0 %3787
  %3791 = vset.pattern.permute.xlu0 0
  %3792 = vperm.xlu0 %3791, %v3660
  %v3793 = vpop.permute.xlu0 %3792
  %3796 = vset.pattern.permute.xlu0 0
  %3797 = vperm.xlu0 %3796, %v3661
  %v3798 = vpop.permute.xlu0 %3797
  %3801 = vset.pattern.permute.xlu0 0
  %3802 = vperm.xlu0 %3801, %v3662
  %v3803 = vpop.permute.xlu0 %3802
  %3806 = vset.pattern.permute.xlu0 0
  %3807 = vperm.xlu0 %3806, %v3663
  %v3808 = vpop.permute.xlu0 %3807
  %3811 = vset.pattern.permute.xlu0 0
  %3812 = vperm.xlu0 %3811, %v3664
  %v3813 = vpop.permute.xlu0 %3812
  %3816 = vset.pattern.permute.xlu0 0
  %3817 = vperm.xlu0 %3816, %v3665
  %v3818 = vpop.permute.xlu0 %3817
  %3821 = vset.pattern.permute.xlu0 0
  %3822 = vperm.xlu0 %3821, %v3666
  %v3823 = vpop.permute.xlu0 %3822
  %3826 = vset.pattern.permute.xlu0 0
  %3827 = vperm.xlu0 %3826, %v3667
  %v3828 = vpop.permute.xlu0 %3827
  %3831 = vset.pattern.permute.xlu0 0
  %3832 = vperm.xlu0 %3831, %v3668
  %v3833 = vpop.permute.xlu0 %3832
  %3836 = vset.pattern.permute.xlu0 0
  %3837 = vperm.xlu0 %3836, %v3669
  %v3838 = vpop.permute.xlu0 %3837
  %3841 = vset.pattern.permute.xlu0 0
  %3842 = vperm.xlu0 %3841, %v3670
  %v3843 = vpop.permute.xlu0 %3842
  %3846 = vset.pattern.permute.xlu0 0
  %3847 = vperm.xlu0 %3846, %v3671
  %v3848 = vpop.permute.xlu0 %3847
  %3851 = vset.pattern.permute.xlu0 0
  %3852 = vperm.xlu0 %3851, %v3672
  %v3853 = vpop.permute.xlu0 %3852
  %3856 = vset.pattern.permute.xlu0 0
  %3857 = vperm.xlu0 %3856, %v3673
  %v3858 = vpop.permute.xlu0 %3857
  %3861 = vset.pattern.permute.xlu0 0
  %3862 = vperm.xlu0 %3861, %v3674
  %v3863 = vpop.permute.xlu0 %3862
  %3866 = vset.pattern.permute.xlu0 0
  %3867 = vperm.xlu0 %3866, %v3675
  %v3868 = vpop.permute.xlu0 %3867
  %3871 = vset.pattern.permute.xlu0 0
  %3872 = vperm.xlu0 %3871, %v3676
  %v3873 = vpop.permute.xlu0 %3872
  %3876 = vset.pattern.permute.xlu0 0
  %3877 = vperm.xlu0 %3876, %v3677
  %v3878 = vpop.permute.xlu0 %3877
  %3881 = vset.pattern.permute.xlu0 0
  %3882 = vperm.xlu0 %3881, %v3678
  %v3883 = vpop.permute.xlu0 %3882
  %3886 = vset.pattern.permute.xlu0 0
  %3887 = vperm.xlu0 %3886, %v3679
  %v3888 = vpop.permute.xlu0 %3887
  %3891 = vset.pattern.permute.xlu0 0
  %3892 = vperm.xlu0 %3891, %v3680
  %v3893 = vpop.permute.xlu0 %3892
  %3896 = vset.pattern.permute.xlu0 0
  %3897 = vperm.xlu0 %3896, %v3681
  %v3898 = vpop.permute.xlu0 %3897
  %3901 = vset.pattern.permute.xlu0 0
  %3902 = vperm.xlu0 %3901, %v3682
  %v3903 = vpop.permute.xlu0 %3902
  %3906 = vset.pattern.permute.xlu0 0
  %3907 = vperm.xlu0 %3906, %v3683
  %v3908 = vpop.permute.xlu0 %3907
  %3911 = vset.pattern.permute.xlu0 0
  %3912 = vperm.xlu0 %3911, %v3684
  %v3913 = vpop.permute.xlu0 %3912
  %3916 = vset.pattern.permute.xlu0 0
  %3917 = vperm.xlu0 %3916, %v3685
  %v3918 = vpop.permute.xlu0 %3917
  %3921 = vset.pattern.permute.xlu0 0
  %3922 = vperm.xlu0 %3921, %v3686
  %v3923 = vpop.permute.xlu0 %3922
  %3926 = vset.pattern.permute.xlu0 0
  %3927 = vperm.xlu0 %3926, %v3687
  %v3928 = vpop.permute.xlu0 %3927
  %3931 = vset.pattern.permute.xlu0 0
  %3932 = vperm.xlu0 %3931, %v3688
  %v3933 = vpop.permute.xlu0 %3932
  %3936 = vset.pattern.permute.xlu0 0
  %3937 = vperm.xlu0 %3936, %v3689
  %v3938 = vpop.permute.xlu0 %3937
  %3941 = vset.pattern.permute.xlu0 0
  %3942 = vperm.xlu0 %3941, %v3690
  %v3943 = vpop.permute.xlu0 %3942
  %3946 = vset.pattern.permute.xlu0 0
  %3947 = vperm.xlu0 %3946, %v3691
  %v3948 = vpop.permute.xlu0 %3947
  %3951 = vset.pattern.permute.xlu0 0
  %3952 = vperm.xlu0 %3951, %v3692
  %v3953 = vpop.permute.xlu0 %3952
  %3956 = vset.pattern.permute.xlu0 0
  %3957 = vperm.xlu0 %3956, %v3693
  %v3958 = vpop.permute.xlu0 %3957
  %3961 = vset.pattern.permute.xlu0 0
  %3962 = vperm.xlu0 %3961, %v3694
  %v3963 = vpop.permute.xlu0 %3962
  %3966 = vset.pattern.permute.xlu0 0
  %3967 = vperm.xlu0 %3966, %v3695
  %v3968 = vpop.permute.xlu0 %3967
  %3971 = vset.pattern.permute.xlu0 0
  %3972 = vperm.xlu0 %3971, %v3696
  %v3973 = vpop.permute.xlu0 %3972
  %3976 = vset.pattern.permute.xlu0 0
  %3977 = vperm.xlu0 %3976, %v3697
  %v3978 = vpop.permute.xlu0 %3977
  %3981 = vset.pattern.permute.xlu0 0
  %3982 = vperm.xlu0 %3981, %v3698
  %v3983 = vpop.permute.xlu0 %3982
  %3986 = vset.pattern.permute.xlu0 0
  %3987 = vperm.xlu0 %3986, %v3699
  %v3988 = vpop.permute.xlu0 %3987
  %3991 = vset.pattern.permute.xlu0 0
  %3992 = vperm.xlu0 %3991, %v3700
  %v3993 = vpop.permute.xlu0 %3992
  %3996 = vset.pattern.permute.xlu0 0
  %3997 = vperm.xlu0 %3996, %v3701
  %v3998 = vpop.permute.xlu0 %3997
  %4001 = vset.pattern.permute.xlu0 0
  %4002 = vperm.xlu0 %4001, %v3702
  %v4003 = vpop.permute.xlu0 %4002
  %4006 = vset.pattern.permute.xlu0 0
  %4007 = vperm.xlu0 %4006, %v3703
  %v4008 = vpop.permute.xlu0 %4007
  %4011 = vset.pattern.permute.xlu0 0
  %4012 = vperm.xlu0 %4011, %v3704
  %v4013 = vpop.permute.xlu0 %4012
  %4016 = vset.pattern.permute.xlu0 0
  %4017 = vperm.xlu0 %4016, %v3705
  %v4018 = vpop.permute.xlu0 %4017
  %4021 = vset.pattern.permute.xlu0 0
  %4022 = vperm.xlu0 %4021, %v3706
  %v4023 = vpop.permute.xlu0 %4022
  %4026 = vset.pattern.permute.xlu0 0
  %4027 = vperm.xlu0 %4026, %v3707
  %v4028 = vpop.permute.xlu0 %4027
  %v4031 = vlaneseq
  %v4032 = vshrl.u32 %v4031, 7
  %v4033 = vsub.s32 0, %v4032
  %v4034 = vrot.slane %v3709, %v4033
  %v4036 = vmul.f32 %v3713, %v4034
  %v4037 = vmul.f32 %v3718, %v4034
  %v4038 = vmul.f32 %v3723, %v4034
  %v4039 = vmul.f32 %v3728, %v4034
  %v4040 = vmul.f32 %v3733, %v4034
  %v4041 = vmul.f32 %v3738, %v4034
  %v4042 = vmul.f32 %v3743, %v4034
  %v4043 = vmul.f32 %v3748, %v4034
  %v4044 = vmul.f32 %v3753, %v4034
  %v4045 = vmul.f32 %v3758, %v4034
  %v4046 = vmul.f32 %v3763, %v4034
  %v4047 = vmul.f32 %v3768, %v4034
  %v4048 = vmul.f32 %v3773, %v4034
  %v4049 = vmul.f32 %v3778, %v4034
  %v4050 = vmul.f32 %v3783, %v4034
  %v4051 = vmul.f32 %v3788, %v4034
  %v4052 = vmul.f32 %v3793, %v4034
  %v4053 = vmul.f32 %v3798, %v4034
  %v4054 = vmul.f32 %v3803, %v4034
  %v4055 = vmul.f32 %v3808, %v4034
  %v4056 = vmul.f32 %v3813, %v4034
  %v4057 = vmul.f32 %v3818, %v4034
  %v4058 = vmul.f32 %v3823, %v4034
  %v4059 = vmul.f32 %v3828, %v4034
  %v4060 = vmul.f32 %v3833, %v4034
  %v4061 = vmul.f32 %v3838, %v4034
  %v4062 = vmul.f32 %v3843, %v4034
  %v4063 = vmul.f32 %v3848, %v4034
  %v4064 = vmul.f32 %v3853, %v4034
  %v4065 = vmul.f32 %v3858, %v4034
  %v4066 = vmul.f32 %v3863, %v4034
  %v4067 = vmul.f32 %v3868, %v4034
  %v4068 = vmul.f32 %v3873, %v4034
  %v4069 = vmul.f32 %v3878, %v4034
  %v4070 = vmul.f32 %v3883, %v4034
  %v4071 = vmul.f32 %v3888, %v4034
  %v4072 = vmul.f32 %v3893, %v4034
  %v4073 = vmul.f32 %v3898, %v4034
  %v4074 = vmul.f32 %v3903, %v4034
  %v4075 = vmul.f32 %v3908, %v4034
  %v4076 = vmul.f32 %v3913, %v4034
  %v4077 = vmul.f32 %v3918, %v4034
  %v4078 = vmul.f32 %v3923, %v4034
  %v4079 = vmul.f32 %v3928, %v4034
  %v4080 = vmul.f32 %v3933, %v4034
  %v4081 = vmul.f32 %v3938, %v4034
  %v4082 = vmul.f32 %v3943, %v4034
  %v4083 = vmul.f32 %v3948, %v4034
  %v4084 = vmul.f32 %v3953, %v4034
  %v4085 = vmul.f32 %v3958, %v4034
  %v4086 = vmul.f32 %v3963, %v4034
  %v4087 = vmul.f32 %v3968, %v4034
  %v4088 = vmul.f32 %v3973, %v4034
  %v4089 = vmul.f32 %v3978, %v4034
  %v4090 = vmul.f32 %v3983, %v4034
  %v4091 = vmul.f32 %v3988, %v4034
  %v4092 = vmul.f32 %v3993, %v4034
  %v4093 = vmul.f32 %v3998, %v4034
  %v4094 = vmul.f32 %v4003, %v4034
  %v4095 = vmul.f32 %v4008, %v4034
  %v4096 = vmul.f32 %v4013, %v4034
  %v4097 = vmul.f32 %v4018, %v4034
  %v4098 = vmul.f32 %v4023, %v4034
  %v4099 = vmul.f32 %v4028, %v4034
  %v4100 = vadd.f32 %v3579, %v4036
  %v4101 = vadd.f32 %v3580, %v4037
  %v4102 = vadd.f32 %v3581, %v4038
  %v4103 = vadd.f32 %v3582, %v4039
  %v4104 = vadd.f32 %v3583, %v4040
  %v4105 = vadd.f32 %v3584, %v4041
  %v4106 = vadd.f32 %v3585, %v4042
  %v4107 = vadd.f32 %v3586, %v4043
  %v4108 = vadd.f32 %v3587, %v4044
  %v4109 = vadd.f32 %v3588, %v4045
  %v4110 = vadd.f32 %v3589, %v4046
  %v4111 = vadd.f32 %v3590, %v4047
  %v4112 = vadd.f32 %v3591, %v4048
  %v4113 = vadd.f32 %v3592, %v4049
  %v4114 = vadd.f32 %v3593, %v4050
  %v4115 = vadd.f32 %v3594, %v4051
  %v4116 = vadd.f32 %v3595, %v4052
  %v4117 = vadd.f32 %v3596, %v4053
  %v4118 = vadd.f32 %v3597, %v4054
  %v4119 = vadd.f32 %v3598, %v4055
  %v4120 = vadd.f32 %v3599, %v4056
  %v4121 = vadd.f32 %v3600, %v4057
  %v4122 = vadd.f32 %v3601, %v4058
  %v4123 = vadd.f32 %v3602, %v4059
  %v4124 = vadd.f32 %v3603, %v4060
  %v4125 = vadd.f32 %v3604, %v4061
  %v4126 = vadd.f32 %v3605, %v4062
  %v4127 = vadd.f32 %v3606, %v4063
  %v4128 = vadd.f32 %v3607, %v4064
  %v4129 = vadd.f32 %v3608, %v4065
  %v4130 = vadd.f32 %v3609, %v4066
  %v4131 = vadd.f32 %v3610, %v4067
  %v4132 = vadd.f32 %v3611, %v4068
  %v4133 = vadd.f32 %v3612, %v4069
  %v4134 = vadd.f32 %v3613, %v4070
  %v4135 = vadd.f32 %v3614, %v4071
  %v4136 = vadd.f32 %v3615, %v4072
  %v4137 = vadd.f32 %v3616, %v4073
  %v4138 = vadd.f32 %v3617, %v4074
  %v4139 = vadd.f32 %v3618, %v4075
  %v4140 = vadd.f32 %v3619, %v4076
  %v4141 = vadd.f32 %v3620, %v4077
  %v4142 = vadd.f32 %v3621, %v4078
  %v4143 = vadd.f32 %v3622, %v4079
  %v4144 = vadd.f32 %v3623, %v4080
  %v4145 = vadd.f32 %v3624, %v4081
  %v4146 = vadd.f32 %v3625, %v4082
  %v4147 = vadd.f32 %v3626, %v4083
  %v4148 = vadd.f32 %v3627, %v4084
  %v4149 = vadd.f32 %v3628, %v4085
  %v4150 = vadd.f32 %v3629, %v4086
  %v4151 = vadd.f32 %v3630, %v4087
  %v4152 = vadd.f32 %v3631, %v4088
  %v4153 = vadd.f32 %v3632, %v4089
  %v4154 = vadd.f32 %v3633, %v4090
  %v4155 = vadd.f32 %v3634, %v4091
  %v4156 = vadd.f32 %v3635, %v4092
  %v4157 = vadd.f32 %v3636, %v4093
  %v4158 = vadd.f32 %v3637, %v4094
  %v4159 = vadd.f32 %v3638, %v4095
  %v4160 = vadd.f32 %v3639, %v4096
  %v4161 = vadd.f32 %v3640, %v4097
  %v4162 = vadd.f32 %v3641, %v4098
  %v4163 = vadd.f32 %v3642, %v4099
  %s4164 = scalar_lea.vmem %s0, 4096
  %v4165 = vld [vmem:[%s4164] sm:$0xff]
  %v4166 = vld [vmem:[%s4164 + $0x8] sm:$0xff]
  %v4167 = vld [vmem:[%s4164 + $0x10] sm:$0xff]
  %v4168 = vld [vmem:[%s4164 + $0x18] sm:$0xff]
  %v4169 = vld [vmem:[%s4164 + $0x20] sm:$0xff]
  %v4170 = vld [vmem:[%s4164 + $0x28] sm:$0xff]
  %v4171 = vld [vmem:[%s4164 + $0x30] sm:$0xff]
  %v4172 = vld [vmem:[%s4164 + $0x38] sm:$0xff]
  %v4173 = vld [vmem:[%s4164 + $0x40] sm:$0xff]
  %v4174 = vld [vmem:[%s4164 + $0x48] sm:$0xff]
  %v4175 = vld [vmem:[%s4164 + $0x50] sm:$0xff]
  %v4176 = vld [vmem:[%s4164 + $0x58] sm:$0xff]
  %v4177 = vld [vmem:[%s4164 + $0x60] sm:$0xff]
  %v4178 = vld [vmem:[%s4164 + $0x68] sm:$0xff]
  %v4179 = vld [vmem:[%s4164 + $0x70] sm:$0xff]
  %v4180 = vld [vmem:[%s4164 + $0x78] sm:$0xff]
  %v4181 = vld [vmem:[%s4164 + $0x80] sm:$0xff]
  %v4182 = vld [vmem:[%s4164 + $0x88] sm:$0xff]
  %v4183 = vld [vmem:[%s4164 + $0x90] sm:$0xff]
  %v4184 = vld [vmem:[%s4164 + $0x98] sm:$0xff]
  %v4185 = vld [vmem:[%s4164 + $0xa0] sm:$0xff]
  %v4186 = vld [vmem:[%s4164 + $0xa8] sm:$0xff]
  %v4187 = vld [vmem:[%s4164 + $0xb0] sm:$0xff]
  %v4188 = vld [vmem:[%s4164 + $0xb8] sm:$0xff]
  %v4189 = vld [vmem:[%s4164 + $0xc0] sm:$0xff]
  %v4190 = vld [vmem:[%s4164 + $0xc8] sm:$0xff]
  %v4191 = vld [vmem:[%s4164 + $0xd0] sm:$0xff]
  %v4192 = vld [vmem:[%s4164 + $0xd8] sm:$0xff]
  %v4193 = vld [vmem:[%s4164 + $0xe0] sm:$0xff]
  %v4194 = vld [vmem:[%s4164 + $0xe8] sm:$0xff]
  %v4195 = vld [vmem:[%s4164 + $0xf0] sm:$0xff]
  %v4196 = vld [vmem:[%s4164 + $0xf8] sm:$0xff]
  %v4197 = vld [vmem:[%s4164 + $0x100] sm:$0xff]
  %v4198 = vld [vmem:[%s4164 + $0x108] sm:$0xff]
  %v4199 = vld [vmem:[%s4164 + $0x110] sm:$0xff]
  %v4200 = vld [vmem:[%s4164 + $0x118] sm:$0xff]
  %v4201 = vld [vmem:[%s4164 + $0x120] sm:$0xff]
  %v4202 = vld [vmem:[%s4164 + $0x128] sm:$0xff]
  %v4203 = vld [vmem:[%s4164 + $0x130] sm:$0xff]
  %v4204 = vld [vmem:[%s4164 + $0x138] sm:$0xff]
  %v4205 = vld [vmem:[%s4164 + $0x140] sm:$0xff]
  %v4206 = vld [vmem:[%s4164 + $0x148] sm:$0xff]
  %v4207 = vld [vmem:[%s4164 + $0x150] sm:$0xff]
  %v4208 = vld [vmem:[%s4164 + $0x158] sm:$0xff]
  %v4209 = vld [vmem:[%s4164 + $0x160] sm:$0xff]
  %v4210 = vld [vmem:[%s4164 + $0x168] sm:$0xff]
  %v4211 = vld [vmem:[%s4164 + $0x170] sm:$0xff]
  %v4212 = vld [vmem:[%s4164 + $0x178] sm:$0xff]
  %v4213 = vld [vmem:[%s4164 + $0x180] sm:$0xff]
  %v4214 = vld [vmem:[%s4164 + $0x188] sm:$0xff]
  %v4215 = vld [vmem:[%s4164 + $0x190] sm:$0xff]
  %v4216 = vld [vmem:[%s4164 + $0x198] sm:$0xff]
  %v4217 = vld [vmem:[%s4164 + $0x1a0] sm:$0xff]
  %v4218 = vld [vmem:[%s4164 + $0x1a8] sm:$0xff]
  %v4219 = vld [vmem:[%s4164 + $0x1b0] sm:$0xff]
  %v4220 = vld [vmem:[%s4164 + $0x1b8] sm:$0xff]
  %v4221 = vld [vmem:[%s4164 + $0x1c0] sm:$0xff]
  %v4222 = vld [vmem:[%s4164 + $0x1c8] sm:$0xff]
  %v4223 = vld [vmem:[%s4164 + $0x1d0] sm:$0xff]
  %v4224 = vld [vmem:[%s4164 + $0x1d8] sm:$0xff]
  %v4225 = vld [vmem:[%s4164 + $0x1e0] sm:$0xff]
  %v4226 = vld [vmem:[%s4164 + $0x1e8] sm:$0xff]
  %v4227 = vld [vmem:[%s4164 + $0x1f0] sm:$0xff]
  %v4228 = vld [vmem:[%s4164 + $0x1f8] sm:$0xff]
  %s4229 = scalar_lea.vmem %s1, 8
  %v4230 = vld [vmem:[%s4229] sm:$0x1]
  %4232 = vset.pattern.permute.xlu0 0
  %4233 = vperm.xlu0 %4232, %v4165
  %v4234 = vpop.permute.xlu0 %4233
  %4237 = vset.pattern.permute.xlu0 0
  %4238 = vperm.xlu0 %4237, %v4166
  %v4239 = vpop.permute.xlu0 %4238
  %4242 = vset.pattern.permute.xlu0 0
  %4243 = vperm.xlu0 %4242, %v4167
  %v4244 = vpop.permute.xlu0 %4243
  %4247 = vset.pattern.permute.xlu0 0
  %4248 = vperm.xlu0 %4247, %v4168
  %v4249 = vpop.permute.xlu0 %4248
  %4252 = vset.pattern.permute.xlu0 0
  %4253 = vperm.xlu0 %4252, %v4169
  %v4254 = vpop.permute.xlu0 %4253
  %4257 = vset.pattern.permute.xlu0 0
  %4258 = vperm.xlu0 %4257, %v4170
  %v4259 = vpop.permute.xlu0 %4258
  %4262 = vset.pattern.permute.xlu0 0
  %4263 = vperm.xlu0 %4262, %v4171
  %v4264 = vpop.permute.xlu0 %4263
  %4267 = vset.pattern.permute.xlu0 0
  %4268 = vperm.xlu0 %4267, %v4172
  %v4269 = vpop.permute.xlu0 %4268
  %4272 = vset.pattern.permute.xlu0 0
  %4273 = vperm.xlu0 %4272, %v4173
  %v4274 = vpop.permute.xlu0 %4273
  %4277 = vset.pattern.permute.xlu0 0
  %4278 = vperm.xlu0 %4277, %v4174
  %v4279 = vpop.permute.xlu0 %4278
  %4282 = vset.pattern.permute.xlu0 0
  %4283 = vperm.xlu0 %4282, %v4175
  %v4284 = vpop.permute.xlu0 %4283
  %4287 = vset.pattern.permute.xlu0 0
  %4288 = vperm.xlu0 %4287, %v4176
  %v4289 = vpop.permute.xlu0 %4288
  %4292 = vset.pattern.permute.xlu0 0
  %4293 = vperm.xlu0 %4292, %v4177
  %v4294 = vpop.permute.xlu0 %4293
  %4297 = vset.pattern.permute.xlu0 0
  %4298 = vperm.xlu0 %4297, %v4178
  %v4299 = vpop.permute.xlu0 %4298
  %4302 = vset.pattern.permute.xlu0 0
  %4303 = vperm.xlu0 %4302, %v4179
  %v4304 = vpop.permute.xlu0 %4303
  %4307 = vset.pattern.permute.xlu0 0
  %4308 = vperm.xlu0 %4307, %v4180
  %v4309 = vpop.permute.xlu0 %4308
  %4312 = vset.pattern.permute.xlu0 0
  %4313 = vperm.xlu0 %4312, %v4181
  %v4314 = vpop.permute.xlu0 %4313
  %4317 = vset.pattern.permute.xlu0 0
  %4318 = vperm.xlu0 %4317, %v4182
  %v4319 = vpop.permute.xlu0 %4318
  %4322 = vset.pattern.permute.xlu0 0
  %4323 = vperm.xlu0 %4322, %v4183
  %v4324 = vpop.permute.xlu0 %4323
  %4327 = vset.pattern.permute.xlu0 0
  %4328 = vperm.xlu0 %4327, %v4184
  %v4329 = vpop.permute.xlu0 %4328
  %4332 = vset.pattern.permute.xlu0 0
  %4333 = vperm.xlu0 %4332, %v4185
  %v4334 = vpop.permute.xlu0 %4333
  %4337 = vset.pattern.permute.xlu0 0
  %4338 = vperm.xlu0 %4337, %v4186
  %v4339 = vpop.permute.xlu0 %4338
  %4342 = vset.pattern.permute.xlu0 0
  %4343 = vperm.xlu0 %4342, %v4187
  %v4344 = vpop.permute.xlu0 %4343
  %4347 = vset.pattern.permute.xlu0 0
  %4348 = vperm.xlu0 %4347, %v4188
  %v4349 = vpop.permute.xlu0 %4348
  %4352 = vset.pattern.permute.xlu0 0
  %4353 = vperm.xlu0 %4352, %v4189
  %v4354 = vpop.permute.xlu0 %4353
  %4357 = vset.pattern.permute.xlu0 0
  %4358 = vperm.xlu0 %4357, %v4190
  %v4359 = vpop.permute.xlu0 %4358
  %4362 = vset.pattern.permute.xlu0 0
  %4363 = vperm.xlu0 %4362, %v4191
  %v4364 = vpop.permute.xlu0 %4363
  %4367 = vset.pattern.permute.xlu0 0
  %4368 = vperm.xlu0 %4367, %v4192
  %v4369 = vpop.permute.xlu0 %4368
  %4372 = vset.pattern.permute.xlu0 0
  %4373 = vperm.xlu0 %4372, %v4193
  %v4374 = vpop.permute.xlu0 %4373
  %4377 = vset.pattern.permute.xlu0 0
  %4378 = vperm.xlu0 %4377, %v4194
  %v4379 = vpop.permute.xlu0 %4378
  %4382 = vset.pattern.permute.xlu0 0
  %4383 = vperm.xlu0 %4382, %v4195
  %v4384 = vpop.permute.xlu0 %4383
  %4387 = vset.pattern.permute.xlu0 0
  %4388 = vperm.xlu0 %4387, %v4196
  %v4389 = vpop.permute.xlu0 %4388
  %4392 = vset.pattern.permute.xlu0 0
  %4393 = vperm.xlu0 %4392, %v4197
  %v4394 = vpop.permute.xlu0 %4393
  %4397 = vset.pattern.permute.xlu0 0
  %4398 = vperm.xlu0 %4397, %v4198
  %v4399 = vpop.permute.xlu0 %4398
  %4402 = vset.pattern.permute.xlu0 0
  %4403 = vperm.xlu0 %4402, %v4199
  %v4404 = vpop.permute.xlu0 %4403
  %4407 = vset.pattern.permute.xlu0 0
  %4408 = vperm.xlu0 %4407, %v4200
  %v4409 = vpop.permute.xlu0 %4408
  %4412 = vset.pattern.permute.xlu0 0
  %4413 = vperm.xlu0 %4412, %v4201
  %v4414 = vpop.permute.xlu0 %4413
  %4417 = vset.pattern.permute.xlu0 0
  %4418 = vperm.xlu0 %4417, %v4202
  %v4419 = vpop.permute.xlu0 %4418
  %4422 = vset.pattern.permute.xlu0 0
  %4423 = vperm.xlu0 %4422, %v4203
  %v4424 = vpop.permute.xlu0 %4423
  %4427 = vset.pattern.permute.xlu0 0
  %4428 = vperm.xlu0 %4427, %v4204
  %v4429 = vpop.permute.xlu0 %4428
  %4432 = vset.pattern.permute.xlu0 0
  %4433 = vperm.xlu0 %4432, %v4205
  %v4434 = vpop.permute.xlu0 %4433
  %4437 = vset.pattern.permute.xlu0 0
  %4438 = vperm.xlu0 %4437, %v4206
  %v4439 = vpop.permute.xlu0 %4438
  %4442 = vset.pattern.permute.xlu0 0
  %4443 = vperm.xlu0 %4442, %v4207
  %v4444 = vpop.permute.xlu0 %4443
  %4447 = vset.pattern.permute.xlu0 0
  %4448 = vperm.xlu0 %4447, %v4208
  %v4449 = vpop.permute.xlu0 %4448
  %4452 = vset.pattern.permute.xlu0 0
  %4453 = vperm.xlu0 %4452, %v4209
  %v4454 = vpop.permute.xlu0 %4453
  %4457 = vset.pattern.permute.xlu0 0
  %4458 = vperm.xlu0 %4457, %v4210
  %v4459 = vpop.permute.xlu0 %4458
  %4462 = vset.pattern.permute.xlu0 0
  %4463 = vperm.xlu0 %4462, %v4211
  %v4464 = vpop.permute.xlu0 %4463
  %4467 = vset.pattern.permute.xlu0 0
  %4468 = vperm.xlu0 %4467, %v4212
  %v4469 = vpop.permute.xlu0 %4468
  %4472 = vset.pattern.permute.xlu0 0
  %4473 = vperm.xlu0 %4472, %v4213
  %v4474 = vpop.permute.xlu0 %4473
  %4477 = vset.pattern.permute.xlu0 0
  %4478 = vperm.xlu0 %4477, %v4214
  %v4479 = vpop.permute.xlu0 %4478
  %4482 = vset.pattern.permute.xlu0 0
  %4483 = vperm.xlu0 %4482, %v4215
  %v4484 = vpop.permute.xlu0 %4483
  %4487 = vset.pattern.permute.xlu0 0
  %4488 = vperm.xlu0 %4487, %v4216
  %v4489 = vpop.permute.xlu0 %4488
  %4492 = vset.pattern.permute.xlu0 0
  %4493 = vperm.xlu0 %4492, %v4217
  %v4494 = vpop.permute.xlu0 %4493
  %4497 = vset.pattern.permute.xlu0 0
  %4498 = vperm.xlu0 %4497, %v4218
  %v4499 = vpop.permute.xlu0 %4498
  %4502 = vset.pattern.permute.xlu0 0
  %4503 = vperm.xlu0 %4502, %v4219
  %v4504 = vpop.permute.xlu0 %4503
  %4507 = vset.pattern.permute.xlu0 0
  %4508 = vperm.xlu0 %4507, %v4220
  %v4509 = vpop.permute.xlu0 %4508
  %4512 = vset.pattern.permute.xlu0 0
  %4513 = vperm.xlu0 %4512, %v4221
  %v4514 = vpop.permute.xlu0 %4513
  %4517 = vset.pattern.permute.xlu0 0
  %4518 = vperm.xlu0 %4517, %v4222
  %v4519 = vpop.permute.xlu0 %4518
  %4522 = vset.pattern.permute.xlu0 0
  %4523 = vperm.xlu0 %4522, %v4223
  %v4524 = vpop.permute.xlu0 %4523
  %4527 = vset.pattern.permute.xlu0 0
  %4528 = vperm.xlu0 %4527, %v4224
  %v4529 = vpop.permute.xlu0 %4528
  %4532 = vset.pattern.permute.xlu0 0
  %4533 = vperm.xlu0 %4532, %v4225
  %v4534 = vpop.permute.xlu0 %4533
  %4537 = vset.pattern.permute.xlu0 0
  %4538 = vperm.xlu0 %4537, %v4226
  %v4539 = vpop.permute.xlu0 %4538
  %4542 = vset.pattern.permute.xlu0 0
  %4543 = vperm.xlu0 %4542, %v4227
  %v4544 = vpop.permute.xlu0 %4543
  %4547 = vset.pattern.permute.xlu0 0
  %4548 = vperm.xlu0 %4547, %v4228
  %v4549 = vpop.permute.xlu0 %4548
  %v4552 = vlaneseq
  %v4553 = vshrl.u32 %v4552, 7
  %v4554 = vsub.s32 0, %v4553
  %v4555 = vrot.slane %v4230, %v4554
  %v4557 = vmul.f32 %v4234, %v4555
  %v4558 = vmul.f32 %v4239, %v4555
  %v4559 = vmul.f32 %v4244, %v4555
  %v4560 = vmul.f32 %v4249, %v4555
  %v4561 = vmul.f32 %v4254, %v4555
  %v4562 = vmul.f32 %v4259, %v4555
  %v4563 = vmul.f32 %v4264, %v4555
  %v4564 = vmul.f32 %v4269, %v4555
  %v4565 = vmul.f32 %v4274, %v4555
  %v4566 = vmul.f32 %v4279, %v4555
  %v4567 = vmul.f32 %v4284, %v4555
  %v4568 = vmul.f32 %v4289, %v4555
  %v4569 = vmul.f32 %v4294, %v4555
  %v4570 = vmul.f32 %v4299, %v4555
  %v4571 = vmul.f32 %v4304, %v4555
  %v4572 = vmul.f32 %v4309, %v4555
  %v4573 = vmul.f32 %v4314, %v4555
  %v4574 = vmul.f32 %v4319, %v4555
  %v4575 = vmul.f32 %v4324, %v4555
  %v4576 = vmul.f32 %v4329, %v4555
  %v4577 = vmul.f32 %v4334, %v4555
  %v4578 = vmul.f32 %v4339, %v4555
  %v4579 = vmul.f32 %v4344, %v4555
  %v4580 = vmul.f32 %v4349, %v4555
  %v4581 = vmul.f32 %v4354, %v4555
  %v4582 = vmul.f32 %v4359, %v4555
  %v4583 = vmul.f32 %v4364, %v4555
  %v4584 = vmul.f32 %v4369, %v4555
  %v4585 = vmul.f32 %v4374, %v4555
  %v4586 = vmul.f32 %v4379, %v4555
  %v4587 = vmul.f32 %v4384, %v4555
  %v4588 = vmul.f32 %v4389, %v4555
  %v4589 = vmul.f32 %v4394, %v4555
  %v4590 = vmul.f32 %v4399, %v4555
  %v4591 = vmul.f32 %v4404, %v4555
  %v4592 = vmul.f32 %v4409, %v4555
  %v4593 = vmul.f32 %v4414, %v4555
  %v4594 = vmul.f32 %v4419, %v4555
  %v4595 = vmul.f32 %v4424, %v4555
  %v4596 = vmul.f32 %v4429, %v4555
  %v4597 = vmul.f32 %v4434, %v4555
  %v4598 = vmul.f32 %v4439, %v4555
  %v4599 = vmul.f32 %v4444, %v4555
  %v4600 = vmul.f32 %v4449, %v4555
  %v4601 = vmul.f32 %v4454, %v4555
  %v4602 = vmul.f32 %v4459, %v4555
  %v4603 = vmul.f32 %v4464, %v4555
  %v4604 = vmul.f32 %v4469, %v4555
  %v4605 = vmul.f32 %v4474, %v4555
  %v4606 = vmul.f32 %v4479, %v4555
  %v4607 = vmul.f32 %v4484, %v4555
  %v4608 = vmul.f32 %v4489, %v4555
  %v4609 = vmul.f32 %v4494, %v4555
  %v4610 = vmul.f32 %v4499, %v4555
  %v4611 = vmul.f32 %v4504, %v4555
  %v4612 = vmul.f32 %v4509, %v4555
  %v4613 = vmul.f32 %v4514, %v4555
  %v4614 = vmul.f32 %v4519, %v4555
  %v4615 = vmul.f32 %v4524, %v4555
  %v4616 = vmul.f32 %v4529, %v4555
  %v4617 = vmul.f32 %v4534, %v4555
  %v4618 = vmul.f32 %v4539, %v4555
  %v4619 = vmul.f32 %v4544, %v4555
  %v4620 = vmul.f32 %v4549, %v4555
  %v4621 = vadd.f32 %v4100, %v4557
  %v4622 = vadd.f32 %v4101, %v4558
  %v4623 = vadd.f32 %v4102, %v4559
  %v4624 = vadd.f32 %v4103, %v4560
  %v4625 = vadd.f32 %v4104, %v4561
  %v4626 = vadd.f32 %v4105, %v4562
  %v4627 = vadd.f32 %v4106, %v4563
  %v4628 = vadd.f32 %v4107, %v4564
  %v4629 = vadd.f32 %v4108, %v4565
  %v4630 = vadd.f32 %v4109, %v4566
  %v4631 = vadd.f32 %v4110, %v4567
  %v4632 = vadd.f32 %v4111, %v4568
  %v4633 = vadd.f32 %v4112, %v4569
  %v4634 = vadd.f32 %v4113, %v4570
  %v4635 = vadd.f32 %v4114, %v4571
  %v4636 = vadd.f32 %v4115, %v4572
  %v4637 = vadd.f32 %v4116, %v4573
  %v4638 = vadd.f32 %v4117, %v4574
  %v4639 = vadd.f32 %v4118, %v4575
  %v4640 = vadd.f32 %v4119, %v4576
  %v4641 = vadd.f32 %v4120, %v4577
  %v4642 = vadd.f32 %v4121, %v4578
  %v4643 = vadd.f32 %v4122, %v4579
  %v4644 = vadd.f32 %v4123, %v4580
  %v4645 = vadd.f32 %v4124, %v4581
  %v4646 = vadd.f32 %v4125, %v4582
  %v4647 = vadd.f32 %v4126, %v4583
  %v4648 = vadd.f32 %v4127, %v4584
  %v4649 = vadd.f32 %v4128, %v4585
  %v4650 = vadd.f32 %v4129, %v4586
  %v4651 = vadd.f32 %v4130, %v4587
  %v4652 = vadd.f32 %v4131, %v4588
  %v4653 = vadd.f32 %v4132, %v4589
  %v4654 = vadd.f32 %v4133, %v4590
  %v4655 = vadd.f32 %v4134, %v4591
  %v4656 = vadd.f32 %v4135, %v4592
  %v4657 = vadd.f32 %v4136, %v4593
  %v4658 = vadd.f32 %v4137, %v4594
  %v4659 = vadd.f32 %v4138, %v4595
  %v4660 = vadd.f32 %v4139, %v4596
  %v4661 = vadd.f32 %v4140, %v4597
  %v4662 = vadd.f32 %v4141, %v4598
  %v4663 = vadd.f32 %v4142, %v4599
  %v4664 = vadd.f32 %v4143, %v4600
  %v4665 = vadd.f32 %v4144, %v4601
  %v4666 = vadd.f32 %v4145, %v4602
  %v4667 = vadd.f32 %v4146, %v4603
  %v4668 = vadd.f32 %v4147, %v4604
  %v4669 = vadd.f32 %v4148, %v4605
  %v4670 = vadd.f32 %v4149, %v4606
  %v4671 = vadd.f32 %v4150, %v4607
  %v4672 = vadd.f32 %v4151, %v4608
  %v4673 = vadd.f32 %v4152, %v4609
  %v4674 = vadd.f32 %v4153, %v4610
  %v4675 = vadd.f32 %v4154, %v4611
  %v4676 = vadd.f32 %v4155, %v4612
  %v4677 = vadd.f32 %v4156, %v4613
  %v4678 = vadd.f32 %v4157, %v4614
  %v4679 = vadd.f32 %v4158, %v4615
  %v4680 = vadd.f32 %v4159, %v4616
  %v4681 = vadd.f32 %v4160, %v4617
  %v4682 = vadd.f32 %v4161, %v4618
  %v4683 = vadd.f32 %v4162, %v4619
  %v4684 = vadd.f32 %v4163, %v4620
  %v4685 = vld [vmem:[%s2] sm:$0x1]
  %v4687 = vlaneseq
  %v4688 = vshrl.u32 %v4687, 7
  %v4689 = vsub.s32 0, %v4688
  %v4690 = vrot.slane %v4685, %v4689
  %v4692 = vmul.f32 %v4621, %v4690
  %v4693 = vmul.f32 %v4622, %v4690
  %v4694 = vmul.f32 %v4623, %v4690
  %v4695 = vmul.f32 %v4624, %v4690
  %v4696 = vmul.f32 %v4625, %v4690
  %v4697 = vmul.f32 %v4626, %v4690
  %v4698 = vmul.f32 %v4627, %v4690
  %v4699 = vmul.f32 %v4628, %v4690
  %v4700 = vmul.f32 %v4629, %v4690
  %v4701 = vmul.f32 %v4630, %v4690
  %v4702 = vmul.f32 %v4631, %v4690
  %v4703 = vmul.f32 %v4632, %v4690
  %v4704 = vmul.f32 %v4633, %v4690
  %v4705 = vmul.f32 %v4634, %v4690
  %v4706 = vmul.f32 %v4635, %v4690
  %v4707 = vmul.f32 %v4636, %v4690
  %v4708 = vmul.f32 %v4637, %v4690
  %v4709 = vmul.f32 %v4638, %v4690
  %v4710 = vmul.f32 %v4639, %v4690
  %v4711 = vmul.f32 %v4640, %v4690
  %v4712 = vmul.f32 %v4641, %v4690
  %v4713 = vmul.f32 %v4642, %v4690
  %v4714 = vmul.f32 %v4643, %v4690
  %v4715 = vmul.f32 %v4644, %v4690
  %v4716 = vmul.f32 %v4645, %v4690
  %v4717 = vmul.f32 %v4646, %v4690
  %v4718 = vmul.f32 %v4647, %v4690
  %v4719 = vmul.f32 %v4648, %v4690
  %v4720 = vmul.f32 %v4649, %v4690
  %v4721 = vmul.f32 %v4650, %v4690
  %v4722 = vmul.f32 %v4651, %v4690
  %v4723 = vmul.f32 %v4652, %v4690
  %v4724 = vmul.f32 %v4653, %v4690
  %v4725 = vmul.f32 %v4654, %v4690
  %v4726 = vmul.f32 %v4655, %v4690
  %v4727 = vmul.f32 %v4656, %v4690
  %v4728 = vmul.f32 %v4657, %v4690
  %v4729 = vmul.f32 %v4658, %v4690
  %v4730 = vmul.f32 %v4659, %v4690
  %v4731 = vmul.f32 %v4660, %v4690
  %v4732 = vmul.f32 %v4661, %v4690
  %v4733 = vmul.f32 %v4662, %v4690
  %v4734 = vmul.f32 %v4663, %v4690
  %v4735 = vmul.f32 %v4664, %v4690
  %v4736 = vmul.f32 %v4665, %v4690
  %v4737 = vmul.f32 %v4666, %v4690
  %v4738 = vmul.f32 %v4667, %v4690
  %v4739 = vmul.f32 %v4668, %v4690
  %v4740 = vmul.f32 %v4669, %v4690
  %v4741 = vmul.f32 %v4670, %v4690
  %v4742 = vmul.f32 %v4671, %v4690
  %v4743 = vmul.f32 %v4672, %v4690
  %v4744 = vmul.f32 %v4673, %v4690
  %v4745 = vmul.f32 %v4674, %v4690
  %v4746 = vmul.f32 %v4675, %v4690
  %v4747 = vmul.f32 %v4676, %v4690
  %v4748 = vmul.f32 %v4677, %v4690
  %v4749 = vmul.f32 %v4678, %v4690
  %v4750 = vmul.f32 %v4679, %v4690
  %v4751 = vmul.f32 %v4680, %v4690
  %v4752 = vmul.f32 %v4681, %v4690
  %v4753 = vmul.f32 %v4682, %v4690
  %v4754 = vmul.f32 %v4683, %v4690
  %v4755 = vmul.f32 %v4684, %v4690
  %v4756 = vld [vmem:[%s3] sm:$0x1]
  %v4758 = vlaneseq
  %v4759 = vshrl.u32 %v4758, 7
  %v4760 = vsub.s32 0, %v4759
  %v4761 = vrot.slane %v4756, %v4760
  %v4763 = vadd.f32 %v4692, %v4761
  %v4764 = vadd.f32 %v4693, %v4761
  %v4765 = vadd.f32 %v4694, %v4761
  %v4766 = vadd.f32 %v4695, %v4761
  %v4767 = vadd.f32 %v4696, %v4761
  %v4768 = vadd.f32 %v4697, %v4761
  %v4769 = vadd.f32 %v4698, %v4761
  %v4770 = vadd.f32 %v4699, %v4761
  %v4771 = vadd.f32 %v4700, %v4761
  %v4772 = vadd.f32 %v4701, %v4761
  %v4773 = vadd.f32 %v4702, %v4761
  %v4774 = vadd.f32 %v4703, %v4761
  %v4775 = vadd.f32 %v4704, %v4761
  %v4776 = vadd.f32 %v4705, %v4761
  %v4777 = vadd.f32 %v4706, %v4761
  %v4778 = vadd.f32 %v4707, %v4761
  %v4779 = vadd.f32 %v4708, %v4761
  %v4780 = vadd.f32 %v4709, %v4761
  %v4781 = vadd.f32 %v4710, %v4761
  %v4782 = vadd.f32 %v4711, %v4761
  %v4783 = vadd.f32 %v4712, %v4761
  %v4784 = vadd.f32 %v4713, %v4761
  %v4785 = vadd.f32 %v4714, %v4761
  %v4786 = vadd.f32 %v4715, %v4761
  %v4787 = vadd.f32 %v4716, %v4761
  %v4788 = vadd.f32 %v4717, %v4761
  %v4789 = vadd.f32 %v4718, %v4761
  %v4790 = vadd.f32 %v4719, %v4761
  %v4791 = vadd.f32 %v4720, %v4761
  %v4792 = vadd.f32 %v4721, %v4761
  %v4793 = vadd.f32 %v4722, %v4761
  %v4794 = vadd.f32 %v4723, %v4761
  %v4795 = vadd.f32 %v4724, %v4761
  %v4796 = vadd.f32 %v4725, %v4761
  %v4797 = vadd.f32 %v4726, %v4761
  %v4798 = vadd.f32 %v4727, %v4761
  %v4799 = vadd.f32 %v4728, %v4761
  %v4800 = vadd.f32 %v4729, %v4761
  %v4801 = vadd.f32 %v4730, %v4761
  %v4802 = vadd.f32 %v4731, %v4761
  %v4803 = vadd.f32 %v4732, %v4761
  %v4804 = vadd.f32 %v4733, %v4761
  %v4805 = vadd.f32 %v4734, %v4761
  %v4806 = vadd.f32 %v4735, %v4761
  %v4807 = vadd.f32 %v4736, %v4761
  %v4808 = vadd.f32 %v4737, %v4761
  %v4809 = vadd.f32 %v4738, %v4761
  %v4810 = vadd.f32 %v4739, %v4761
  %v4811 = vadd.f32 %v4740, %v4761
  %v4812 = vadd.f32 %v4741, %v4761
  %v4813 = vadd.f32 %v4742, %v4761
  %v4814 = vadd.f32 %v4743, %v4761
  %v4815 = vadd.f32 %v4744, %v4761
  %v4816 = vadd.f32 %v4745, %v4761
  %v4817 = vadd.f32 %v4746, %v4761
  %v4818 = vadd.f32 %v4747, %v4761
  %v4819 = vadd.f32 %v4748, %v4761
  %v4820 = vadd.f32 %v4749, %v4761
  %v4821 = vadd.f32 %v4750, %v4761
  %v4822 = vadd.f32 %v4751, %v4761
  %v4823 = vadd.f32 %v4752, %v4761
  %v4824 = vadd.f32 %v4753, %v4761
  %v4825 = vadd.f32 %v4754, %v4761
  %v4826 = vadd.f32 %v4755, %v4761
  %v4827 = vmax.f32 %v4763, 0.0
  %v4828 = vmax.f32 %v4764, 0.0
  %v4829 = vmax.f32 %v4765, 0.0
  %v4830 = vmax.f32 %v4766, 0.0
  %v4831 = vmax.f32 %v4767, 0.0
  %v4832 = vmax.f32 %v4768, 0.0
  %v4833 = vmax.f32 %v4769, 0.0
  %v4834 = vmax.f32 %v4770, 0.0
  %v4835 = vmax.f32 %v4771, 0.0
  %v4836 = vmax.f32 %v4772, 0.0
  %v4837 = vmax.f32 %v4773, 0.0
  %v4838 = vmax.f32 %v4774, 0.0
  %v4839 = vmax.f32 %v4775, 0.0
  %v4840 = vmax.f32 %v4776, 0.0
  %v4841 = vmax.f32 %v4777, 0.0
  %v4842 = vmax.f32 %v4778, 0.0
  %v4843 = vmax.f32 %v4779, 0.0
  %v4844 = vmax.f32 %v4780, 0.0
  %v4845 = vmax.f32 %v4781, 0.0
  %v4846 = vmax.f32 %v4782, 0.0
  %v4847 = vmax.f32 %v4783, 0.0
  %v4848 = vmax.f32 %v4784, 0.0
  %v4849 = vmax.f32 %v4785, 0.0
  %v4850 = vmax.f32 %v4786, 0.0
  %v4851 = vmax.f32 %v4787, 0.0
  %v4852 = vmax.f32 %v4788, 0.0
  %v4853 = vmax.f32 %v4789, 0.0
  %v4854 = vmax.f32 %v4790, 0.0
  %v4855 = vmax.f32 %v4791, 0.0
  %v4856 = vmax.f32 %v4792, 0.0
  %v4857 = vmax.f32 %v4793, 0.0
  %v4858 = vmax.f32 %v4794, 0.0
  %v4859 = vmax.f32 %v4795, 0.0
  %v4860 = vmax.f32 %v4796, 0.0
  %v4861 = vmax.f32 %v4797, 0.0
  %v4862 = vmax.f32 %v4798, 0.0
  %v4863 = vmax.f32 %v4799, 0.0
  %v4864 = vmax.f32 %v4800, 0.0
  %v4865 = vmax.f32 %v4801, 0.0
  %v4866 = vmax.f32 %v4802, 0.0
  %v4867 = vmax.f32 %v4803, 0.0
  %v4868 = vmax.f32 %v4804, 0.0
  %v4869 = vmax.f32 %v4805, 0.0
  %v4870 = vmax.f32 %v4806, 0.0
  %v4871 = vmax.f32 %v4807, 0.0
  %v4872 = vmax.f32 %v4808, 0.0
  %v4873 = vmax.f32 %v4809, 0.0
  %v4874 = vmax.f32 %v4810, 0.0
  %v4875 = vmax.f32 %v4811, 0.0
  %v4876 = vmax.f32 %v4812, 0.0
  %v4877 = vmax.f32 %v4813, 0.0
  %v4878 = vmax.f32 %v4814, 0.0
  %v4879 = vmax.f32 %v4815, 0.0
  %v4880 = vmax.f32 %v4816, 0.0
  %v4881 = vmax.f32 %v4817, 0.0
  %v4882 = vmax.f32 %v4818, 0.0
  %v4883 = vmax.f32 %v4819, 0.0
  %v4884 = vmax.f32 %v4820, 0.0
  %v4885 = vmax.f32 %v4821, 0.0
  %v4886 = vmax.f32 %v4822, 0.0
  %v4887 = vmax.f32 %v4823, 0.0
  %v4888 = vmax.f32 %v4824, 0.0
  %v4889 = vmax.f32 %v4825, 0.0
  %v4890 = vmax.f32 %v4826, 0.0
  %v4891 = vmax.f32 %v4827, %v4843
  %v4892 = vmax.f32 %v4828, %v4844
  %v4893 = vmax.f32 %v4829, %v4845
  %v4894 = vmax.f32 %v4830, %v4846
  %v4895 = vmax.f32 %v4831, %v4847
  %v4896 = vmax.f32 %v4832, %v4848
  %v4897 = vmax.f32 %v4833, %v4849
  %v4898 = vmax.f32 %v4834, %v4850
  %v4899 = vmax.f32 %v4835, %v4851
  %v4900 = vmax.f32 %v4836, %v4852
  %v4901 = vmax.f32 %v4837, %v4853
  %v4902 = vmax.f32 %v4838, %v4854
  %v4903 = vmax.f32 %v4839, %v4855
  %v4904 = vmax.f32 %v4840, %v4856
  %v4905 = vmax.f32 %v4841, %v4857
  %v4906 = vmax.f32 %v4842, %v4858
  %v4907 = vmax.f32 %v4859, %v4875
  %v4908 = vmax.f32 %v4860, %v4876
  %v4909 = vmax.f32 %v4861, %v4877
  %v4910 = vmax.f32 %v4862, %v4878
  %v4911 = vmax.f32 %v4863, %v4879
  %v4912 = vmax.f32 %v4864, %v4880
  %v4913 = vmax.f32 %v4865, %v4881
  %v4914 = vmax.f32 %v4866, %v4882
  %v4915 = vmax.f32 %v4867, %v4883
  %v4916 = vmax.f32 %v4868, %v4884
  %v4917 = vmax.f32 %v4869, %v4885
  %v4918 = vmax.f32 %v4870, %v4886
  %v4919 = vmax.f32 %v4871, %v4887
  %v4920 = vmax.f32 %v4872, %v4888
  %v4921 = vmax.f32 %v4873, %v4889
  %v4922 = vmax.f32 %v4874, %v4890
  %v4923 = vmax.f32 %v4891, %v4907
  %v4924 = vmax.f32 %v4892, %v4908
  %v4925 = vmax.f32 %v4893, %v4909
  %v4926 = vmax.f32 %v4894, %v4910
  %v4927 = vmax.f32 %v4895, %v4911
  %v4928 = vmax.f32 %v4896, %v4912
  %v4929 = vmax.f32 %v4897, %v4913
  %v4930 = vmax.f32 %v4898, %v4914
  %v4931 = vmax.f32 %v4899, %v4915
  %v4932 = vmax.f32 %v4900, %v4916
  %v4933 = vmax.f32 %v4901, %v4917
  %v4934 = vmax.f32 %v4902, %v4918
  %v4935 = vmax.f32 %v4903, %v4919
  %v4936 = vmax.f32 %v4904, %v4920
  %v4937 = vmax.f32 %v4905, %v4921
  %v4938 = vmax.f32 %v4906, %v4922
  %v4939 = vpack.c.bf16 %v4924, %v4923
  %v4940 = vpack.c.bf16 %v4926, %v4925
  %v4941 = vpack.c.bf16 %v4928, %v4927
  %v4942 = vpack.c.bf16 %v4930, %v4929
  %v4943 = vpack.c.bf16 %v4932, %v4931
  %v4944 = vpack.c.bf16 %v4934, %v4933
  %v4945 = vpack.c.bf16 %v4936, %v4935
  %v4946 = vpack.c.bf16 %v4938, %v4937
  %v4947 = vld [vmem:[%s5] sm:$0xff]
  %v4948 = vld [vmem:[%s5 + $0x8] sm:$0xff]
  %v4949 = vld [vmem:[%s5 + $0x10] sm:$0xf]
  %v4950 = vld [vmem:[%s5 + $0x14] sm:$0xff]
  %v4951 = vld [vmem:[%s5 + $0x1c] sm:$0xff]
  %v4952 = vld [vmem:[%s5 + $0x24] sm:$0xf]
  %v4953 = vld [vmem:[%s5 + $0x28] sm:$0xff]
  %v4954 = vld [vmem:[%s5 + $0x30] sm:$0xff]
  %v4955 = vld [vmem:[%s5 + $0x38] sm:$0xf]
  %v4956 = vld [vmem:[%s5 + $0x3c] sm:$0xff]
  %v4957 = vld [vmem:[%s5 + $0x44] sm:$0xff]
  %v4958 = vld [vmem:[%s5 + $0x4c] sm:$0xf]
  %v4971 = vunpack.c.l.b16 %v4947
  %v4972 = vunpack.c.h.b16 %v4947
  %v4973 = vunpack.c.l.b16 %v4948
  %v4974 = vunpack.c.h.b16 %v4948
  %v4975 = vunpack.c.l.b16 %v4949
  %v4976 = vunpack.c.l.b16 %v4950
  %v4977 = vunpack.c.h.b16 %v4950
  %v4978 = vunpack.c.l.b16 %v4951
  %v4979 = vunpack.c.h.b16 %v4951
  %v4980 = vunpack.c.l.b16 %v4952
  %v4981 = vunpack.c.l.b16 %v4953
  %v4982 = vunpack.c.h.b16 %v4953
  %v4983 = vunpack.c.l.b16 %v4954
  %v4984 = vunpack.c.h.b16 %v4954
  %v4985 = vunpack.c.l.b16 %v4955
  %v4986 = vunpack.c.l.b16 %v4956
  %v4987 = vunpack.c.h.b16 %v4956
  %v4988 = vunpack.c.l.b16 %v4957
  %v4989 = vunpack.c.h.b16 %v4957
  %v4990 = vunpack.c.l.b16 %v4958
  %v4991 = vpack.c.b16 %v4976, %v4971
  %v4992 = vpack.c.b16 %v4977, %v4972
  %v4993 = vpack.c.b16 %v4978, %v4973
  %v4994 = vpack.c.b16 %v4979, %v4974
  %v4995 = vpack.c.b16 %v4980, %v4975
  %v4996 = vpack.c.b16 %v4986, %v4981
  %v4997 = vpack.c.b16 %v4987, %v4982
  %v4998 = vpack.c.b16 %v4988, %v4983
  %v4999 = vpack.c.b16 %v4989, %v4984
  %v5000 = vpack.c.b16 %v4990, %v4985
  %vm5011 = vcmask 261120
  %v5013 = vsel %vm5011, %v4939, 0
  %v5016 = vsel %vm5011, %v4940, 0
  %v5019 = vsel %vm5011, %v4941, 0
  %v5022 = vsel %vm5011, %v4942, 0
  %v5025 = vsel %vm5011, %v4943, 0
  %v5028 = vsel %vm5011, %v4944, 0
  %v5031 = vsel %vm5011, %v4945, 0
  %v5034 = vsel %vm5011, %v4946, 0
  %5036 = vmatprep.subr.bf16.mxu0 %v4992
  %5037 = vmatpush1.bf16.msra.mxu0 %v4991
  %5038 = vmatprep.subr.bf16.mxu0 %v4997
  %5039 = vmatpush1.bf16.msra.mxu0 %v4996
  %5040 = vmatprep.subr.bf16.mxu0 0
  %5041 = vmatpush1.bf16.msra.mxu0 0
  %5042 = vmatprep.subr.bf16.mxu0 0
  %5043 = vmatpush1.bf16.msra.mxu0 0
  %5044 = vmatprep.subr.bf16.mxu0 0
  %5045 = vmatpush1.bf16.msra.mxu0 0
  %5046 = vmatprep.subr.bf16.mxu0 0
  %5047 = vmatpush1.bf16.msra.mxu0 0
  %5048 = vmatprep.subr.bf16.mxu0 0
  %5049 = vmatpush1.bf16.msra.mxu0 0
  %5050 = vmatprep.subr.bf16.mxu0 0
  %5051 = vmatpush1.bf16.msra.mxu0 0
  %5052 = vmatprep.subr.bf16.mxu0 0
  %5053 = vmatpush1.bf16.msra.mxu0 0
  %5054 = vmatprep.subr.bf16.mxu0 0
  %5055 = vmatpush1.bf16.msra.mxu0 0
  %5056 = vmatprep.subr.bf16.mxu0 0
  %5057 = vmatpush1.bf16.msra.mxu0 0
  %5058 = vmatprep.subr.bf16.mxu0 0
  %5059 = vmatpush1.bf16.msra.mxu0 0
  %5060 = vmatprep.subr.bf16.mxu0 0
  %5061 = vmatpush1.bf16.msra.mxu0 0
  %5062 = vmatprep.subr.bf16.mxu0 0
  %5063 = vmatpush1.bf16.msra.mxu0 0
  %5064 = vmatprep.subr.bf16.mxu0 0
  %5065 = vmatpush1.bf16.msra.mxu0 0
  %5066 = vmatprep.subr.bf16.mxu0 0
  %5067 = vmatpush1.bf16.msra.mxu0 0
  %5068 = vmatprep.mubr.bf16.mxu0 0
  %5069 = vmatmul.mubr.bf16.gmra.mrb[0].mxu0 %v5013
  %v5070 = vpop.f32.mrb[0].mxu0
  %v5071 = vadd.f32 0.0, %v5070
  %v5072 = vpop.f32.mrb[0].mxu0
  %v5073 = vadd.f32 0.0, %v5072
  %v5074 = vpop.f32.mrb[0].mxu0
  %v5075 = vadd.f32 0.0, %v5074
  %v5076 = vpop.f32.mrb[0].mxu0
  %v5077 = vadd.f32 0.0, %v5076
  %5078 = vmatprep.mubr.bf16.mxu0 0
  %5079 = vmatmul.mubr.bf16.gmra.mrb[0].mxu0 %v5016
  %v5080 = vpop.f32.mrb[0].mxu0
  %v5081 = vadd.f32 0.0, %v5080
  %v5082 = vpop.f32.mrb[0].mxu0
  %v5083 = vadd.f32 0.0, %v5082
  %v5084 = vpop.f32.mrb[0].mxu0
  %v5085 = vadd.f32 0.0, %v5084
  %v5086 = vpop.f32.mrb[0].mxu0
  %v5087 = vadd.f32 0.0, %v5086
  %5088 = vmatprep.mubr.bf16.mxu0 0
  %5089 = vmatmul.mubr.bf16.gmra.mrb[0].mxu0 %v5019
  %v5090 = vpop.f32.mrb[0].mxu0
  %v5091 = vadd.f32 0.0, %v5090
  %v5092 = vpop.f32.mrb[0].mxu0
  %v5093 = vadd.f32 0.0, %v5092
  %v5094 = vpop.f32.mrb[0].mxu0
  %v5095 = vadd.f32 0.0, %v5094
  %v5096 = vpop.f32.mrb[0].mxu0
  %v5097 = vadd.f32 0.0, %v5096
  %5098 = vmatprep.mubr.bf16.mxu0 0
  %5099 = vmatmul.mubr.bf16.gmra.mrb[0].mxu0 %v5022
  %v5100 = vpop.f32.mrb[0].mxu0
  %v5101 = vadd.f32 0.0, %v5100
  %v5102 = vpop.f32.mrb[0].mxu0
  %v5103 = vadd.f32 0.0, %v5102
  %v5104 = vpop.f32.mrb[0].mxu0
  %v5105 = vadd.f32 0.0, %v5104
  %v5106 = vpop.f32.mrb[0].mxu0
  %v5107 = vadd.f32 0.0, %v5106
  %5108 = vmatprep.mubr.bf16.mxu0 0
  %5109 = vmatmul.mubr.bf16.gmra.mrb[0].mxu0 %v5025
  %v5110 = vpop.f32.mrb[0].mxu0
  %v5111 = vadd.f32 0.0, %v5110
  %v5112 = vpop.f32.mrb[0].mxu0
  %v5113 = vadd.f32 0.0, %v5112
  %v5114 = vpop.f32.mrb[0].mxu0
  %v5115 = vadd.f32 0.0, %v5114
  %v5116 = vpop.f32.mrb[0].mxu0
  %v5117 = vadd.f32 0.0, %v5116
  %5118 = vmatprep.mubr.bf16.mxu0 0
  %5119 = vmatmul.mubr.bf16.gmra.mrb[0].mxu0 %v5028
  %v5120 = vpop.f32.mrb[0].mxu0
  %v5121 = vadd.f32 0.0, %v5120
  %v5122 = vpop.f32.mrb[0].mxu0
  %v5123 = vadd.f32 0.0, %v5122
  %v5124 = vpop.f32.mrb[0].mxu0
  %v5125 = vadd.f32 0.0, %v5124
  %v5126 = vpop.f32.mrb[0].mxu0
  %v5127 = vadd.f32 0.0, %v5126
  %5128 = vmatprep.mubr.bf16.mxu0 0
  %5129 = vmatmul.mubr.bf16.gmra.mrb[0].mxu0 %v5031
  %v5130 = vpop.f32.mrb[0].mxu0
  %v5131 = vadd.f32 0.0, %v5130
  %v5132 = vpop.f32.mrb[0].mxu0
  %v5133 = vadd.f32 0.0, %v5132
  %v5134 = vpop.f32.mrb[0].mxu0
  %v5135 = vadd.f32 0.0, %v5134
  %v5136 = vpop.f32.mrb[0].mxu0
  %v5137 = vadd.f32 0.0, %v5136
  %5138 = vmatprep.mubr.bf16.mxu0 0
  %5139 = vmatmul.mubr.bf16.gmra.mrb[0].mxu0 %v5034
  %v5140 = vpop.f32.mrb[0].mxu0
  %v5141 = vadd.f32 0.0, %v5140
  %v5142 = vpop.f32.mrb[0].mxu0
  %v5143 = vadd.f32 0.0, %v5142
  %v5144 = vpop.f32.mrb[0].mxu0
  %v5145 = vadd.f32 0.0, %v5144
  %v5146 = vpop.f32.mrb[0].mxu0
  %v5147 = vadd.f32 0.0, %v5146
  %5148 = vdwg.mxu0
  %5149 = vmatprep.subr.bf16.mxu0 %v4994
  %5150 = vmatpush1.bf16.msra.mxu0 %v4993
  %5151 = vmatprep.subr.bf16.mxu0 %v4999
  %5152 = vmatpush1.bf16.msra.mxu0 %v4998
  %5153 = vmatprep.subr.bf16.mxu0 0
  %5154 = vmatpush1.bf16.msra.mxu0 0
  %5155 = vmatprep.subr.bf16.mxu0 0
  %5156 = vmatpush1.bf16.msra.mxu0 0
  %5157 = vmatprep.subr.bf16.mxu0 0
  %5158 = vmatpush1.bf16.msra.mxu0 0
  %5159 = vmatprep.subr.bf16.mxu0 0
  %5160 = vmatpush1.bf16.msra.mxu0 0
  %5161 = vmatprep.subr.bf16.mxu0 0
  %5162 = vmatpush1.bf16.msra.mxu0 0
  %5163 = vmatprep.subr.bf16.mxu0 0
  %5164 = vmatpush1.bf16.msra.mxu0 0
  %5165 = vmatprep.subr.bf16.mxu0 0
  %5166 = vmatpush1.bf16.msra.mxu0 0
  %5167 = vmatprep.subr.bf16.mxu0 0
  %5168 = vmatpush1.bf16.msra.mxu0 0
  %5169 = vmatprep.subr.bf16.mxu0 0
  %5170 = vmatpush1.bf16.msra.mxu0 0
  %5171 = vmatprep.subr.bf16.mxu0 0
  %5172 = vmatpush1.bf16.msra.mxu0 0
  %5173 = vmatprep.subr.bf16.mxu0 0
  %5174 = vmatpush1.bf16.msra.mxu0 0
  %5175 = vmatprep.subr.bf16.mxu0 0
  %5176 = vmatpush1.bf16.msra.mxu0 0
  %5177 = vmatprep.subr.bf16.mxu0 0
  %5178 = vmatpush1.bf16.msra.mxu0 0
  %5179 = vmatprep.subr.bf16.mxu0 0
  %5180 = vmatpush1.bf16.msra.mxu0 0
  %5181 = vmatprep.mubr.bf16.mxu0 0
  %5182 = vmatmul.mubr.bf16.gmra.mrb[0].mxu0 %v5013
  %v5183 = vpop.f32.mrb[0].mxu0
  %v5184 = vadd.f32 0.0, %v5183
  %v5185 = vpop.f32.mrb[0].mxu0
  %v5186 = vadd.f32 0.0, %v5185
  %v5187 = vpop.f32.mrb[0].mxu0
  %v5188 = vadd.f32 0.0, %v5187
  %v5189 = vpop.f32.mrb[0].mxu0
  %v5190 = vadd.f32 0.0, %v5189
  %5191 = vmatprep.mubr.bf16.mxu0 0
  %5192 = vmatmul.mubr.bf16.gmra.mrb[0].mxu0 %v5016
  %v5193 = vpop.f32.mrb[0].mxu0
  %v5194 = vadd.f32 0.0, %v5193
  %v5195 = vpop.f32.mrb[0].mxu0
  %v5196 = vadd.f32 0.0, %v5195
  %v5197 = vpop.f32.mrb[0].mxu0
  %v5198 = vadd.f32 0.0, %v5197
  %v5199 = vpop.f32.mrb[0].mxu0
  %v5200 = vadd.f32 0.0, %v5199
  %5201 = vmatprep.mubr.bf16.mxu0 0
  %5202 = vmatmul.mubr.bf16.gmra.mrb[0].mxu0 %v5019
  %v5203 = vpop.f32.mrb[0].mxu0
  %v5204 = vadd.f32 0.0, %v5203
  %v5205 = vpop.f32.mrb[0].mxu0
  %v5206 = vadd.f32 0.0, %v5205
  %v5207 = vpop.f32.mrb[0].mxu0
  %v5208 = vadd.f32 0.0, %v5207
  %v5209 = vpop.f32.mrb[0].mxu0
  %v5210 = vadd.f32 0.0, %v5209
  %5211 = vmatprep.mubr.bf16.mxu0 0
  %5212 = vmatmul.mubr.bf16.gmra.mrb[0].mxu0 %v5022
  %v5213 = vpop.f32.mrb[0].mxu0
  %v5214 = vadd.f32 0.0, %v5213
  %v5215 = vpop.f32.mrb[0].mxu0
  %v5216 = vadd.f32 0.0, %v5215
  %v5217 = vpop.f32.mrb[0].mxu0
  %v5218 = vadd.f32 0.0, %v5217
  %v5219 = vpop.f32.mrb[0].mxu0
  %v5220 = vadd.f32 0.0, %v5219
  %5221 = vmatprep.mubr.bf16.mxu0 0
  %5222 = vmatmul.mubr.bf16.gmra.mrb[0].mxu0 %v5025
  %v5223 = vpop.f32.mrb[0].mxu0
  %v5224 = vadd.f32 0.0, %v5223
  %v5225 = vpop.f32.mrb[0].mxu0
  %v5226 = vadd.f32 0.0, %v5225
  %v5227 = vpop.f32.mrb[0].mxu0
  %v5228 = vadd.f32 0.0, %v5227
  %v5229 = vpop.f32.mrb[0].mxu0
  %v5230 = vadd.f32 0.0, %v5229
  %5231 = vmatprep.mubr.bf16.mxu0 0
  %5232 = vmatmul.mubr.bf16.gmra.mrb[0].mxu0 %v5028
  %v5233 = vpop.f32.mrb[0].mxu0
  %v5234 = vadd.f32 0.0, %v5233
  %v5235 = vpop.f32.mrb[0].mxu0
  %v5236 = vadd.f32 0.0, %v5235
  %v5237 = vpop.f32.mrb[0].mxu0
  %v5238 = vadd.f32 0.0, %v5237
  %v5239 = vpop.f32.mrb[0].mxu0
  %v5240 = vadd.f32 0.0, %v5239
  %5241 = vmatprep.mubr.bf16.mxu0 0
  %5242 = vmatmul.mubr.bf16.gmra.mrb[0].mxu0 %v5031
  %v5243 = vpop.f32.mrb[0].mxu0
  %v5244 = vadd.f32 0.0, %v5243
  %v5245 = vpop.f32.mrb[0].mxu0
  %v5246 = vadd.f32 0.0, %v5245
  %v5247 = vpop.f32.mrb[0].mxu0
  %v5248 = vadd.f32 0.0, %v5247
  %v5249 = vpop.f32.mrb[0].mxu0
  %v5250 = vadd.f32 0.0, %v5249
  %5251 = vmatprep.mubr.bf16.mxu0 0
  %5252 = vmatmul.mubr.bf16.gmra.mrb[0].mxu0 %v5034
  %v5253 = vpop.f32.mrb[0].mxu0
  %v5254 = vadd.f32 0.0, %v5253
  %v5255 = vpop.f32.mrb[0].mxu0
  %v5256 = vadd.f32 0.0, %v5255
  %v5257 = vpop.f32.mrb[0].mxu0
  %v5258 = vadd.f32 0.0, %v5257
  %v5259 = vpop.f32.mrb[0].mxu0
  %v5260 = vadd.f32 0.0, %v5259
  %5261 = vdwg.mxu0
  %5262 = vmatprep.subr.bf16.mxu0 0
  %5263 = vmatpush1.bf16.msra.mxu0 %v4995
  %5264 = vmatprep.subr.bf16.mxu0 0
  %5265 = vmatpush1.bf16.msra.mxu0 %v5000
  %5266 = vmatprep.subr.bf16.mxu0 0
  %5267 = vmatpush1.bf16.msra.mxu0 0
  %5268 = vmatprep.subr.bf16.mxu0 0
  %5269 = vmatpush1.bf16.msra.mxu0 0
  %5270 = vmatprep.subr.bf16.mxu0 0
  %5271 = vmatpush1.bf16.msra.mxu0 0
  %5272 = vmatprep.subr.bf16.mxu0 0
  %5273 = vmatpush1.bf16.msra.mxu0 0
  %5274 = vmatprep.subr.bf16.mxu0 0
  %5275 = vmatpush1.bf16.msra.mxu0 0
  %5276 = vmatprep.subr.bf16.mxu0 0
  %5277 = vmatpush1.bf16.msra.mxu0 0
  %5278 = vmatprep.subr.bf16.mxu0 0
  %5279 = vmatpush1.bf16.msra.mxu0 0
  %5280 = vmatprep.subr.bf16.mxu0 0
  %5281 = vmatpush1.bf16.msra.mxu0 0
  %5282 = vmatprep.subr.bf16.mxu0 0
  %5283 = vmatpush1.bf16.msra.mxu0 0
  %5284 = vmatprep.subr.bf16.mxu0 0
  %5285 = vmatpush1.bf16.msra.mxu0 0
  %5286 = vmatprep.subr.bf16.mxu0 0
  %5287 = vmatpush1.bf16.msra.mxu0 0
  %5288 = vmatprep.subr.bf16.mxu0 0
  %5289 = vmatpush1.bf16.msra.mxu0 0
  %5290 = vmatprep.subr.bf16.mxu0 0
  %5291 = vmatpush1.bf16.msra.mxu0 0
  %5292 = vmatprep.subr.bf16.mxu0 0
  %5293 = vmatpush1.bf16.msra.mxu0 0
  %5294 = vmatprep.mubr.bf16.mxu0 0
  %5295 = vmatmul.mubr.bf16.gmra.mrb[0].mxu0 %v5013
  %v5296 = vpop.f32.mrb[0].mxu0
  %v5297 = vadd.f32 0.0, %v5296
  %v5298 = vpop.f32.mrb[0].mxu0
  %v5299 = vpop.f32.mrb[0].mxu0
  %v5300 = vadd.f32 0.0, %v5299
  %v5301 = vpop.f32.mrb[0].mxu0
  %5302 = vmatprep.mubr.bf16.mxu0 0
  %5303 = vmatmul.mubr.bf16.gmra.mrb[0].mxu0 %v5016
  %v5304 = vpop.f32.mrb[0].mxu0
  %v5305 = vadd.f32 0.0, %v5304
  %v5306 = vpop.f32.mrb[0].mxu0
  %v5307 = vpop.f32.mrb[0].mxu0
  %v5308 = vadd.f32 0.0, %v5307
  %v5309 = vpop.f32.mrb[0].mxu0
  %5310 = vmatprep.mubr.bf16.mxu0 0
  %5311 = vmatmul.mubr.bf16.gmra.mrb[0].mxu0 %v5019
  %v5312 = vpop.f32.mrb[0].mxu0
  %v5313 = vadd.f32 0.0, %v5312
  %v5314 = vpop.f32.mrb[0].mxu0
  %v5315 = vpop.f32.mrb[0].mxu0
  %v5316 = vadd.f32 0.0, %v5315
  %v5317 = vpop.f32.mrb[0].mxu0
  %5318 = vmatprep.mubr.bf16.mxu0 0
  %5319 = vmatmul.mubr.bf16.gmra.mrb[0].mxu0 %v5022
  %v5320 = vpop.f32.mrb[0].mxu0
  %v5321 = vadd.f32 0.0, %v5320
  %v5322 = vpop.f32.mrb[0].mxu0
  %v5323 = vpop.f32.mrb[0].mxu0
  %v5324 = vadd.f32 0.0, %v5323
  %v5325 = vpop.f32.mrb[0].mxu0
  %5326 = vmatprep.mubr.bf16.mxu0 0
  %5327 = vmatmul.mubr.bf16.gmra.mrb[0].mxu0 %v5025
  %v5328 = vpop.f32.mrb[0].mxu0
  %v5329 = vadd.f32 0.0, %v5328
  %v5330 = vpop.f32.mrb[0].mxu0
  %v5331 = vpop.f32.mrb[0].mxu0
  %v5332 = vadd.f32 0.0, %v5331
  %v5333 = vpop.f32.mrb[0].mxu0
  %5334 = vmatprep.mubr.bf16.mxu0 0
  %5335 = vmatmul.mubr.bf16.gmra.mrb[0].mxu0 %v5028
  %v5336 = vpop.f32.mrb[0].mxu0
  %v5337 = vadd.f32 0.0, %v5336
  %v5338 = vpop.f32.mrb[0].mxu0
  %v5339 = vpop.f32.mrb[0].mxu0
  %v5340 = vadd.f32 0.0, %v5339
  %v5341 = vpop.f32.mrb[0].mxu0
  %5342 = vmatprep.mubr.bf16.mxu0 0
  %5343 = vmatmul.mubr.bf16.gmra.mrb[0].mxu0 %v5031
  %v5344 = vpop.f32.mrb[0].mxu0
  %v5345 = vadd.f32 0.0, %v5344
  %v5346 = vpop.f32.mrb[0].mxu0
  %v5347 = vpop.f32.mrb[0].mxu0
  %v5348 = vadd.f32 0.0, %v5347
  %v5349 = vpop.f32.mrb[0].mxu0
  %5350 = vmatprep.mubr.bf16.mxu0 0
  %5351 = vmatmul.mubr.bf16.gmra.mrb[0].mxu0 %v5034
  %v5352 = vpop.f32.mrb[0].mxu0
  %v5353 = vadd.f32 0.0, %v5352
  %v5354 = vpop.f32.mrb[0].mxu0
  %v5355 = vpop.f32.mrb[0].mxu0
  %v5356 = vadd.f32 0.0, %v5355
  %v5357 = vpop.f32.mrb[0].mxu0
  %5358 = vdwg.mxu0
  %v5359 = vpack.c.bf16 %v5075, %v5071
  %v5360 = vpack.c.bf16 %v5077, %v5073
  %v5361 = vpack.c.bf16 %v5188, %v5184
  %v5362 = vpack.c.bf16 %v5190, %v5186
  %v5363 = vpack.c.bf16 %v5300, %v5297
  %v5364 = vpack.c.bf16 %v5085, %v5081
  %v5365 = vpack.c.bf16 %v5087, %v5083
  %v5366 = vpack.c.bf16 %v5198, %v5194
  %v5367 = vpack.c.bf16 %v5200, %v5196
  %v5368 = vpack.c.bf16 %v5308, %v5305
  %v5369 = vpack.c.bf16 %v5095, %v5091
  %v5370 = vpack.c.bf16 %v5097, %v5093
  %v5371 = vpack.c.bf16 %v5208, %v5204
  %v5372 = vpack.c.bf16 %v5210, %v5206
  %v5373 = vpack.c.bf16 %v5316, %v5313
  %v5374 = vpack.c.bf16 %v5105, %v5101
  %v5375 = vpack.c.bf16 %v5107, %v5103
  %v5376 = vpack.c.bf16 %v5218, %v5214
  %v5377 = vpack.c.bf16 %v5220, %v5216
  %v5378 = vpack.c.bf16 %v5324, %v5321
  %v5379 = vpack.c.bf16 %v5115, %v5111
  %v5380 = vpack.c.bf16 %v5117, %v5113
  %v5381 = vpack.c.bf16 %v5228, %v5224
  %v5382 = vpack.c.bf16 %v5230, %v5226
  %v5383 = vpack.c.bf16 %v5332, %v5329
  %v5384 = vpack.c.bf16 %v5125, %v5121
  %v5385 = vpack.c.bf16 %v5127, %v5123
  %v5386 = vpack.c.bf16 %v5238, %v5234
  %v5387 = vpack.c.bf16 %v5240, %v5236
  %v5388 = vpack.c.bf16 %v5340, %v5337
  %v5389 = vpack.c.bf16 %v5135, %v5131
  %v5390 = vpack.c.bf16 %v5137, %v5133
  %v5391 = vpack.c.bf16 %v5248, %v5244
  %v5392 = vpack.c.bf16 %v5250, %v5246
  %v5393 = vpack.c.bf16 %v5348, %v5345
  %v5394 = vpack.c.bf16 %v5145, %v5141
  %v5395 = vpack.c.bf16 %v5147, %v5143
  %v5396 = vpack.c.bf16 %v5258, %v5254
  %v5397 = vpack.c.bf16 %v5260, %v5256
  %v5398 = vpack.c.bf16 %v5356, %v5353
  %v5399 = vld [vmem:[%s4] sm:$0xf]
  %v5400 = vld [vmem:[%s4 + $0x4] sm:$0xf]
  %v5401 = vld [vmem:[%s4 + $0x8] sm:$0xf]
  %v5402 = vld [vmem:[%s4 + $0xc] sm:$0xf]
  %v5403 = vld [vmem:[%s4 + $0x10] sm:$0xf]
  %v5404 = vld [vmem:[%s4 + $0x14] sm:$0xf]
  %v5405 = vld [vmem:[%s4 + $0x18] sm:$0xf]
  %v5406 = vld [vmem:[%s4 + $0x1c] sm:$0xf]
  %v5407 = vld [vmem:[%s4 + $0x20] sm:$0xf]
  %v5408 = vld [vmem:[%s4 + $0x24] sm:$0xf]
  %v5409 = vld [vmem:[%s4 + $0x28] sm:$0xf]
  %v5410 = vld [vmem:[%s4 + $0x2c] sm:$0xf]
  %v5411 = vld [vmem:[%s4 + $0x30] sm:$0xf]
  %v5412 = vld [vmem:[%s4 + $0x34] sm:$0xf]
  %v5413 = vld [vmem:[%s4 + $0x38] sm:$0xf]
  %v5414 = vld [vmem:[%s4 + $0x3c] sm:$0xf]
  %s5415 = scalar_lea.vmem %s4, 64
  %v5416 = vld [vmem:[%s5415] sm:$0xf]
  %v5417 = vld [vmem:[%s5415 + $0x4] sm:$0xf]
  %v5418 = vld [vmem:[%s5415 + $0x8] sm:$0xf]
  %v5419 = vld [vmem:[%s5415 + $0xc] sm:$0xf]
  %v5420 = vld [vmem:[%s5415 + $0x10] sm:$0xf]
  %v5421 = vld [vmem:[%s5415 + $0x14] sm:$0xf]
  %v5422 = vld [vmem:[%s5415 + $0x18] sm:$0xf]
  %v5423 = vld [vmem:[%s5415 + $0x1c] sm:$0xf]
  %v5424 = vld [vmem:[%s5415 + $0x20] sm:$0xf]
  %v5425 = vld [vmem:[%s5415 + $0x24] sm:$0xf]
  %v5426 = vld [vmem:[%s5415 + $0x28] sm:$0xf]
  %v5427 = vld [vmem:[%s5415 + $0x2c] sm:$0xf]
  %v5428 = vld [vmem:[%s5415 + $0x30] sm:$0xf]
  %v5429 = vld [vmem:[%s5415 + $0x34] sm:$0xf]
  %v5430 = vld [vmem:[%s5415 + $0x38] sm:$0xf]
  %v5431 = vld [vmem:[%s5415 + $0x3c] sm:$0xf]
  %v5448 = vunpack.c.l.b16 %v5416
  %v5449 = vunpack.c.l.b16 %v5417
  %v5450 = vunpack.c.l.b16 %v5418
  %v5451 = vunpack.c.l.b16 %v5419
  %v5452 = vunpack.c.l.b16 %v5420
  %v5453 = vunpack.c.l.b16 %v5421
  %v5454 = vunpack.c.l.b16 %v5422
  %v5455 = vunpack.c.l.b16 %v5423
  %v5456 = vunpack.c.l.b16 %v5424
  %v5457 = vunpack.c.l.b16 %v5425
  %v5458 = vunpack.c.l.b16 %v5426
  %v5459 = vunpack.c.l.b16 %v5427
  %v5460 = vunpack.c.l.b16 %v5428
  %v5461 = vunpack.c.l.b16 %v5429
  %v5462 = vunpack.c.l.b16 %v5430
  %v5463 = vunpack.c.l.b16 %v5431
  %v5464 = vpack.c.b16 %v5449, %v5448
  %v5465 = vpack.c.b16 %v5451, %v5450
  %v5466 = vpack.c.b16 %v5453, %v5452
  %v5467 = vpack.c.b16 %v5455, %v5454
  %v5468 = vpack.c.b16 %v5457, %v5456
  %v5469 = vpack.c.b16 %v5459, %v5458
  %v5470 = vpack.c.b16 %v5461, %v5460
  %v5471 = vpack.c.b16 %v5463, %v5462
  %5488 = vrot.lane.b32.xlu0 %v5359, 64
  %v5489 = vpop.permute.xlu0 %5488
  %5490 = vrot.lane.b32.xlu0 %v5364, 64
  %v5491 = vpop.permute.xlu0 %5490
  %5492 = vrot.lane.b32.xlu0 %v5369, 64
  %v5493 = vpop.permute.xlu0 %5492
  %5494 = vrot.lane.b32.xlu0 %v5374, 64
  %v5495 = vpop.permute.xlu0 %5494
  %5496 = vrot.lane.b32.xlu0 %v5379, 64
  %v5497 = vpop.permute.xlu0 %5496
  %5498 = vrot.lane.b32.xlu0 %v5384, 64
  %v5499 = vpop.permute.xlu0 %5498
  %5500 = vrot.lane.b32.xlu0 %v5389, 64
  %v5501 = vpop.permute.xlu0 %5500
  %5502 = vrot.lane.b32.xlu0 %v5394, 64
  %v5503 = vpop.permute.xlu0 %5502
  %5512 = vmatprep.subr.bf16.mxu0 0
  %5513 = vmatpush1.bf16.msra.mxu0 %v5489
  %5514 = vmatprep.subr.bf16.mxu0 0
  %5515 = vmatpush1.bf16.msra.mxu0 %v5491
  %5516 = vmatprep.subr.bf16.mxu0 0
  %5517 = vmatpush1.bf16.msra.mxu0 %v5493
  %5518 = vmatprep.subr.bf16.mxu0 0
  %5519 = vmatpush1.bf16.msra.mxu0 %v5495
  %5520 = vmatprep.subr.bf16.mxu0 0
  %5521 = vmatpush1.bf16.msra.mxu0 %v5497
  %5522 = vmatprep.subr.bf16.mxu0 0
  %5523 = vmatpush1.bf16.msra.mxu0 %v5499
  %5524 = vmatprep.subr.bf16.mxu0 0
  %5525 = vmatpush1.bf16.msra.mxu0 %v5501
  %5526 = vmatprep.subr.bf16.mxu0 0
  %5527 = vmatpush1.bf16.msra.mxu0 %v5503
  %5528 = vmatprep.subr.bf16.mxu0 0
  %5529 = vmatpush1.bf16.msra.mxu0 0
  %5530 = vmatprep.subr.bf16.mxu0 0
  %5531 = vmatpush1.bf16.msra.mxu0 0
  %5532 = vmatprep.subr.bf16.mxu0 0
  %5533 = vmatpush1.bf16.msra.mxu0 0
  %5534 = vmatprep.subr.bf16.mxu0 0
  %5535 = vmatpush1.bf16.msra.mxu0 0
  %5536 = vmatprep.subr.bf16.mxu0 0
  %5537 = vmatpush1.bf16.msra.mxu0 0
  %5538 = vmatprep.subr.bf16.mxu0 0
  %5539 = vmatpush1.bf16.msra.mxu0 0
  %5540 = vmatprep.subr.bf16.mxu0 0
  %5541 = vmatpush1.bf16.msra.mxu0 0
  %5542 = vmatprep.subr.bf16.mxu0 0
  %5543 = vmatpush1.bf16.msra.mxu0 0
  %5544 = vmatprep.mubr.bf16.mxu0 0
  %5545 = vmatmul.mubr.bf16.gmra.mrb[0].mxu0 %v5464
  %v5546 = vpop.f32.mrb[0].mxu0
  %v5547 = vadd.f32 0.0, %v5546
  %v5548 = vpop.f32.mrb[0].mxu0
  %v5549 = vpop.f32.mrb[0].mxu0
  %v5550 = vadd.f32 0.0, %v5549
  %v5551 = vpop.f32.mrb[0].mxu0
  %5552 = vmatprep.mubr.bf16.mxu0 0
  %5553 = vmatmul.mubr.bf16.gmra.mrb[0].mxu0 %v5465
  %v5554 = vpop.f32.mrb[0].mxu0
  %v5555 = vadd.f32 0.0, %v5554
  %v5556 = vpop.f32.mrb[0].mxu0
  %v5557 = vpop.f32.mrb[0].mxu0
  %v5558 = vadd.f32 0.0, %v5557
  %v5559 = vpop.f32.mrb[0].mxu0
  %5560 = vmatprep.mubr.bf16.mxu0 0
  %5561 = vmatmul.mubr.bf16.gmra.mrb[0].mxu0 %v5466
  %v5562 = vpop.f32.mrb[0].mxu0
  %v5563 = vadd.f32 0.0, %v5562
  %v5564 = vpop.f32.mrb[0].mxu0
  %v5565 = vpop.f32.mrb[0].mxu0
  %v5566 = vadd.f32 0.0, %v5565
  %v5567 = vpop.f32.mrb[0].mxu0
  %5568 = vmatprep.mubr.bf16.mxu0 0
  %5569 = vmatmul.mubr.bf16.gmra.mrb[0].mxu0 %v5467
  %v5570 = vpop.f32.mrb[0].mxu0
  %v5571 = vadd.f32 0.0, %v5570
  %v5572 = vpop.f32.mrb[0].mxu0
  %v5573 = vpop.f32.mrb[0].mxu0
  %v5574 = vadd.f32 0.0, %v5573
  %v5575 = vpop.f32.mrb[0].mxu0
  %5576 = vmatprep.mubr.bf16.mxu0 0
  %5577 = vmatmul.mubr.bf16.gmra.mrb[0].mxu0 %v5468
  %v5578 = vpop.f32.mrb[0].mxu0
  %v5579 = vadd.f32 0.0, %v5578
  %v5580 = vpop.f32.mrb[0].mxu0
  %v5581 = vpop.f32.mrb[0].mxu0
  %v5582 = vadd.f32 0.0, %v5581
  %v5583 = vpop.f32.mrb[0].mxu0
  %5584 = vmatprep.mubr.bf16.mxu0 0
  %5585 = vmatmul.mubr.bf16.gmra.mrb[0].mxu0 %v5469
  %v5586 = vpop.f32.mrb[0].mxu0
  %v5587 = vadd.f32 0.0, %v5586
  %v5588 = vpop.f32.mrb[0].mxu0
  %v5589 = vpop.f32.mrb[0].mxu0
  %v5590 = vadd.f32 0.0, %v5589
  %v5591 = vpop.f32.mrb[0].mxu0
  %5592 = vmatprep.mubr.bf16.mxu0 0
  %5593 = vmatmul.mubr.bf16.gmra.mrb[0].mxu0 %v5470
  %v5594 = vpop.f32.mrb[0].mxu0
  %v5595 = vadd.f32 0.0, %v5594
  %v5596 = vpop.f32.mrb[0].mxu0
  %v5597 = vpop.f32.mrb[0].mxu0
  %v5598 = vadd.f32 0.0, %v5597
  %v5599 = vpop.f32.mrb[0].mxu0
  %5600 = vmatprep.mubr.bf16.mxu0 0
  %5601 = vmatmul.mubr.bf16.gmra.mrb[0].mxu0 %v5471
  %v5602 = vpop.f32.mrb[0].mxu0
  %v5603 = vadd.f32 0.0, %v5602
  %v5604 = vpop.f32.mrb[0].mxu0
  %v5605 = vpop.f32.mrb[0].mxu0
  %v5606 = vadd.f32 0.0, %v5605
  %v5607 = vpop.f32.mrb[0].mxu0
  %5608 = vdwg.mxu0
  %v5625 = vunpack.c.l.b16 %v5399
  %v5626 = vunpack.c.l.b16 %v5400
  %v5627 = vunpack.c.l.b16 %v5401
  %v5628 = vunpack.c.l.b16 %v5402
  %v5629 = vunpack.c.l.b16 %v5403
  %v5630 = vunpack.c.l.b16 %v5404
  %v5631 = vunpack.c.l.b16 %v5405
  %v5632 = vunpack.c.l.b16 %v5406
  %v5633 = vunpack.c.l.b16 %v5407
  %v5634 = vunpack.c.l.b16 %v5408
  %v5635 = vunpack.c.l.b16 %v5409
  %v5636 = vunpack.c.l.b16 %v5410
  %v5637 = vunpack.c.l.b16 %v5411
  %v5638 = vunpack.c.l.b16 %v5412
  %v5639 = vunpack.c.l.b16 %v5413
  %v5640 = vunpack.c.l.b16 %v5414
  %v5641 = vpack.c.b16 %v5626, %v5625
  %v5642 = vpack.c.b16 %v5628, %v5627
  %v5643 = vpack.c.b16 %v5630, %v5629
  %v5644 = vpack.c.b16 %v5632, %v5631
  %v5645 = vpack.c.b16 %v5634, %v5633
  %v5646 = vpack.c.b16 %v5636, %v5635
  %v5647 = vpack.c.b16 %v5638, %v5637
  %v5648 = vpack.c.b16 %v5640, %v5639
  %5657 = vmatprep.subr.bf16.mxu0 0
  %5658 = vmatpush1.bf16.msra.mxu0 %v5359
  %5659 = vmatprep.subr.bf16.mxu0 0
  %5660 = vmatpush1.bf16.msra.mxu0 %v5364
  %5661 = vmatprep.subr.bf16.mxu0 0
  %5662 = vmatpush1.bf16.msra.mxu0 %v5369
  %5663 = vmatprep.subr.bf16.mxu0 0
  %5664 = vmatpush1.bf16.msra.mxu0 %v5374
  %5665 = vmatprep.subr.bf16.mxu0 0
  %5666 = vmatpush1.bf16.msra.mxu0 %v5379
  %5667 = vmatprep.subr.bf16.mxu0 0
  %5668 = vmatpush1.bf16.msra.mxu0 %v5384
  %5669 = vmatprep.subr.bf16.mxu0 0
  %5670 = vmatpush1.bf16.msra.mxu0 %v5389
  %5671 = vmatprep.subr.bf16.mxu0 0
  %5672 = vmatpush1.bf16.msra.mxu0 %v5394
  %5673 = vmatprep.subr.bf16.mxu0 0
  %5674 = vmatpush1.bf16.msra.mxu0 0
  %5675 = vmatprep.subr.bf16.mxu0 0
  %5676 = vmatpush1.bf16.msra.mxu0 0
  %5677 = vmatprep.subr.bf16.mxu0 0
  %5678 = vmatpush1.bf16.msra.mxu0 0
  %5679 = vmatprep.subr.bf16.mxu0 0
  %5680 = vmatpush1.bf16.msra.mxu0 0
  %5681 = vmatprep.subr.bf16.mxu0 0
  %5682 = vmatpush1.bf16.msra.mxu0 0
  %5683 = vmatprep.subr.bf16.mxu0 0
  %5684 = vmatpush1.bf16.msra.mxu0 0
  %5685 = vmatprep.subr.bf16.mxu0 0
  %5686 = vmatpush1.bf16.msra.mxu0 0
  %5687 = vmatprep.subr.bf16.mxu0 0
  %5688 = vmatpush1.bf16.msra.mxu0 0
  %5689 = vmatprep.mubr.bf16.mxu0 0
  %5690 = vmatmul.mubr.bf16.gmra.mrb[0].mxu0 %v5641
  %v5691 = vpop.f32.mrb[0].mxu0
  %v5692 = vadd.f32 %v5547, %v5691
  %v5693 = vpop.f32.mrb[0].mxu0
  %v5694 = vpop.f32.mrb[0].mxu0
  %v5695 = vadd.f32 %v5550, %v5694
  %v5696 = vpop.f32.mrb[0].mxu0
  %5697 = vmatprep.mubr.bf16.mxu0 0
  %5698 = vmatmul.mubr.bf16.gmra.mrb[0].mxu0 %v5642
  %v5699 = vpop.f32.mrb[0].mxu0
  %v5700 = vadd.f32 %v5555, %v5699
  %v5701 = vpop.f32.mrb[0].mxu0
  %v5702 = vpop.f32.mrb[0].mxu0
  %v5703 = vadd.f32 %v5558, %v5702
  %v5704 = vpop.f32.mrb[0].mxu0
  %5705 = vmatprep.mubr.bf16.mxu0 0
  %5706 = vmatmul.mubr.bf16.gmra.mrb[0].mxu0 %v5643
  %v5707 = vpop.f32.mrb[0].mxu0
  %v5708 = vadd.f32 %v5563, %v5707
  %v5709 = vpop.f32.mrb[0].mxu0
  %v5710 = vpop.f32.mrb[0].mxu0
  %v5711 = vadd.f32 %v5566, %v5710
  %v5712 = vpop.f32.mrb[0].mxu0
  %5713 = vmatprep.mubr.bf16.mxu0 0
  %5714 = vmatmul.mubr.bf16.gmra.mrb[0].mxu0 %v5644
  %v5715 = vpop.f32.mrb[0].mxu0
  %v5716 = vadd.f32 %v5571, %v5715
  %v5717 = vpop.f32.mrb[0].mxu0
  %v5718 = vpop.f32.mrb[0].mxu0
  %v5719 = vadd.f32 %v5574, %v5718
  %v5720 = vpop.f32.mrb[0].mxu0
  %5721 = vmatprep.mubr.bf16.mxu0 0
  %5722 = vmatmul.mubr.bf16.gmra.mrb[0].mxu0 %v5645
  %v5723 = vpop.f32.mrb[0].mxu0
  %v5724 = vadd.f32 %v5579, %v5723
  %v5725 = vpop.f32.mrb[0].mxu0
  %v5726 = vpop.f32.mrb[0].mxu0
  %v5727 = vadd.f32 %v5582, %v5726
  %v5728 = vpop.f32.mrb[0].mxu0
  %5729 = vmatprep.mubr.bf16.mxu0 0
  %5730 = vmatmul.mubr.bf16.gmra.mrb[0].mxu0 %v5646
  %v5731 = vpop.f32.mrb[0].mxu0
  %v5732 = vadd.f32 %v5587, %v5731
  %v5733 = vpop.f32.mrb[0].mxu0
  %v5734 = vpop.f32.mrb[0].mxu0
  %v5735 = vadd.f32 %v5590, %v5734
  %v5736 = vpop.f32.mrb[0].mxu0
  %5737 = vmatprep.mubr.bf16.mxu0 0
  %5738 = vmatmul.mubr.bf16.gmra.mrb[0].mxu0 %v5647
  %v5739 = vpop.f32.mrb[0].mxu0
  %v5740 = vadd.f32 %v5595, %v5739
  %v5741 = vpop.f32.mrb[0].mxu0
  %v5742 = vpop.f32.mrb[0].mxu0
  %v5743 = vadd.f32 %v5598, %v5742
  %v5744 = vpop.f32.mrb[0].mxu0
  %5745 = vmatprep.mubr.bf16.mxu0 0
  %5746 = vmatmul.mubr.bf16.gmra.mrb[0].mxu0 %v5648
  %v5747 = vpop.f32.mrb[0].mxu0
  %v5748 = vadd.f32 %v5603, %v5747
  %v5749 = vpop.f32.mrb[0].mxu0
  %v5750 = vpop.f32.mrb[0].mxu0
  %v5751 = vadd.f32 %v5606, %v5750
  %v5752 = vpop.f32.mrb[0].mxu0
  %5753 = vdwg.mxu0
  %s5754 = scalar_lea.vmem %s4, 128
  %v5755 = vld [vmem:[%s5754] sm:$0xf]
  %v5756 = vld [vmem:[%s5754 + $0x4] sm:$0xf]
  %v5757 = vld [vmem:[%s5754 + $0x8] sm:$0xf]
  %v5758 = vld [vmem:[%s5754 + $0xc] sm:$0xf]
  %v5759 = vld [vmem:[%s5754 + $0x10] sm:$0xf]
  %v5760 = vld [vmem:[%s5754 + $0x14] sm:$0xf]
  %v5761 = vld [vmem:[%s5754 + $0x18] sm:$0xf]
  %v5762 = vld [vmem:[%s5754 + $0x1c] sm:$0xf]
  %v5763 = vld [vmem:[%s5754 + $0x20] sm:$0xf]
  %v5764 = vld [vmem:[%s5754 + $0x24] sm:$0xf]
  %v5765 = vld [vmem:[%s5754 + $0x28] sm:$0xf]
  %v5766 = vld [vmem:[%s5754 + $0x2c] sm:$0xf]
  %v5767 = vld [vmem:[%s5754 + $0x30] sm:$0xf]
  %v5768 = vld [vmem:[%s5754 + $0x34] sm:$0xf]
  %v5769 = vld [vmem:[%s5754 + $0x38] sm:$0xf]
  %v5770 = vld [vmem:[%s5754 + $0x3c] sm:$0xf]
  %v5787 = vunpack.c.l.b16 %v5755
  %v5788 = vunpack.c.l.b16 %v5756
  %v5789 = vunpack.c.l.b16 %v5757
  %v5790 = vunpack.c.l.b16 %v5758
  %v5791 = vunpack.c.l.b16 %v5759
  %v5792 = vunpack.c.l.b16 %v5760
  %v5793 = vunpack.c.l.b16 %v5761
  %v5794 = vunpack.c.l.b16 %v5762
  %v5795 = vunpack.c.l.b16 %v5763
  %v5796 = vunpack.c.l.b16 %v5764
  %v5797 = vunpack.c.l.b16 %v5765
  %v5798 = vunpack.c.l.b16 %v5766
  %v5799 = vunpack.c.l.b16 %v5767
  %v5800 = vunpack.c.l.b16 %v5768
  %v5801 = vunpack.c.l.b16 %v5769
  %v5802 = vunpack.c.l.b16 %v5770
  %v5803 = vpack.c.b16 %v5788, %v5787
  %v5804 = vpack.c.b16 %v5790, %v5789
  %v5805 = vpack.c.b16 %v5792, %v5791
  %v5806 = vpack.c.b16 %v5794, %v5793
  %v5807 = vpack.c.b16 %v5796, %v5795
  %v5808 = vpack.c.b16 %v5798, %v5797
  %v5809 = vpack.c.b16 %v5800, %v5799
  %v5810 = vpack.c.b16 %v5802, %v5801
  %5819 = vmatprep.subr.bf16.mxu0 0
  %5820 = vmatpush1.bf16.msra.mxu0 %v5360
  %5821 = vmatprep.subr.bf16.mxu0 0
  %5822 = vmatpush1.bf16.msra.mxu0 %v5365
  %5823 = vmatprep.subr.bf16.mxu0 0
  %5824 = vmatpush1.bf16.msra.mxu0 %v5370
  %5825 = vmatprep.subr.bf16.mxu0 0
  %5826 = vmatpush1.bf16.msra.mxu0 %v5375
  %5827 = vmatprep.subr.bf16.mxu0 0
  %5828 = vmatpush1.bf16.msra.mxu0 %v5380
  %5829 = vmatprep.subr.bf16.mxu0 0
  %5830 = vmatpush1.bf16.msra.mxu0 %v5385
  %5831 = vmatprep.subr.bf16.mxu0 0
  %5832 = vmatpush1.bf16.msra.mxu0 %v5390
  %5833 = vmatprep.subr.bf16.mxu0 0
  %5834 = vmatpush1.bf16.msra.mxu0 %v5395
  %5835 = vmatprep.subr.bf16.mxu0 0
  %5836 = vmatpush1.bf16.msra.mxu0 0
  %5837 = vmatprep.subr.bf16.mxu0 0
  %5838 = vmatpush1.bf16.msra.mxu0 0
  %5839 = vmatprep.subr.bf16.mxu0 0
  %5840 = vmatpush1.bf16.msra.mxu0 0
  %5841 = vmatprep.subr.bf16.mxu0 0
  %5842 = vmatpush1.bf16.msra.mxu0 0
  %5843 = vmatprep.subr.bf16.mxu0 0
  %5844 = vmatpush1.bf16.msra.mxu0 0
  %5845 = vmatprep.subr.bf16.mxu0 0
  %5846 = vmatpush1.bf16.msra.mxu0 0
  %5847 = vmatprep.subr.bf16.mxu0 0
  %5848 = vmatpush1.bf16.msra.mxu0 0
  %5849 = vmatprep.subr.bf16.mxu0 0
  %5850 = vmatpush1.bf16.msra.mxu0 0
  %5851 = vmatprep.mubr.bf16.mxu0 0
  %5852 = vmatmul.mubr.bf16.gmra.mrb[0].mxu0 %v5803
  %v5853 = vpop.f32.mrb[0].mxu0
  %v5854 = vadd.f32 0.0, %v5853
  %v5855 = vpop.f32.mrb[0].mxu0
  %v5856 = vpop.f32.mrb[0].mxu0
  %v5857 = vadd.f32 0.0, %v5856
  %v5858 = vpop.f32.mrb[0].mxu0
  %5859 = vmatprep.mubr.bf16.mxu0 0
  %5860 = vmatmul.mubr.bf16.gmra.mrb[0].mxu0 %v5804
  %v5861 = vpop.f32.mrb[0].mxu0
  %v5862 = vadd.f32 0.0, %v5861
  %v5863 = vpop.f32.mrb[0].mxu0
  %v5864 = vpop.f32.mrb[0].mxu0
  %v5865 = vadd.f32 0.0, %v5864
  %v5866 = vpop.f32.mrb[0].mxu0
  %5867 = vmatprep.mubr.bf16.mxu0 0
  %5868 = vmatmul.mubr.bf16.gmra.mrb[0].mxu0 %v5805
  %v5869 = vpop.f32.mrb[0].mxu0
  %v5870 = vadd.f32 0.0, %v5869
  %v5871 = vpop.f32.mrb[0].mxu0
  %v5872 = vpop.f32.mrb[0].mxu0
  %v5873 = vadd.f32 0.0, %v5872
  %v5874 = vpop.f32.mrb[0].mxu0
  %5875 = vmatprep.mubr.bf16.mxu0 0
  %5876 = vmatmul.mubr.bf16.gmra.mrb[0].mxu0 %v5806
  %v5877 = vpop.f32.mrb[0].mxu0
  %v5878 = vadd.f32 0.0, %v5877
  %v5879 = vpop.f32.mrb[0].mxu0
  %v5880 = vpop.f32.mrb[0].mxu0
  %v5881 = vadd.f32 0.0, %v5880
  %v5882 = vpop.f32.mrb[0].mxu0
  %5883 = vmatprep.mubr.bf16.mxu0 0
  %5884 = vmatmul.mubr.bf16.gmra.mrb[0].mxu0 %v5807
  %v5885 = vpop.f32.mrb[0].mxu0
  %v5886 = vadd.f32 0.0, %v5885
  %v5887 = vpop.f32.mrb[0].mxu0
  %v5888 = vpop.f32.mrb[0].mxu0
  %v5889 = vadd.f32 0.0, %v5888
  %v5890 = vpop.f32.mrb[0].mxu0
  %5891 = vmatprep.mubr.bf16.mxu0 0
  %5892 = vmatmul.mubr.bf16.gmra.mrb[0].mxu0 %v5808
  %v5893 = vpop.f32.mrb[0].mxu0
  %v5894 = vadd.f32 0.0, %v5893
  %v5895 = vpop.f32.mrb[0].mxu0
  %v5896 = vpop.f32.mrb[0].mxu0
  %v5897 = vadd.f32 0.0, %v5896
  %v5898 = vpop.f32.mrb[0].mxu0
  %5899 = vmatprep.mubr.bf16.mxu0 0
  %5900 = vmatmul.mubr.bf16.gmra.mrb[0].mxu0 %v5809
  %v5901 = vpop.f32.mrb[0].mxu0
  %v5902 = vadd.f32 0.0, %v5901
  %v5903 = vpop.f32.mrb[0].mxu0
  %v5904 = vpop.f32.mrb[0].mxu0
  %v5905 = vadd.f32 0.0, %v5904
  %v5906 = vpop.f32.mrb[0].mxu0
  %5907 = vmatprep.mubr.bf16.mxu0 0
  %5908 = vmatmul.mubr.bf16.gmra.mrb[0].mxu0 %v5810
  %v5909 = vpop.f32.mrb[0].mxu0
  %v5910 = vadd.f32 0.0, %v5909
  %v5911 = vpop.f32.mrb[0].mxu0
  %v5912 = vpop.f32.mrb[0].mxu0
  %v5913 = vadd.f32 0.0, %v5912
  %v5914 = vpop.f32.mrb[0].mxu0
  %5915 = vdwg.mxu0
  %v5916 = vadd.f32 %v5692, %v5854
  %v5917 = vadd.f32 %v5695, %v5857
  %v5918 = vadd.f32 %v5700, %v5862
  %v5919 = vadd.f32 %v5703, %v5865
  %v5920 = vadd.f32 %v5708, %v5870
  %v5921 = vadd.f32 %v5711, %v5873
  %v5922 = vadd.f32 %v5716, %v5878
  %v5923 = vadd.f32 %v5719, %v5881
  %v5924 = vadd.f32 %v5724, %v5886
  %v5925 = vadd.f32 %v5727, %v5889
  %v5926 = vadd.f32 %v5732, %v5894
  %v5927 = vadd.f32 %v5735, %v5897
  %v5928 = vadd.f32 %v5740, %v5902
  %v5929 = vadd.f32 %v5743, %v5905
  %v5930 = vadd.f32 %v5748, %v5910
  %v5931 = vadd.f32 %v5751, %v5913
  %s5932 = scalar_lea.vmem %s4, 192
  %v5933 = vld [vmem:[%s5932] sm:$0xf]
  %v5934 = vld [vmem:[%s5932 + $0x4] sm:$0xf]
  %v5935 = vld [vmem:[%s5932 + $0x8] sm:$0xf]
  %v5936 = vld [vmem:[%s5932 + $0xc] sm:$0xf]
  %v5937 = vld [vmem:[%s5932 + $0x10] sm:$0xf]
  %v5938 = vld [vmem:[%s5932 + $0x14] sm:$0xf]
  %v5939 = vld [vmem:[%s5932 + $0x18] sm:$0xf]
  %v5940 = vld [vmem:[%s5932 + $0x1c] sm:$0xf]
  %v5941 = vld [vmem:[%s5932 + $0x20] sm:$0xf]
  %v5942 = vld [vmem:[%s5932 + $0x24] sm:$0xf]
  %v5943 = vld [vmem:[%s5932 + $0x28] sm:$0xf]
  %v5944 = vld [vmem:[%s5932 + $0x2c] sm:$0xf]
  %v5945 = vld [vmem:[%s5932 + $0x30] sm:$0xf]
  %v5946 = vld [vmem:[%s5932 + $0x34] sm:$0xf]
  %v5947 = vld [vmem:[%s5932 + $0x38] sm:$0xf]
  %v5948 = vld [vmem:[%s5932 + $0x3c] sm:$0xf]
  %v5965 = vunpack.c.l.b16 %v5933
  %v5966 = vunpack.c.l.b16 %v5934
  %v5967 = vunpack.c.l.b16 %v5935
  %v5968 = vunpack.c.l.b16 %v5936
  %v5969 = vunpack.c.l.b16 %v5937
  %v5970 = vunpack.c.l.b16 %v5938
  %v5971 = vunpack.c.l.b16 %v5939
  %v5972 = vunpack.c.l.b16 %v5940
  %v5973 = vunpack.c.l.b16 %v5941
  %v5974 = vunpack.c.l.b16 %v5942
  %v5975 = vunpack.c.l.b16 %v5943
  %v5976 = vunpack.c.l.b16 %v5944
  %v5977 = vunpack.c.l.b16 %v5945
  %v5978 = vunpack.c.l.b16 %v5946
  %v5979 = vunpack.c.l.b16 %v5947
  %v5980 = vunpack.c.l.b16 %v5948
  %v5981 = vpack.c.b16 %v5966, %v5965
  %v5982 = vpack.c.b16 %v5968, %v5967
  %v5983 = vpack.c.b16 %v5970, %v5969
  %v5984 = vpack.c.b16 %v5972, %v5971
  %v5985 = vpack.c.b16 %v5974, %v5973
  %v5986 = vpack.c.b16 %v5976, %v5975
  %v5987 = vpack.c.b16 %v5978, %v5977
  %v5988 = vpack.c.b16 %v5980, %v5979
  %6005 = vrot.lane.b32.xlu0 %v5360, 64
  %v6006 = vpop.permute.xlu0 %6005
  %6007 = vrot.lane.b32.xlu0 %v5365, 64
  %v6008 = vpop.permute.xlu0 %6007
  %6009 = vrot.lane.b32.xlu0 %v5370, 64
  %v6010 = vpop.permute.xlu0 %6009
  %6011 = vrot.lane.b32.xlu0 %v5375, 64
  %v6012 = vpop.permute.xlu0 %6011
  %6013 = vrot.lane.b32.xlu0 %v5380, 64
  %v6014 = vpop.permute.xlu0 %6013
  %6015 = vrot.lane.b32.xlu0 %v5385, 64
  %v6016 = vpop.permute.xlu0 %6015
  %6017 = vrot.lane.b32.xlu0 %v5390, 64
  %v6018 = vpop.permute.xlu0 %6017
  %6019 = vrot.lane.b32.xlu0 %v5395, 64
  %v6020 = vpop.permute.xlu0 %6019
  %6029 = vmatprep.subr.bf16.mxu0 0
  %6030 = vmatpush1.bf16.msra.mxu0 %v6006
  %6031 = vmatprep.subr.bf16.mxu0 0
  %6032 = vmatpush1.bf16.msra.mxu0 %v6008
  %6033 = vmatprep.subr.bf16.mxu0 0
  %6034 = vmatpush1.bf16.msra.mxu0 %v6010
  %6035 = vmatprep.subr.bf16.mxu0 0
  %6036 = vmatpush1.bf16.msra.mxu0 %v6012
  %6037 = vmatprep.subr.bf16.mxu0 0
  %6038 = vmatpush1.bf16.msra.mxu0 %v6014
  %6039 = vmatprep.subr.bf16.mxu0 0
  %6040 = vmatpush1.bf16.msra.mxu0 %v6016
  %6041 = vmatprep.subr.bf16.mxu0 0
  %6042 = vmatpush1.bf16.msra.mxu0 %v6018
  %6043 = vmatprep.subr.bf16.mxu0 0
  %6044 = vmatpush1.bf16.msra.mxu0 %v6020
  %6045 = vmatprep.subr.bf16.mxu0 0
  %6046 = vmatpush1.bf16.msra.mxu0 0
  %6047 = vmatprep.subr.bf16.mxu0 0
  %6048 = vmatpush1.bf16.msra.mxu0 0
  %6049 = vmatprep.subr.bf16.mxu0 0
  %6050 = vmatpush1.bf16.msra.mxu0 0
  %6051 = vmatprep.subr.bf16.mxu0 0
  %6052 = vmatpush1.bf16.msra.mxu0 0
  %6053 = vmatprep.subr.bf16.mxu0 0
  %6054 = vmatpush1.bf16.msra.mxu0 0
  %6055 = vmatprep.subr.bf16.mxu0 0
  %6056 = vmatpush1.bf16.msra.mxu0 0
  %6057 = vmatprep.subr.bf16.mxu0 0
  %6058 = vmatpush1.bf16.msra.mxu0 0
  %6059 = vmatprep.subr.bf16.mxu0 0
  %6060 = vmatpush1.bf16.msra.mxu0 0
  %6061 = vmatprep.mubr.bf16.mxu0 0
  %6062 = vmatmul.mubr.bf16.gmra.mrb[0].mxu0 %v5981
  %v6063 = vpop.f32.mrb[0].mxu0
  %v6064 = vadd.f32 0.0, %v6063
  %v6065 = vpop.f32.mrb[0].mxu0
  %v6066 = vpop.f32.mrb[0].mxu0
  %v6067 = vadd.f32 0.0, %v6066
  %v6068 = vpop.f32.mrb[0].mxu0
  %6069 = vmatprep.mubr.bf16.mxu0 0
  %6070 = vmatmul.mubr.bf16.gmra.mrb[0].mxu0 %v5982
  %v6071 = vpop.f32.mrb[0].mxu0
  %v6072 = vadd.f32 0.0, %v6071
  %v6073 = vpop.f32.mrb[0].mxu0
  %v6074 = vpop.f32.mrb[0].mxu0
  %v6075 = vadd.f32 0.0, %v6074
  %v6076 = vpop.f32.mrb[0].mxu0
  %6077 = vmatprep.mubr.bf16.mxu0 0
  %6078 = vmatmul.mubr.bf16.gmra.mrb[0].mxu0 %v5983
  %v6079 = vpop.f32.mrb[0].mxu0
  %v6080 = vadd.f32 0.0, %v6079
  %v6081 = vpop.f32.mrb[0].mxu0
  %v6082 = vpop.f32.mrb[0].mxu0
  %v6083 = vadd.f32 0.0, %v6082
  %v6084 = vpop.f32.mrb[0].mxu0
  %6085 = vmatprep.mubr.bf16.mxu0 0
  %6086 = vmatmul.mubr.bf16.gmra.mrb[0].mxu0 %v5984
  %v6087 = vpop.f32.mrb[0].mxu0
  %v6088 = vadd.f32 0.0, %v6087
  %v6089 = vpop.f32.mrb[0].mxu0
  %v6090 = vpop.f32.mrb[0].mxu0
  %v6091 = vadd.f32 0.0, %v6090
  %v6092 = vpop.f32.mrb[0].mxu0
  %6093 = vmatprep.mubr.bf16.mxu0 0
  %6094 = vmatmul.mubr.bf16.gmra.mrb[0].mxu0 %v5985
  %v6095 = vpop.f32.mrb[0].mxu0
  %v6096 = vadd.f32 0.0, %v6095
  %v6097 = vpop.f32.mrb[0].mxu0
  %v6098 = vpop.f32.mrb[0].mxu0
  %v6099 = vadd.f32 0.0, %v6098
  %v6100 = vpop.f32.mrb[0].mxu0
  %6101 = vmatprep.mubr.bf16.mxu0 0
  %6102 = vmatmul.mubr.bf16.gmra.mrb[0].mxu0 %v5986
  %v6103 = vpop.f32.mrb[0].mxu0
  %v6104 = vadd.f32 0.0, %v6103
  %v6105 = vpop.f32.mrb[0].mxu0
  %v6106 = vpop.f32.mrb[0].mxu0
  %v6107 = vadd.f32 0.0, %v6106
  %v6108 = vpop.f32.mrb[0].mxu0
  %6109 = vmatprep.mubr.bf16.mxu0 0
  %6110 = vmatmul.mubr.bf16.gmra.mrb[0].mxu0 %v5987
  %v6111 = vpop.f32.mrb[0].mxu0
  %v6112 = vadd.f32 0.0, %v6111
  %v6113 = vpop.f32.mrb[0].mxu0
  %v6114 = vpop.f32.mrb[0].mxu0
  %v6115 = vadd.f32 0.0, %v6114
  %v6116 = vpop.f32.mrb[0].mxu0
  %6117 = vmatprep.mubr.bf16.mxu0 0
  %6118 = vmatmul.mubr.bf16.gmra.mrb[0].mxu0 %v5988
  %v6119 = vpop.f32.mrb[0].mxu0
  %v6120 = vadd.f32 0.0, %v6119
  %v6121 = vpop.f32.mrb[0].mxu0
  %v6122 = vpop.f32.mrb[0].mxu0
  %v6123 = vadd.f32 0.0, %v6122
  %v6124 = vpop.f32.mrb[0].mxu0
  %6125 = vdwg.mxu0
  %v6126 = vadd.f32 %v5916, %v6064
  %v6127 = vadd.f32 %v5917, %v6067
  %v6128 = vadd.f32 %v5918, %v6072
  %v6129 = vadd.f32 %v5919, %v6075
  %v6130 = vadd.f32 %v5920, %v6080
  %v6131 = vadd.f32 %v5921, %v6083
  %v6132 = vadd.f32 %v5922, %v6088
  %v6133 = vadd.f32 %v5923, %v6091
  %v6134 = vadd.f32 %v5924, %v6096
  %v6135 = vadd.f32 %v5925, %v6099
  %v6136 = vadd.f32 %v5926, %v6104
  %v6137 = vadd.f32 %v5927, %v6107
  %v6138 = vadd.f32 %v5928, %v6112
  %v6139 = vadd.f32 %v5929, %v6115
  %v6140 = vadd.f32 %v5930, %v6120
  %v6141 = vadd.f32 %v5931, %v6123
  %s6142 = scalar_lea.vmem %s4, 256
  %v6143 = vld [vmem:[%s6142] sm:$0xf]
  %v6144 = vld [vmem:[%s6142 + $0x4] sm:$0xf]
  %v6145 = vld [vmem:[%s6142 + $0x8] sm:$0xf]
  %v6146 = vld [vmem:[%s6142 + $0xc] sm:$0xf]
  %v6147 = vld [vmem:[%s6142 + $0x10] sm:$0xf]
  %v6148 = vld [vmem:[%s6142 + $0x14] sm:$0xf]
  %v6149 = vld [vmem:[%s6142 + $0x18] sm:$0xf]
  %v6150 = vld [vmem:[%s6142 + $0x1c] sm:$0xf]
  %v6151 = vld [vmem:[%s6142 + $0x20] sm:$0xf]
  %v6152 = vld [vmem:[%s6142 + $0x24] sm:$0xf]
  %v6153 = vld [vmem:[%s6142 + $0x28] sm:$0xf]
  %v6154 = vld [vmem:[%s6142 + $0x2c] sm:$0xf]
  %v6155 = vld [vmem:[%s6142 + $0x30] sm:$0xf]
  %v6156 = vld [vmem:[%s6142 + $0x34] sm:$0xf]
  %v6157 = vld [vmem:[%s6142 + $0x38] sm:$0xf]
  %v6158 = vld [vmem:[%s6142 + $0x3c] sm:$0xf]
  %v6175 = vunpack.c.l.b16 %v6143
  %v6176 = vunpack.c.l.b16 %v6144
  %v6177 = vunpack.c.l.b16 %v6145
  %v6178 = vunpack.c.l.b16 %v6146
  %v6179 = vunpack.c.l.b16 %v6147
  %v6180 = vunpack.c.l.b16 %v6148
  %v6181 = vunpack.c.l.b16 %v6149
  %v6182 = vunpack.c.l.b16 %v6150
  %v6183 = vunpack.c.l.b16 %v6151
  %v6184 = vunpack.c.l.b16 %v6152
  %v6185 = vunpack.c.l.b16 %v6153
  %v6186 = vunpack.c.l.b16 %v6154
  %v6187 = vunpack.c.l.b16 %v6155
  %v6188 = vunpack.c.l.b16 %v6156
  %v6189 = vunpack.c.l.b16 %v6157
  %v6190 = vunpack.c.l.b16 %v6158
  %v6191 = vpack.c.b16 %v6176, %v6175
  %v6192 = vpack.c.b16 %v6178, %v6177
  %v6193 = vpack.c.b16 %v6180, %v6179
  %v6194 = vpack.c.b16 %v6182, %v6181
  %v6195 = vpack.c.b16 %v6184, %v6183
  %v6196 = vpack.c.b16 %v6186, %v6185
  %v6197 = vpack.c.b16 %v6188, %v6187
  %v6198 = vpack.c.b16 %v6190, %v6189
  %6207 = vmatprep.subr.bf16.mxu0 0
  %6208 = vmatpush1.bf16.msra.mxu0 %v5361
  %6209 = vmatprep.subr.bf16.mxu0 0
  %6210 = vmatpush1.bf16.msra.mxu0 %v5366
  %6211 = vmatprep.subr.bf16.mxu0 0
  %6212 = vmatpush1.bf16.msra.mxu0 %v5371
  %6213 = vmatprep.subr.bf16.mxu0 0
  %6214 = vmatpush1.bf16.msra.mxu0 %v5376
  %6215 = vmatprep.subr.bf16.mxu0 0
  %6216 = vmatpush1.bf16.msra.mxu0 %v5381
  %6217 = vmatprep.subr.bf16.mxu0 0
  %6218 = vmatpush1.bf16.msra.mxu0 %v5386
  %6219 = vmatprep.subr.bf16.mxu0 0
  %6220 = vmatpush1.bf16.msra.mxu0 %v5391
  %6221 = vmatprep.subr.bf16.mxu0 0
  %6222 = vmatpush1.bf16.msra.mxu0 %v5396
  %6223 = vmatprep.subr.bf16.mxu0 0
  %6224 = vmatpush1.bf16.msra.mxu0 0
  %6225 = vmatprep.subr.bf16.mxu0 0
  %6226 = vmatpush1.bf16.msra.mxu0 0
  %6227 = vmatprep.subr.bf16.mxu0 0
  %6228 = vmatpush1.bf16.msra.mxu0 0
  %6229 = vmatprep.subr.bf16.mxu0 0
  %6230 = vmatpush1.bf16.msra.mxu0 0
  %6231 = vmatprep.subr.bf16.mxu0 0
  %6232 = vmatpush1.bf16.msra.mxu0 0
  %6233 = vmatprep.subr.bf16.mxu0 0
  %6234 = vmatpush1.bf16.msra.mxu0 0
  %6235 = vmatprep.subr.bf16.mxu0 0
  %6236 = vmatpush1.bf16.msra.mxu0 0
  %6237 = vmatprep.subr.bf16.mxu0 0
  %6238 = vmatpush1.bf16.msra.mxu0 0
  %6239 = vmatprep.mubr.bf16.mxu0 0
  %6240 = vmatmul.mubr.bf16.gmra.mrb[0].mxu0 %v6191
  %v6241 = vpop.f32.mrb[0].mxu0
  %v6242 = vadd.f32 0.0, %v6241
  %v6243 = vpop.f32.mrb[0].mxu0
  %v6244 = vpop.f32.mrb[0].mxu0
  %v6245 = vadd.f32 0.0, %v6244
  %v6246 = vpop.f32.mrb[0].mxu0
  %6247 = vmatprep.mubr.bf16.mxu0 0
  %6248 = vmatmul.mubr.bf16.gmra.mrb[0].mxu0 %v6192
  %v6249 = vpop.f32.mrb[0].mxu0
  %v6250 = vadd.f32 0.0, %v6249
  %v6251 = vpop.f32.mrb[0].mxu0
  %v6252 = vpop.f32.mrb[0].mxu0
  %v6253 = vadd.f32 0.0, %v6252
  %v6254 = vpop.f32.mrb[0].mxu0
  %6255 = vmatprep.mubr.bf16.mxu0 0
  %6256 = vmatmul.mubr.bf16.gmra.mrb[0].mxu0 %v6193
  %v6257 = vpop.f32.mrb[0].mxu0
  %v6258 = vadd.f32 0.0, %v6257
  %v6259 = vpop.f32.mrb[0].mxu0
  %v6260 = vpop.f32.mrb[0].mxu0
  %v6261 = vadd.f32 0.0, %v6260
  %v6262 = vpop.f32.mrb[0].mxu0
  %6263 = vmatprep.mubr.bf16.mxu0 0
  %6264 = vmatmul.mubr.bf16.gmra.mrb[0].mxu0 %v6194
  %v6265 = vpop.f32.mrb[0].mxu0
  %v6266 = vadd.f32 0.0, %v6265
  %v6267 = vpop.f32.mrb[0].mxu0
  %v6268 = vpop.f32.mrb[0].mxu0
  %v6269 = vadd.f32 0.0, %v6268
  %v6270 = vpop.f32.mrb[0].mxu0
  %6271 = vmatprep.mubr.bf16.mxu0 0
  %6272 = vmatmul.mubr.bf16.gmra.mrb[0].mxu0 %v6195
  %v6273 = vpop.f32.mrb[0].mxu0
  %v6274 = vadd.f32 0.0, %v6273
  %v6275 = vpop.f32.mrb[0].mxu0
  %v6276 = vpop.f32.mrb[0].mxu0
  %v6277 = vadd.f32 0.0, %v6276
  %v6278 = vpop.f32.mrb[0].mxu0
  %6279 = vmatprep.mubr.bf16.mxu0 0
  %6280 = vmatmul.mubr.bf16.gmra.mrb[0].mxu0 %v6196
  %v6281 = vpop.f32.mrb[0].mxu0
  %v6282 = vadd.f32 0.0, %v6281
  %v6283 = vpop.f32.mrb[0].mxu0
  %v6284 = vpop.f32.mrb[0].mxu0
  %v6285 = vadd.f32 0.0, %v6284
  %v6286 = vpop.f32.mrb[0].mxu0
  %6287 = vmatprep.mubr.bf16.mxu0 0
  %6288 = vmatmul.mubr.bf16.gmra.mrb[0].mxu0 %v6197
  %v6289 = vpop.f32.mrb[0].mxu0
  %v6290 = vadd.f32 0.0, %v6289
  %v6291 = vpop.f32.mrb[0].mxu0
  %v6292 = vpop.f32.mrb[0].mxu0
  %v6293 = vadd.f32 0.0, %v6292
  %v6294 = vpop.f32.mrb[0].mxu0
  %6295 = vmatprep.mubr.bf16.mxu0 0
  %6296 = vmatmul.mubr.bf16.gmra.mrb[0].mxu0 %v6198
  %v6297 = vpop.f32.mrb[0].mxu0
  %v6298 = vadd.f32 0.0, %v6297
  %v6299 = vpop.f32.mrb[0].mxu0
  %v6300 = vpop.f32.mrb[0].mxu0
  %v6301 = vadd.f32 0.0, %v6300
  %v6302 = vpop.f32.mrb[0].mxu0
  %6303 = vdwg.mxu0
  %v6304 = vadd.f32 %v6126, %v6242
  %v6305 = vadd.f32 %v6127, %v6245
  %v6306 = vadd.f32 %v6128, %v6250
  %v6307 = vadd.f32 %v6129, %v6253
  %v6308 = vadd.f32 %v6130, %v6258
  %v6309 = vadd.f32 %v6131, %v6261
  %v6310 = vadd.f32 %v6132, %v6266
  %v6311 = vadd.f32 %v6133, %v6269
  %v6312 = vadd.f32 %v6134, %v6274
  %v6313 = vadd.f32 %v6135, %v6277
  %v6314 = vadd.f32 %v6136, %v6282
  %v6315 = vadd.f32 %v6137, %v6285
  %v6316 = vadd.f32 %v6138, %v6290
  %v6317 = vadd.f32 %v6139, %v6293
  %v6318 = vadd.f32 %v6140, %v6298
  %v6319 = vadd.f32 %v6141, %v6301
  %s6320 = scalar_lea.vmem %s4, 320
  %v6321 = vld [vmem:[%s6320] sm:$0xf]
  %v6322 = vld [vmem:[%s6320 + $0x4] sm:$0xf]
  %v6323 = vld [vmem:[%s6320 + $0x8] sm:$0xf]
  %v6324 = vld [vmem:[%s6320 + $0xc] sm:$0xf]
  %v6325 = vld [vmem:[%s6320 + $0x10] sm:$0xf]
  %v6326 = vld [vmem:[%s6320 + $0x14] sm:$0xf]
  %v6327 = vld [vmem:[%s6320 + $0x18] sm:$0xf]
  %v6328 = vld [vmem:[%s6320 + $0x1c] sm:$0xf]
  %v6329 = vld [vmem:[%s6320 + $0x20] sm:$0xf]
  %v6330 = vld [vmem:[%s6320 + $0x24] sm:$0xf]
  %v6331 = vld [vmem:[%s6320 + $0x28] sm:$0xf]
  %v6332 = vld [vmem:[%s6320 + $0x2c] sm:$0xf]
  %v6333 = vld [vmem:[%s6320 + $0x30] sm:$0xf]
  %v6334 = vld [vmem:[%s6320 + $0x34] sm:$0xf]
  %v6335 = vld [vmem:[%s6320 + $0x38] sm:$0xf]
  %v6336 = vld [vmem:[%s6320 + $0x3c] sm:$0xf]
  %v6353 = vunpack.c.l.b16 %v6321
  %v6354 = vunpack.c.l.b16 %v6322
  %v6355 = vunpack.c.l.b16 %v6323
  %v6356 = vunpack.c.l.b16 %v6324
  %v6357 = vunpack.c.l.b16 %v6325
  %v6358 = vunpack.c.l.b16 %v6326
  %v6359 = vunpack.c.l.b16 %v6327
  %v6360 = vunpack.c.l.b16 %v6328
  %v6361 = vunpack.c.l.b16 %v6329
  %v6362 = vunpack.c.l.b16 %v6330
  %v6363 = vunpack.c.l.b16 %v6331
  %v6364 = vunpack.c.l.b16 %v6332
  %v6365 = vunpack.c.l.b16 %v6333
  %v6366 = vunpack.c.l.b16 %v6334
  %v6367 = vunpack.c.l.b16 %v6335
  %v6368 = vunpack.c.l.b16 %v6336
  %v6369 = vpack.c.b16 %v6354, %v6353
  %v6370 = vpack.c.b16 %v6356, %v6355
  %v6371 = vpack.c.b16 %v6358, %v6357
  %v6372 = vpack.c.b16 %v6360, %v6359
  %v6373 = vpack.c.b16 %v6362, %v6361
  %v6374 = vpack.c.b16 %v6364, %v6363
  %v6375 = vpack.c.b16 %v6366, %v6365
  %v6376 = vpack.c.b16 %v6368, %v6367
  %6393 = vrot.lane.b32.xlu0 %v5361, 64
  %v6394 = vpop.permute.xlu0 %6393
  %6395 = vrot.lane.b32.xlu0 %v5366, 64
  %v6396 = vpop.permute.xlu0 %6395
  %6397 = vrot.lane.b32.xlu0 %v5371, 64
  %v6398 = vpop.permute.xlu0 %6397
  %6399 = vrot.lane.b32.xlu0 %v5376, 64
  %v6400 = vpop.permute.xlu0 %6399
  %6401 = vrot.lane.b32.xlu0 %v5381, 64
  %v6402 = vpop.permute.xlu0 %6401
  %6403 = vrot.lane.b32.xlu0 %v5386, 64
  %v6404 = vpop.permute.xlu0 %6403
  %6405 = vrot.lane.b32.xlu0 %v5391, 64
  %v6406 = vpop.permute.xlu0 %6405
  %6407 = vrot.lane.b32.xlu0 %v5396, 64
  %v6408 = vpop.permute.xlu0 %6407
  %6417 = vmatprep.subr.bf16.mxu0 0
  %6418 = vmatpush1.bf16.msra.mxu0 %v6394
  %6419 = vmatprep.subr.bf16.mxu0 0
  %6420 = vmatpush1.bf16.msra.mxu0 %v6396
  %6421 = vmatprep.subr.bf16.mxu0 0
  %6422 = vmatpush1.bf16.msra.mxu0 %v6398
  %6423 = vmatprep.subr.bf16.mxu0 0
  %6424 = vmatpush1.bf16.msra.mxu0 %v6400
  %6425 = vmatprep.subr.bf16.mxu0 0
  %6426 = vmatpush1.bf16.msra.mxu0 %v6402
  %6427 = vmatprep.subr.bf16.mxu0 0
  %6428 = vmatpush1.bf16.msra.mxu0 %v6404
  %6429 = vmatprep.subr.bf16.mxu0 0
  %6430 = vmatpush1.bf16.msra.mxu0 %v6406
  %6431 = vmatprep.subr.bf16.mxu0 0
  %6432 = vmatpush1.bf16.msra.mxu0 %v6408
  %6433 = vmatprep.subr.bf16.mxu0 0
  %6434 = vmatpush1.bf16.msra.mxu0 0
  %6435 = vmatprep.subr.bf16.mxu0 0
  %6436 = vmatpush1.bf16.msra.mxu0 0
  %6437 = vmatprep.subr.bf16.mxu0 0
  %6438 = vmatpush1.bf16.msra.mxu0 0
  %6439 = vmatprep.subr.bf16.mxu0 0
  %6440 = vmatpush1.bf16.msra.mxu0 0
  %6441 = vmatprep.subr.bf16.mxu0 0
  %6442 = vmatpush1.bf16.msra.mxu0 0
  %6443 = vmatprep.subr.bf16.mxu0 0
  %6444 = vmatpush1.bf16.msra.mxu0 0
  %6445 = vmatprep.subr.bf16.mxu0 0
  %6446 = vmatpush1.bf16.msra.mxu0 0
  %6447 = vmatprep.subr.bf16.mxu0 0
  %6448 = vmatpush1.bf16.msra.mxu0 0
  %6449 = vmatprep.mubr.bf16.mxu0 0
  %6450 = vmatmul.mubr.bf16.gmra.mrb[0].mxu0 %v6369
  %v6451 = vpop.f32.mrb[0].mxu0
  %v6452 = vadd.f32 0.0, %v6451
  %v6453 = vpop.f32.mrb[0].mxu0
  %v6454 = vpop.f32.mrb[0].mxu0
  %v6455 = vadd.f32 0.0, %v6454
  %v6456 = vpop.f32.mrb[0].mxu0
  %6457 = vmatprep.mubr.bf16.mxu0 0
  %6458 = vmatmul.mubr.bf16.gmra.mrb[0].mxu0 %v6370
  %v6459 = vpop.f32.mrb[0].mxu0
  %v6460 = vadd.f32 0.0, %v6459
  %v6461 = vpop.f32.mrb[0].mxu0
  %v6462 = vpop.f32.mrb[0].mxu0
  %v6463 = vadd.f32 0.0, %v6462
  %v6464 = vpop.f32.mrb[0].mxu0
  %6465 = vmatprep.mubr.bf16.mxu0 0
  %6466 = vmatmul.mubr.bf16.gmra.mrb[0].mxu0 %v6371
  %v6467 = vpop.f32.mrb[0].mxu0
  %v6468 = vadd.f32 0.0, %v6467
  %v6469 = vpop.f32.mrb[0].mxu0
  %v6470 = vpop.f32.mrb[0].mxu0
  %v6471 = vadd.f32 0.0, %v6470
  %v6472 = vpop.f32.mrb[0].mxu0
  %6473 = vmatprep.mubr.bf16.mxu0 0
  %6474 = vmatmul.mubr.bf16.gmra.mrb[0].mxu0 %v6372
  %v6475 = vpop.f32.mrb[0].mxu0
  %v6476 = vadd.f32 0.0, %v6475
  %v6477 = vpop.f32.mrb[0].mxu0
  %v6478 = vpop.f32.mrb[0].mxu0
  %v6479 = vadd.f32 0.0, %v6478
  %v6480 = vpop.f32.mrb[0].mxu0
  %6481 = vmatprep.mubr.bf16.mxu0 0
  %6482 = vmatmul.mubr.bf16.gmra.mrb[0].mxu0 %v6373
  %v6483 = vpop.f32.mrb[0].mxu0
  %v6484 = vadd.f32 0.0, %v6483
  %v6485 = vpop.f32.mrb[0].mxu0
  %v6486 = vpop.f32.mrb[0].mxu0
  %v6487 = vadd.f32 0.0, %v6486
  %v6488 = vpop.f32.mrb[0].mxu0
  %6489 = vmatprep.mubr.bf16.mxu0 0
  %6490 = vmatmul.mubr.bf16.gmra.mrb[0].mxu0 %v6374
  %v6491 = vpop.f32.mrb[0].mxu0
  %v6492 = vadd.f32 0.0, %v6491
  %v6493 = vpop.f32.mrb[0].mxu0
  %v6494 = vpop.f32.mrb[0].mxu0
  %v6495 = vadd.f32 0.0, %v6494
  %v6496 = vpop.f32.mrb[0].mxu0
  %6497 = vmatprep.mubr.bf16.mxu0 0
  %6498 = vmatmul.mubr.bf16.gmra.mrb[0].mxu0 %v6375
  %v6499 = vpop.f32.mrb[0].mxu0
  %v6500 = vadd.f32 0.0, %v6499
  %v6501 = vpop.f32.mrb[0].mxu0
  %v6502 = vpop.f32.mrb[0].mxu0
  %v6503 = vadd.f32 0.0, %v6502
  %v6504 = vpop.f32.mrb[0].mxu0
  %6505 = vmatprep.mubr.bf16.mxu0 0
  %6506 = vmatmul.mubr.bf16.gmra.mrb[0].mxu0 %v6376
  %v6507 = vpop.f32.mrb[0].mxu0
  %v6508 = vadd.f32 0.0, %v6507
  %v6509 = vpop.f32.mrb[0].mxu0
  %v6510 = vpop.f32.mrb[0].mxu0
  %v6511 = vadd.f32 0.0, %v6510
  %v6512 = vpop.f32.mrb[0].mxu0
  %6513 = vdwg.mxu0
  %v6514 = vadd.f32 %v6304, %v6452
  %v6515 = vadd.f32 %v6305, %v6455
  %v6516 = vadd.f32 %v6306, %v6460
  %v6517 = vadd.f32 %v6307, %v6463
  %v6518 = vadd.f32 %v6308, %v6468
  %v6519 = vadd.f32 %v6309, %v6471
  %v6520 = vadd.f32 %v6310, %v6476
  %v6521 = vadd.f32 %v6311, %v6479
  %v6522 = vadd.f32 %v6312, %v6484
  %v6523 = vadd.f32 %v6313, %v6487
  %v6524 = vadd.f32 %v6314, %v6492
  %v6525 = vadd.f32 %v6315, %v6495
  %v6526 = vadd.f32 %v6316, %v6500
  %v6527 = vadd.f32 %v6317, %v6503
  %v6528 = vadd.f32 %v6318, %v6508
  %v6529 = vadd.f32 %v6319, %v6511
  %s6530 = scalar_lea.vmem %s4, 384
  %v6531 = vld [vmem:[%s6530] sm:$0xf]
  %v6532 = vld [vmem:[%s6530 + $0x4] sm:$0xf]
  %v6533 = vld [vmem:[%s6530 + $0x8] sm:$0xf]
  %v6534 = vld [vmem:[%s6530 + $0xc] sm:$0xf]
  %v6535 = vld [vmem:[%s6530 + $0x10] sm:$0xf]
  %v6536 = vld [vmem:[%s6530 + $0x14] sm:$0xf]
  %v6537 = vld [vmem:[%s6530 + $0x18] sm:$0xf]
  %v6538 = vld [vmem:[%s6530 + $0x1c] sm:$0xf]
  %v6539 = vld [vmem:[%s6530 + $0x20] sm:$0xf]
  %v6540 = vld [vmem:[%s6530 + $0x24] sm:$0xf]
  %v6541 = vld [vmem:[%s6530 + $0x28] sm:$0xf]
  %v6542 = vld [vmem:[%s6530 + $0x2c] sm:$0xf]
  %v6543 = vld [vmem:[%s6530 + $0x30] sm:$0xf]
  %v6544 = vld [vmem:[%s6530 + $0x34] sm:$0xf]
  %v6545 = vld [vmem:[%s6530 + $0x38] sm:$0xf]
  %v6546 = vld [vmem:[%s6530 + $0x3c] sm:$0xf]
  %v6563 = vunpack.c.l.b16 %v6531
  %v6564 = vunpack.c.l.b16 %v6532
  %v6565 = vunpack.c.l.b16 %v6533
  %v6566 = vunpack.c.l.b16 %v6534
  %v6567 = vunpack.c.l.b16 %v6535
  %v6568 = vunpack.c.l.b16 %v6536
  %v6569 = vunpack.c.l.b16 %v6537
  %v6570 = vunpack.c.l.b16 %v6538
  %v6571 = vunpack.c.l.b16 %v6539
  %v6572 = vunpack.c.l.b16 %v6540
  %v6573 = vunpack.c.l.b16 %v6541
  %v6574 = vunpack.c.l.b16 %v6542
  %v6575 = vunpack.c.l.b16 %v6543
  %v6576 = vunpack.c.l.b16 %v6544
  %v6577 = vunpack.c.l.b16 %v6545
  %v6578 = vunpack.c.l.b16 %v6546
  %v6579 = vpack.c.b16 %v6564, %v6563
  %v6580 = vpack.c.b16 %v6566, %v6565
  %v6581 = vpack.c.b16 %v6568, %v6567
  %v6582 = vpack.c.b16 %v6570, %v6569
  %v6583 = vpack.c.b16 %v6572, %v6571
  %v6584 = vpack.c.b16 %v6574, %v6573
  %v6585 = vpack.c.b16 %v6576, %v6575
  %v6586 = vpack.c.b16 %v6578, %v6577
  %6595 = vmatprep.subr.bf16.mxu0 0
  %6596 = vmatpush1.bf16.msra.mxu0 %v5362
  %6597 = vmatprep.subr.bf16.mxu0 0
  %6598 = vmatpush1.bf16.msra.mxu0 %v5367
  %6599 = vmatprep.subr.bf16.mxu0 0
  %6600 = vmatpush1.bf16.msra.mxu0 %v5372
  %6601 = vmatprep.subr.bf16.mxu0 0
  %6602 = vmatpush1.bf16.msra.mxu0 %v5377
  %6603 = vmatprep.subr.bf16.mxu0 0
  %6604 = vmatpush1.bf16.msra.mxu0 %v5382
  %6605 = vmatprep.subr.bf16.mxu0 0
  %6606 = vmatpush1.bf16.msra.mxu0 %v5387
  %6607 = vmatprep.subr.bf16.mxu0 0
  %6608 = vmatpush1.bf16.msra.mxu0 %v5392
  %6609 = vmatprep.subr.bf16.mxu0 0
  %6610 = vmatpush1.bf16.msra.mxu0 %v5397
  %6611 = vmatprep.subr.bf16.mxu0 0
  %6612 = vmatpush1.bf16.msra.mxu0 0
  %6613 = vmatprep.subr.bf16.mxu0 0
  %6614 = vmatpush1.bf16.msra.mxu0 0
  %6615 = vmatprep.subr.bf16.mxu0 0
  %6616 = vmatpush1.bf16.msra.mxu0 0
  %6617 = vmatprep.subr.bf16.mxu0 0
  %6618 = vmatpush1.bf16.msra.mxu0 0
  %6619 = vmatprep.subr.bf16.mxu0 0
  %6620 = vmatpush1.bf16.msra.mxu0 0
  %6621 = vmatprep.subr.bf16.mxu0 0
  %6622 = vmatpush1.bf16.msra.mxu0 0
  %6623 = vmatprep.subr.bf16.mxu0 0
  %6624 = vmatpush1.bf16.msra.mxu0 0
  %6625 = vmatprep.subr.bf16.mxu0 0
  %6626 = vmatpush1.bf16.msra.mxu0 0
  %6627 = vmatprep.mubr.bf16.mxu0 0
  %6628 = vmatmul.mubr.bf16.gmra.mrb[0].mxu0 %v6579
  %v6629 = vpop.f32.mrb[0].mxu0
  %v6630 = vadd.f32 0.0, %v6629
  %v6631 = vpop.f32.mrb[0].mxu0
  %v6632 = vpop.f32.mrb[0].mxu0
  %v6633 = vadd.f32 0.0, %v6632
  %v6634 = vpop.f32.mrb[0].mxu0
  %6635 = vmatprep.mubr.bf16.mxu0 0
  %6636 = vmatmul.mubr.bf16.gmra.mrb[0].mxu0 %v6580
  %v6637 = vpop.f32.mrb[0].mxu0
  %v6638 = vadd.f32 0.0, %v6637
  %v6639 = vpop.f32.mrb[0].mxu0
  %v6640 = vpop.f32.mrb[0].mxu0
  %v6641 = vadd.f32 0.0, %v6640
  %v6642 = vpop.f32.mrb[0].mxu0
  %6643 = vmatprep.mubr.bf16.mxu0 0
  %6644 = vmatmul.mubr.bf16.gmra.mrb[0].mxu0 %v6581
  %v6645 = vpop.f32.mrb[0].mxu0
  %v6646 = vadd.f32 0.0, %v6645
  %v6647 = vpop.f32.mrb[0].mxu0
  %v6648 = vpop.f32.mrb[0].mxu0
  %v6649 = vadd.f32 0.0, %v6648
  %v6650 = vpop.f32.mrb[0].mxu0
  %6651 = vmatprep.mubr.bf16.mxu0 0
  %6652 = vmatmul.mubr.bf16.gmra.mrb[0].mxu0 %v6582
  %v6653 = vpop.f32.mrb[0].mxu0
  %v6654 = vadd.f32 0.0, %v6653
  %v6655 = vpop.f32.mrb[0].mxu0
  %v6656 = vpop.f32.mrb[0].mxu0
  %v6657 = vadd.f32 0.0, %v6656
  %v6658 = vpop.f32.mrb[0].mxu0
  %6659 = vmatprep.mubr.bf16.mxu0 0
  %6660 = vmatmul.mubr.bf16.gmra.mrb[0].mxu0 %v6583
  %v6661 = vpop.f32.mrb[0].mxu0
  %v6662 = vadd.f32 0.0, %v6661
  %v6663 = vpop.f32.mrb[0].mxu0
  %v6664 = vpop.f32.mrb[0].mxu0
  %v6665 = vadd.f32 0.0, %v6664
  %v6666 = vpop.f32.mrb[0].mxu0
  %6667 = vmatprep.mubr.bf16.mxu0 0
  %6668 = vmatmul.mubr.bf16.gmra.mrb[0].mxu0 %v6584
  %v6669 = vpop.f32.mrb[0].mxu0
  %v6670 = vadd.f32 0.0, %v6669
  %v6671 = vpop.f32.mrb[0].mxu0
  %v6672 = vpop.f32.mrb[0].mxu0
  %v6673 = vadd.f32 0.0, %v6672
  %v6674 = vpop.f32.mrb[0].mxu0
  %6675 = vmatprep.mubr.bf16.mxu0 0
  %6676 = vmatmul.mubr.bf16.gmra.mrb[0].mxu0 %v6585
  %v6677 = vpop.f32.mrb[0].mxu0
  %v6678 = vadd.f32 0.0, %v6677
  %v6679 = vpop.f32.mrb[0].mxu0
  %v6680 = vpop.f32.mrb[0].mxu0
  %v6681 = vadd.f32 0.0, %v6680
  %v6682 = vpop.f32.mrb[0].mxu0
  %6683 = vmatprep.mubr.bf16.mxu0 0
  %6684 = vmatmul.mubr.bf16.gmra.mrb[0].mxu0 %v6586
  %v6685 = vpop.f32.mrb[0].mxu0
  %v6686 = vadd.f32 0.0, %v6685
  %v6687 = vpop.f32.mrb[0].mxu0
  %v6688 = vpop.f32.mrb[0].mxu0
  %v6689 = vadd.f32 0.0, %v6688
  %v6690 = vpop.f32.mrb[0].mxu0
  %6691 = vdwg.mxu0
  %v6692 = vadd.f32 %v6514, %v6630
  %v6693 = vadd.f32 %v6515, %v6633
  %v6694 = vadd.f32 %v6516, %v6638
  %v6695 = vadd.f32 %v6517, %v6641
  %v6696 = vadd.f32 %v6518, %v6646
  %v6697 = vadd.f32 %v6519, %v6649
  %v6698 = vadd.f32 %v6520, %v6654
  %v6699 = vadd.f32 %v6521, %v6657
  %v6700 = vadd.f32 %v6522, %v6662
  %v6701 = vadd.f32 %v6523, %v6665
  %v6702 = vadd.f32 %v6524, %v6670
  %v6703 = vadd.f32 %v6525, %v6673
  %v6704 = vadd.f32 %v6526, %v6678
  %v6705 = vadd.f32 %v6527, %v6681
  %v6706 = vadd.f32 %v6528, %v6686
  %v6707 = vadd.f32 %v6529, %v6689
  %s6708 = scalar_lea.vmem %s4, 448
  %v6709 = vld [vmem:[%s6708] sm:$0xf]
  %v6710 = vld [vmem:[%s6708 + $0x4] sm:$0xf]
  %v6711 = vld [vmem:[%s6708 + $0x8] sm:$0xf]
  %v6712 = vld [vmem:[%s6708 + $0xc] sm:$0xf]
  %v6713 = vld [vmem:[%s6708 + $0x10] sm:$0xf]
  %v6714 = vld [vmem:[%s6708 + $0x14] sm:$0xf]
  %v6715 = vld [vmem:[%s6708 + $0x18] sm:$0xf]
  %v6716 = vld [vmem:[%s6708 + $0x1c] sm:$0xf]
  %v6717 = vld [vmem:[%s6708 + $0x20] sm:$0xf]
  %v6718 = vld [vmem:[%s6708 + $0x24] sm:$0xf]
  %v6719 = vld [vmem:[%s6708 + $0x28] sm:$0xf]
  %v6720 = vld [vmem:[%s6708 + $0x2c] sm:$0xf]
  %v6721 = vld [vmem:[%s6708 + $0x30] sm:$0xf]
  %v6722 = vld [vmem:[%s6708 + $0x34] sm:$0xf]
  %v6723 = vld [vmem:[%s6708 + $0x38] sm:$0xf]
  %v6724 = vld [vmem:[%s6708 + $0x3c] sm:$0xf]
  %v6741 = vunpack.c.l.b16 %v6709
  %v6742 = vunpack.c.l.b16 %v6710
  %v6743 = vunpack.c.l.b16 %v6711
  %v6744 = vunpack.c.l.b16 %v6712
  %v6745 = vunpack.c.l.b16 %v6713
  %v6746 = vunpack.c.l.b16 %v6714
  %v6747 = vunpack.c.l.b16 %v6715
  %v6748 = vunpack.c.l.b16 %v6716
  %v6749 = vunpack.c.l.b16 %v6717
  %v6750 = vunpack.c.l.b16 %v6718
  %v6751 = vunpack.c.l.b16 %v6719
  %v6752 = vunpack.c.l.b16 %v6720
  %v6753 = vunpack.c.l.b16 %v6721
  %v6754 = vunpack.c.l.b16 %v6722
  %v6755 = vunpack.c.l.b16 %v6723
  %v6756 = vunpack.c.l.b16 %v6724
  %v6757 = vpack.c.b16 %v6742, %v6741
  %v6758 = vpack.c.b16 %v6744, %v6743
  %v6759 = vpack.c.b16 %v6746, %v6745
  %v6760 = vpack.c.b16 %v6748, %v6747
  %v6761 = vpack.c.b16 %v6750, %v6749
  %v6762 = vpack.c.b16 %v6752, %v6751
  %v6763 = vpack.c.b16 %v6754, %v6753
  %v6764 = vpack.c.b16 %v6756, %v6755
  %6781 = vrot.lane.b32.xlu0 %v5362, 64
  %v6782 = vpop.permute.xlu0 %6781
  %6783 = vrot.lane.b32.xlu0 %v5367, 64
  %v6784 = vpop.permute.xlu0 %6783
  %6785 = vrot.lane.b32.xlu0 %v5372, 64
  %v6786 = vpop.permute.xlu0 %6785
  %6787 = vrot.lane.b32.xlu0 %v5377, 64
  %v6788 = vpop.permute.xlu0 %6787
  %6789 = vrot.lane.b32.xlu0 %v5382, 64
  %v6790 = vpop.permute.xlu0 %6789
  %6791 = vrot.lane.b32.xlu0 %v5387, 64
  %v6792 = vpop.permute.xlu0 %6791
  %6793 = vrot.lane.b32.xlu0 %v5392, 64
  %v6794 = vpop.permute.xlu0 %6793
  %6795 = vrot.lane.b32.xlu0 %v5397, 64
  %v6796 = vpop.permute.xlu0 %6795
  %6805 = vmatprep.subr.bf16.mxu0 0
  %6806 = vmatpush1.bf16.msra.mxu0 %v6782
  %6807 = vmatprep.subr.bf16.mxu0 0
  %6808 = vmatpush1.bf16.msra.mxu0 %v6784
  %6809 = vmatprep.subr.bf16.mxu0 0
  %6810 = vmatpush1.bf16.msra.mxu0 %v6786
  %6811 = vmatprep.subr.bf16.mxu0 0
  %6812 = vmatpush1.bf16.msra.mxu0 %v6788
  %6813 = vmatprep.subr.bf16.mxu0 0
  %6814 = vmatpush1.bf16.msra.mxu0 %v6790
  %6815 = vmatprep.subr.bf16.mxu0 0
  %6816 = vmatpush1.bf16.msra.mxu0 %v6792
  %6817 = vmatprep.subr.bf16.mxu0 0
  %6818 = vmatpush1.bf16.msra.mxu0 %v6794
  %6819 = vmatprep.subr.bf16.mxu0 0
  %6820 = vmatpush1.bf16.msra.mxu0 %v6796
  %6821 = vmatprep.subr.bf16.mxu0 0
  %6822 = vmatpush1.bf16.msra.mxu0 0
  %6823 = vmatprep.subr.bf16.mxu0 0
  %6824 = vmatpush1.bf16.msra.mxu0 0
  %6825 = vmatprep.subr.bf16.mxu0 0
  %6826 = vmatpush1.bf16.msra.mxu0 0
  %6827 = vmatprep.subr.bf16.mxu0 0
  %6828 = vmatpush1.bf16.msra.mxu0 0
  %6829 = vmatprep.subr.bf16.mxu0 0
  %6830 = vmatpush1.bf16.msra.mxu0 0
  %6831 = vmatprep.subr.bf16.mxu0 0
  %6832 = vmatpush1.bf16.msra.mxu0 0
  %6833 = vmatprep.subr.bf16.mxu0 0
  %6834 = vmatpush1.bf16.msra.mxu0 0
  %6835 = vmatprep.subr.bf16.mxu0 0
  %6836 = vmatpush1.bf16.msra.mxu0 0
  %6837 = vmatprep.mubr.bf16.mxu0 0
  %6838 = vmatmul.mubr.bf16.gmra.mrb[0].mxu0 %v6757
  %v6839 = vpop.f32.mrb[0].mxu0
  %v6840 = vadd.f32 0.0, %v6839
  %v6841 = vpop.f32.mrb[0].mxu0
  %v6842 = vpop.f32.mrb[0].mxu0
  %v6843 = vadd.f32 0.0, %v6842
  %v6844 = vpop.f32.mrb[0].mxu0
  %6845 = vmatprep.mubr.bf16.mxu0 0
  %6846 = vmatmul.mubr.bf16.gmra.mrb[0].mxu0 %v6758
  %v6847 = vpop.f32.mrb[0].mxu0
  %v6848 = vadd.f32 0.0, %v6847
  %v6849 = vpop.f32.mrb[0].mxu0
  %v6850 = vpop.f32.mrb[0].mxu0
  %v6851 = vadd.f32 0.0, %v6850
  %v6852 = vpop.f32.mrb[0].mxu0
  %6853 = vmatprep.mubr.bf16.mxu0 0
  %6854 = vmatmul.mubr.bf16.gmra.mrb[0].mxu0 %v6759
  %v6855 = vpop.f32.mrb[0].mxu0
  %v6856 = vadd.f32 0.0, %v6855
  %v6857 = vpop.f32.mrb[0].mxu0
  %v6858 = vpop.f32.mrb[0].mxu0
  %v6859 = vadd.f32 0.0, %v6858
  %v6860 = vpop.f32.mrb[0].mxu0
  %6861 = vmatprep.mubr.bf16.mxu0 0
  %6862 = vmatmul.mubr.bf16.gmra.mrb[0].mxu0 %v6760
  %v6863 = vpop.f32.mrb[0].mxu0
  %v6864 = vadd.f32 0.0, %v6863
  %v6865 = vpop.f32.mrb[0].mxu0
  %v6866 = vpop.f32.mrb[0].mxu0
  %v6867 = vadd.f32 0.0, %v6866
  %v6868 = vpop.f32.mrb[0].mxu0
  %6869 = vmatprep.mubr.bf16.mxu0 0
  %6870 = vmatmul.mubr.bf16.gmra.mrb[0].mxu0 %v6761
  %v6871 = vpop.f32.mrb[0].mxu0
  %v6872 = vadd.f32 0.0, %v6871
  %v6873 = vpop.f32.mrb[0].mxu0
  %v6874 = vpop.f32.mrb[0].mxu0
  %v6875 = vadd.f32 0.0, %v6874
  %v6876 = vpop.f32.mrb[0].mxu0
  %6877 = vmatprep.mubr.bf16.mxu0 0
  %6878 = vmatmul.mubr.bf16.gmra.mrb[0].mxu0 %v6762
  %v6879 = vpop.f32.mrb[0].mxu0
  %v6880 = vadd.f32 0.0, %v6879
  %v6881 = vpop.f32.mrb[0].mxu0
  %v6882 = vpop.f32.mrb[0].mxu0
  %v6883 = vadd.f32 0.0, %v6882
  %v6884 = vpop.f32.mrb[0].mxu0
  %6885 = vmatprep.mubr.bf16.mxu0 0
  %6886 = vmatmul.mubr.bf16.gmra.mrb[0].mxu0 %v6763
  %v6887 = vpop.f32.mrb[0].mxu0
  %v6888 = vadd.f32 0.0, %v6887
  %v6889 = vpop.f32.mrb[0].mxu0
  %v6890 = vpop.f32.mrb[0].mxu0
  %v6891 = vadd.f32 0.0, %v6890
  %v6892 = vpop.f32.mrb[0].mxu0
  %6893 = vmatprep.mubr.bf16.mxu0 0
  %6894 = vmatmul.mubr.bf16.gmra.mrb[0].mxu0 %v6764
  %v6895 = vpop.f32.mrb[0].mxu0
  %v6896 = vadd.f32 0.0, %v6895
  %v6897 = vpop.f32.mrb[0].mxu0
  %v6898 = vpop.f32.mrb[0].mxu0
  %v6899 = vadd.f32 0.0, %v6898
  %v6900 = vpop.f32.mrb[0].mxu0
  %6901 = vdwg.mxu0
  %v6902 = vadd.f32 %v6692, %v6840
  %v6903 = vadd.f32 %v6693, %v6843
  %v6904 = vadd.f32 %v6694, %v6848
  %v6905 = vadd.f32 %v6695, %v6851
  %v6906 = vadd.f32 %v6696, %v6856
  %v6907 = vadd.f32 %v6697, %v6859
  %v6908 = vadd.f32 %v6698, %v6864
  %v6909 = vadd.f32 %v6699, %v6867
  %v6910 = vadd.f32 %v6700, %v6872
  %v6911 = vadd.f32 %v6701, %v6875
  %v6912 = vadd.f32 %v6702, %v6880
  %v6913 = vadd.f32 %v6703, %v6883
  %v6914 = vadd.f32 %v6704, %v6888
  %v6915 = vadd.f32 %v6705, %v6891
  %v6916 = vadd.f32 %v6706, %v6896
  %v6917 = vadd.f32 %v6707, %v6899
  %s6918 = scalar_lea.vmem %s4, 512
  %v6919 = vld [vmem:[%s6918] sm:$0xf]
  %v6920 = vld [vmem:[%s6918 + $0x4] sm:$0xf]
  %v6921 = vld [vmem:[%s6918 + $0x8] sm:$0xf]
  %v6922 = vld [vmem:[%s6918 + $0xc] sm:$0xf]
  %v6923 = vld [vmem:[%s6918 + $0x10] sm:$0xf]
  %v6924 = vld [vmem:[%s6918 + $0x14] sm:$0xf]
  %v6925 = vld [vmem:[%s6918 + $0x18] sm:$0xf]
  %v6926 = vld [vmem:[%s6918 + $0x1c] sm:$0xf]
  %v6927 = vld [vmem:[%s6918 + $0x20] sm:$0xf]
  %v6928 = vld [vmem:[%s6918 + $0x24] sm:$0xf]
  %v6929 = vld [vmem:[%s6918 + $0x28] sm:$0xf]
  %v6930 = vld [vmem:[%s6918 + $0x2c] sm:$0xf]
  %v6931 = vld [vmem:[%s6918 + $0x30] sm:$0xf]
  %v6932 = vld [vmem:[%s6918 + $0x34] sm:$0xf]
  %v6933 = vld [vmem:[%s6918 + $0x38] sm:$0xf]
  %v6934 = vld [vmem:[%s6918 + $0x3c] sm:$0xf]
  %v6951 = vunpack.c.l.b16 %v6919
  %v6952 = vunpack.c.l.b16 %v6920
  %v6953 = vunpack.c.l.b16 %v6921
  %v6954 = vunpack.c.l.b16 %v6922
  %v6955 = vunpack.c.l.b16 %v6923
  %v6956 = vunpack.c.l.b16 %v6924
  %v6957 = vunpack.c.l.b16 %v6925
  %v6958 = vunpack.c.l.b16 %v6926
  %v6959 = vunpack.c.l.b16 %v6927
  %v6960 = vunpack.c.l.b16 %v6928
  %v6961 = vunpack.c.l.b16 %v6929
  %v6962 = vunpack.c.l.b16 %v6930
  %v6963 = vunpack.c.l.b16 %v6931
  %v6964 = vunpack.c.l.b16 %v6932
  %v6965 = vunpack.c.l.b16 %v6933
  %v6966 = vunpack.c.l.b16 %v6934
  %v6967 = vpack.c.b16 %v6952, %v6951
  %v6968 = vpack.c.b16 %v6954, %v6953
  %v6969 = vpack.c.b16 %v6956, %v6955
  %v6970 = vpack.c.b16 %v6958, %v6957
  %v6971 = vpack.c.b16 %v6960, %v6959
  %v6972 = vpack.c.b16 %v6962, %v6961
  %v6973 = vpack.c.b16 %v6964, %v6963
  %v6974 = vpack.c.b16 %v6966, %v6965
  %6983 = vmatprep.subr.bf16.mxu0 0
  %6984 = vmatpush1.bf16.msra.mxu0 %v5363
  %6985 = vmatprep.subr.bf16.mxu0 0
  %6986 = vmatpush1.bf16.msra.mxu0 %v5368
  %6987 = vmatprep.subr.bf16.mxu0 0
  %6988 = vmatpush1.bf16.msra.mxu0 %v5373
  %6989 = vmatprep.subr.bf16.mxu0 0
  %6990 = vmatpush1.bf16.msra.mxu0 %v5378
  %6991 = vmatprep.subr.bf16.mxu0 0
  %6992 = vmatpush1.bf16.msra.mxu0 %v5383
  %6993 = vmatprep.subr.bf16.mxu0 0
  %6994 = vmatpush1.bf16.msra.mxu0 %v5388
  %6995 = vmatprep.subr.bf16.mxu0 0
  %6996 = vmatpush1.bf16.msra.mxu0 %v5393
  %6997 = vmatprep.subr.bf16.mxu0 0
  %6998 = vmatpush1.bf16.msra.mxu0 %v5398
  %6999 = vmatprep.subr.bf16.mxu0 0
  %7000 = vmatpush1.bf16.msra.mxu0 0
  %7001 = vmatprep.subr.bf16.mxu0 0
  %7002 = vmatpush1.bf16.msra.mxu0 0
  %7003 = vmatprep.subr.bf16.mxu0 0
  %7004 = vmatpush1.bf16.msra.mxu0 0
  %7005 = vmatprep.subr.bf16.mxu0 0
  %7006 = vmatpush1.bf16.msra.mxu0 0
  %7007 = vmatprep.subr.bf16.mxu0 0
  %7008 = vmatpush1.bf16.msra.mxu0 0
  %7009 = vmatprep.subr.bf16.mxu0 0
  %7010 = vmatpush1.bf16.msra.mxu0 0
  %7011 = vmatprep.subr.bf16.mxu0 0
  %7012 = vmatpush1.bf16.msra.mxu0 0
  %7013 = vmatprep.subr.bf16.mxu0 0
  %7014 = vmatpush1.bf16.msra.mxu0 0
  %7015 = vmatprep.mubr.bf16.mxu0 0
  %7016 = vmatmul.mubr.bf16.gmra.mrb[0].mxu0 %v6967
  %v7017 = vpop.f32.mrb[0].mxu0
  %v7018 = vadd.f32 0.0, %v7017
  %v7019 = vpop.f32.mrb[0].mxu0
  %v7020 = vpop.f32.mrb[0].mxu0
  %v7021 = vadd.f32 0.0, %v7020
  %v7022 = vpop.f32.mrb[0].mxu0
  %7023 = vmatprep.mubr.bf16.mxu0 0
  %7024 = vmatmul.mubr.bf16.gmra.mrb[0].mxu0 %v6968
  %v7025 = vpop.f32.mrb[0].mxu0
  %v7026 = vadd.f32 0.0, %v7025
  %v7027 = vpop.f32.mrb[0].mxu0
  %v7028 = vpop.f32.mrb[0].mxu0
  %v7029 = vadd.f32 0.0, %v7028
  %v7030 = vpop.f32.mrb[0].mxu0
  %7031 = vmatprep.mubr.bf16.mxu0 0
  %7032 = vmatmul.mubr.bf16.gmra.mrb[0].mxu0 %v6969
  %v7033 = vpop.f32.mrb[0].mxu0
  %v7034 = vadd.f32 0.0, %v7033
  %v7035 = vpop.f32.mrb[0].mxu0
  %v7036 = vpop.f32.mrb[0].mxu0
  %v7037 = vadd.f32 0.0, %v7036
  %v7038 = vpop.f32.mrb[0].mxu0
  %7039 = vmatprep.mubr.bf16.mxu0 0
  %7040 = vmatmul.mubr.bf16.gmra.mrb[0].mxu0 %v6970
  %v7041 = vpop.f32.mrb[0].mxu0
  %v7042 = vadd.f32 0.0, %v7041
  %v7043 = vpop.f32.mrb[0].mxu0
  %v7044 = vpop.f32.mrb[0].mxu0
  %v7045 = vadd.f32 0.0, %v7044
  %v7046 = vpop.f32.mrb[0].mxu0
  %7047 = vmatprep.mubr.bf16.mxu0 0
  %7048 = vmatmul.mubr.bf16.gmra.mrb[0].mxu0 %v6971
  %v7049 = vpop.f32.mrb[0].mxu0
  %v7050 = vadd.f32 0.0, %v7049
  %v7051 = vpop.f32.mrb[0].mxu0
  %v7052 = vpop.f32.mrb[0].mxu0
  %v7053 = vadd.f32 0.0, %v7052
  %v7054 = vpop.f32.mrb[0].mxu0
  %7055 = vmatprep.mubr.bf16.mxu0 0
  %7056 = vmatmul.mubr.bf16.gmra.mrb[0].mxu0 %v6972
  %v7057 = vpop.f32.mrb[0].mxu0
  %v7058 = vadd.f32 0.0, %v7057
  %v7059 = vpop.f32.mrb[0].mxu0
  %v7060 = vpop.f32.mrb[0].mxu0
  %v7061 = vadd.f32 0.0, %v7060
  %v7062 = vpop.f32.mrb[0].mxu0
  %7063 = vmatprep.mubr.bf16.mxu0 0
  %7064 = vmatmul.mubr.bf16.gmra.mrb[0].mxu0 %v6973
  %v7065 = vpop.f32.mrb[0].mxu0
  %v7066 = vadd.f32 0.0, %v7065
  %v7067 = vpop.f32.mrb[0].mxu0
  %v7068 = vpop.f32.mrb[0].mxu0
  %v7069 = vadd.f32 0.0, %v7068
  %v7070 = vpop.f32.mrb[0].mxu0
  %7071 = vmatprep.mubr.bf16.mxu0 0
  %7072 = vmatmul.mubr.bf16.gmra.mrb[0].mxu0 %v6974
  %v7073 = vpop.f32.mrb[0].mxu0
  %v7074 = vadd.f32 0.0, %v7073
  %v7075 = vpop.f32.mrb[0].mxu0
  %v7076 = vpop.f32.mrb[0].mxu0
  %v7077 = vadd.f32 0.0, %v7076
  %v7078 = vpop.f32.mrb[0].mxu0
  %7079 = vdwg.mxu0
  %v7080 = vadd.f32 %v6902, %v7018
  %v7081 = vadd.f32 %v6903, %v7021
  %v7082 = vadd.f32 %v6904, %v7026
  %v7083 = vadd.f32 %v6905, %v7029
  %v7084 = vadd.f32 %v6906, %v7034
  %v7085 = vadd.f32 %v6907, %v7037
  %v7086 = vadd.f32 %v6908, %v7042
  %v7087 = vadd.f32 %v6909, %v7045
  %v7088 = vadd.f32 %v6910, %v7050
  %v7089 = vadd.f32 %v6911, %v7053
  %v7090 = vadd.f32 %v6912, %v7058
  %v7091 = vadd.f32 %v6913, %v7061
  %v7092 = vadd.f32 %v6914, %v7066
  %v7093 = vadd.f32 %v6915, %v7069
  %v7094 = vadd.f32 %v6916, %v7074
  %v7095 = vadd.f32 %v6917, %v7077
  %v7096 = vld [vmem:[%s6] sm:$0x1]
  %v7098 = vlaneseq
  %v7099 = vshrl.u32 %v7098, 7
  %v7100 = vsub.s32 0, %v7099
  %v7101 = vrot.slane %v7096, %v7100
  %v7103 = vmul.f32 %v7080, %v7101
  %v7104 = vmul.f32 %v7081, %v7101
  %v7105 = vmul.f32 %v7082, %v7101
  %v7106 = vmul.f32 %v7083, %v7101
  %v7107 = vmul.f32 %v7084, %v7101
  %v7108 = vmul.f32 %v7085, %v7101
  %v7109 = vmul.f32 %v7086, %v7101
  %v7110 = vmul.f32 %v7087, %v7101
  %v7111 = vmul.f32 %v7088, %v7101
  %v7112 = vmul.f32 %v7089, %v7101
  %v7113 = vmul.f32 %v7090, %v7101
  %v7114 = vmul.f32 %v7091, %v7101
  %v7115 = vmul.f32 %v7092, %v7101
  %v7116 = vmul.f32 %v7093, %v7101
  %v7117 = vmul.f32 %v7094, %v7101
  %v7118 = vmul.f32 %v7095, %v7101
  %v7119 = vld [vmem:[%s7] sm:$0x1]
  %v7121 = vlaneseq
  %v7122 = vshrl.u32 %v7121, 7
  %v7123 = vsub.s32 0, %v7122
  %v7124 = vrot.slane %v7119, %v7123
  %v7126 = vadd.f32 %v7103, %v7124
  %v7127 = vadd.f32 %v7104, %v7124
  %v7128 = vadd.f32 %v7105, %v7124
  %v7129 = vadd.f32 %v7106, %v7124
  %v7130 = vadd.f32 %v7107, %v7124
  %v7131 = vadd.f32 %v7108, %v7124
  %v7132 = vadd.f32 %v7109, %v7124
  %v7133 = vadd.f32 %v7110, %v7124
  %v7134 = vadd.f32 %v7111, %v7124
  %v7135 = vadd.f32 %v7112, %v7124
  %v7136 = vadd.f32 %v7113, %v7124
  %v7137 = vadd.f32 %v7114, %v7124
  %v7138 = vadd.f32 %v7115, %v7124
  %v7139 = vadd.f32 %v7116, %v7124
  %v7140 = vadd.f32 %v7117, %v7124
  %v7141 = vadd.f32 %v7118, %v7124
  %v7142 = vmax.f32 %v7126, 0.0
  %v7143 = vmax.f32 %v7127, 0.0
  %v7144 = vmax.f32 %v7128, 0.0
  %v7145 = vmax.f32 %v7129, 0.0
  %v7146 = vmax.f32 %v7130, 0.0
  %v7147 = vmax.f32 %v7131, 0.0
  %v7148 = vmax.f32 %v7132, 0.0
  %v7149 = vmax.f32 %v7133, 0.0
  %v7150 = vmax.f32 %v7134, 0.0
  %v7151 = vmax.f32 %v7135, 0.0
  %v7152 = vmax.f32 %v7136, 0.0
  %v7153 = vmax.f32 %v7137, 0.0
  %v7154 = vmax.f32 %v7138, 0.0
  %v7155 = vmax.f32 %v7139, 0.0
  %v7156 = vmax.f32 %v7140, 0.0
  %v7157 = vmax.f32 %v7141, 0.0
  %v7158 = vmax.f32 %v7142, %v7146
  %v7159 = vmax.f32 %v7143, %v7147
  %v7160 = vmax.f32 %v7144, %v7148
  %v7161 = vmax.f32 %v7145, %v7149
  %v7162 = vmax.f32 %v7150, %v7154
  %v7163 = vmax.f32 %v7151, %v7155
  %v7164 = vmax.f32 %v7152, %v7156
  %v7165 = vmax.f32 %v7153, %v7157
  %v7166 = vmax.f32 %v7158, %v7162
  %v7167 = vmax.f32 %v7159, %v7163
  %v7168 = vmax.f32 %v7160, %v7164
  %v7169 = vmax.f32 %v7161, %v7165
  %v7170 = vpack.c.bf16 %v7167, %v7166
  %v7171 = vpack.c.bf16 %v7169, %v7168
  %v7172 = vld [vmem:[%s9] sm:$0xff]
  %v7173 = vld [vmem:[%s9 + $0x8] sm:$0xff]
  %v7174 = vld [vmem:[%s9 + $0x10] sm:$0xff]
  %v7175 = vld [vmem:[%s9 + $0x18] sm:$0xff]
  %v7176 = vld [vmem:[%s9 + $0x20] sm:$0xf]
  %v7177 = vld [vmem:[%s9 + $0x24] sm:$0xff]
  %v7178 = vld [vmem:[%s9 + $0x2c] sm:$0xff]
  %v7179 = vld [vmem:[%s9 + $0x34] sm:$0xff]
  %v7180 = vld [vmem:[%s9 + $0x3c] sm:$0xff]
  %v7181 = vld [vmem:[%s9 + $0x44] sm:$0xf]
  %v7182 = vld [vmem:[%s9 + $0x48] sm:$0xff]
  %v7183 = vld [vmem:[%s9 + $0x50] sm:$0xff]
  %v7184 = vld [vmem:[%s9 + $0x58] sm:$0xff]
  %v7185 = vld [vmem:[%s9 + $0x60] sm:$0xff]
  %v7186 = vld [vmem:[%s9 + $0x68] sm:$0xf]
  %v7187 = vld [vmem:[%s9 + $0x6c] sm:$0xff]
  %v7188 = vld [vmem:[%s9 + $0x74] sm:$0xff]
  %v7189 = vld [vmem:[%s9 + $0x7c] sm:$0xff]
  %v7190 = vld [vmem:[%s9 + $0x84] sm:$0xff]
  %v7191 = vld [vmem:[%s9 + $0x8c] sm:$0xf]
  %v7192 = vld [vmem:[%s9 + $0x90] sm:$0xff]
  %v7193 = vld [vmem:[%s9 + $0x98] sm:$0xff]
  %v7194 = vld [vmem:[%s9 + $0xa0] sm:$0xff]
  %v7195 = vld [vmem:[%s9 + $0xa8] sm:$0xff]
  %v7196 = vld [vmem:[%s9 + $0xb0] sm:$0xf]
  %v7197 = vld [vmem:[%s9 + $0xb4] sm:$0xff]
  %v7198 = vld [vmem:[%s9 + $0xbc] sm:$0xff]
  %v7199 = vld [vmem:[%s9 + $0xc4] sm:$0xff]
  %v7200 = vld [vmem:[%s9 + $0xcc] sm:$0xff]
  %v7201 = vld [vmem:[%s9 + $0xd4] sm:$0xf]
  %v7202 = vld [vmem:[%s9 + $0xd8] sm:$0xff]
  %v7203 = vld [vmem:[%s9 + $0xe0] sm:$0xff]
  %v7204 = vld [vmem:[%s9 + $0xe8] sm:$0xff]
  %v7205 = vld [vmem:[%s9 + $0xf0] sm:$0xff]
  %v7206 = vld [vmem:[%s9 + $0xf8] sm:$0xf]
  %v7207 = vld [vmem:[%s9 + $0xfc] sm:$0xff]
  %v7208 = vld [vmem:[%s9 + $0x104] sm:$0xff]
  %v7209 = vld [vmem:[%s9 + $0x10c] sm:$0xff]
  %v7210 = vld [vmem:[%s9 + $0x114] sm:$0xff]
  %v7211 = vld [vmem:[%s9 + $0x11c] sm:$0xf]
  %v7252 = vunpack.c.l.b16 %v7172
  %v7253 = vunpack.c.h.b16 %v7172
  %v7254 = vunpack.c.l.b16 %v7173
  %v7255 = vunpack.c.h.b16 %v7173
  %v7256 = vunpack.c.l.b16 %v7174
  %v7257 = vunpack.c.h.b16 %v7174
  %v7258 = vunpack.c.l.b16 %v7175
  %v7259 = vunpack.c.h.b16 %v7175
  %v7260 = vunpack.c.l.b16 %v7176
  %v7261 = vunpack.c.l.b16 %v7177
  %v7262 = vunpack.c.h.b16 %v7177
  %v7263 = vunpack.c.l.b16 %v7178
  %v7264 = vunpack.c.h.b16 %v7178
  %v7265 = vunpack.c.l.b16 %v7179
  %v7266 = vunpack.c.h.b16 %v7179
  %v7267 = vunpack.c.l.b16 %v7180
  %v7268 = vunpack.c.h.b16 %v7180
  %v7269 = vunpack.c.l.b16 %v7181
  %v7270 = vunpack.c.l.b16 %v7182
  %v7271 = vunpack.c.h.b16 %v7182
  %v7272 = vunpack.c.l.b16 %v7183
  %v7273 = vunpack.c.h.b16 %v7183
  %v7274 = vunpack.c.l.b16 %v7184
  %v7275 = vunpack.c.h.b16 %v7184
  %v7276 = vunpack.c.l.b16 %v7185
  %v7277 = vunpack.c.h.b16 %v7185
  %v7278 = vunpack.c.l.b16 %v7186
  %v7279 = vunpack.c.l.b16 %v7187
  %v7280 = vunpack.c.h.b16 %v7187
  %v7281 = vunpack.c.l.b16 %v7188
  %v7282 = vunpack.c.h.b16 %v7188
  %v7283 = vunpack.c.l.b16 %v7189
  %v7284 = vunpack.c.h.b16 %v7189
  %v7285 = vunpack.c.l.b16 %v7190
  %v7286 = vunpack.c.h.b16 %v7190
  %v7287 = vunpack.c.l.b16 %v7191
  %v7288 = vunpack.c.l.b16 %v7192
  %v7289 = vunpack.c.h.b16 %v7192
  %v7290 = vunpack.c.l.b16 %v7193
  %v7291 = vunpack.c.h.b16 %v7193
  %v7292 = vunpack.c.l.b16 %v7194
  %v7293 = vunpack.c.h.b16 %v7194
  %v7294 = vunpack.c.l.b16 %v7195
  %v7295 = vunpack.c.h.b16 %v7195
  %v7296 = vunpack.c.l.b16 %v7196
  %v7297 = vunpack.c.l.b16 %v7197
  %v7298 = vunpack.c.h.b16 %v7197
  %v7299 = vunpack.c.l.b16 %v7198
  %v7300 = vunpack.c.h.b16 %v7198
  %v7301 = vunpack.c.l.b16 %v7199
  %v7302 = vunpack.c.h.b16 %v7199
  %v7303 = vunpack.c.l.b16 %v7200
  %v7304 = vunpack.c.h.b16 %v7200
  %v7305 = vunpack.c.l.b16 %v7201
  %v7306 = vunpack.c.l.b16 %v7202
  %v7307 = vunpack.c.h.b16 %v7202
  %v7308 = vunpack.c.l.b16 %v7203
  %v7309 = vunpack.c.h.b16 %v7203
  %v7310 = vunpack.c.l.b16 %v7204
  %v7311 = vunpack.c.h.b16 %v7204
  %v7312 = vunpack.c.l.b16 %v7205
  %v7313 = vunpack.c.h.b16 %v7205
  %v7314 = vunpack.c.l.b16 %v7206
  %v7315 = vunpack.c.l.b16 %v7207
  %v7316 = vunpack.c.h.b16 %v7207
  %v7317 = vunpack.c.l.b16 %v7208
  %v7318 = vunpack.c.h.b16 %v7208
  %v7319 = vunpack.c.l.b16 %v7209
  %v7320 = vunpack.c.h.b16 %v7209
  %v7321 = vunpack.c.l.b16 %v7210
  %v7322 = vunpack.c.h.b16 %v7210
  %v7323 = vunpack.c.l.b16 %v7211
  %v7324 = vpack.c.b16 %v7261, %v7252
  %v7325 = vpack.c.b16 %v7262, %v7253
  %v7326 = vpack.c.b16 %v7263, %v7254
  %v7327 = vpack.c.b16 %v7264, %v7255
  %v7328 = vpack.c.b16 %v7265, %v7256
  %v7329 = vpack.c.b16 %v7266, %v7257
  %v7330 = vpack.c.b16 %v7267, %v7258
  %v7331 = vpack.c.b16 %v7268, %v7259
  %v7332 = vpack.c.b16 %v7269, %v7260
  %v7333 = vpack.c.b16 %v7279, %v7270
  %v7334 = vpack.c.b16 %v7280, %v7271
  %v7335 = vpack.c.b16 %v7281, %v7272
  %v7336 = vpack.c.b16 %v7282, %v7273
  %v7337 = vpack.c.b16 %v7283, %v7274
  %v7338 = vpack.c.b16 %v7284, %v7275
  %v7339 = vpack.c.b16 %v7285, %v7276
  %v7340 = vpack.c.b16 %v7286, %v7277
  %v7341 = vpack.c.b16 %v7287, %v7278
  %v7342 = vpack.c.b16 %v7297, %v7288
  %v7343 = vpack.c.b16 %v7298, %v7289
  %v7344 = vpack.c.b16 %v7299, %v7290
  %v7345 = vpack.c.b16 %v7300, %v7291
  %v7346 = vpack.c.b16 %v7301, %v7292
  %v7347 = vpack.c.b16 %v7302, %v7293
  %v7348 = vpack.c.b16 %v7303, %v7294
  %v7349 = vpack.c.b16 %v7304, %v7295
  %v7350 = vpack.c.b16 %v7305, %v7296
  %v7351 = vpack.c.b16 %v7315, %v7306
  %v7352 = vpack.c.b16 %v7316, %v7307
  %v7353 = vpack.c.b16 %v7317, %v7308
  %v7354 = vpack.c.b16 %v7318, %v7309
  %v7355 = vpack.c.b16 %v7319, %v7310
  %v7356 = vpack.c.b16 %v7320, %v7311
  %v7357 = vpack.c.b16 %v7321, %v7312
  %v7358 = vpack.c.b16 %v7322, %v7313
  %v7359 = vpack.c.b16 %v7323, %v7314
  %vm7396 = vcmask 523264
  %v7398 = vsel %vm7396, %v7170, 0
  %v7401 = vsel %vm7396, %v7171, 0
  %7403 = vmatprep.subr.bf16.mxu0 %v7325
  %7404 = vmatpush1.bf16.msra.mxu0 %v7324
  %7405 = vmatprep.subr.bf16.mxu0 %v7334
  %7406 = vmatpush1.bf16.msra.mxu0 %v7333
  %7407 = vmatprep.subr.bf16.mxu0 %v7343
  %7408 = vmatpush1.bf16.msra.mxu0 %v7342
  %7409 = vmatprep.subr.bf16.mxu0 %v7352
  %7410 = vmatpush1.bf16.msra.mxu0 %v7351
  %7411 = vmatprep.subr.bf16.mxu0 0
  %7412 = vmatpush1.bf16.msra.mxu0 0
  %7413 = vmatprep.subr.bf16.mxu0 0
  %7414 = vmatpush1.bf16.msra.mxu0 0
  %7415 = vmatprep.subr.bf16.mxu0 0
  %7416 = vmatpush1.bf16.msra.mxu0 0
  %7417 = vmatprep.subr.bf16.mxu0 0
  %7418 = vmatpush1.bf16.msra.mxu0 0
  %7419 = vmatprep.subr.bf16.mxu0 0
  %7420 = vmatpush1.bf16.msra.mxu0 0
  %7421 = vmatprep.subr.bf16.mxu0 0
  %7422 = vmatpush1.bf16.msra.mxu0 0
  %7423 = vmatprep.subr.bf16.mxu0 0
  %7424 = vmatpush1.bf16.msra.mxu0 0
  %7425 = vmatprep.subr.bf16.mxu0 0
  %7426 = vmatpush1.bf16.msra.mxu0 0
  %7427 = vmatprep.subr.bf16.mxu0 0
  %7428 = vmatpush1.bf16.msra.mxu0 0
  %7429 = vmatprep.subr.bf16.mxu0 0
  %7430 = vmatpush1.bf16.msra.mxu0 0
  %7431 = vmatprep.subr.bf16.mxu0 0
  %7432 = vmatpush1.bf16.msra.mxu0 0
  %7433 = vmatprep.subr.bf16.mxu0 0
  %7434 = vmatpush1.bf16.msra.mxu0 0
  %7435 = vmatprep.mubr.bf16.mxu0 0
  %7436 = vmatmul.mubr.bf16.gmra.mrb[0].mxu0 %v7398
  %v7437 = vpop.f32.mrb[0].mxu0
  %v7438 = vadd.f32 0.0, %v7437
  %v7439 = vpop.f32.mrb[0].mxu0
  %v7440 = vadd.f32 0.0, %v7439
  %v7441 = vpop.f32.mrb[0].mxu0
  %v7442 = vadd.f32 0.0, %v7441
  %v7443 = vpop.f32.mrb[0].mxu0
  %v7444 = vadd.f32 0.0, %v7443
  %7445 = vmatprep.mubr.bf16.mxu0 0
  %7446 = vmatmul.mubr.bf16.gmra.mrb[0].mxu0 %v7401
  %v7447 = vpop.f32.mrb[0].mxu0
  %v7448 = vadd.f32 0.0, %v7447
  %v7449 = vpop.f32.mrb[0].mxu0
  %v7450 = vadd.f32 0.0, %v7449
  %v7451 = vpop.f32.mrb[0].mxu0
  %v7452 = vadd.f32 0.0, %v7451
  %v7453 = vpop.f32.mrb[0].mxu0
  %v7454 = vadd.f32 0.0, %v7453
  %7455 = vdwg.mxu0
  %7456 = vmatprep.subr.bf16.mxu0 %v7327
  %7457 = vmatpush1.bf16.msra.mxu0 %v7326
  %7458 = vmatprep.subr.bf16.mxu0 %v7336
  %7459 = vmatpush1.bf16.msra.mxu0 %v7335
  %7460 = vmatprep.subr.bf16.mxu0 %v7345
  %7461 = vmatpush1.bf16.msra.mxu0 %v7344
  %7462 = vmatprep.subr.bf16.mxu0 %v7354
  %7463 = vmatpush1.bf16.msra.mxu0 %v7353
  %7464 = vmatprep.subr.bf16.mxu0 0
  %7465 = vmatpush1.bf16.msra.mxu0 0
  %7466 = vmatprep.subr.bf16.mxu0 0
  %7467 = vmatpush1.bf16.msra.mxu0 0
  %7468 = vmatprep.subr.bf16.mxu0 0
  %7469 = vmatpush1.bf16.msra.mxu0 0
  %7470 = vmatprep.subr.bf16.mxu0 0
  %7471 = vmatpush1.bf16.msra.mxu0 0
  %7472 = vmatprep.subr.bf16.mxu0 0
  %7473 = vmatpush1.bf16.msra.mxu0 0
  %7474 = vmatprep.subr.bf16.mxu0 0
  %7475 = vmatpush1.bf16.msra.mxu0 0
  %7476 = vmatprep.subr.bf16.mxu0 0
  %7477 = vmatpush1.bf16.msra.mxu0 0
  %7478 = vmatprep.subr.bf16.mxu0 0
  %7479 = vmatpush1.bf16.msra.mxu0 0
  %7480 = vmatprep.subr.bf16.mxu0 0
  %7481 = vmatpush1.bf16.msra.mxu0 0
  %7482 = vmatprep.subr.bf16.mxu0 0
  %7483 = vmatpush1.bf16.msra.mxu0 0
  %7484 = vmatprep.subr.bf16.mxu0 0
  %7485 = vmatpush1.bf16.msra.mxu0 0
  %7486 = vmatprep.subr.bf16.mxu0 0
  %7487 = vmatpush1.bf16.msra.mxu0 0
  %7488 = vmatprep.mubr.bf16.mxu0 0
  %7489 = vmatmul.mubr.bf16.gmra.mrb[0].mxu0 %v7398
  %v7490 = vpop.f32.mrb[0].mxu0
  %v7491 = vadd.f32 0.0, %v7490
  %v7492 = vpop.f32.mrb[0].mxu0
  %v7493 = vadd.f32 0.0, %v7492
  %v7494 = vpop.f32.mrb[0].mxu0
  %v7495 = vadd.f32 0.0, %v7494
  %v7496 = vpop.f32.mrb[0].mxu0
  %v7497 = vadd.f32 0.0, %v7496
  %7498 = vmatprep.mubr.bf16.mxu0 0
  %7499 = vmatmul.mubr.bf16.gmra.mrb[0].mxu0 %v7401
  %v7500 = vpop.f32.mrb[0].mxu0
  %v7501 = vadd.f32 0.0, %v7500
  %v7502 = vpop.f32.mrb[0].mxu0
  %v7503 = vadd.f32 0.0, %v7502
  %v7504 = vpop.f32.mrb[0].mxu0
  %v7505 = vadd.f32 0.0, %v7504
  %v7506 = vpop.f32.mrb[0].mxu0
  %v7507 = vadd.f32 0.0, %v7506
  %7508 = vdwg.mxu0
  %7509 = vmatprep.subr.bf16.mxu0 %v7329
  %7510 = vmatpush1.bf16.msra.mxu0 %v7328
  %7511 = vmatprep.subr.bf16.mxu0 %v7338
  %7512 = vmatpush1.bf16.msra.mxu0 %v7337
  %7513 = vmatprep.subr.bf16.mxu0 %v7347
  %7514 = vmatpush1.bf16.msra.mxu0 %v7346
  %7515 = vmatprep.subr.bf16.mxu0 %v7356
  %7516 = vmatpush1.bf16.msra.mxu0 %v7355
  %7517 = vmatprep.subr.bf16.mxu0 0
  %7518 = vmatpush1.bf16.msra.mxu0 0
  %7519 = vmatprep.subr.bf16.mxu0 0
  %7520 = vmatpush1.bf16.msra.mxu0 0
  %7521 = vmatprep.subr.bf16.mxu0 0
  %7522 = vmatpush1.bf16.msra.mxu0 0
  %7523 = vmatprep.subr.bf16.mxu0 0
  %7524 = vmatpush1.bf16.msra.mxu0 0
  %7525 = vmatprep.subr.bf16.mxu0 0
  %7526 = vmatpush1.bf16.msra.mxu0 0
  %7527 = vmatprep.subr.bf16.mxu0 0
  %7528 = vmatpush1.bf16.msra.mxu0 0
  %7529 = vmatprep.subr.bf16.mxu0 0
  %7530 = vmatpush1.bf16.msra.mxu0 0
  %7531 = vmatprep.subr.bf16.mxu0 0
  %7532 = vmatpush1.bf16.msra.mxu0 0
  %7533 = vmatprep.subr.bf16.mxu0 0
  %7534 = vmatpush1.bf16.msra.mxu0 0
  %7535 = vmatprep.subr.bf16.mxu0 0
  %7536 = vmatpush1.bf16.msra.mxu0 0
  %7537 = vmatprep.subr.bf16.mxu0 0
  %7538 = vmatpush1.bf16.msra.mxu0 0
  %7539 = vmatprep.subr.bf16.mxu0 0
  %7540 = vmatpush1.bf16.msra.mxu0 0
  %7541 = vmatprep.mubr.bf16.mxu0 0
  %7542 = vmatmul.mubr.bf16.gmra.mrb[0].mxu0 %v7398
  %v7543 = vpop.f32.mrb[0].mxu0
  %v7544 = vadd.f32 0.0, %v7543
  %v7545 = vpop.f32.mrb[0].mxu0
  %v7546 = vadd.f32 0.0, %v7545
  %v7547 = vpop.f32.mrb[0].mxu0
  %v7548 = vadd.f32 0.0, %v7547
  %v7549 = vpop.f32.mrb[0].mxu0
  %v7550 = vadd.f32 0.0, %v7549
  %7551 = vmatprep.mubr.bf16.mxu0 0
  %7552 = vmatmul.mubr.bf16.gmra.mrb[0].mxu0 %v7401
  %v7553 = vpop.f32.mrb[0].mxu0
  %v7554 = vadd.f32 0.0, %v7553
  %v7555 = vpop.f32.mrb[0].mxu0
  %v7556 = vadd.f32 0.0, %v7555
  %v7557 = vpop.f32.mrb[0].mxu0
  %v7558 = vadd.f32 0.0, %v7557
  %v7559 = vpop.f32.mrb[0].mxu0
  %v7560 = vadd.f32 0.0, %v7559
  %7561 = vdwg.mxu0
  %7562 = vmatprep.subr.bf16.mxu0 %v7331
  %7563 = vmatpush1.bf16.msra.mxu0 %v7330
  %7564 = vmatprep.subr.bf16.mxu0 %v7340
  %7565 = vmatpush1.bf16.msra.mxu0 %v7339
  %7566 = vmatprep.subr.bf16.mxu0 %v7349
  %7567 = vmatpush1.bf16.msra.mxu0 %v7348
  %7568 = vmatprep.subr.bf16.mxu0 %v7358
  %7569 = vmatpush1.bf16.msra.mxu0 %v7357
  %7570 = vmatprep.subr.bf16.mxu0 0
  %7571 = vmatpush1.bf16.msra.mxu0 0
  %7572 = vmatprep.subr.bf16.mxu0 0
  %7573 = vmatpush1.bf16.msra.mxu0 0
  %7574 = vmatprep.subr.bf16.mxu0 0
  %7575 = vmatpush1.bf16.msra.mxu0 0
  %7576 = vmatprep.subr.bf16.mxu0 0
  %7577 = vmatpush1.bf16.msra.mxu0 0
  %7578 = vmatprep.subr.bf16.mxu0 0
  %7579 = vmatpush1.bf16.msra.mxu0 0
  %7580 = vmatprep.subr.bf16.mxu0 0
  %7581 = vmatpush1.bf16.msra.mxu0 0
  %7582 = vmatprep.subr.bf16.mxu0 0
  %7583 = vmatpush1.bf16.msra.mxu0 0
  %7584 = vmatprep.subr.bf16.mxu0 0
  %7585 = vmatpush1.bf16.msra.mxu0 0
  %7586 = vmatprep.subr.bf16.mxu0 0
  %7587 = vmatpush1.bf16.msra.mxu0 0
  %7588 = vmatprep.subr.bf16.mxu0 0
  %7589 = vmatpush1.bf16.msra.mxu0 0
  %7590 = vmatprep.subr.bf16.mxu0 0
  %7591 = vmatpush1.bf16.msra.mxu0 0
  %7592 = vmatprep.subr.bf16.mxu0 0
  %7593 = vmatpush1.bf16.msra.mxu0 0
  %7594 = vmatprep.mubr.bf16.mxu0 0
  %7595 = vmatmul.mubr.bf16.gmra.mrb[0].mxu0 %v7398
  %v7596 = vpop.f32.mrb[0].mxu0
  %v7597 = vadd.f32 0.0, %v7596
  %v7598 = vpop.f32.mrb[0].mxu0
  %v7599 = vadd.f32 0.0, %v7598
  %v7600 = vpop.f32.mrb[0].mxu0
  %v7601 = vadd.f32 0.0, %v7600
  %v7602 = vpop.f32.mrb[0].mxu0
  %v7603 = vadd.f32 0.0, %v7602
  %7604 = vmatprep.mubr.bf16.mxu0 0
  %7605 = vmatmul.mubr.bf16.gmra.mrb[0].mxu0 %v7401
  %v7606 = vpop.f32.mrb[0].mxu0
  %v7607 = vadd.f32 0.0, %v7606
  %v7608 = vpop.f32.mrb[0].mxu0
  %v7609 = vadd.f32 0.0, %v7608
  %v7610 = vpop.f32.mrb[0].mxu0
  %v7611 = vadd.f32 0.0, %v7610
  %v7612 = vpop.f32.mrb[0].mxu0
  %v7613 = vadd.f32 0.0, %v7612
  %7614 = vdwg.mxu0
  %7615 = vmatprep.subr.bf16.mxu0 0
  %7616 = vmatpush1.bf16.msra.mxu0 %v7332
  %7617 = vmatprep.subr.bf16.mxu0 0
  %7618 = vmatpush1.bf16.msra.mxu0 %v7341
  %7619 = vmatprep.subr.bf16.mxu0 0
  %7620 = vmatpush1.bf16.msra.mxu0 %v7350
  %7621 = vmatprep.subr.bf16.mxu0 0
  %7622 = vmatpush1.bf16.msra.mxu0 %v7359
  %7623 = vmatprep.subr.bf16.mxu0 0
  %7624 = vmatpush1.bf16.msra.mxu0 0
  %7625 = vmatprep.subr.bf16.mxu0 0
  %7626 = vmatpush1.bf16.msra.mxu0 0
  %7627 = vmatprep.subr.bf16.mxu0 0
  %7628 = vmatpush1.bf16.msra.mxu0 0
  %7629 = vmatprep.subr.bf16.mxu0 0
  %7630 = vmatpush1.bf16.msra.mxu0 0
  %7631 = vmatprep.subr.bf16.mxu0 0
  %7632 = vmatpush1.bf16.msra.mxu0 0
  %7633 = vmatprep.subr.bf16.mxu0 0
  %7634 = vmatpush1.bf16.msra.mxu0 0
  %7635 = vmatprep.subr.bf16.mxu0 0
  %7636 = vmatpush1.bf16.msra.mxu0 0
  %7637 = vmatprep.subr.bf16.mxu0 0
  %7638 = vmatpush1.bf16.msra.mxu0 0
  %7639 = vmatprep.subr.bf16.mxu0 0
  %7640 = vmatpush1.bf16.msra.mxu0 0
  %7641 = vmatprep.subr.bf16.mxu0 0
  %7642 = vmatpush1.bf16.msra.mxu0 0
  %7643 = vmatprep.subr.bf16.mxu0 0
  %7644 = vmatpush1.bf16.msra.mxu0 0
  %7645 = vmatprep.subr.bf16.mxu0 0
  %7646 = vmatpush1.bf16.msra.mxu0 0
  %7647 = vmatprep.mubr.bf16.mxu0 0
  %7648 = vmatmul.mubr.bf16.gmra.mrb[0].mxu0 %v7398
  %v7649 = vpop.f32.mrb[0].mxu0
  %v7650 = vadd.f32 0.0, %v7649
  %v7651 = vpop.f32.mrb[0].mxu0
  %v7652 = vpop.f32.mrb[0].mxu0
  %v7653 = vadd.f32 0.0, %v7652
  %v7654 = vpop.f32.mrb[0].mxu0
  %7655 = vmatprep.mubr.bf16.mxu0 0
  %7656 = vmatmul.mubr.bf16.gmra.mrb[0].mxu0 %v7401
  %v7657 = vpop.f32.mrb[0].mxu0
  %v7658 = vadd.f32 0.0, %v7657
  %v7659 = vpop.f32.mrb[0].mxu0
  %v7660 = vpop.f32.mrb[0].mxu0
  %v7661 = vadd.f32 0.0, %v7660
  %v7662 = vpop.f32.mrb[0].mxu0
  %7663 = vdwg.mxu0
  %v7664 = vpack.c.bf16 %v7442, %v7438
  %v7665 = vpack.c.bf16 %v7444, %v7440
  %v7666 = vpack.c.bf16 %v7495, %v7491
  %v7667 = vpack.c.bf16 %v7497, %v7493
  %v7668 = vpack.c.bf16 %v7548, %v7544
  %v7669 = vpack.c.bf16 %v7550, %v7546
  %v7670 = vpack.c.bf16 %v7601, %v7597
  %v7671 = vpack.c.bf16 %v7603, %v7599
  %v7672 = vpack.c.bf16 %v7653, %v7650
  %v7673 = vpack.c.bf16 %v7452, %v7448
  %v7674 = vpack.c.bf16 %v7454, %v7450
  %v7675 = vpack.c.bf16 %v7505, %v7501
  %v7676 = vpack.c.bf16 %v7507, %v7503
  %v7677 = vpack.c.bf16 %v7558, %v7554
  %v7678 = vpack.c.bf16 %v7560, %v7556
  %v7679 = vpack.c.bf16 %v7611, %v7607
  %v7680 = vpack.c.bf16 %v7613, %v7609
  %v7681 = vpack.c.bf16 %v7661, %v7658
  %v7682 = vld [vmem:[%s8] sm:$0xf]
  %v7683 = vld [vmem:[%s8 + $0x4] sm:$0xf]
  %v7684 = vld [vmem:[%s8 + $0x8] sm:$0xf]
  %v7685 = vld [vmem:[%s8 + $0xc] sm:$0xf]
  %s7686 = scalar_lea.vmem %s8, 16
  %v7687 = vld [vmem:[%s7686] sm:$0xf]
  %v7688 = vld [vmem:[%s7686 + $0x4] sm:$0xf]
  %v7689 = vld [vmem:[%s7686 + $0x8] sm:$0xf]
  %v7690 = vld [vmem:[%s7686 + $0xc] sm:$0xf]
  %v7695 = vunpack.c.l.b16 %v7687
  %v7696 = vunpack.c.l.b16 %v7688
  %v7697 = vunpack.c.l.b16 %v7689
  %v7698 = vunpack.c.l.b16 %v7690
  %v7699 = vpack.c.b16 %v7696, %v7695
  %v7700 = vpack.c.b16 %v7698, %v7697
  %v7702 = vsel %vm5011, %v7699, 0
  %v7705 = vsel %vm5011, %v7700, 0
  %7707 = vmatprep.subr.bf16.mxu0 0
  %7708 = vmatpush1.bf16.msra.mxu0 %v7665
  %7709 = vmatprep.subr.bf16.mxu0 0
  %7710 = vmatpush1.bf16.msra.mxu0 %v7674
  %7711 = vmatprep.subr.bf16.mxu0 0
  %7712 = vmatpush1.bf16.msra.mxu0 0
  %7713 = vmatprep.subr.bf16.mxu0 0
  %7714 = vmatpush1.bf16.msra.mxu0 0
  %7715 = vmatprep.subr.bf16.mxu0 0
  %7716 = vmatpush1.bf16.msra.mxu0 0
  %7717 = vmatprep.subr.bf16.mxu0 0
  %7718 = vmatpush1.bf16.msra.mxu0 0
  %7719 = vmatprep.subr.bf16.mxu0 0
  %7720 = vmatpush1.bf16.msra.mxu0 0
  %7721 = vmatprep.subr.bf16.mxu0 0
  %7722 = vmatpush1.bf16.msra.mxu0 0
  %7723 = vmatprep.subr.bf16.mxu0 0
  %7724 = vmatpush1.bf16.msra.mxu0 0
  %7725 = vmatprep.subr.bf16.mxu0 0
  %7726 = vmatpush1.bf16.msra.mxu0 0
  %7727 = vmatprep.subr.bf16.mxu0 0
  %7728 = vmatpush1.bf16.msra.mxu0 0
  %7729 = vmatprep.subr.bf16.mxu0 0
  %7730 = vmatpush1.bf16.msra.mxu0 0
  %7731 = vmatprep.subr.bf16.mxu0 0
  %7732 = vmatpush1.bf16.msra.mxu0 0
  %7733 = vmatprep.subr.bf16.mxu0 0
  %7734 = vmatpush1.bf16.msra.mxu0 0
  %7735 = vmatprep.subr.bf16.mxu0 0
  %7736 = vmatpush1.bf16.msra.mxu0 0
  %7737 = vmatprep.subr.bf16.mxu0 0
  %7738 = vmatpush1.bf16.msra.mxu0 0
  %7739 = vmatprep.mubr.bf16.mxu0 0
  %7740 = vmatmul.mubr.bf16.gmra.mrb[0].mxu0 %v7702
  %v7741 = vpop.f32.mrb[0].mxu0
  %v7742 = vadd.f32 0.0, %v7741
  %v7743 = vpop.f32.mrb[0].mxu0
  %v7744 = vpop.f32.mrb[0].mxu0
  %v7745 = vadd.f32 0.0, %v7744
  %v7746 = vpop.f32.mrb[0].mxu0
  %7747 = vmatprep.mubr.bf16.mxu0 0
  %7748 = vmatmul.mubr.bf16.gmra.mrb[0].mxu0 %v7705
  %v7749 = vpop.f32.mrb[0].mxu0
  %v7750 = vadd.f32 0.0, %v7749
  %v7751 = vpop.f32.mrb[0].mxu0
  %v7752 = vpop.f32.mrb[0].mxu0
  %v7753 = vadd.f32 0.0, %v7752
  %v7754 = vpop.f32.mrb[0].mxu0
  %7755 = vdwg.mxu0
  %v7760 = vunpack.c.l.b16 %v7682
  %v7761 = vunpack.c.l.b16 %v7683
  %v7762 = vunpack.c.l.b16 %v7684
  %v7763 = vunpack.c.l.b16 %v7685
  %v7764 = vpack.c.b16 %v7761, %v7760
  %v7765 = vpack.c.b16 %v7763, %v7762
  %v7767 = vsel %vm5011, %v7764, 0
  %v7770 = vsel %vm5011, %v7765, 0
  %7772 = vmatprep.subr.bf16.mxu0 0
  %7773 = vmatpush1.bf16.msra.mxu0 %v7664
  %7774 = vmatprep.subr.bf16.mxu0 0
  %7775 = vmatpush1.bf16.msra.mxu0 %v7673
  %7776 = vmatprep.subr.bf16.mxu0 0
  %7777 = vmatpush1.bf16.msra.mxu0 0
  %7778 = vmatprep.subr.bf16.mxu0 0
  %7779 = vmatpush1.bf16.msra.mxu0 0
  %7780 = vmatprep.subr.bf16.mxu0 0
  %7781 = vmatpush1.bf16.msra.mxu0 0
  %7782 = vmatprep.subr.bf16.mxu0 0
  %7783 = vmatpush1.bf16.msra.mxu0 0
  %7784 = vmatprep.subr.bf16.mxu0 0
  %7785 = vmatpush1.bf16.msra.mxu0 0
  %7786 = vmatprep.subr.bf16.mxu0 0
  %7787 = vmatpush1.bf16.msra.mxu0 0
  %7788 = vmatprep.subr.bf16.mxu0 0
  %7789 = vmatpush1.bf16.msra.mxu0 0
  %7790 = vmatprep.subr.bf16.mxu0 0
  %7791 = vmatpush1.bf16.msra.mxu0 0
  %7792 = vmatprep.subr.bf16.mxu0 0
  %7793 = vmatpush1.bf16.msra.mxu0 0
  %7794 = vmatprep.subr.bf16.mxu0 0
  %7795 = vmatpush1.bf16.msra.mxu0 0
  %7796 = vmatprep.subr.bf16.mxu0 0
  %7797 = vmatpush1.bf16.msra.mxu0 0
  %7798 = vmatprep.subr.bf16.mxu0 0
  %7799 = vmatpush1.bf16.msra.mxu0 0
  %7800 = vmatprep.subr.bf16.mxu0 0
  %7801 = vmatpush1.bf16.msra.mxu0 0
  %7802 = vmatprep.subr.bf16.mxu0 0
  %7803 = vmatpush1.bf16.msra.mxu0 0
  %7804 = vmatprep.mubr.bf16.mxu0 0
  %7805 = vmatmul.mubr.bf16.gmra.mrb[0].mxu0 %v7767
  %v7806 = vpop.f32.mrb[0].mxu0
  %v7807 = vadd.f32 %v7742, %v7806
  %v7808 = vpop.f32.mrb[0].mxu0
  %v7809 = vpop.f32.mrb[0].mxu0
  %v7810 = vadd.f32 %v7745, %v7809
  %v7811 = vpop.f32.mrb[0].mxu0
  %7812 = vmatprep.mubr.bf16.mxu0 0
  %7813 = vmatmul.mubr.bf16.gmra.mrb[0].mxu0 %v7770
  %v7814 = vpop.f32.mrb[0].mxu0
  %v7815 = vadd.f32 %v7750, %v7814
  %v7816 = vpop.f32.mrb[0].mxu0
  %v7817 = vpop.f32.mrb[0].mxu0
  %v7818 = vadd.f32 %v7753, %v7817
  %v7819 = vpop.f32.mrb[0].mxu0
  %7820 = vdwg.mxu0
  %s7821 = scalar_lea.vmem %s8, 32
  %v7822 = vld [vmem:[%s7821] sm:$0xf]
  %v7823 = vld [vmem:[%s7821 + $0x4] sm:$0xf]
  %v7824 = vld [vmem:[%s7821 + $0x8] sm:$0xf]
  %v7825 = vld [vmem:[%s7821 + $0xc] sm:$0xf]
  %v7830 = vunpack.c.l.b16 %v7822
  %v7831 = vunpack.c.l.b16 %v7823
  %v7832 = vunpack.c.l.b16 %v7824
  %v7833 = vunpack.c.l.b16 %v7825
  %v7834 = vpack.c.b16 %v7831, %v7830
  %v7835 = vpack.c.b16 %v7833, %v7832
  %v7837 = vsel %vm5011, %v7834, 0
  %v7840 = vsel %vm5011, %v7835, 0
  %7842 = vmatprep.subr.bf16.mxu0 0
  %7843 = vmatpush1.bf16.msra.mxu0 %v7666
  %7844 = vmatprep.subr.bf16.mxu0 0
  %7845 = vmatpush1.bf16.msra.mxu0 %v7675
  %7846 = vmatprep.subr.bf16.mxu0 0
  %7847 = vmatpush1.bf16.msra.mxu0 0
  %7848 = vmatprep.subr.bf16.mxu0 0
  %7849 = vmatpush1.bf16.msra.mxu0 0
  %7850 = vmatprep.subr.bf16.mxu0 0
  %7851 = vmatpush1.bf16.msra.mxu0 0
  %7852 = vmatprep.subr.bf16.mxu0 0
  %7853 = vmatpush1.bf16.msra.mxu0 0
  %7854 = vmatprep.subr.bf16.mxu0 0
  %7855 = vmatpush1.bf16.msra.mxu0 0
  %7856 = vmatprep.subr.bf16.mxu0 0
  %7857 = vmatpush1.bf16.msra.mxu0 0
  %7858 = vmatprep.subr.bf16.mxu0 0
  %7859 = vmatpush1.bf16.msra.mxu0 0
  %7860 = vmatprep.subr.bf16.mxu0 0
  %7861 = vmatpush1.bf16.msra.mxu0 0
  %7862 = vmatprep.subr.bf16.mxu0 0
  %7863 = vmatpush1.bf16.msra.mxu0 0
  %7864 = vmatprep.subr.bf16.mxu0 0
  %7865 = vmatpush1.bf16.msra.mxu0 0
  %7866 = vmatprep.subr.bf16.mxu0 0
  %7867 = vmatpush1.bf16.msra.mxu0 0
  %7868 = vmatprep.subr.bf16.mxu0 0
  %7869 = vmatpush1.bf16.msra.mxu0 0
  %7870 = vmatprep.subr.bf16.mxu0 0
  %7871 = vmatpush1.bf16.msra.mxu0 0
  %7872 = vmatprep.subr.bf16.mxu0 0
  %7873 = vmatpush1.bf16.msra.mxu0 0
  %7874 = vmatprep.mubr.bf16.mxu0 0
  %7875 = vmatmul.mubr.bf16.gmra.mrb[0].mxu0 %v7837
  %v7876 = vpop.f32.mrb[0].mxu0
  %v7877 = vadd.f32 0.0, %v7876
  %v7878 = vpop.f32.mrb[0].mxu0
  %v7879 = vpop.f32.mrb[0].mxu0
  %v7880 = vadd.f32 0.0, %v7879
  %v7881 = vpop.f32.mrb[0].mxu0
  %7882 = vmatprep.mubr.bf16.mxu0 0
  %7883 = vmatmul.mubr.bf16.gmra.mrb[0].mxu0 %v7840
  %v7884 = vpop.f32.mrb[0].mxu0
  %v7885 = vadd.f32 0.0, %v7884
  %v7886 = vpop.f32.mrb[0].mxu0
  %v7887 = vpop.f32.mrb[0].mxu0
  %v7888 = vadd.f32 0.0, %v7887
  %v7889 = vpop.f32.mrb[0].mxu0
  %7890 = vdwg.mxu0
  %v7891 = vadd.f32 %v7807, %v7877
  %v7892 = vadd.f32 %v7810, %v7880
  %v7893 = vadd.f32 %v7815, %v7885
  %v7894 = vadd.f32 %v7818, %v7888
  %s7895 = scalar_lea.vmem %s8, 48
  %v7896 = vld [vmem:[%s7895] sm:$0xf]
  %v7897 = vld [vmem:[%s7895 + $0x4] sm:$0xf]
  %v7898 = vld [vmem:[%s7895 + $0x8] sm:$0xf]
  %v7899 = vld [vmem:[%s7895 + $0xc] sm:$0xf]
  %v7904 = vunpack.c.l.b16 %v7896
  %v7905 = vunpack.c.l.b16 %v7897
  %v7906 = vunpack.c.l.b16 %v7898
  %v7907 = vunpack.c.l.b16 %v7899
  %v7908 = vpack.c.b16 %v7905, %v7904
  %v7909 = vpack.c.b16 %v7907, %v7906
  %v7911 = vsel %vm5011, %v7908, 0
  %v7914 = vsel %vm5011, %v7909, 0
  %7916 = vmatprep.subr.bf16.mxu0 0
  %7917 = vmatpush1.bf16.msra.mxu0 %v7667
  %7918 = vmatprep.subr.bf16.mxu0 0
  %7919 = vmatpush1.bf16.msra.mxu0 %v7676
  %7920 = vmatprep.subr.bf16.mxu0 0
  %7921 = vmatpush1.bf16.msra.mxu0 0
  %7922 = vmatprep.subr.bf16.mxu0 0
  %7923 = vmatpush1.bf16.msra.mxu0 0
  %7924 = vmatprep.subr.bf16.mxu0 0
  %7925 = vmatpush1.bf16.msra.mxu0 0
  %7926 = vmatprep.subr.bf16.mxu0 0
  %7927 = vmatpush1.bf16.msra.mxu0 0
  %7928 = vmatprep.subr.bf16.mxu0 0
  %7929 = vmatpush1.bf16.msra.mxu0 0
  %7930 = vmatprep.subr.bf16.mxu0 0
  %7931 = vmatpush1.bf16.msra.mxu0 0
  %7932 = vmatprep.subr.bf16.mxu0 0
  %7933 = vmatpush1.bf16.msra.mxu0 0
  %7934 = vmatprep.subr.bf16.mxu0 0
  %7935 = vmatpush1.bf16.msra.mxu0 0
  %7936 = vmatprep.subr.bf16.mxu0 0
  %7937 = vmatpush1.bf16.msra.mxu0 0
  %7938 = vmatprep.subr.bf16.mxu0 0
  %7939 = vmatpush1.bf16.msra.mxu0 0
  %7940 = vmatprep.subr.bf16.mxu0 0
  %7941 = vmatpush1.bf16.msra.mxu0 0
  %7942 = vmatprep.subr.bf16.mxu0 0
  %7943 = vmatpush1.bf16.msra.mxu0 0
  %7944 = vmatprep.subr.bf16.mxu0 0
  %7945 = vmatpush1.bf16.msra.mxu0 0
  %7946 = vmatprep.subr.bf16.mxu0 0
  %7947 = vmatpush1.bf16.msra.mxu0 0
  %7948 = vmatprep.mubr.bf16.mxu0 0
  %7949 = vmatmul.mubr.bf16.gmra.mrb[0].mxu0 %v7911
  %v7950 = vpop.f32.mrb[0].mxu0
  %v7951 = vadd.f32 0.0, %v7950
  %v7952 = vpop.f32.mrb[0].mxu0
  %v7953 = vpop.f32.mrb[0].mxu0
  %v7954 = vadd.f32 0.0, %v7953
  %v7955 = vpop.f32.mrb[0].mxu0
  %7956 = vmatprep.mubr.bf16.mxu0 0
  %7957 = vmatmul.mubr.bf16.gmra.mrb[0].mxu0 %v7914
  %v7958 = vpop.f32.mrb[0].mxu0
  %v7959 = vadd.f32 0.0, %v7958
  %v7960 = vpop.f32.mrb[0].mxu0
  %v7961 = vpop.f32.mrb[0].mxu0
  %v7962 = vadd.f32 0.0, %v7961
  %v7963 = vpop.f32.mrb[0].mxu0
  %7964 = vdwg.mxu0
  %v7965 = vadd.f32 %v7891, %v7951
  %v7966 = vadd.f32 %v7892, %v7954
  %v7967 = vadd.f32 %v7893, %v7959
  %v7968 = vadd.f32 %v7894, %v7962
  %s7969 = scalar_lea.vmem %s8, 64
  %v7970 = vld [vmem:[%s7969] sm:$0xf]
  %v7971 = vld [vmem:[%s7969 + $0x4] sm:$0xf]
  %v7972 = vld [vmem:[%s7969 + $0x8] sm:$0xf]
  %v7973 = vld [vmem:[%s7969 + $0xc] sm:$0xf]
  %v7978 = vunpack.c.l.b16 %v7970
  %v7979 = vunpack.c.l.b16 %v7971
  %v7980 = vunpack.c.l.b16 %v7972
  %v7981 = vunpack.c.l.b16 %v7973
  %v7982 = vpack.c.b16 %v7979, %v7978
  %v7983 = vpack.c.b16 %v7981, %v7980
  %v7985 = vsel %vm5011, %v7982, 0
  %v7988 = vsel %vm5011, %v7983, 0
  %7990 = vmatprep.subr.bf16.mxu0 0
  %7991 = vmatpush1.bf16.msra.mxu0 %v7668
  %7992 = vmatprep.subr.bf16.mxu0 0
  %7993 = vmatpush1.bf16.msra.mxu0 %v7677
  %7994 = vmatprep.subr.bf16.mxu0 0
  %7995 = vmatpush1.bf16.msra.mxu0 0
  %7996 = vmatprep.subr.bf16.mxu0 0
  %7997 = vmatpush1.bf16.msra.mxu0 0
  %7998 = vmatprep.subr.bf16.mxu0 0
  %7999 = vmatpush1.bf16.msra.mxu0 0
  %8000 = vmatprep.subr.bf16.mxu0 0
  %8001 = vmatpush1.bf16.msra.mxu0 0
  %8002 = vmatprep.subr.bf16.mxu0 0
  %8003 = vmatpush1.bf16.msra.mxu0 0
  %8004 = vmatprep.subr.bf16.mxu0 0
  %8005 = vmatpush1.bf16.msra.mxu0 0
  %8006 = vmatprep.subr.bf16.mxu0 0
  %8007 = vmatpush1.bf16.msra.mxu0 0
  %8008 = vmatprep.subr.bf16.mxu0 0
  %8009 = vmatpush1.bf16.msra.mxu0 0
  %8010 = vmatprep.subr.bf16.mxu0 0
  %8011 = vmatpush1.bf16.msra.mxu0 0
  %8012 = vmatprep.subr.bf16.mxu0 0
  %8013 = vmatpush1.bf16.msra.mxu0 0
  %8014 = vmatprep.subr.bf16.mxu0 0
  %8015 = vmatpush1.bf16.msra.mxu0 0
  %8016 = vmatprep.subr.bf16.mxu0 0
  %8017 = vmatpush1.bf16.msra.mxu0 0
  %8018 = vmatprep.subr.bf16.mxu0 0
  %8019 = vmatpush1.bf16.msra.mxu0 0
  %8020 = vmatprep.subr.bf16.mxu0 0
  %8021 = vmatpush1.bf16.msra.mxu0 0
  %8022 = vmatprep.mubr.bf16.mxu0 0
  %8023 = vmatmul.mubr.bf16.gmra.mrb[0].mxu0 %v7985
  %v8024 = vpop.f32.mrb[0].mxu0
  %v8025 = vadd.f32 0.0, %v8024
  %v8026 = vpop.f32.mrb[0].mxu0
  %v8027 = vpop.f32.mrb[0].mxu0
  %v8028 = vadd.f32 0.0, %v8027
  %v8029 = vpop.f32.mrb[0].mxu0
  %8030 = vmatprep.mubr.bf16.mxu0 0
  %8031 = vmatmul.mubr.bf16.gmra.mrb[0].mxu0 %v7988
  %v8032 = vpop.f32.mrb[0].mxu0
  %v8033 = vadd.f32 0.0, %v8032
  %v8034 = vpop.f32.mrb[0].mxu0
  %v8035 = vpop.f32.mrb[0].mxu0
  %v8036 = vadd.f32 0.0, %v8035
  %v8037 = vpop.f32.mrb[0].mxu0
  %8038 = vdwg.mxu0
  %v8039 = vadd.f32 %v7965, %v8025
  %v8040 = vadd.f32 %v7966, %v8028
  %v8041 = vadd.f32 %v7967, %v8033
  %v8042 = vadd.f32 %v7968, %v8036
  %s8043 = scalar_lea.vmem %s8, 80
  %v8044 = vld [vmem:[%s8043] sm:$0xf]
  %v8045 = vld [vmem:[%s8043 + $0x4] sm:$0xf]
  %v8046 = vld [vmem:[%s8043 + $0x8] sm:$0xf]
  %v8047 = vld [vmem:[%s8043 + $0xc] sm:$0xf]
  %v8052 = vunpack.c.l.b16 %v8044
  %v8053 = vunpack.c.l.b16 %v8045
  %v8054 = vunpack.c.l.b16 %v8046
  %v8055 = vunpack.c.l.b16 %v8047
  %v8056 = vpack.c.b16 %v8053, %v8052
  %v8057 = vpack.c.b16 %v8055, %v8054
  %v8059 = vsel %vm5011, %v8056, 0
  %v8062 = vsel %vm5011, %v8057, 0
  %8064 = vmatprep.subr.bf16.mxu0 0
  %8065 = vmatpush1.bf16.msra.mxu0 %v7669
  %8066 = vmatprep.subr.bf16.mxu0 0
  %8067 = vmatpush1.bf16.msra.mxu0 %v7678
  %8068 = vmatprep.subr.bf16.mxu0 0
  %8069 = vmatpush1.bf16.msra.mxu0 0
  %8070 = vmatprep.subr.bf16.mxu0 0
  %8071 = vmatpush1.bf16.msra.mxu0 0
  %8072 = vmatprep.subr.bf16.mxu0 0
  %8073 = vmatpush1.bf16.msra.mxu0 0
  %8074 = vmatprep.subr.bf16.mxu0 0
  %8075 = vmatpush1.bf16.msra.mxu0 0
  %8076 = vmatprep.subr.bf16.mxu0 0
  %8077 = vmatpush1.bf16.msra.mxu0 0
  %8078 = vmatprep.subr.bf16.mxu0 0
  %8079 = vmatpush1.bf16.msra.mxu0 0
  %8080 = vmatprep.subr.bf16.mxu0 0
  %8081 = vmatpush1.bf16.msra.mxu0 0
  %8082 = vmatprep.subr.bf16.mxu0 0
  %8083 = vmatpush1.bf16.msra.mxu0 0
  %8084 = vmatprep.subr.bf16.mxu0 0
  %8085 = vmatpush1.bf16.msra.mxu0 0
  %8086 = vmatprep.subr.bf16.mxu0 0
  %8087 = vmatpush1.bf16.msra.mxu0 0
  %8088 = vmatprep.subr.bf16.mxu0 0
  %8089 = vmatpush1.bf16.msra.mxu0 0
  %8090 = vmatprep.subr.bf16.mxu0 0
  %8091 = vmatpush1.bf16.msra.mxu0 0
  %8092 = vmatprep.subr.bf16.mxu0 0
  %8093 = vmatpush1.bf16.msra.mxu0 0
  %8094 = vmatprep.subr.bf16.mxu0 0
  %8095 = vmatpush1.bf16.msra.mxu0 0
  %8096 = vmatprep.mubr.bf16.mxu0 0
  %8097 = vmatmul.mubr.bf16.gmra.mrb[0].mxu0 %v8059
  %v8098 = vpop.f32.mrb[0].mxu0
  %v8099 = vadd.f32 0.0, %v8098
  %v8100 = vpop.f32.mrb[0].mxu0
  %v8101 = vpop.f32.mrb[0].mxu0
  %v8102 = vadd.f32 0.0, %v8101
  %v8103 = vpop.f32.mrb[0].mxu0
  %8104 = vmatprep.mubr.bf16.mxu0 0
  %8105 = vmatmul.mubr.bf16.gmra.mrb[0].mxu0 %v8062
  %v8106 = vpop.f32.mrb[0].mxu0
  %v8107 = vadd.f32 0.0, %v8106
  %v8108 = vpop.f32.mrb[0].mxu0
  %v8109 = vpop.f32.mrb[0].mxu0
  %v8110 = vadd.f32 0.0, %v8109
  %v8111 = vpop.f32.mrb[0].mxu0
  %8112 = vdwg.mxu0
  %v8113 = vadd.f32 %v8039, %v8099
  %v8114 = vadd.f32 %v8040, %v8102
  %v8115 = vadd.f32 %v8041, %v8107
  %v8116 = vadd.f32 %v8042, %v8110
  %s8117 = scalar_lea.vmem %s8, 96
  %v8118 = vld [vmem:[%s8117] sm:$0xf]
  %v8119 = vld [vmem:[%s8117 + $0x4] sm:$0xf]
  %v8120 = vld [vmem:[%s8117 + $0x8] sm:$0xf]
  %v8121 = vld [vmem:[%s8117 + $0xc] sm:$0xf]
  %v8126 = vunpack.c.l.b16 %v8118
  %v8127 = vunpack.c.l.b16 %v8119
  %v8128 = vunpack.c.l.b16 %v8120
  %v8129 = vunpack.c.l.b16 %v8121
  %v8130 = vpack.c.b16 %v8127, %v8126
  %v8131 = vpack.c.b16 %v8129, %v8128
  %v8133 = vsel %vm5011, %v8130, 0
  %v8136 = vsel %vm5011, %v8131, 0
  %8138 = vmatprep.subr.bf16.mxu0 0
  %8139 = vmatpush1.bf16.msra.mxu0 %v7670
  %8140 = vmatprep.subr.bf16.mxu0 0
  %8141 = vmatpush1.bf16.msra.mxu0 %v7679
  %8142 = vmatprep.subr.bf16.mxu0 0
  %8143 = vmatpush1.bf16.msra.mxu0 0
  %8144 = vmatprep.subr.bf16.mxu0 0
  %8145 = vmatpush1.bf16.msra.mxu0 0
  %8146 = vmatprep.subr.bf16.mxu0 0
  %8147 = vmatpush1.bf16.msra.mxu0 0
  %8148 = vmatprep.subr.bf16.mxu0 0
  %8149 = vmatpush1.bf16.msra.mxu0 0
  %8150 = vmatprep.subr.bf16.mxu0 0
  %8151 = vmatpush1.bf16.msra.mxu0 0
  %8152 = vmatprep.subr.bf16.mxu0 0
  %8153 = vmatpush1.bf16.msra.mxu0 0
  %8154 = vmatprep.subr.bf16.mxu0 0
  %8155 = vmatpush1.bf16.msra.mxu0 0
  %8156 = vmatprep.subr.bf16.mxu0 0
  %8157 = vmatpush1.bf16.msra.mxu0 0
  %8158 = vmatprep.subr.bf16.mxu0 0
  %8159 = vmatpush1.bf16.msra.mxu0 0
  %8160 = vmatprep.subr.bf16.mxu0 0
  %8161 = vmatpush1.bf16.msra.mxu0 0
  %8162 = vmatprep.subr.bf16.mxu0 0
  %8163 = vmatpush1.bf16.msra.mxu0 0
  %8164 = vmatprep.subr.bf16.mxu0 0
  %8165 = vmatpush1.bf16.msra.mxu0 0
  %8166 = vmatprep.subr.bf16.mxu0 0
  %8167 = vmatpush1.bf16.msra.mxu0 0
  %8168 = vmatprep.subr.bf16.mxu0 0
  %8169 = vmatpush1.bf16.msra.mxu0 0
  %8170 = vmatprep.mubr.bf16.mxu0 0
  %8171 = vmatmul.mubr.bf16.gmra.mrb[0].mxu0 %v8133
  %v8172 = vpop.f32.mrb[0].mxu0
  %v8173 = vadd.f32 0.0, %v8172
  %v8174 = vpop.f32.mrb[0].mxu0
  %v8175 = vpop.f32.mrb[0].mxu0
  %v8176 = vadd.f32 0.0, %v8175
  %v8177 = vpop.f32.mrb[0].mxu0
  %8178 = vmatprep.mubr.bf16.mxu0 0
  %8179 = vmatmul.mubr.bf16.gmra.mrb[0].mxu0 %v8136
  %v8180 = vpop.f32.mrb[0].mxu0
  %v8181 = vadd.f32 0.0, %v8180
  %v8182 = vpop.f32.mrb[0].mxu0
  %v8183 = vpop.f32.mrb[0].mxu0
  %v8184 = vadd.f32 0.0, %v8183
  %v8185 = vpop.f32.mrb[0].mxu0
  %8186 = vdwg.mxu0
  %v8187 = vadd.f32 %v8113, %v8173
  %v8188 = vadd.f32 %v8114, %v8176
  %v8189 = vadd.f32 %v8115, %v8181
  %v8190 = vadd.f32 %v8116, %v8184
  %s8191 = scalar_lea.vmem %s8, 112
  %v8192 = vld [vmem:[%s8191] sm:$0xf]
  %v8193 = vld [vmem:[%s8191 + $0x4] sm:$0xf]
  %v8194 = vld [vmem:[%s8191 + $0x8] sm:$0xf]
  %v8195 = vld [vmem:[%s8191 + $0xc] sm:$0xf]
  %v8200 = vunpack.c.l.b16 %v8192
  %v8201 = vunpack.c.l.b16 %v8193
  %v8202 = vunpack.c.l.b16 %v8194
  %v8203 = vunpack.c.l.b16 %v8195
  %v8204 = vpack.c.b16 %v8201, %v8200
  %v8205 = vpack.c.b16 %v8203, %v8202
  %v8207 = vsel %vm5011, %v8204, 0
  %v8210 = vsel %vm5011, %v8205, 0
  %8212 = vmatprep.subr.bf16.mxu0 0
  %8213 = vmatpush1.bf16.msra.mxu0 %v7671
  %8214 = vmatprep.subr.bf16.mxu0 0
  %8215 = vmatpush1.bf16.msra.mxu0 %v7680
  %8216 = vmatprep.subr.bf16.mxu0 0
  %8217 = vmatpush1.bf16.msra.mxu0 0
  %8218 = vmatprep.subr.bf16.mxu0 0
  %8219 = vmatpush1.bf16.msra.mxu0 0
  %8220 = vmatprep.subr.bf16.mxu0 0
  %8221 = vmatpush1.bf16.msra.mxu0 0
  %8222 = vmatprep.subr.bf16.mxu0 0
  %8223 = vmatpush1.bf16.msra.mxu0 0
  %8224 = vmatprep.subr.bf16.mxu0 0
  %8225 = vmatpush1.bf16.msra.mxu0 0
  %8226 = vmatprep.subr.bf16.mxu0 0
  %8227 = vmatpush1.bf16.msra.mxu0 0
  %8228 = vmatprep.subr.bf16.mxu0 0
  %8229 = vmatpush1.bf16.msra.mxu0 0
  %8230 = vmatprep.subr.bf16.mxu0 0
  %8231 = vmatpush1.bf16.msra.mxu0 0
  %8232 = vmatprep.subr.bf16.mxu0 0
  %8233 = vmatpush1.bf16.msra.mxu0 0
  %8234 = vmatprep.subr.bf16.mxu0 0
  %8235 = vmatpush1.bf16.msra.mxu0 0
  %8236 = vmatprep.subr.bf16.mxu0 0
  %8237 = vmatpush1.bf16.msra.mxu0 0
  %8238 = vmatprep.subr.bf16.mxu0 0
  %8239 = vmatpush1.bf16.msra.mxu0 0
  %8240 = vmatprep.subr.bf16.mxu0 0
  %8241 = vmatpush1.bf16.msra.mxu0 0
  %8242 = vmatprep.subr.bf16.mxu0 0
  %8243 = vmatpush1.bf16.msra.mxu0 0
  %8244 = vmatprep.mubr.bf16.mxu0 0
  %8245 = vmatmul.mubr.bf16.gmra.mrb[0].mxu0 %v8207
  %v8246 = vpop.f32.mrb[0].mxu0
  %v8247 = vadd.f32 0.0, %v8246
  %v8248 = vpop.f32.mrb[0].mxu0
  %v8249 = vpop.f32.mrb[0].mxu0
  %v8250 = vadd.f32 0.0, %v8249
  %v8251 = vpop.f32.mrb[0].mxu0
  %8252 = vmatprep.mubr.bf16.mxu0 0
  %8253 = vmatmul.mubr.bf16.gmra.mrb[0].mxu0 %v8210
  %v8254 = vpop.f32.mrb[0].mxu0
  %v8255 = vadd.f32 0.0, %v8254
  %v8256 = vpop.f32.mrb[0].mxu0
  %v8257 = vpop.f32.mrb[0].mxu0
  %v8258 = vadd.f32 0.0, %v8257
  %v8259 = vpop.f32.mrb[0].mxu0
  %8260 = vdwg.mxu0
  %v8261 = vadd.f32 %v8187, %v8247
  %v8262 = vadd.f32 %v8188, %v8250
  %v8263 = vadd.f32 %v8189, %v8255
  %v8264 = vadd.f32 %v8190, %v8258
  %s8265 = scalar_lea.vmem %s8, 128
  %v8266 = vld [vmem:[%s8265] sm:$0xf]
  %v8267 = vld [vmem:[%s8265 + $0x4] sm:$0xf]
  %v8268 = vld [vmem:[%s8265 + $0x8] sm:$0xf]
  %v8269 = vld [vmem:[%s8265 + $0xc] sm:$0xf]
  %v8274 = vunpack.c.l.b16 %v8266
  %v8275 = vunpack.c.l.b16 %v8267
  %v8276 = vunpack.c.l.b16 %v8268
  %v8277 = vunpack.c.l.b16 %v8269
  %v8278 = vpack.c.b16 %v8275, %v8274
  %v8279 = vpack.c.b16 %v8277, %v8276
  %v8281 = vsel %vm5011, %v8278, 0
  %v8284 = vsel %vm5011, %v8279, 0
  %8286 = vmatprep.subr.bf16.mxu0 0
  %8287 = vmatpush1.bf16.msra.mxu0 %v7672
  %8288 = vmatprep.subr.bf16.mxu0 0
  %8289 = vmatpush1.bf16.msra.mxu0 %v7681
  %8290 = vmatprep.subr.bf16.mxu0 0
  %8291 = vmatpush1.bf16.msra.mxu0 0
  %8292 = vmatprep.subr.bf16.mxu0 0
  %8293 = vmatpush1.bf16.msra.mxu0 0
  %8294 = vmatprep.subr.bf16.mxu0 0
  %8295 = vmatpush1.bf16.msra.mxu0 0
  %8296 = vmatprep.subr.bf16.mxu0 0
  %8297 = vmatpush1.bf16.msra.mxu0 0
  %8298 = vmatprep.subr.bf16.mxu0 0
  %8299 = vmatpush1.bf16.msra.mxu0 0
  %8300 = vmatprep.subr.bf16.mxu0 0
  %8301 = vmatpush1.bf16.msra.mxu0 0
  %8302 = vmatprep.subr.bf16.mxu0 0
  %8303 = vmatpush1.bf16.msra.mxu0 0
  %8304 = vmatprep.subr.bf16.mxu0 0
  %8305 = vmatpush1.bf16.msra.mxu0 0
  %8306 = vmatprep.subr.bf16.mxu0 0
  %8307 = vmatpush1.bf16.msra.mxu0 0
  %8308 = vmatprep.subr.bf16.mxu0 0
  %8309 = vmatpush1.bf16.msra.mxu0 0
  %8310 = vmatprep.subr.bf16.mxu0 0
  %8311 = vmatpush1.bf16.msra.mxu0 0
  %8312 = vmatprep.subr.bf16.mxu0 0
  %8313 = vmatpush1.bf16.msra.mxu0 0
  %8314 = vmatprep.subr.bf16.mxu0 0
  %8315 = vmatpush1.bf16.msra.mxu0 0
  %8316 = vmatprep.subr.bf16.mxu0 0
  %8317 = vmatpush1.bf16.msra.mxu0 0
  %8318 = vmatprep.mubr.bf16.mxu0 0
  %8319 = vmatmul.mubr.bf16.gmra.mrb[0].mxu0 %v8281
  %v8320 = vpop.f32.mrb[0].mxu0
  %v8321 = vadd.f32 0.0, %v8320
  %v8322 = vpop.f32.mrb[0].mxu0
  %v8323 = vpop.f32.mrb[0].mxu0
  %v8324 = vadd.f32 0.0, %v8323
  %v8325 = vpop.f32.mrb[0].mxu0
  %8326 = vmatprep.mubr.bf16.mxu0 0
  %8327 = vmatmul.mubr.bf16.gmra.mrb[0].mxu0 %v8284
  %v8328 = vpop.f32.mrb[0].mxu0
  %v8329 = vadd.f32 0.0, %v8328
  %v8330 = vpop.f32.mrb[0].mxu0
  %v8331 = vpop.f32.mrb[0].mxu0
  %v8332 = vadd.f32 0.0, %v8331
  %v8333 = vpop.f32.mrb[0].mxu0
  %8334 = vdwg.mxu0
  %v8335 = vadd.f32 %v8261, %v8321
  %v8336 = vadd.f32 %v8262, %v8324
  %v8337 = vadd.f32 %v8263, %v8329
  %v8338 = vadd.f32 %v8264, %v8332
  %v8339 = vld [vmem:[%s10] sm:$0x1]
  %v8341 = vlaneseq
  %v8342 = vshrl.u32 %v8341, 7
  %v8343 = vsub.s32 0, %v8342
  %v8344 = vrot.slane %v8339, %v8343
  %v8346 = vmul.f32 %v8335, %v8344
  %v8347 = vmul.f32 %v8336, %v8344
  %v8348 = vmul.f32 %v8337, %v8344
  %v8349 = vmul.f32 %v8338, %v8344
  %v8350 = vld [vmem:[%s11] sm:$0x1]
  %v8352 = vlaneseq
  %v8353 = vshrl.u32 %v8352, 7
  %v8354 = vsub.s32 0, %v8353
  %v8355 = vrot.slane %v8350, %v8354
  %v8357 = vadd.f32 %v8346, %v8355
  %v8358 = vadd.f32 %v8347, %v8355
  %v8359 = vadd.f32 %v8348, %v8355
  %v8360 = vadd.f32 %v8349, %v8355
  %v8361 = vmax.f32 %v8357, 0.0
  %v8362 = vmax.f32 %v8358, 0.0
  %v8363 = vmax.f32 %v8359, 0.0
  %v8364 = vmax.f32 %v8360, 0.0
  %v8365 = vmax.f32 %v8361, %v8362
  %v8366 = vmax.f32 %v8363, %v8364
  %v8367 = vmax.f32 %v8365, %v8366
  %v8368 = vld [vmem:[%s12] sm:$0x3]
  %vm8369 = vcmask 64512
  %v8371 = vsel %vm8369, %v8368, 0
  %8373 = vmatprep.subr.mxu0 0.0
  %8374 = vmatpush1.msra.mxu0 %v8367
  %8375 = vmatprep.subr.mxu0 0.0
  %8376 = vmatpush1.msra.mxu0 0.0
  %8377 = vmatprep.subr.mxu0 0.0
  %8378 = vmatpush1.msra.mxu0 0.0
  %8379 = vmatprep.subr.mxu0 0.0
  %8380 = vmatpush1.msra.mxu0 0.0
  %8381 = vmatprep.subr.mxu0 0.0
  %8382 = vmatpush1.msra.mxu0 0.0
  %8383 = vmatprep.subr.mxu0 0.0
  %8384 = vmatpush1.msra.mxu0 0.0
  %8385 = vmatprep.subr.mxu0 0.0
  %8386 = vmatpush1.msra.mxu0 0.0
  %8387 = vmatprep.subr.mxu0 0.0
  %8388 = vmatpush1.msra.mxu0 0.0
  %8389 = vmatprep.subr.mxu0 0.0
  %8390 = vmatpush1.msra.mxu0 0.0
  %8391 = vmatprep.subr.mxu0 0.0
  %8392 = vmatpush1.msra.mxu0 0.0
  %8393 = vmatprep.subr.mxu0 0.0
  %8394 = vmatpush1.msra.mxu0 0.0
  %8395 = vmatprep.subr.mxu0 0.0
  %8396 = vmatpush1.msra.mxu0 0.0
  %8397 = vmatprep.subr.mxu0 0.0
  %8398 = vmatpush1.msra.mxu0 0.0
  %8399 = vmatprep.subr.mxu0 0.0
  %8400 = vmatpush1.msra.mxu0 0.0
  %8401 = vmatprep.subr.mxu0 0.0
  %8402 = vmatpush1.msra.mxu0 0.0
  %8403 = vmatprep.subr.mxu0 0.0
  %8404 = vmatpush1.msra.mxu0 0.0
  %8405 = vmatprep.subr.mxu0 0.0
  %8406 = vmatpush1.msra.mxu0 0.0
  %8407 = vmatprep.subr.mxu0 0.0
  %8408 = vmatpush1.msra.mxu0 0.0
  %8409 = vmatprep.subr.mxu0 0.0
  %8410 = vmatpush1.msra.mxu0 0.0
  %8411 = vmatprep.subr.mxu0 0.0
  %8412 = vmatpush1.msra.mxu0 0.0
  %8413 = vmatprep.subr.mxu0 0.0
  %8414 = vmatpush1.msra.mxu0 0.0
  %8415 = vmatprep.subr.mxu0 0.0
  %8416 = vmatpush1.msra.mxu0 0.0
  %8417 = vmatprep.subr.mxu0 0.0
  %8418 = vmatpush1.msra.mxu0 0.0
  %8419 = vmatprep.subr.mxu0 0.0
  %8420 = vmatpush1.msra.mxu0 0.0
  %8421 = vmatprep.subr.mxu0 0.0
  %8422 = vmatpush1.msra.mxu0 0.0
  %8423 = vmatprep.subr.mxu0 0.0
  %8424 = vmatpush1.msra.mxu0 0.0
  %8425 = vmatprep.subr.mxu0 0.0
  %8426 = vmatpush1.msra.mxu0 0.0
  %8427 = vmatprep.subr.mxu0 0.0
  %8428 = vmatpush1.msra.mxu0 0.0
  %8429 = vmatprep.subr.mxu0 0.0
  %8430 = vmatpush1.msra.mxu0 0.0
  %8431 = vmatprep.subr.mxu0 0.0
  %8432 = vmatpush1.msra.mxu0 0.0
  %8433 = vmatprep.subr.mxu0 0.0
  %8434 = vmatpush1.msra.mxu0 0.0
  %8435 = vmatprep.subr.mxu0 0.0
  %8436 = vmatpush1.msra.mxu0 0.0
  %8437 = vmatprep.mubr.f32.mxu0 0.0
  %8438 = vmatmul.mubr.f32.gmra.mrb[0].mxu0 %v8371
  %v8439 = vpop.f32.mrb[0].mxu0
  %v8440 = vadd.f32 0.0, %v8439
  %v8441 = vpop.f32.mrb[0].mxu0
  %8442 = vdwg.mxu0
  %v8443 = vld [vmem:[%s13] sm:$0xff]
  %v8444 = vld [vmem:[%s13 + $0x8] sm:$0xff]
  %v8445 = vld [vmem:[%s13 + $0x10] sm:$0xff]
  %v8446 = vld [vmem:[%s13 + $0x18] sm:$0xff]
  %v8447 = vld [vmem:[%s13 + $0x20] sm:$0xff]
  %v8448 = vld [vmem:[%s13 + $0x28] sm:$0xff]
  %v8449 = vld [vmem:[%s13 + $0x30] sm:$0xff]
  %v8450 = vld [vmem:[%s13 + $0x38] sm:$0xff]
  %v8451 = vld [vmem:[%s13 + $0x40] sm:$0xff]
  %v8452 = vld [vmem:[%s13 + $0x48] sm:$0xff]
  %v8453 = vld [vmem:[%s13 + $0x50] sm:$0xff]
  %v8454 = vld [vmem:[%s13 + $0x58] sm:$0xff]
  %v8455 = vld [vmem:[%s13 + $0x60] sm:$0xff]
  %v8456 = vld [vmem:[%s13 + $0x68] sm:$0xff]
  %v8457 = vld [vmem:[%s13 + $0x70] sm:$0xff]
  %v8458 = vld [vmem:[%s13 + $0x78] sm:$0xff]
  %8459 = vmatprep.subr.mxu0 0.0
  %8460 = vmatpush1.msra.mxu0 %v8443
  %8461 = vmatprep.subr.mxu0 0.0
  %8462 = vmatpush1.msra.mxu0 %v8444
  %8463 = vmatprep.subr.mxu0 0.0
  %8464 = vmatpush1.msra.mxu0 %v8445
  %8465 = vmatprep.subr.mxu0 0.0
  %8466 = vmatpush1.msra.mxu0 %v8446
  %8467 = vmatprep.subr.mxu0 0.0
  %8468 = vmatpush1.msra.mxu0 %v8447
  %8469 = vmatprep.subr.mxu0 0.0
  %8470 = vmatpush1.msra.mxu0 %v8448
  %8471 = vmatprep.subr.mxu0 0.0
  %8472 = vmatpush1.msra.mxu0 %v8449
  %8473 = vmatprep.subr.mxu0 0.0
  %8474 = vmatpush1.msra.mxu0 %v8450
  %8475 = vmatprep.subr.mxu0 0.0
  %8476 = vmatpush1.msra.mxu0 %v8451
  %8477 = vmatprep.subr.mxu0 0.0
  %8478 = vmatpush1.msra.mxu0 %v8452
  %8479 = vmatprep.subr.mxu0 0.0
  %8480 = vmatpush1.msra.mxu0 %v8453
  %8481 = vmatprep.subr.mxu0 0.0
  %8482 = vmatpush1.msra.mxu0 %v8454
  %8483 = vmatprep.subr.mxu0 0.0
  %8484 = vmatpush1.msra.mxu0 %v8455
  %8485 = vmatprep.subr.mxu0 0.0
  %8486 = vmatpush1.msra.mxu0 %v8456
  %8487 = vmatprep.subr.mxu0 0.0
  %8488 = vmatpush1.msra.mxu0 %v8457
  %8489 = vmatprep.subr.mxu0 0.0
  %8490 = vmatpush1.msra.mxu0 %v8458
  %8491 = vmatprep.subr.mxu0 0.0
  %8492 = vmatpush1.msra.mxu0 0.0
  %8493 = vmatprep.subr.mxu0 0.0
  %8494 = vmatpush1.msra.mxu0 0.0
  %8495 = vmatprep.subr.mxu0 0.0
  %8496 = vmatpush1.msra.mxu0 0.0
  %8497 = vmatprep.subr.mxu0 0.0
  %8498 = vmatpush1.msra.mxu0 0.0
  %8499 = vmatprep.subr.mxu0 0.0
  %8500 = vmatpush1.msra.mxu0 0.0
  %8501 = vmatprep.subr.mxu0 0.0
  %8502 = vmatpush1.msra.mxu0 0.0
  %8503 = vmatprep.subr.mxu0 0.0
  %8504 = vmatpush1.msra.mxu0 0.0
  %8505 = vmatprep.subr.mxu0 0.0
  %8506 = vmatpush1.msra.mxu0 0.0
  %8507 = vmatprep.subr.mxu0 0.0
  %8508 = vmatpush1.msra.mxu0 0.0
  %8509 = vmatprep.subr.mxu0 0.0
  %8510 = vmatpush1.msra.mxu0 0.0
  %8511 = vmatprep.subr.mxu0 0.0
  %8512 = vmatpush1.msra.mxu0 0.0
  %8513 = vmatprep.subr.mxu0 0.0
  %8514 = vmatpush1.msra.mxu0 0.0
  %8515 = vmatprep.subr.mxu0 0.0
  %8516 = vmatpush1.msra.mxu0 0.0
  %8517 = vmatprep.subr.mxu0 0.0
  %8518 = vmatpush1.msra.mxu0 0.0
  %8519 = vmatprep.subr.mxu0 0.0
  %8520 = vmatpush1.msra.mxu0 0.0
  %8521 = vmatprep.subr.mxu0 0.0
  %8522 = vmatpush1.msra.mxu0 0.0
  %8523 = vmatprep.mubr.f32.mxu0 0.0
  %8524 = vmatmul.mubr.f32.gmra.mrb[0].mxu0 %v8440
  %v8525 = vpop.f32.mrb[0].mxu0
  %v8526 = vadd.f32 0.0, %v8525
  %v8527 = vpop.f32.mrb[0].mxu0
  %8528 = vdwg.mxu0
  %v8529 = vld [vmem:[%s14] sm:$0x1]
  %v8531 = vlaneseq
  %v8532 = vshrl.u32 %v8531, 7
  %v8533 = vsub.s32 0, %v8532
  %v8534 = vrot.slane %v8529, %v8533
  %v8536 = vmul.f32 %v8526, %v8534
  %v8537 = vld [vmem:[%s15] sm:$0x1]
  %v8539 = vlaneseq
  %v8540 = vshrl.u32 %v8539, 7
  %v8541 = vsub.s32 0, %v8540
  %v8542 = vrot.slane %v8537, %v8541
  %v8544 = vadd.f32 %v8536, %v8542
  %v8545 = vmax.f32 %v8544, 0.0
  %v8546 = vld [vmem:[%s16] sm:$0xff]
  %v8547 = vld [vmem:[%s16 + $0x8] sm:$0xff]
  %v8548 = vld [vmem:[%s16 + $0x10] sm:$0xff]
  %v8549 = vld [vmem:[%s16 + $0x18] sm:$0xff]
  %v8550 = vld [vmem:[%s16 + $0x20] sm:$0xff]
  %v8551 = vld [vmem:[%s16 + $0x28] sm:$0xff]
  %v8552 = vld [vmem:[%s16 + $0x30] sm:$0xff]
  %v8553 = vld [vmem:[%s16 + $0x38] sm:$0xff]
  %v8554 = vld [vmem:[#allocation2] sm:$0x1]
  %v8556 = vlaneseq
  %v8557 = vshrl.u32 %v8556, 7
  %v8558 = vsub.s32 0, %v8557
  %v8559 = vrot.slane %v8554, %v8558
  %v8562 = vsel %vm7396, %v8545, 0
  %8564 = vmatprep.subr.mxu0 0.0
  %8565 = vmatpush1.msra.mxu0 %v8546
  %8566 = vmatprep.subr.mxu0 0.0
  %8567 = vmatpush1.msra.mxu0 %v8547
  %8568 = vmatprep.subr.mxu0 0.0
  %8569 = vmatpush1.msra.mxu0 %v8548
  %8570 = vmatprep.subr.mxu0 0.0
  %8571 = vmatpush1.msra.mxu0 %v8549
  %8572 = vmatprep.subr.mxu0 0.0
  %8573 = vmatpush1.msra.mxu0 %v8550
  %8574 = vmatprep.subr.mxu0 0.0
  %8575 = vmatpush1.msra.mxu0 %v8551
  %8576 = vmatprep.subr.mxu0 0.0
  %8577 = vmatpush1.msra.mxu0 %v8552
  %8578 = vmatprep.subr.mxu0 0.0
  %8579 = vmatpush1.msra.mxu0 %v8553
  %8580 = vmatprep.subr.mxu0 0.0
  %8581 = vmatpush1.msra.mxu0 0.0
  %8582 = vmatprep.subr.mxu0 0.0
  %8583 = vmatpush1.msra.mxu0 0.0
  %8584 = vmatprep.subr.mxu0 0.0
  %8585 = vmatpush1.msra.mxu0 0.0
  %8586 = vmatprep.subr.mxu0 0.0
  %8587 = vmatpush1.msra.mxu0 0.0
  %8588 = vmatprep.subr.mxu0 0.0
  %8589 = vmatpush1.msra.mxu0 0.0
  %8590 = vmatprep.subr.mxu0 0.0
  %8591 = vmatpush1.msra.mxu0 0.0
  %8592 = vmatprep.subr.mxu0 0.0
  %8593 = vmatpush1.msra.mxu0 0.0
  %8594 = vmatprep.subr.mxu0 0.0
  %8595 = vmatpush1.msra.mxu0 0.0
  %8596 = vmatprep.subr.mxu0 0.0
  %8597 = vmatpush1.msra.mxu0 0.0
  %8598 = vmatprep.subr.mxu0 0.0
  %8599 = vmatpush1.msra.mxu0 0.0
  %8600 = vmatprep.subr.mxu0 0.0
  %8601 = vmatpush1.msra.mxu0 0.0
  %8602 = vmatprep.subr.mxu0 0.0
  %8603 = vmatpush1.msra.mxu0 0.0
  %8604 = vmatprep.subr.mxu0 0.0
  %8605 = vmatpush1.msra.mxu0 0.0
  %8606 = vmatprep.subr.mxu0 0.0
  %8607 = vmatpush1.msra.mxu0 0.0
  %8608 = vmatprep.subr.mxu0 0.0
  %8609 = vmatpush1.msra.mxu0 0.0
  %8610 = vmatprep.subr.mxu0 0.0
  %8611 = vmatpush1.msra.mxu0 0.0
  %8612 = vmatprep.subr.mxu0 0.0
  %8613 = vmatpush1.msra.mxu0 0.0
  %8614 = vmatprep.subr.mxu0 0.0
  %8615 = vmatpush1.msra.mxu0 0.0
  %8616 = vmatprep.subr.mxu0 0.0
  %8617 = vmatpush1.msra.mxu0 0.0
  %8618 = vmatprep.subr.mxu0 0.0
  %8619 = vmatpush1.msra.mxu0 0.0
  %8620 = vmatprep.subr.mxu0 0.0
  %8621 = vmatpush1.msra.mxu0 0.0
  %8622 = vmatprep.subr.mxu0 0.0
  %8623 = vmatpush1.msra.mxu0 0.0
  %8624 = vmatprep.subr.mxu0 0.0
  %8625 = vmatpush1.msra.mxu0 0.0
  %8626 = vmatprep.subr.mxu0 0.0
  %8627 = vmatpush1.msra.mxu0 0.0
  %8628 = vmatprep.mubr.f32.mxu0 0.0
  %8629 = vmatmul.mubr.f32.gmra.mrb[0].mxu0 %v8562
  %v8630 = vpop.f32.mrb[0].mxu0
  %v8631 = vadd.f32 %v8559, %v8630
  %v8632 = vpop.f32.mrb[0].mxu0
  %8633 = vdwg.mxu0
  %v8634 = vsub.f32 0.0, %v8631
  %v8635 = vmul.f32 %v8634, 1.442695
  %v8636 = vpow.pop %v8635
  %v8637 = vadd.f32 %v8636, 1.0
  %v8638 = vrcp.pop %v8637
  %v8639 = vmul.f32 1.0, %v8638
  %vm8640 = vcmask 1024
  %8641 = vst.msk [vmem:[%s18] sm:$0x3] %vm8640, %v8639
  // Predicated region
  $region74: #{improved_cnn_forward.1} parent=0 // pred_check
    _
  $region75: #{improved_cnn_forward.1} parent=0 // pred_check_branch
    %8643 = sbr.rel (0) target = $region77
  $region76: #{improved_cnn_forward.1} parent=0 // pred_region
    _
  $region77: #{improved_cnn_forward.1} parent=0 // pred_fallthru
    _
  // Predicated region
  $region78: #{improved_cnn_forward.1} parent=0 // pred_check
    _
  $region79: #{improved_cnn_forward.1} parent=0 // pred_check_branch
    %8645 = sbr.rel (0) target = $region81
  $region80: #{improved_cnn_forward.1} parent=0 // pred_region
    _
  $region81: #{improved_cnn_forward.1} parent=0 // pred_fallthru
    _

</llo_original>
